<compile_context>
chip_gen: v7x
topology: tpu7x:2x2x1
jax: 0.10.0
libtpu: 0.0.40
codegen_flags: <defaults>
</compile_context>

<pallas_src>
import math

import jax
import jax.numpy as jnp
from jax.experimental import pallas as pl
from jax.experimental.pallas import tpu as pltpu


# --------------------------------------------------------------------------
# In-kernel helpers
# --------------------------------------------------------------------------
def _erf_approx(x):
    # Abramowitz & Stegun 7.1.26 (|err| < 1.5e-7); single exp per element.
    a1, a2, a3, a4, a5 = 0.254829592, -0.284496736, 1.421413741, -1.453152027, 1.061405429
    p = 0.3275911
    s = jnp.sign(x)
    ax = jnp.abs(x)
    t = 1.0 / (1.0 + p * ax)
    poly = ((((a5 * t + a4) * t + a3) * t + a2) * t + a1) * t
    return s * (1.0 - poly * jnp.exp(-ax * ax))


def _gelu_exact(x):
    return 0.5 * x * (1.0 + _erf_approx(x * (1.0 / math.sqrt(2.0))))


def _pick_tile(full, target, align):
    """Largest divisor of `full` that is <= target and a multiple of `align`;
    falls back to `full` (single block) if no such divisor exists."""
    if full <= target:
        return full
    for cand in range(min(target, full), align - 1, -1):
        if full % cand == 0 and cand % align == 0:
            return cand
    return full


# --------------------------------------------------------------------------
# Tiled linear: y = x @ w (+ b) (+ activation) (+ residual), f32 K-accumulator
# --------------------------------------------------------------------------
def linear(x2d, w, b=None, residual=None, activation=None, tm=256, tn=256, tk=512):
    M, Cin = x2d.shape
    Cout = w.shape[1]
    has_b = b is not None
    has_r = residual is not None

    tm_ = M if M <= tm else tm                       # tm multiple of 8 when tiled
    tn_ = _pick_tile(Cout, tn, 128)                  # lane-dense output tiles
    tk_ = _pick_tile(Cin, tk, 128)                   # K must divide exactly
    grid = (pl.cdiv(M, tm_), Cout // tn_, Cin // tk_)

    def kernel(*refs):
        refs = list(refs)
        acc_ref = refs.pop()
        o_ref = refs.pop()
        x_ref, w_ref = refs[0], refs[1]
        nxt = 2
        b_ref = None
        r_ref = None
        if has_b:
            b_ref = refs[nxt]
            nxt += 1
        if has_r:
            r_ref = refs[nxt]
            nxt += 1

        kk = pl.program_id(2)

        @pl.when(kk == 0)
        def _init():
            acc_ref[...] = jnp.zeros_like(acc_ref)

        # Feed MXU in the input dtype (bf16 stays bf16); accumulate in f32.
        acc_ref[...] += jnp.dot(x_ref[...], w_ref[...],
                                preferred_element_type=jnp.float32)

        @pl.when(kk == pl.num_programs(2) - 1)
        def _fini():
            y = acc_ref[...]
            if has_b:
                y = y + b_ref[...].astype(jnp.float32)
            if activation is not None:
                y = activation(y)
            if has_r:
                y = y + r_ref[...].astype(jnp.float32)
            o_ref[...] = y.astype(o_ref.dtype)

    in_specs = [
        pl.BlockSpec((tm_, tk_), lambda i, j, k: (i, k)),
        pl.BlockSpec((tk_, tn_), lambda i, j, k: (k, j)),
    ]
    args = [x2d, w]
    if has_b:
        in_specs.append(pl.BlockSpec((1, tn_), lambda i, j, k: (0, j)))
        args.append(b.reshape(1, Cout))
    if has_r:
        in_specs.append(pl.BlockSpec((tm_, tn_), lambda i, j, k: (i, j)))
        args.append(residual)

    return pl.pallas_call(
        kernel,
        out_shape=jax.ShapeDtypeStruct((M, Cout), x2d.dtype),
        grid=grid,
        in_specs=in_specs,
        out_specs=pl.BlockSpec((tm_, tn_), lambda i, j, k: (i, j)),
        scratch_shapes=[pltpu.VMEM((tm_, tn_), jnp.float32)],
        compiler_params=pltpu.CompilerParams(
            dimension_semantics=("parallel", "parallel", "arbitrary")),
    )(*args)


# --------------------------------------------------------------------------
# Fused LayerNorm + linear (+ bias, + activation); full C per row in one K block
# --------------------------------------------------------------------------
def layernorm_linear(x2d, gamma, beta, w, b=None, activation=None, tm=256, tn=512):
    M, C = x2d.shape
    Cout = w.shape[1]
    has_b = b is not None

    tm_ = M if M <= tm else tm
    tn_ = _pick_tile(Cout, tn, 128)
    grid = (pl.cdiv(M, tm_), Cout // tn_)

    def kernel(*refs):
        if has_b:
            x_ref, g_ref, bt_ref, w_ref, b_ref, o_ref = refs
        else:
            x_ref, g_ref, bt_ref, w_ref, o_ref = refs
        x = x_ref[...].astype(jnp.float32)
        mu = jnp.mean(x, axis=-1, keepdims=True)
        var = jnp.mean(jnp.square(x - mu), axis=-1, keepdims=True)
        xn = (x - mu) * jax.lax.rsqrt(var + 1e-5)
        xn = xn * g_ref[...].astype(jnp.float32) + bt_ref[...].astype(jnp.float32)
        y = jnp.dot(xn.astype(x_ref.dtype), w_ref[...],
                    preferred_element_type=jnp.float32)
        if has_b:
            y = y + b_ref[...].astype(jnp.float32)
        if activation is not None:
            y = activation(y)
        o_ref[...] = y.astype(o_ref.dtype)

    in_specs = [
        pl.BlockSpec((tm_, C), lambda i, j: (i, 0)),
        pl.BlockSpec((1, C), lambda i, j: (0, 0)),
        pl.BlockSpec((1, C), lambda i, j: (0, 0)),
        pl.BlockSpec((C, tn_), lambda i, j: (0, j)),
    ]
    args = [x2d, gamma.reshape(1, C), beta.reshape(1, C), w]
    if has_b:
        in_specs.append(pl.BlockSpec((1, tn_), lambda i, j: (0, j)))
        args.append(b.reshape(1, Cout))

    return pl.pallas_call(
        kernel,
        out_shape=jax.ShapeDtypeStruct((M, Cout), x2d.dtype),
        grid=grid,
        in_specs=in_specs,
        out_specs=pl.BlockSpec((tm_, tn_), lambda i, j: (i, j)),
        compiler_params=pltpu.CompilerParams(
            dimension_semantics=("parallel", "parallel")),
    )(*args)


# --------------------------------------------------------------------------
# Fused attention: LayerNorm + qkv + multi-head softmax attention + projection
# --------------------------------------------------------------------------
def fused_attention(x3d, ln_g, ln_b, wqkv, wproj, bproj, num_heads):
    """x3d: (S, N, C)  ->  proj(MHA(LN(x3d))) : (S, N, C)."""
    S, N, C = x3d.shape
    Dh = C // num_heads
    scale = Dh ** (-0.5)

    # Head-major weight slabs (weight-side reshuffle only; activations never
    # transposed in HBM). qk scale is folded into the q weights.
    wq = (wqkv[:, 0 * C:1 * C] * scale).reshape(C, num_heads, Dh).transpose(1, 0, 2)
    wk = wqkv[:, 1 * C:2 * C].reshape(C, num_heads, Dh).transpose(1, 0, 2)
    wv = wqkv[:, 2 * C:3 * C].reshape(C, num_heads, Dh).transpose(1, 0, 2)

    # Batch G sequences per grid step: amortize per-step overhead while keeping
    # the (G, N, C) blocks + f32 intermediates comfortably inside VMEM
    # (sized for the smallest budget, v7x's 64 MiB).
    bytes_per_seq = N * C * 4
    g_target = max(1, min(64, (2 * 1024 * 1024) // max(bytes_per_seq, 1)))
    G = 1
    for cand in range(min(S, g_target), 0, -1):
        if S % cand == 0:
            G = cand
            break

    def kernel(x_ref, g_ref, bta_ref, wq_ref, wk_ref, wv_ref, wp_ref, bp_ref, o_ref):
        cdt = x_ref.dtype
        x = x_ref[...].astype(jnp.float32)                         # (G, N, C)
        mu = jnp.mean(x, axis=-1, keepdims=True)
        var = jnp.mean(jnp.square(x - mu), axis=-1, keepdims=True)
        xn = (x - mu) * jax.lax.rsqrt(var + 1e-5)
        xn = xn * g_ref[...].astype(jnp.float32) + bta_ref[...].astype(jnp.float32)
        xn2 = xn.astype(cdt).reshape(G * N, C)                     # MXU operand

        acc = jnp.zeros((G * N, C), jnp.float32)                   # fused proj acc
        for h in range(num_heads):                                 # static unroll
            q = jnp.dot(xn2, wq_ref[h], preferred_element_type=jnp.float32)
            k = jnp.dot(xn2, wk_ref[h], preferred_element_type=jnp.float32)
            v = jnp.dot(xn2, wv_ref[h], preferred_element_type=jnp.float32)
            q = q.reshape(G, N, Dh).astype(cdt)
            k = k.reshape(G, N, Dh).astype(cdt)
            v = v.reshape(G, N, Dh).astype(cdt)
            # q @ k^T: contract last dims of both operands (no explicit .T).
            s = jax.lax.dot_general(q, k, (((2,), (2,)), ((0,), (0,))),
                                    preferred_element_type=jnp.float32)
            s = s - jnp.max(s, axis=-1, keepdims=True)
            p = jnp.exp(s)
            p = p * pl.reciprocal(jnp.sum(p, axis=-1, keepdims=True), approx=True)
            o = jax.lax.dot_general(p.astype(cdt), v, (((2,), (1,)), ((0,), (0,))),
                                    preferred_element_type=jnp.float32)
            # Fused output projection: this head's (sublane-aligned) rows of wproj.
            acc = acc + jnp.dot(o.reshape(G * N, Dh).astype(cdt),
                                wp_ref[h * Dh:(h + 1) * Dh, :],
                                preferred_element_type=jnp.float32)
        acc = acc + bp_ref[...].astype(jnp.float32)
        o_ref[...] = acc.reshape(G, N, C).astype(o_ref.dtype)      # lane-dense store

    blk = pl.BlockSpec((G, N, C), lambda i: (i, 0, 0))
    return pl.pallas_call(
        kernel,
        out_shape=jax.ShapeDtypeStruct((S, N, C), x3d.dtype),
        grid=(S // G,),
        in_specs=[
            blk,
            pl.BlockSpec((1, C), lambda i: (0, 0)),
            pl.BlockSpec((1, C), lambda i: (0, 0)),
            pl.BlockSpec((num_heads, C, Dh), lambda i: (0, 0, 0)),
            pl.BlockSpec((num_heads, C, Dh), lambda i: (0, 0, 0)),
            pl.BlockSpec((num_heads, C, Dh), lambda i: (0, 0, 0)),
            pl.BlockSpec((C, C), lambda i: (0, 0)),
            pl.BlockSpec((1, C), lambda i: (0, 0)),
        ],
        out_specs=blk,
        compiler_params=pltpu.CompilerParams(dimension_semantics=("parallel",)),
    )(x3d, ln_g.reshape(1, C), ln_b.reshape(1, C), wq, wk, wv, wproj,
      bproj.reshape(1, C))


# --------------------------------------------------------------------------
# Module-level composition (glue in plain JAX, hot paths in Pallas)
# --------------------------------------------------------------------------
def block_forward(params, x, B, T, W, num_heads):
    """Block.forward, attention_type='divided_space_time', eval mode."""
    _, Ntot, C = x.shape
    num_spatial = (Ntot - 1) // T
    H = num_spatial // W
    HW = H * W

    # ---- temporal attention (LN + qkv + MHA + proj fused in one kernel) ----
    x_patches = x[:, 1:, :]                                            # (B, HW*T, C)
    xt = x_patches.reshape(B * HW, T, C)                               # b (h w t) m -> (b h w) t m
    res_t = fused_attention(xt, params["tnorm1_g"], params["tnorm1_b"],
                            params["tattn"]["wqkv"], params["tattn"]["wproj"],
                            params["tattn"]["bproj"], num_heads)       # (B*HW, T, C)
    # temporal_fc with the residual add fused into the epilogue
    xt2 = linear(res_t.reshape(B * HW * T, C), params["tfc_w"], params["tfc_b"],
                 residual=x_patches.reshape(B * HW * T, C)).reshape(B, HW * T, C)

    # ---- spatial attention ----
    init_cls = x[:, 0:1, :]                                            # (B, 1, C)
    cls_tok = jnp.tile(init_cls, (1, T, 1)).reshape(B * T, 1, C)
    xs = xt2.reshape(B, HW, T, C).transpose(0, 2, 1, 3).reshape(B * T, HW, C)
    xs = jnp.concatenate([cls_tok, xs], axis=1)                        # (B*T, 1+HW, C)
    res_s = fused_attention(xs, params["norm1_g"], params["norm1_b"],
                            params["attn"]["wqkv"], params["attn"]["wproj"],
                            params["attn"]["bproj"], num_heads)        # (B*T, 1+HW, C)
    cls_out = res_s[:, 0, :].reshape(B, T, C).mean(axis=1, keepdims=True)
    res_sp = res_s[:, 1:, :].reshape(B, T, HW, C).transpose(0, 2, 1, 3).reshape(B, HW * T, C)

    x_new = jnp.concatenate([init_cls, xt2], axis=1) + \
            jnp.concatenate([cls_out, res_sp], axis=1)                 # (B, Ntot, C)

    # ---- MLP: LayerNorm fused into fc1 (+GELU), residual fused into fc2 ----
    x_new_2d = x_new.reshape(B * Ntot, C)
    hdn = layernorm_linear(x_new_2d, params["norm2_g"], params["norm2_b"],
                           params["fc1_w"], params["fc1_b"], activation=_gelu_exact)
    out = linear(hdn, params["fc2_w"], params["fc2_b"], residual=x_new_2d)
    return out.reshape(B, Ntot, C)


# --------------------------------------------------------------------------
# Pure-JAX reference (for correctness check)
# --------------------------------------------------------------------------
def _ln_ref(x, g, b):
    mu = x.mean(-1, keepdims=True)
    var = ((x - mu) ** 2).mean(-1, keepdims=True)
    return (x - mu) / jnp.sqrt(var + 1e-5) * g + b


def _attn_ref(x, p, nh):
    S, N, C = x.shape
    Dh = C // nh
    scale = Dh ** (-0.5)
    qkv = (x @ p["wqkv"]).reshape(S, N, 3, nh, Dh).transpose(2, 0, 3, 1, 4)
    q, k, v = qkv[0], qkv[1], qkv[2]
    s = jnp.einsum("shnd,shmd->shnm", q, k) * scale
    a = jax.nn.softmax(s, axis=-1)
    o = jnp.einsum("shnm,shmd->shnd", a, v)
    o = o.transpose(0, 2, 1, 3).reshape(S, N, C)
    return o @ p["wproj"] + p["bproj"]


def block_forward_ref(params, x, B, T, W, num_heads):
    _, Ntot, C = x.shape
    num_spatial = (Ntot - 1) // T
    H = num_spatial // W
    HW = H * W
    xt = x[:, 1:, :].reshape(B, HW, T, C).reshape(B * HW, T, C)
    res_t = _attn_ref(_ln_ref(xt, params["tnorm1_g"], params["tnorm1_b"]),
                      params["tattn"], num_heads)
    res_t = res_t.reshape(B, HW * T, C) @ params["tfc_w"] + params["tfc_b"]
    xt2 = x[:, 1:, :] + res_t
    init_cls = x[:, 0:1, :]
    cls_tok = jnp.tile(init_cls, (1, T, 1)).reshape(B * T, 1, C)
    xs = xt2.reshape(B, HW, T, C).transpose(0, 2, 1, 3).reshape(B * T, HW, C)
    xs = jnp.concatenate([cls_tok, xs], axis=1)
    res_s = _attn_ref(_ln_ref(xs, params["norm1_g"], params["norm1_b"]),
                      params["attn"], num_heads)
    cls_out = res_s[:, 0, :].reshape(B, T, C).mean(axis=1, keepdims=True)
    res_s = res_s[:, 1:, :].reshape(B, T, HW, C).transpose(0, 2, 1, 3).reshape(B, HW * T, C)
    x_new = jnp.concatenate([init_cls, xt2], axis=1) + \
            jnp.concatenate([cls_out, res_s], axis=1)
    xn = _ln_ref(x_new, params["norm2_g"], params["norm2_b"])
    h = jax.nn.gelu(xn @ params["fc1_w"] + params["fc1_b"], approximate=False)
    o = h @ params["fc2_w"] + params["fc2_b"]
    return x_new + o


# --------------------------------------------------------------------------
# Deterministic parameter init (synthetic, not a checkpoint load)
# --------------------------------------------------------------------------
def init_params(key, dim, mlp_ratio=4.0):
    hidden = int(dim * mlp_ratio)
    ks = jax.random.split(key, 12)
    n01 = lambda k, shape: (jax.random.normal(k, shape, jnp.float32) * 0.02)
    return {
        "norm1_g": jnp.ones((dim,), jnp.float32),
        "norm1_b": jnp.zeros((dim,), jnp.float32),
        "tnorm1_g": jnp.ones((dim,), jnp.float32),
        "tnorm1_b": jnp.zeros((dim,), jnp.float32),
        "norm2_g": jnp.ones((dim,), jnp.float32),
        "norm2_b": jnp.zeros((dim,), jnp.float32),
        "attn": {
            "wqkv": n01(ks[0], (dim, 3 * dim)),   # qkv_bias=False
            "wproj": n01(ks[1], (dim, dim)),
            "bproj": n01(ks[2], (dim,)),
        },
        "tattn": {
            "wqkv": n01(ks[3], (dim, 3 * dim)),
            "wproj": n01(ks[4], (dim, dim)),
            "bproj": n01(ks[5], (dim,)),
        },
        "tfc_w": n01(ks[6], (dim, dim)),
        "tfc_b": n01(ks[7], (dim,)),
        "fc1_w": n01(ks[8], (dim, hidden)),
        "fc1_b": n01(ks[9], (hidden,)),
        "fc2_w": n01(ks[10], (hidden, dim)),
        "fc2_b": n01(ks[11], (dim,)),
    }


# --------------------------------------------------------------------------
if __name__ == "__main__":
    # Small but shape-consistent config: dim=32, heads=4, B=2, T=2, H=W=2.
    dim, num_heads = 32, 4
    B, T, Hh, W = 2, 2, 2, 2
    Ntot = 1 + Hh * W * T                      # 9 tokens (1 cls + H*W*T patches)

    key = jax.random.PRNGKey(0)
    kx, kp = jax.random.split(key)
    x = jax.random.normal(kx, (B, Ntot, dim), jnp.float32)
    params = init_params(kp, dim, mlp_ratio=4.0)

    out = block_forward(params, x, B, T, W, num_heads)
    out = jax.block_until_ready(out)

    ref = block_forward_ref(params, x, B, T, W, num_heads)
    assert out.shape == (B, Ntot, dim)
    assert bool(jnp.all(jnp.isfinite(out)))
    assert bool(jnp.allclose(out, ref, atol=2e-2, rtol=2e-2)), "mismatch vs reference"

    print("KERNEL_OK")
</pallas_src>

<mosaic_0001>
module attributes {stable_mosaic.version = 11 : i64} {
  func.func @kernel(%arg0: i32, %arg1: memref<8x2x32xf32, #tpu.memory_space<vmem>>, %arg2: memref<1x32xf32, #tpu.memory_space<vmem>>, %arg3: memref<1x32xf32, #tpu.memory_space<vmem>>, %arg4: memref<4x32x8xf32, #tpu.memory_space<vmem>>, %arg5: memref<4x32x8xf32, #tpu.memory_space<vmem>>, %arg6: memref<4x32x8xf32, #tpu.memory_space<vmem>>, %arg7: memref<32x32xf32, #tpu.memory_space<vmem>>, %arg8: memref<1x32xf32, #tpu.memory_space<vmem>>, %arg9: memref<8x2x32xf32, #tpu.memory_space<vmem>>) attributes {dimension_semantics = [#tpu.dimension_semantics<parallel>], iteration_bounds = array<i64: 1>, scalar_prefetch = 0 : i64, scratch_operands = 0 : i64, tpu.core_type = #tpu.core_type<tc>, window_params = [{transform_indices = @transform_0, window_bounds = array<i64: 8, 2, 32>}, {pipeline_mode = #tpu.pipeline_mode<synchronous>, transform_indices = @transform_1, window_bounds = array<i64: 1, 32>}, {pipeline_mode = #tpu.pipeline_mode<synchronous>, transform_indices = @transform_2, window_bounds = array<i64: 1, 32>}, {pipeline_mode = #tpu.pipeline_mode<synchronous>, transform_indices = @transform_3, window_bounds = array<i64: 4, 32, 8>}, {pipeline_mode = #tpu.pipeline_mode<synchronous>, transform_indices = @transform_4, window_bounds = array<i64: 4, 32, 8>}, {pipeline_mode = #tpu.pipeline_mode<synchronous>, transform_indices = @transform_5, window_bounds = array<i64: 4, 32, 8>}, {pipeline_mode = #tpu.pipeline_mode<synchronous>, transform_indices = @transform_6, window_bounds = array<i64: 32, 32>}, {pipeline_mode = #tpu.pipeline_mode<synchronous>, transform_indices = @transform_7, window_bounds = array<i64: 1, 32>}, {transform_indices = @transform_8, window_bounds = array<i64: 8, 2, 32>}]} {
    %c0 = arith.constant 0 : index
    %c0_0 = arith.constant 0 : index
    %c0_1 = arith.constant 0 : index
    %0 = vector.load %arg1[%c0, %c0_0, %c0_1] : memref<8x2x32xf32, #tpu.memory_space<vmem>>, vector<8x2x32xf32>
    %cst = arith.constant dense<0.000000e+00> : vector<8x2xf32>
    %1 = vector.multi_reduction <add>, %0, %cst [2] : vector<8x2x32xf32> to vector<8x2xf32>
    %2 = vector.shape_cast %1 : vector<8x2xf32> to vector<8x2x1xf32>
    %cst_2 = arith.constant 3.200000e+01 : f32
    %3 = vector.broadcast %cst_2 : f32 to vector<8x2x1xf32>
    %4 = arith.divf %2, %3 : vector<8x2x1xf32>
    %5 = vector.broadcast %4 : vector<8x2x1xf32> to vector<8x2x32xf32>
    %6 = arith.subf %0, %5 : vector<8x2x32xf32>
    %7 = arith.mulf %6, %6 : vector<8x2x32xf32>
    %cst_3 = arith.constant dense<0.000000e+00> : vector<8x2xf32>
    %8 = vector.multi_reduction <add>, %7, %cst_3 [2] : vector<8x2x32xf32> to vector<8x2xf32>
    %9 = vector.shape_cast %8 : vector<8x2xf32> to vector<8x2x1xf32>
    %cst_4 = arith.constant 3.200000e+01 : f32
    %10 = vector.broadcast %cst_4 : f32 to vector<8x2x1xf32>
    %11 = arith.divf %9, %10 : vector<8x2x1xf32>
    %12 = vector.broadcast %4 : vector<8x2x1xf32> to vector<8x2x32xf32>
    %13 = arith.subf %0, %12 : vector<8x2x32xf32>
    %cst_5 = arith.constant 9.99999974E-6 : f32
    %14 = vector.broadcast %cst_5 : f32 to vector<8x2x1xf32>
    %15 = arith.addf %11, %14 : vector<8x2x1xf32>
    %16 = math.rsqrt %15 : vector<8x2x1xf32>
    %17 = vector.broadcast %16 : vector<8x2x1xf32> to vector<8x2x32xf32>
    %18 = arith.mulf %13, %17 : vector<8x2x32xf32>
    %c0_6 = arith.constant 0 : index
    %c0_7 = arith.constant 0 : index
    %19 = vector.load %arg2[%c0_6, %c0_7] : memref<1x32xf32, #tpu.memory_space<vmem>>, vector<1x32xf32>
    %20 = vector.shape_cast %19 : vector<1x32xf32> to vector<1x1x32xf32>
    %21 = vector.broadcast %20 : vector<1x1x32xf32> to vector<8x2x32xf32>
    %22 = arith.mulf %18, %21 : vector<8x2x32xf32>
    %c0_8 = arith.constant 0 : index
    %c0_9 = arith.constant 0 : index
    %23 = vector.load %arg3[%c0_8, %c0_9] : memref<1x32xf32, #tpu.memory_space<vmem>>, vector<1x32xf32>
    %24 = vector.shape_cast %23 : vector<1x32xf32> to vector<1x1x32xf32>
    %25 = vector.broadcast %24 : vector<1x1x32xf32> to vector<8x2x32xf32>
    %26 = arith.addf %22, %25 : vector<8x2x32xf32>
    %27 = vector.shape_cast %26 : vector<8x2x32xf32> to vector<16x32xf32>
    %cst_10 = arith.constant 0.000000e+00 : f32
    %28 = vector.broadcast %cst_10 : f32 to vector<16x32xf32>
    %c0_11 = arith.constant 0 : index
    %c0_12 = arith.constant 0 : index
    %c0_13 = arith.constant 0 : index
    %29 = vector.load %arg4[%c0_11, %c0_12, %c0_13] : memref<4x32x8xf32, #tpu.memory_space<vmem>>, vector<1x32x8xf32>
    %30 = vector.shape_cast %29 : vector<1x32x8xf32> to vector<32x8xf32>
    %cst_14 = arith.constant dense<0.000000e+00> : vector<16x8xf32>
    %31 = tpu.matmul %27, %30, %cst_14 {dimension_numbers = #tpu.dot_dimension_numbers<[1], [0], [0], [1], [0, 0, 1, 1], [], []>} : vector<16x32xf32>, vector<32x8xf32>, vector<16x8xf32> -> vector<16x8xf32>
    %c0_15 = arith.constant 0 : index
    %c0_16 = arith.constant 0 : index
    %c0_17 = arith.constant 0 : index
    %32 = vector.load %arg5[%c0_15, %c0_16, %c0_17] : memref<4x32x8xf32, #tpu.memory_space<vmem>>, vector<1x32x8xf32>
    %33 = vector.shape_cast %32 : vector<1x32x8xf32> to vector<32x8xf32>
    %cst_18 = arith.constant dense<0.000000e+00> : vector<16x8xf32>
    %34 = tpu.matmul %27, %33, %cst_18 {dimension_numbers = #tpu.dot_dimension_numbers<[1], [0], [0], [1], [0, 0, 1, 1], [], []>} : vector<16x32xf32>, vector<32x8xf32>, vector<16x8xf32> -> vector<16x8xf32>
    %c0_19 = arith.constant 0 : index
    %c0_20 = arith.constant 0 : index
    %c0_21 = arith.constant 0 : index
    %35 = vector.load %arg6[%c0_19, %c0_20, %c0_21] : memref<4x32x8xf32, #tpu.memory_space<vmem>>, vector<1x32x8xf32>
    %36 = vector.shape_cast %35 : vector<1x32x8xf32> to vector<32x8xf32>
    %cst_22 = arith.constant dense<0.000000e+00> : vector<16x8xf32>
    %37 = tpu.matmul %27, %36, %cst_22 {dimension_numbers = #tpu.dot_dimension_numbers<[1], [0], [0], [1], [0, 0, 1, 1], [], []>} : vector<16x32xf32>, vector<32x8xf32>, vector<16x8xf32> -> vector<16x8xf32>
    %38 = vector.shape_cast %31 : vector<16x8xf32> to vector<8x2x8xf32>
    %39 = vector.shape_cast %34 : vector<16x8xf32> to vector<8x2x8xf32>
    %40 = vector.shape_cast %37 : vector<16x8xf32> to vector<8x2x8xf32>
    %cst_23 = arith.constant dense<0.000000e+00> : vector<8x2x2xf32>
    %41 = tpu.matmul %38, %39, %cst_23 {dimension_numbers = #tpu.dot_dimension_numbers<[2], [2], [1], [1], [0, 0, 0, 1, 1, 1], [0], [0]>} : vector<8x2x8xf32>, vector<8x2x8xf32>, vector<8x2x2xf32> -> vector<8x2x2xf32>
    %cst_24 = arith.constant dense<0xFF800000> : vector<8x2xf32>
    %42 = vector.multi_reduction <maximumf>, %41, %cst_24 [2] : vector<8x2x2xf32> to vector<8x2xf32>
    %43 = vector.shape_cast %42 : vector<8x2xf32> to vector<8x2x1xf32>
    %44 = vector.broadcast %43 : vector<8x2x1xf32> to vector<8x2x2xf32>
    %45 = arith.subf %41, %44 : vector<8x2x2xf32>
    %46 = math.exp %45 : vector<8x2x2xf32>
    %cst_25 = arith.constant dense<0.000000e+00> : vector<8x2xf32>
    %47 = vector.multi_reduction <add>, %46, %cst_25 [2] : vector<8x2x2xf32> to vector<8x2xf32>
    %48 = vector.shape_cast %47 : vector<8x2xf32> to vector<8x2x1xf32>
    %49 = tpu.reciprocal %48 {approx = true} : vector<8x2x1xf32> -> vector<8x2x1xf32>
    %50 = vector.broadcast %49 : vector<8x2x1xf32> to vector<8x2x2xf32>
    %51 = arith.mulf %46, %50 : vector<8x2x2xf32>
    %cst_26 = arith.constant dense<0.000000e+00> : vector<8x2x8xf32>
    %52 = tpu.matmul %51, %40, %cst_26 {dimension_numbers = #tpu.dot_dimension_numbers<[2], [1], [1], [2], [0, 0, 0, 1, 1, 2], [0], [0]>} : vector<8x2x2xf32>, vector<8x2x8xf32>, vector<8x2x8xf32> -> vector<8x2x8xf32>
    %53 = vector.shape_cast %52 : vector<8x2x8xf32> to vector<16x8xf32>
    %c0_27 = arith.constant 0 : index
    %c0_28 = arith.constant 0 : index
    %54 = vector.load %arg7[%c0_27, %c0_28] : memref<32x32xf32, #tpu.memory_space<vmem>>, vector<8x32xf32>
    %cst_29 = arith.constant dense<0.000000e+00> : vector<16x32xf32>
    %55 = tpu.matmul %53, %54, %cst_29 {dimension_numbers = #tpu.dot_dimension_numbers<[1], [0], [0], [1], [0, 0, 1, 1], [], []>} : vector<16x8xf32>, vector<8x32xf32>, vector<16x32xf32> -> vector<16x32xf32>
    %56 = arith.addf %28, %55 : vector<16x32xf32>
    %c1 = arith.constant 1 : index
    %c0_30 = arith.constant 0 : index
    %c0_31 = arith.constant 0 : index
    %57 = vector.load %arg4[%c1, %c0_30, %c0_31] : memref<4x32x8xf32, #tpu.memory_space<vmem>>, vector<1x32x8xf32>
    %58 = vector.shape_cast %57 : vector<1x32x8xf32> to vector<32x8xf32>
    %cst_32 = arith.constant dense<0.000000e+00> : vector<16x8xf32>
    %59 = tpu.matmul %27, %58, %cst_32 {dimension_numbers = #tpu.dot_dimension_numbers<[1], [0], [0], [1], [0, 0, 1, 1], [], []>} : vector<16x32xf32>, vector<32x8xf32>, vector<16x8xf32> -> vector<16x8xf32>
    %c1_33 = arith.constant 1 : index
    %c0_34 = arith.constant 0 : index
    %c0_35 = arith.constant 0 : index
    %60 = vector.load %arg5[%c1_33, %c0_34, %c0_35] : memref<4x32x8xf32, #tpu.memory_space<vmem>>, vector<1x32x8xf32>
    %61 = vector.shape_cast %60 : vector<1x32x8xf32> to vector<32x8xf32>
    %cst_36 = arith.constant dense<0.000000e+00> : vector<16x8xf32>
    %62 = tpu.matmul %27, %61, %cst_36 {dimension_numbers = #tpu.dot_dimension_numbers<[1], [0], [0], [1], [0, 0, 1, 1], [], []>} : vector<16x32xf32>, vector<32x8xf32>, vector<16x8xf32> -> vector<16x8xf32>
    %c1_37 = arith.constant 1 : index
    %c0_38 = arith.constant 0 : index
    %c0_39 = arith.constant 0 : index
    %63 = vector.load %arg6[%c1_37, %c0_38, %c0_39] : memref<4x32x8xf32, #tpu.memory_space<vmem>>, vector<1x32x8xf32>
    %64 = vector.shape_cast %63 : vector<1x32x8xf32> to vector<32x8xf32>
    %cst_40 = arith.constant dense<0.000000e+00> : vector<16x8xf32>
    %65 = tpu.matmul %27, %64, %cst_40 {dimension_numbers = #tpu.dot_dimension_numbers<[1], [0], [0], [1], [0, 0, 1, 1], [], []>} : vector<16x32xf32>, vector<32x8xf32>, vector<16x8xf32> -> vector<16x8xf32>
    %66 = vector.shape_cast %59 : vector<16x8xf32> to vector<8x2x8xf32>
    %67 = vector.shape_cast %62 : vector<16x8xf32> to vector<8x2x8xf32>
    %68 = vector.shape_cast %65 : vector<16x8xf32> to vector<8x2x8xf32>
    %cst_41 = arith.constant dense<0.000000e+00> : vector<8x2x2xf32>
    %69 = tpu.matmul %66, %67, %cst_41 {dimension_numbers = #tpu.dot_dimension_numbers<[2], [2], [1], [1], [0, 0, 0, 1, 1, 1], [0], [0]>} : vector<8x2x8xf32>, vector<8x2x8xf32>, vector<8x2x2xf32> -> vector<8x2x2xf32>
    %cst_42 = arith.constant dense<0xFF800000> : vector<8x2xf32>
    %70 = vector.multi_reduction <maximumf>, %69, %cst_42 [2] : vector<8x2x2xf32> to vector<8x2xf32>
    %71 = vector.shape_cast %70 : vector<8x2xf32> to vector<8x2x1xf32>
    %72 = vector.broadcast %71 : vector<8x2x1xf32> to vector<8x2x2xf32>
    %73 = arith.subf %69, %72 : vector<8x2x2xf32>
    %74 = math.exp %73 : vector<8x2x2xf32>
    %cst_43 = arith.constant dense<0.000000e+00> : vector<8x2xf32>
    %75 = vector.multi_reduction <add>, %74, %cst_43 [2] : vector<8x2x2xf32> to vector<8x2xf32>
    %76 = vector.shape_cast %75 : vector<8x2xf32> to vector<8x2x1xf32>
    %77 = tpu.reciprocal %76 {approx = true} : vector<8x2x1xf32> -> vector<8x2x1xf32>
    %78 = vector.broadcast %77 : vector<8x2x1xf32> to vector<8x2x2xf32>
    %79 = arith.mulf %74, %78 : vector<8x2x2xf32>
    %cst_44 = arith.constant dense<0.000000e+00> : vector<8x2x8xf32>
    %80 = tpu.matmul %79, %68, %cst_44 {dimension_numbers = #tpu.dot_dimension_numbers<[2], [1], [1], [2], [0, 0, 0, 1, 1, 2], [0], [0]>} : vector<8x2x2xf32>, vector<8x2x8xf32>, vector<8x2x8xf32> -> vector<8x2x8xf32>
    %81 = vector.shape_cast %80 : vector<8x2x8xf32> to vector<16x8xf32>
    %c8 = arith.constant 8 : index
    %c0_45 = arith.constant 0 : index
    %82 = vector.load %arg7[%c8, %c0_45] : memref<32x32xf32, #tpu.memory_space<vmem>>, vector<8x32xf32>
    %cst_46 = arith.constant dense<0.000000e+00> : vector<16x32xf32>
    %83 = tpu.matmul %81, %82, %cst_46 {dimension_numbers = #tpu.dot_dimension_numbers<[1], [0], [0], [1], [0, 0, 1, 1], [], []>} : vector<16x8xf32>, vector<8x32xf32>, vector<16x32xf32> -> vector<16x32xf32>
    %84 = arith.addf %56, %83 : vector<16x32xf32>
    %c2 = arith.constant 2 : index
    %c0_47 = arith.constant 0 : index
    %c0_48 = arith.constant 0 : index
    %85 = vector.load %arg4[%c2, %c0_47, %c0_48] : memref<4x32x8xf32, #tpu.memory_space<vmem>>, vector<1x32x8xf32>
    %86 = vector.shape_cast %85 : vector<1x32x8xf32> to vector<32x8xf32>
    %cst_49 = arith.constant dense<0.000000e+00> : vector<16x8xf32>
    %87 = tpu.matmul %27, %86, %cst_49 {dimension_numbers = #tpu.dot_dimension_numbers<[1], [0], [0], [1], [0, 0, 1, 1], [], []>} : vector<16x32xf32>, vector<32x8xf32>, vector<16x8xf32> -> vector<16x8xf32>
    %c2_50 = arith.constant 2 : index
    %c0_51 = arith.constant 0 : index
    %c0_52 = arith.constant 0 : index
    %88 = vector.load %arg5[%c2_50, %c0_51, %c0_52] : memref<4x32x8xf32, #tpu.memory_space<vmem>>, vector<1x32x8xf32>
    %89 = vector.shape_cast %88 : vector<1x32x8xf32> to vector<32x8xf32>
    %cst_53 = arith.constant dense<0.000000e+00> : vector<16x8xf32>
    %90 = tpu.matmul %27, %89, %cst_53 {dimension_numbers = #tpu.dot_dimension_numbers<[1], [0], [0], [1], [0, 0, 1, 1], [], []>} : vector<16x32xf32>, vector<32x8xf32>, vector<16x8xf32> -> vector<16x8xf32>
    %c2_54 = arith.constant 2 : index
    %c0_55 = arith.constant 0 : index
    %c0_56 = arith.constant 0 : index
    %91 = vector.load %arg6[%c2_54, %c0_55, %c0_56] : memref<4x32x8xf32, #tpu.memory_space<vmem>>, vector<1x32x8xf32>
    %92 = vector.shape_cast %91 : vector<1x32x8xf32> to vector<32x8xf32>
    %cst_57 = arith.constant dense<0.000000e+00> : vector<16x8xf32>
    %93 = tpu.matmul %27, %92, %cst_57 {dimension_numbers = #tpu.dot_dimension_numbers<[1], [0], [0], [1], [0, 0, 1, 1], [], []>} : vector<16x32xf32>, vector<32x8xf32>, vector<16x8xf32> -> vector<16x8xf32>
    %94 = vector.shape_cast %87 : vector<16x8xf32> to vector<8x2x8xf32>
    %95 = vector.shape_cast %90 : vector<16x8xf32> to vector<8x2x8xf32>
    %96 = vector.shape_cast %93 : vector<16x8xf32> to vector<8x2x8xf32>
    %cst_58 = arith.constant dense<0.000000e+00> : vector<8x2x2xf32>
    %97 = tpu.matmul %94, %95, %cst_58 {dimension_numbers = #tpu.dot_dimension_numbers<[2], [2], [1], [1], [0, 0, 0, 1, 1, 1], [0], [0]>} : vector<8x2x8xf32>, vector<8x2x8xf32>, vector<8x2x2xf32> -> vector<8x2x2xf32>
    %cst_59 = arith.constant dense<0xFF800000> : vector<8x2xf32>
    %98 = vector.multi_reduction <maximumf>, %97, %cst_59 [2] : vector<8x2x2xf32> to vector<8x2xf32>
    %99 = vector.shape_cast %98 : vector<8x2xf32> to vector<8x2x1xf32>
    %100 = vector.broadcast %99 : vector<8x2x1xf32> to vector<8x2x2xf32>
    %101 = arith.subf %97, %100 : vector<8x2x2xf32>
    %102 = math.exp %101 : vector<8x2x2xf32>
    %cst_60 = arith.constant dense<0.000000e+00> : vector<8x2xf32>
    %103 = vector.multi_reduction <add>, %102, %cst_60 [2] : vector<8x2x2xf32> to vector<8x2xf32>
    %104 = vector.shape_cast %103 : vector<8x2xf32> to vector<8x2x1xf32>
    %105 = tpu.reciprocal %104 {approx = true} : vector<8x2x1xf32> -> vector<8x2x1xf32>
    %106 = vector.broadcast %105 : vector<8x2x1xf32> to vector<8x2x2xf32>
    %107 = arith.mulf %102, %106 : vector<8x2x2xf32>
    %cst_61 = arith.constant dense<0.000000e+00> : vector<8x2x8xf32>
    %108 = tpu.matmul %107, %96, %cst_61 {dimension_numbers = #tpu.dot_dimension_numbers<[2], [1], [1], [2], [0, 0, 0, 1, 1, 2], [0], [0]>} : vector<8x2x2xf32>, vector<8x2x8xf32>, vector<8x2x8xf32> -> vector<8x2x8xf32>
    %109 = vector.shape_cast %108 : vector<8x2x8xf32> to vector<16x8xf32>
    %c16 = arith.constant 16 : index
    %c0_62 = arith.constant 0 : index
    %110 = vector.load %arg7[%c16, %c0_62] : memref<32x32xf32, #tpu.memory_space<vmem>>, vector<8x32xf32>
    %cst_63 = arith.constant dense<0.000000e+00> : vector<16x32xf32>
    %111 = tpu.matmul %109, %110, %cst_63 {dimension_numbers = #tpu.dot_dimension_numbers<[1], [0], [0], [1], [0, 0, 1, 1], [], []>} : vector<16x8xf32>, vector<8x32xf32>, vector<16x32xf32> -> vector<16x32xf32>
    %112 = arith.addf %84, %111 : vector<16x32xf32>
    %c3 = arith.constant 3 : index
    %c0_64 = arith.constant 0 : index
    %c0_65 = arith.constant 0 : index
    %113 = vector.load %arg4[%c3, %c0_64, %c0_65] : memref<4x32x8xf32, #tpu.memory_space<vmem>>, vector<1x32x8xf32>
    %114 = vector.shape_cast %113 : vector<1x32x8xf32> to vector<32x8xf32>
    %cst_66 = arith.constant dense<0.000000e+00> : vector<16x8xf32>
    %115 = tpu.matmul %27, %114, %cst_66 {dimension_numbers = #tpu.dot_dimension_numbers<[1], [0], [0], [1], [0, 0, 1, 1], [], []>} : vector<16x32xf32>, vector<32x8xf32>, vector<16x8xf32> -> vector<16x8xf32>
    %c3_67 = arith.constant 3 : index
    %c0_68 = arith.constant 0 : index
    %c0_69 = arith.constant 0 : index
    %116 = vector.load %arg5[%c3_67, %c0_68, %c0_69] : memref<4x32x8xf32, #tpu.memory_space<vmem>>, vector<1x32x8xf32>
    %117 = vector.shape_cast %116 : vector<1x32x8xf32> to vector<32x8xf32>
    %cst_70 = arith.constant dense<0.000000e+00> : vector<16x8xf32>
    %118 = tpu.matmul %27, %117, %cst_70 {dimension_numbers = #tpu.dot_dimension_numbers<[1], [0], [0], [1], [0, 0, 1, 1], [], []>} : vector<16x32xf32>, vector<32x8xf32>, vector<16x8xf32> -> vector<16x8xf32>
    %c3_71 = arith.constant 3 : index
    %c0_72 = arith.constant 0 : index
    %c0_73 = arith.constant 0 : index
    %119 = vector.load %arg6[%c3_71, %c0_72, %c0_73] : memref<4x32x8xf32, #tpu.memory_space<vmem>>, vector<1x32x8xf32>
    %120 = vector.shape_cast %119 : vector<1x32x8xf32> to vector<32x8xf32>
    %cst_74 = arith.constant dense<0.000000e+00> : vector<16x8xf32>
    %121 = tpu.matmul %27, %120, %cst_74 {dimension_numbers = #tpu.dot_dimension_numbers<[1], [0], [0], [1], [0, 0, 1, 1], [], []>} : vector<16x32xf32>, vector<32x8xf32>, vector<16x8xf32> -> vector<16x8xf32>
    %122 = vector.shape_cast %115 : vector<16x8xf32> to vector<8x2x8xf32>
    %123 = vector.shape_cast %118 : vector<16x8xf32> to vector<8x2x8xf32>
    %124 = vector.shape_cast %121 : vector<16x8xf32> to vector<8x2x8xf32>
    %cst_75 = arith.constant dense<0.000000e+00> : vector<8x2x2xf32>
    %125 = tpu.matmul %122, %123, %cst_75 {dimension_numbers = #tpu.dot_dimension_numbers<[2], [2], [1], [1], [0, 0, 0, 1, 1, 1], [0], [0]>} : vector<8x2x8xf32>, vector<8x2x8xf32>, vector<8x2x2xf32> -> vector<8x2x2xf32>
    %cst_76 = arith.constant dense<0xFF800000> : vector<8x2xf32>
    %126 = vector.multi_reduction <maximumf>, %125, %cst_76 [2] : vector<8x2x2xf32> to vector<8x2xf32>
    %127 = vector.shape_cast %126 : vector<8x2xf32> to vector<8x2x1xf32>
    %128 = vector.broadcast %127 : vector<8x2x1xf32> to vector<8x2x2xf32>
    %129 = arith.subf %125, %128 : vector<8x2x2xf32>
    %130 = math.exp %129 : vector<8x2x2xf32>
    %cst_77 = arith.constant dense<0.000000e+00> : vector<8x2xf32>
    %131 = vector.multi_reduction <add>, %130, %cst_77 [2] : vector<8x2x2xf32> to vector<8x2xf32>
    %132 = vector.shape_cast %131 : vector<8x2xf32> to vector<8x2x1xf32>
    %133 = tpu.reciprocal %132 {approx = true} : vector<8x2x1xf32> -> vector<8x2x1xf32>
    %134 = vector.broadcast %133 : vector<8x2x1xf32> to vector<8x2x2xf32>
    %135 = arith.mulf %130, %134 : vector<8x2x2xf32>
    %cst_78 = arith.constant dense<0.000000e+00> : vector<8x2x8xf32>
    %136 = tpu.matmul %135, %124, %cst_78 {dimension_numbers = #tpu.dot_dimension_numbers<[2], [1], [1], [2], [0, 0, 0, 1, 1, 2], [0], [0]>} : vector<8x2x2xf32>, vector<8x2x8xf32>, vector<8x2x8xf32> -> vector<8x2x8xf32>
    %137 = vector.shape_cast %136 : vector<8x2x8xf32> to vector<16x8xf32>
    %c24 = arith.constant 24 : index
    %c0_79 = arith.constant 0 : index
    %138 = vector.load %arg7[%c24, %c0_79] : memref<32x32xf32, #tpu.memory_space<vmem>>, vector<8x32xf32>
    %cst_80 = arith.constant dense<0.000000e+00> : vector<16x32xf32>
    %139 = tpu.matmul %137, %138, %cst_80 {dimension_numbers = #tpu.dot_dimension_numbers<[1], [0], [0], [1], [0, 0, 1, 1], [], []>} : vector<16x8xf32>, vector<8x32xf32>, vector<16x32xf32> -> vector<16x32xf32>
    %140 = arith.addf %112, %139 : vector<16x32xf32>
    %c0_81 = arith.constant 0 : index
    %c0_82 = arith.constant 0 : index
    %141 = vector.load %arg8[%c0_81, %c0_82] : memref<1x32xf32, #tpu.memory_space<vmem>>, vector<1x32xf32>
    %142 = vector.broadcast %141 : vector<1x32xf32> to vector<16x32xf32>
    %143 = arith.addf %140, %142 : vector<16x32xf32>
    %144 = vector.shape_cast %143 : vector<16x32xf32> to vector<8x2x32xf32>
    %c0_83 = arith.constant 0 : index
    %c0_84 = arith.constant 0 : index
    %c0_85 = arith.constant 0 : index
    %145 = vector.load %arg9[%c0_83, %c0_84, %c0_85] : memref<8x2x32xf32, #tpu.memory_space<vmem>>, vector<8x2x32xf32>
    tpu.vector_store %arg9[%c0_83, %c0_84, %c0_85], %144 {strides = array<i32>} : memref<8x2x32xf32, #tpu.memory_space<vmem>>, vector<8x2x32xf32>,
    return
  }
  func.func @transform_0(%arg0: i32) -> (i32, i32, i32) {
    %c0_i32 = arith.constant 0 : i32
    %c0_i32_0 = arith.constant 0 : i32
    %c0_i32_1 = arith.constant 0 : i32
    return %arg0, %c0_i32, %c0_i32_0 : i32, i32, i32
  }
  func.func @transform_1(%arg0: i32) -> (i32, i32) {
    %c0_i32 = arith.constant 0 : i32
    %c0_i32_0 = arith.constant 0 : i32
    %c0_i32_1 = arith.constant 0 : i32
    return %c0_i32, %c0_i32_0 : i32, i32
  }
  func.func @transform_2(%arg0: i32) -> (i32, i32) {
    %c0_i32 = arith.constant 0 : i32
    %c0_i32_0 = arith.constant 0 : i32
    %c0_i32_1 = arith.constant 0 : i32
    return %c0_i32, %c0_i32_0 : i32, i32
  }
  func.func @transform_3(%arg0: i32) -> (i32, i32, i32) {
    %c0_i32 = arith.constant 0 : i32
    %c0_i32_0 = arith.constant 0 : i32
    %c0_i32_1 = arith.constant 0 : i32
    %c0_i32_2 = arith.constant 0 : i32
    return %c0_i32, %c0_i32_0, %c0_i32_1 : i32, i32, i32
  }
  func.func @transform_4(%arg0: i32) -> (i32, i32, i32) {
    %c0_i32 = arith.constant 0 : i32
    %c0_i32_0 = arith.constant 0 : i32
    %c0_i32_1 = arith.constant 0 : i32
    %c0_i32_2 = arith.constant 0 : i32
    return %c0_i32, %c0_i32_0, %c0_i32_1 : i32, i32, i32
  }
  func.func @transform_5(%arg0: i32) -> (i32, i32, i32) {
    %c0_i32 = arith.constant 0 : i32
    %c0_i32_0 = arith.constant 0 : i32
    %c0_i32_1 = arith.constant 0 : i32
    %c0_i32_2 = arith.constant 0 : i32
    return %c0_i32, %c0_i32_0, %c0_i32_1 : i32, i32, i32
  }
  func.func @transform_6(%arg0: i32) -> (i32, i32) {
    %c0_i32 = arith.constant 0 : i32
    %c0_i32_0 = arith.constant 0 : i32
    %c0_i32_1 = arith.constant 0 : i32
    return %c0_i32, %c0_i32_0 : i32, i32
  }
  func.func @transform_7(%arg0: i32) -> (i32, i32) {
    %c0_i32 = arith.constant 0 : i32
    %c0_i32_0 = arith.constant 0 : i32
    %c0_i32_1 = arith.constant 0 : i32
    return %c0_i32, %c0_i32_0 : i32, i32
  }
  func.func @transform_8(%arg0: i32) -> (i32, i32, i32) {
    %c0_i32 = arith.constant 0 : i32
    %c0_i32_0 = arith.constant 0 : i32
    %c0_i32_1 = arith.constant 0 : i32
    return %arg0, %c0_i32, %c0_i32_0 : i32, i32, i32
  }
}

</mosaic_0001>

<llo_original>
// kernel: tpu_custom_call.1
$region0: #{tpu_custom_call.1}
  #allocation0 [shape = 'u32[]', space=smem, size = 0x4, offset = 0x4, fixed_abs, tag = 'smem constant byte address 0x4 - core index']
  #allocation1 [shape = 'u32[144,128]{1,0:T(1,128)}', space=vmem, size = 0x12000, scoped, tag = 'internal scratch']
  %s0 = inlined_call_operand.vmem [shape: f32[8,2,32], index: 0, kind: input, shape index: {}]
  %s1 = inlined_call_operand.vmem [shape: f32[1,32], index: 1, kind: input, shape index: {}]
  %s2 = inlined_call_operand.vmem [shape: f32[1,32], index: 2, kind: input, shape index: {}]
  %s3 = inlined_call_operand.vmem [shape: f32[4,32,8], index: 3, kind: input, shape index: {}]
  %s4 = inlined_call_operand.vmem [shape: f32[4,32,8], index: 4, kind: input, shape index: {}]
  %s5 = inlined_call_operand.vmem [shape: f32[4,32,8], index: 5, kind: input, shape index: {}]
  %s6 = inlined_call_operand.vmem [shape: f32[32,32], index: 6, kind: input, shape index: {}]
  %s7 = inlined_call_operand.vmem [shape: f32[1,32], index: 7, kind: input, shape index: {}]
  %s8 = inlined_call_operand.hbm [shape: f32[8,2,32], index: 8, kind: output, shape index: {}]
  %s9 = sld [smem:[#allocation0]]
  $region42: #{tpu_custom_call.1} parent=0
    _
  %s11 = ssub.s32 1, %s9
  %s12 = scalar_select 0, %s11, %s9
  $region1: #{tpu_custom_call.1} parent=0
    #allocation2 [shape = 'u8[8192]{0}', space=vmem, size = 0x2000, scoped, tag = 'output window, operand 0, single buffered']
    #allocation3 [shape = 's32[1]{0}', space=sflag, size = 0x4, scoped, tag = 'scoped memory for tpu_custom_call.1']
    %13 = vsyncpa [#allocation3], 0
    // Predicated region
    $region2: #{tpu_custom_call.1} parent=1 // pred_check
      _
    $region3: #{tpu_custom_call.1} parent=1 // pred_check_branch
      %15 = sbr.rel (0) target = $region5
    $region4: #{tpu_custom_call.1} parent=1 // pred_region
      _
    $region5: #{tpu_custom_call.1} parent=1 // pred_fallthru
      _
    // Predicated region
    $region6: #{tpu_custom_call.1} parent=1 // pred_check
      _
    $region7: #{tpu_custom_call.1} parent=1 // pred_check_branch
      %17 = sbr.rel (0) target = $region9
    $region8: #{tpu_custom_call.1} parent=1 // pred_region
      _
    $region9: #{tpu_custom_call.1} parent=1 // pred_fallthru
      _
    // Predicated region
    $region10: #{tpu_custom_call.1} parent=1 // pred_check
      _
    $region11: #{tpu_custom_call.1} parent=1 // pred_check_branch
      %19 = sbr.rel (0) target = $region13
    $region12: #{tpu_custom_call.1} parent=1 // pred_region
      _
    $region13: #{tpu_custom_call.1} parent=1 // pred_fallthru
      _
    // Predicated region
    $region14: #{tpu_custom_call.1} parent=1 // pred_check
      _
    $region15: #{tpu_custom_call.1} parent=1 // pred_check_branch
      %21 = sbr.rel (0) target = $region17
    $region16: #{tpu_custom_call.1} parent=1 // pred_region
      _
    $region17: #{tpu_custom_call.1} parent=1 // pred_fallthru
      _
    // Predicated region
    $region18: #{tpu_custom_call.1} parent=1 // pred_check
      _
    $region19: #{tpu_custom_call.1} parent=1 // pred_check_branch
      %23 = sbr.rel (0) target = $region21
    $region20: #{tpu_custom_call.1} parent=1 // pred_region
      _
    $region21: #{tpu_custom_call.1} parent=1 // pred_fallthru
      _
    // Predicated region
    $region22: #{tpu_custom_call.1} parent=1 // pred_check
      _
    $region23: #{tpu_custom_call.1} parent=1 // pred_check_branch
      %25 = sbr.rel (0) target = $region25
    $region24: #{tpu_custom_call.1} parent=1 // pred_region
      _
    $region25: #{tpu_custom_call.1} parent=1 // pred_fallthru
      _
    // Predicated region
    $region26: #{tpu_custom_call.1} parent=1 // pred_check
      _
    $region27: #{tpu_custom_call.1} parent=1 // pred_check_branch
      %27 = sbr.rel (0) target = $region29
    $region28: #{tpu_custom_call.1} parent=1 // pred_region
      _
    $region29: #{tpu_custom_call.1} parent=1 // pred_fallthru
      _
    // Predicated region
    $region30: #{tpu_custom_call.1} parent=1 // pred_check
      _
    $region31: #{tpu_custom_call.1} parent=1 // pred_check_branch
      %29 = sbr.rel (0) target = $region33
    $region32: #{tpu_custom_call.1} parent=1 // pred_region
      _
    $region33: #{tpu_custom_call.1} parent=1 // pred_fallthru
      _
    %v30 = vld [vmem:[%s0] sm:$0x3]
    %v31 = vld [vmem:[%s0 + $0x2] sm:$0x3]
    %v32 = vld [vmem:[%s0 + $0x4] sm:$0x3]
    %v33 = vld [vmem:[%s0 + $0x6] sm:$0x3]
    %v34 = vld [vmem:[%s0 + $0x8] sm:$0x3]
    %v35 = vld [vmem:[%s0 + $0xa] sm:$0x3]
    %v36 = vld [vmem:[%s0 + $0xc] sm:$0x3]
    %v37 = vld [vmem:[%s0 + $0xe] sm:$0x3]
    %vm38 = vcmask 254976
    %v39 = vsel %vm38, %v30, 0.0
    %40 = vadd.xlane.f32.xlu0 %v39
    %v41 = vpop.xlane.xlu0 %40
    %v42 = vsel %vm38, %v31, 0.0
    %43 = vadd.xlane.f32.xlu0 %v42
    %v44 = vpop.xlane.xlu0 %43
    %v45 = vsel %vm38, %v32, 0.0
    %46 = vadd.xlane.f32.xlu0 %v45
    %v47 = vpop.xlane.xlu0 %46
    %v48 = vsel %vm38, %v33, 0.0
    %49 = vadd.xlane.f32.xlu0 %v48
    %v50 = vpop.xlane.xlu0 %49
    %v51 = vsel %vm38, %v34, 0.0
    %52 = vadd.xlane.f32.xlu0 %v51
    %v53 = vpop.xlane.xlu0 %52
    %v54 = vsel %vm38, %v35, 0.0
    %55 = vadd.xlane.f32.xlu0 %v54
    %v56 = vpop.xlane.xlu0 %55
    %v57 = vsel %vm38, %v36, 0.0
    %58 = vadd.xlane.f32.xlu0 %v57
    %v59 = vpop.xlane.xlu0 %58
    %v60 = vsel %vm38, %v37, 0.0
    %61 = vadd.xlane.f32.xlu0 %v60
    %v62 = vpop.xlane.xlu0 %61
    %v63 = vrcp.pop 32.0
    %v64 = vmul.f32 %v41, %v63
    %v65 = vmul.f32 %v44, %v63
    %v66 = vmul.f32 %v47, %v63
    %v67 = vmul.f32 %v50, %v63
    %v68 = vmul.f32 %v53, %v63
    %v69 = vmul.f32 %v56, %v63
    %v70 = vmul.f32 %v59, %v63
    %v71 = vmul.f32 %v62, %v63
    %v72 = vsub.f32 %v30, %v64
    %v73 = vsub.f32 %v31, %v65
    %v74 = vsub.f32 %v32, %v66
    %v75 = vsub.f32 %v33, %v67
    %v76 = vsub.f32 %v34, %v68
    %v77 = vsub.f32 %v35, %v69
    %v78 = vsub.f32 %v36, %v70
    %v79 = vsub.f32 %v37, %v71
    %v80 = vmul.f32 %v72, %v72
    %v81 = vmul.f32 %v73, %v73
    %v82 = vmul.f32 %v74, %v74
    %v83 = vmul.f32 %v75, %v75
    %v84 = vmul.f32 %v76, %v76
    %v85 = vmul.f32 %v77, %v77
    %v86 = vmul.f32 %v78, %v78
    %v87 = vmul.f32 %v79, %v79
    %v88 = vsel %vm38, %v80, 0.0
    %89 = vadd.xlane.f32.xlu0 %v88
    %v90 = vpop.xlane.xlu0 %89
    %v91 = vsel %vm38, %v81, 0.0
    %92 = vadd.xlane.f32.xlu0 %v91
    %v93 = vpop.xlane.xlu0 %92
    %v94 = vsel %vm38, %v82, 0.0
    %95 = vadd.xlane.f32.xlu0 %v94
    %v96 = vpop.xlane.xlu0 %95
    %v97 = vsel %vm38, %v83, 0.0
    %98 = vadd.xlane.f32.xlu0 %v97
    %v99 = vpop.xlane.xlu0 %98
    %v100 = vsel %vm38, %v84, 0.0
    %101 = vadd.xlane.f32.xlu0 %v100
    %v102 = vpop.xlane.xlu0 %101
    %v103 = vsel %vm38, %v85, 0.0
    %104 = vadd.xlane.f32.xlu0 %v103
    %v105 = vpop.xlane.xlu0 %104
    %v106 = vsel %vm38, %v86, 0.0
    %107 = vadd.xlane.f32.xlu0 %v106
    %v108 = vpop.xlane.xlu0 %107
    %v109 = vsel %vm38, %v87, 0.0
    %110 = vadd.xlane.f32.xlu0 %v109
    %v111 = vpop.xlane.xlu0 %110
    %v112 = vmul.f32 %v90, %v63
    %v113 = vmul.f32 %v93, %v63
    %v114 = vmul.f32 %v96, %v63
    %v115 = vmul.f32 %v99, %v63
    %v116 = vmul.f32 %v102, %v63
    %v117 = vmul.f32 %v105, %v63
    %v118 = vmul.f32 %v108, %v63
    %v119 = vmul.f32 %v111, %v63
    %v120 = vadd.f32 %v112, 1e-05
    %v121 = vadd.f32 %v113, 1e-05
    %v122 = vadd.f32 %v114, 1e-05
    %v123 = vadd.f32 %v115, 1e-05
    %v124 = vadd.f32 %v116, 1e-05
    %v125 = vadd.f32 %v117, 1e-05
    %v126 = vadd.f32 %v118, 1e-05
    %v127 = vadd.f32 %v119, 1e-05
    %v128 = vrsqrt.pop %v120
    %v129 = vrsqrt.pop %v121
    %v130 = vrsqrt.pop %v122
    %v131 = vrsqrt.pop %v123
    %v132 = vrsqrt.pop %v124
    %v133 = vrsqrt.pop %v125
    %v134 = vrsqrt.pop %v126
    %v135 = vrsqrt.pop %v127
    %v136 = vmul.f32 %v72, %v128
    %v137 = vmul.f32 %v73, %v129
    %v138 = vmul.f32 %v74, %v130
    %v139 = vmul.f32 %v75, %v131
    %v140 = vmul.f32 %v76, %v132
    %v141 = vmul.f32 %v77, %v133
    %v142 = vmul.f32 %v78, %v134
    %v143 = vmul.f32 %v79, %v135
    %v144 = vld [vmem:[%s1] sm:$0x1]
    %v146 = vlaneseq
    %v147 = vshrl.u32 %v146, 7
    %v148 = vsub.s32 0, %v147
    %v149 = vrot.slane %v144, %v148
    %v151 = vmul.f32 %v136, %v149
    %v152 = vmul.f32 %v137, %v149
    %v153 = vmul.f32 %v138, %v149
    %v154 = vmul.f32 %v139, %v149
    %v155 = vmul.f32 %v140, %v149
    %v156 = vmul.f32 %v141, %v149
    %v157 = vmul.f32 %v142, %v149
    %v158 = vmul.f32 %v143, %v149
    %v159 = vld [vmem:[%s2] sm:$0x1]
    %v161 = vlaneseq
    %v162 = vshrl.u32 %v161, 7
    %v163 = vsub.s32 0, %v162
    %v164 = vrot.slane %v159, %v163
    %v166 = vadd.f32 %v151, %v164
    %v167 = vadd.f32 %v152, %v164
    %v168 = vadd.f32 %v153, %v164
    %v169 = vadd.f32 %v154, %v164
    %v170 = vadd.f32 %v155, %v164
    %v171 = vadd.f32 %v156, %v164
    %v172 = vadd.f32 %v157, %v164
    %v173 = vadd.f32 %v158, %v164
    %v174 = vld [vmem:[%s3] sm:$0xff]
    %v175 = vld [vmem:[%s3 + $0x8] sm:$0xff]
    %v176 = vld [vmem:[%s3 + $0x10] sm:$0xff]
    %v177 = vld [vmem:[%s3 + $0x18] sm:$0xff]
    %v186 = vcombine.low %v166, %v167
    %v187 = vcombine.low %v168, %v169
    %v189 = vunpack.c.l.s4 1983009808
    %v190 = vunpack.c.0.s8 %v189
    %v191 = vlaneseq
    %v192 = vshrl.u32 %v191, 7
    %v193 = vsub.s32 %v190, %v192
    %v194 = vrot.slane %v186, %v193
    %v196 = vunpack.c.l.s4 1983009808
    %v197 = vunpack.c.0.s8 %v196
    %v198 = vlaneseq
    %v199 = vshrl.u32 %v198, 7
    %v200 = vsub.s32 %v197, %v199
    %v201 = vrot.slane %v187, %v200
    %v202 = vcombine.low %v194, %v201
    %v203 = vcombine.low %v170, %v171
    %v204 = vcombine.low %v172, %v173
    %v206 = vunpack.c.l.s4 1983009808
    %v207 = vunpack.c.0.s8 %v206
    %v208 = vlaneseq
    %v209 = vshrl.u32 %v208, 7
    %v210 = vsub.s32 %v207, %v209
    %v211 = vrot.slane %v203, %v210
    %v213 = vunpack.c.l.s4 1983009808
    %v214 = vunpack.c.0.s8 %v213
    %v215 = vlaneseq
    %v216 = vshrl.u32 %v215, 7
    %v217 = vsub.s32 %v214, %v216
    %v218 = vrot.slane %v204, %v217
    %v219 = vcombine.low %v211, %v218
    %vm220 = vcmask 261120
    %v221 = vsel %vm220, %v202, 0
    %v223 = vsel %vm220, %v219, 0
    %225 = vmatprep.subr.mxu0 0.0
    %226 = vmatpush1.msra.mxu0 %v174
    %227 = vmatprep.subr.mxu0 0.0
    %228 = vmatpush1.msra.mxu0 %v175
    %229 = vmatprep.subr.mxu0 0.0
    %230 = vmatpush1.msra.mxu0 %v176
    %231 = vmatprep.subr.mxu0 0.0
    %232 = vmatpush1.msra.mxu0 %v177
    %233 = vmatprep.subr.mxu0 0.0
    %234 = vmatpush1.msra.mxu0 0.0
    %235 = vmatprep.subr.mxu0 0.0
    %236 = vmatpush1.msra.mxu0 0.0
    %237 = vmatprep.subr.mxu0 0.0
    %238 = vmatpush1.msra.mxu0 0.0
    %239 = vmatprep.subr.mxu0 0.0
    %240 = vmatpush1.msra.mxu0 0.0
    %241 = vmatprep.subr.mxu0 0.0
    %242 = vmatpush1.msra.mxu0 0.0
    %243 = vmatprep.subr.mxu0 0.0
    %244 = vmatpush1.msra.mxu0 0.0
    %245 = vmatprep.subr.mxu0 0.0
    %246 = vmatpush1.msra.mxu0 0.0
    %247 = vmatprep.subr.mxu0 0.0
    %248 = vmatpush1.msra.mxu0 0.0
    %249 = vmatprep.subr.mxu0 0.0
    %250 = vmatpush1.msra.mxu0 0.0
    %251 = vmatprep.subr.mxu0 0.0
    %252 = vmatpush1.msra.mxu0 0.0
    %253 = vmatprep.subr.mxu0 0.0
    %254 = vmatpush1.msra.mxu0 0.0
    %255 = vmatprep.subr.mxu0 0.0
    %256 = vmatpush1.msra.mxu0 0.0
    %257 = vmatprep.subr.mxu0 0.0
    %258 = vmatpush1.msra.mxu0 0.0
    %259 = vmatprep.subr.mxu0 0.0
    %260 = vmatpush1.msra.mxu0 0.0
    %261 = vmatprep.subr.mxu0 0.0
    %262 = vmatpush1.msra.mxu0 0.0
    %263 = vmatprep.subr.mxu0 0.0
    %264 = vmatpush1.msra.mxu0 0.0
    %265 = vmatprep.subr.mxu0 0.0
    %266 = vmatpush1.msra.mxu0 0.0
    %267 = vmatprep.subr.mxu0 0.0
    %268 = vmatpush1.msra.mxu0 0.0
    %269 = vmatprep.subr.mxu0 0.0
    %270 = vmatpush1.msra.mxu0 0.0
    %271 = vmatprep.subr.mxu0 0.0
    %272 = vmatpush1.msra.mxu0 0.0
    %273 = vmatprep.subr.mxu0 0.0
    %274 = vmatpush1.msra.mxu0 0.0
    %275 = vmatprep.subr.mxu0 0.0
    %276 = vmatpush1.msra.mxu0 0.0
    %277 = vmatprep.subr.mxu0 0.0
    %278 = vmatpush1.msra.mxu0 0.0
    %279 = vmatprep.subr.mxu0 0.0
    %280 = vmatpush1.msra.mxu0 0.0
    %281 = vmatprep.subr.mxu0 0.0
    %282 = vmatpush1.msra.mxu0 0.0
    %283 = vmatprep.subr.mxu0 0.0
    %284 = vmatpush1.msra.mxu0 0.0
    %285 = vmatprep.subr.mxu0 0.0
    %286 = vmatpush1.msra.mxu0 0.0
    %287 = vmatprep.subr.mxu0 0.0
    %288 = vmatpush1.msra.mxu0 0.0
    %289 = vmatprep.mubr.f32.mxu0 0.0
    %290 = vmatmul.mubr.f32.gmra.mrb[0].mxu0 %v221
    %v291 = vpop.f32.mrb[0].mxu0
    %v292 = vadd.f32 0.0, %v291
    %v293 = vpop.f32.mrb[0].mxu0
    %294 = vmatprep.mubr.f32.mxu0 0.0
    %295 = vmatmul.mubr.f32.gmra.mrb[0].mxu0 %v223
    %v296 = vpop.f32.mrb[0].mxu0
    %v297 = vadd.f32 0.0, %v296
    %v298 = vpop.f32.mrb[0].mxu0
    %299 = vdwg.mxu0
    %v300 = vld [vmem:[%s4] sm:$0xff]
    %v301 = vld [vmem:[%s4 + $0x8] sm:$0xff]
    %v302 = vld [vmem:[%s4 + $0x10] sm:$0xff]
    %v303 = vld [vmem:[%s4 + $0x18] sm:$0xff]
    %304 = vmatprep.subr.mxu0 0.0
    %305 = vmatpush1.msra.mxu0 %v300
    %306 = vmatprep.subr.mxu0 0.0
    %307 = vmatpush1.msra.mxu0 %v301
    %308 = vmatprep.subr.mxu0 0.0
    %309 = vmatpush1.msra.mxu0 %v302
    %310 = vmatprep.subr.mxu0 0.0
    %311 = vmatpush1.msra.mxu0 %v303
    %312 = vmatprep.subr.mxu0 0.0
    %313 = vmatpush1.msra.mxu0 0.0
    %314 = vmatprep.subr.mxu0 0.0
    %315 = vmatpush1.msra.mxu0 0.0
    %316 = vmatprep.subr.mxu0 0.0
    %317 = vmatpush1.msra.mxu0 0.0
    %318 = vmatprep.subr.mxu0 0.0
    %319 = vmatpush1.msra.mxu0 0.0
    %320 = vmatprep.subr.mxu0 0.0
    %321 = vmatpush1.msra.mxu0 0.0
    %322 = vmatprep.subr.mxu0 0.0
    %323 = vmatpush1.msra.mxu0 0.0
    %324 = vmatprep.subr.mxu0 0.0
    %325 = vmatpush1.msra.mxu0 0.0
    %326 = vmatprep.subr.mxu0 0.0
    %327 = vmatpush1.msra.mxu0 0.0
    %328 = vmatprep.subr.mxu0 0.0
    %329 = vmatpush1.msra.mxu0 0.0
    %330 = vmatprep.subr.mxu0 0.0
    %331 = vmatpush1.msra.mxu0 0.0
    %332 = vmatprep.subr.mxu0 0.0
    %333 = vmatpush1.msra.mxu0 0.0
    %334 = vmatprep.subr.mxu0 0.0
    %335 = vmatpush1.msra.mxu0 0.0
    %336 = vmatprep.subr.mxu0 0.0
    %337 = vmatpush1.msra.mxu0 0.0
    %338 = vmatprep.subr.mxu0 0.0
    %339 = vmatpush1.msra.mxu0 0.0
    %340 = vmatprep.subr.mxu0 0.0
    %341 = vmatpush1.msra.mxu0 0.0
    %342 = vmatprep.subr.mxu0 0.0
    %343 = vmatpush1.msra.mxu0 0.0
    %344 = vmatprep.subr.mxu0 0.0
    %345 = vmatpush1.msra.mxu0 0.0
    %346 = vmatprep.subr.mxu0 0.0
    %347 = vmatpush1.msra.mxu0 0.0
    %348 = vmatprep.subr.mxu0 0.0
    %349 = vmatpush1.msra.mxu0 0.0
    %350 = vmatprep.subr.mxu0 0.0
    %351 = vmatpush1.msra.mxu0 0.0
    %352 = vmatprep.subr.mxu0 0.0
    %353 = vmatpush1.msra.mxu0 0.0
    %354 = vmatprep.subr.mxu0 0.0
    %355 = vmatpush1.msra.mxu0 0.0
    %356 = vmatprep.subr.mxu0 0.0
    %357 = vmatpush1.msra.mxu0 0.0
    %358 = vmatprep.subr.mxu0 0.0
    %359 = vmatpush1.msra.mxu0 0.0
    %360 = vmatprep.subr.mxu0 0.0
    %361 = vmatpush1.msra.mxu0 0.0
    %362 = vmatprep.subr.mxu0 0.0
    %363 = vmatpush1.msra.mxu0 0.0
    %364 = vmatprep.subr.mxu0 0.0
    %365 = vmatpush1.msra.mxu0 0.0
    %366 = vmatprep.subr.mxu0 0.0
    %367 = vmatpush1.msra.mxu0 0.0
    %368 = vmatprep.mubr.f32.mxu0 0.0
    %369 = vmatmul.mubr.f32.gmra.mrb[0].mxu0 %v221
    %v370 = vpop.f32.mrb[0].mxu0
    %v371 = vadd.f32 0.0, %v370
    %v372 = vpop.f32.mrb[0].mxu0
    %373 = vmatprep.mubr.f32.mxu0 0.0
    %374 = vmatmul.mubr.f32.gmra.mrb[0].mxu0 %v223
    %v375 = vpop.f32.mrb[0].mxu0
    %v376 = vadd.f32 0.0, %v375
    %v377 = vpop.f32.mrb[0].mxu0
    %378 = vdwg.mxu0
    %v379 = vld [vmem:[%s5] sm:$0xff]
    %v380 = vld [vmem:[%s5 + $0x8] sm:$0xff]
    %v381 = vld [vmem:[%s5 + $0x10] sm:$0xff]
    %v382 = vld [vmem:[%s5 + $0x18] sm:$0xff]
    %383 = vmatprep.subr.mxu0 0.0
    %384 = vmatpush1.msra.mxu0 %v379
    %385 = vmatprep.subr.mxu0 0.0
    %386 = vmatpush1.msra.mxu0 %v380
    %387 = vmatprep.subr.mxu0 0.0
    %388 = vmatpush1.msra.mxu0 %v381
    %389 = vmatprep.subr.mxu0 0.0
    %390 = vmatpush1.msra.mxu0 %v382
    %391 = vmatprep.subr.mxu0 0.0
    %392 = vmatpush1.msra.mxu0 0.0
    %393 = vmatprep.subr.mxu0 0.0
    %394 = vmatpush1.msra.mxu0 0.0
    %395 = vmatprep.subr.mxu0 0.0
    %396 = vmatpush1.msra.mxu0 0.0
    %397 = vmatprep.subr.mxu0 0.0
    %398 = vmatpush1.msra.mxu0 0.0
    %399 = vmatprep.subr.mxu0 0.0
    %400 = vmatpush1.msra.mxu0 0.0
    %401 = vmatprep.subr.mxu0 0.0
    %402 = vmatpush1.msra.mxu0 0.0
    %403 = vmatprep.subr.mxu0 0.0
    %404 = vmatpush1.msra.mxu0 0.0
    %405 = vmatprep.subr.mxu0 0.0
    %406 = vmatpush1.msra.mxu0 0.0
    %407 = vmatprep.subr.mxu0 0.0
    %408 = vmatpush1.msra.mxu0 0.0
    %409 = vmatprep.subr.mxu0 0.0
    %410 = vmatpush1.msra.mxu0 0.0
    %411 = vmatprep.subr.mxu0 0.0
    %412 = vmatpush1.msra.mxu0 0.0
    %413 = vmatprep.subr.mxu0 0.0
    %414 = vmatpush1.msra.mxu0 0.0
    %415 = vmatprep.subr.mxu0 0.0
    %416 = vmatpush1.msra.mxu0 0.0
    %417 = vmatprep.subr.mxu0 0.0
    %418 = vmatpush1.msra.mxu0 0.0
    %419 = vmatprep.subr.mxu0 0.0
    %420 = vmatpush1.msra.mxu0 0.0
    %421 = vmatprep.subr.mxu0 0.0
    %422 = vmatpush1.msra.mxu0 0.0
    %423 = vmatprep.subr.mxu0 0.0
    %424 = vmatpush1.msra.mxu0 0.0
    %425 = vmatprep.subr.mxu0 0.0
    %426 = vmatpush1.msra.mxu0 0.0
    %427 = vmatprep.subr.mxu0 0.0
    %428 = vmatpush1.msra.mxu0 0.0
    %429 = vmatprep.subr.mxu0 0.0
    %430 = vmatpush1.msra.mxu0 0.0
    %431 = vmatprep.subr.mxu0 0.0
    %432 = vmatpush1.msra.mxu0 0.0
    %433 = vmatprep.subr.mxu0 0.0
    %434 = vmatpush1.msra.mxu0 0.0
    %435 = vmatprep.subr.mxu0 0.0
    %436 = vmatpush1.msra.mxu0 0.0
    %437 = vmatprep.subr.mxu0 0.0
    %438 = vmatpush1.msra.mxu0 0.0
    %439 = vmatprep.subr.mxu0 0.0
    %440 = vmatpush1.msra.mxu0 0.0
    %441 = vmatprep.subr.mxu0 0.0
    %442 = vmatpush1.msra.mxu0 0.0
    %443 = vmatprep.subr.mxu0 0.0
    %444 = vmatpush1.msra.mxu0 0.0
    %445 = vmatprep.subr.mxu0 0.0
    %446 = vmatpush1.msra.mxu0 0.0
    %447 = vmatprep.mubr.f32.mxu0 0.0
    %448 = vmatmul.mubr.f32.gmra.mrb[0].mxu0 %v221
    %v449 = vpop.f32.mrb[0].mxu0
    %v450 = vadd.f32 0.0, %v449
    %v451 = vpop.f32.mrb[0].mxu0
    %452 = vmatprep.mubr.f32.mxu0 0.0
    %453 = vmatmul.mubr.f32.gmra.mrb[0].mxu0 %v223
    %v454 = vpop.f32.mrb[0].mxu0
    %v455 = vadd.f32 0.0, %v454
    %v456 = vpop.f32.mrb[0].mxu0
    %457 = vdwg.mxu0
    %v460 = vcombine.high %v292, %v292
    %v462 = vunpack.c.l.s4 1983009808
    %v463 = vunpack.c.0.s8 %v462
    %v464 = vlaneseq
    %v465 = vshrl.u32 %v464, 7
    %v466 = vsub.s32 %v463, %v465
    %v467 = vrot.slane %v292, %v466
    %v469 = vunpack.c.l.s4 1983009808
    %v470 = vunpack.c.0.s8 %v469
    %v471 = vlaneseq
    %v472 = vshrl.u32 %v471, 7
    %v473 = vsub.s32 %v470, %v472
    %v474 = vrot.slane %v460, %v473
    %v475 = vcombine.high %v467, %v467
    %v476 = vcombine.high %v474, %v474
    %v477 = vcombine.high %v297, %v297
    %v479 = vunpack.c.l.s4 1983009808
    %v480 = vunpack.c.0.s8 %v479
    %v481 = vlaneseq
    %v482 = vshrl.u32 %v481, 7
    %v483 = vsub.s32 %v480, %v482
    %v484 = vrot.slane %v297, %v483
    %v486 = vunpack.c.l.s4 1983009808
    %v487 = vunpack.c.0.s8 %v486
    %v488 = vlaneseq
    %v489 = vshrl.u32 %v488, 7
    %v490 = vsub.s32 %v487, %v489
    %v491 = vrot.slane %v477, %v490
    %v492 = vcombine.high %v484, %v484
    %v493 = vcombine.high %v491, %v491
    %v496 = vcombine.high %v371, %v371
    %v498 = vunpack.c.l.s4 1983009808
    %v499 = vunpack.c.0.s8 %v498
    %v500 = vlaneseq
    %v501 = vshrl.u32 %v500, 7
    %v502 = vsub.s32 %v499, %v501
    %v503 = vrot.slane %v371, %v502
    %v505 = vunpack.c.l.s4 1983009808
    %v506 = vunpack.c.0.s8 %v505
    %v507 = vlaneseq
    %v508 = vshrl.u32 %v507, 7
    %v509 = vsub.s32 %v506, %v508
    %v510 = vrot.slane %v496, %v509
    %v511 = vcombine.high %v503, %v503
    %v512 = vcombine.high %v510, %v510
    %v513 = vcombine.high %v376, %v376
    %v515 = vunpack.c.l.s4 1983009808
    %v516 = vunpack.c.0.s8 %v515
    %v517 = vlaneseq
    %v518 = vshrl.u32 %v517, 7
    %v519 = vsub.s32 %v516, %v518
    %v520 = vrot.slane %v376, %v519
    %v522 = vunpack.c.l.s4 1983009808
    %v523 = vunpack.c.0.s8 %v522
    %v524 = vlaneseq
    %v525 = vshrl.u32 %v524, 7
    %v526 = vsub.s32 %v523, %v525
    %v527 = vrot.slane %v513, %v526
    %v528 = vcombine.high %v520, %v520
    %v529 = vcombine.high %v527, %v527
    %v532 = vcombine.high %v450, %v450
    %v534 = vunpack.c.l.s4 1983009808
    %v535 = vunpack.c.0.s8 %v534
    %v536 = vlaneseq
    %v537 = vshrl.u32 %v536, 7
    %v538 = vsub.s32 %v535, %v537
    %v539 = vrot.slane %v450, %v538
    %v541 = vunpack.c.l.s4 1983009808
    %v542 = vunpack.c.0.s8 %v541
    %v543 = vlaneseq
    %v544 = vshrl.u32 %v543, 7
    %v545 = vsub.s32 %v542, %v544
    %v546 = vrot.slane %v532, %v545
    %v547 = vcombine.high %v539, %v539
    %v548 = vcombine.high %v546, %v546
    %v549 = vcombine.high %v455, %v455
    %v551 = vunpack.c.l.s4 1983009808
    %v552 = vunpack.c.0.s8 %v551
    %v553 = vlaneseq
    %v554 = vshrl.u32 %v553, 7
    %v555 = vsub.s32 %v552, %v554
    %v556 = vrot.slane %v455, %v555
    %v558 = vunpack.c.l.s4 1983009808
    %v559 = vunpack.c.0.s8 %v558
    %v560 = vlaneseq
    %v561 = vshrl.u32 %v560, 7
    %v562 = vsub.s32 %v559, %v561
    %v563 = vrot.slane %v549, %v562
    %v564 = vcombine.high %v556, %v556
    %v565 = vcombine.high %v563, %v563
    %vm566 = vcmask 64512
    %v567 = vsel %vm566, %v467, 0
    %v569 = vsel %vm566, %v503, 0
    %571 = vmatprep.subr.mxu0 0.0
    %572 = vmatpush1.xpose.msra.mxu0 %v569
    %573 = vmatprep.subr.mxu0 0.0
    %574 = vmatpush1.xpose.msra.mxu0 0.0
    %575 = vmatprep.subr.mxu0 0.0
    %576 = vmatpush1.xpose.msra.mxu0 0.0
    %577 = vmatprep.subr.mxu0 0.0
    %578 = vmatpush1.xpose.msra.mxu0 0.0
    %579 = vmatprep.subr.mxu0 0.0
    %580 = vmatpush1.xpose.msra.mxu0 0.0
    %581 = vmatprep.subr.mxu0 0.0
    %582 = vmatpush1.xpose.msra.mxu0 0.0
    %583 = vmatprep.subr.mxu0 0.0
    %584 = vmatpush1.xpose.msra.mxu0 0.0
    %585 = vmatprep.subr.mxu0 0.0
    %586 = vmatpush1.xpose.msra.mxu0 0.0
    %587 = vmatprep.subr.mxu0 0.0
    %588 = vmatpush1.xpose.msra.mxu0 0.0
    %589 = vmatprep.subr.mxu0 0.0
    %590 = vmatpush1.xpose.msra.mxu0 0.0
    %591 = vmatprep.subr.mxu0 0.0
    %592 = vmatpush1.xpose.msra.mxu0 0.0
    %593 = vmatprep.subr.mxu0 0.0
    %594 = vmatpush1.xpose.msra.mxu0 0.0
    %595 = vmatprep.subr.mxu0 0.0
    %596 = vmatpush1.xpose.msra.mxu0 0.0
    %597 = vmatprep.subr.mxu0 0.0
    %598 = vmatpush1.xpose.msra.mxu0 0.0
    %599 = vmatprep.subr.mxu0 0.0
    %600 = vmatpush1.xpose.msra.mxu0 0.0
    %601 = vmatprep.subr.mxu0 0.0
    %602 = vmatpush1.xpose.msra.mxu0 0.0
    %603 = vmatprep.subr.mxu0 0.0
    %604 = vmatpush1.xpose.msra.mxu0 0.0
    %605 = vmatprep.subr.mxu0 0.0
    %606 = vmatpush1.xpose.msra.mxu0 0.0
    %607 = vmatprep.subr.mxu0 0.0
    %608 = vmatpush1.xpose.msra.mxu0 0.0
    %609 = vmatprep.subr.mxu0 0.0
    %610 = vmatpush1.xpose.msra.mxu0 0.0
    %611 = vmatprep.subr.mxu0 0.0
    %612 = vmatpush1.xpose.msra.mxu0 0.0
    %613 = vmatprep.subr.mxu0 0.0
    %614 = vmatpush1.xpose.msra.mxu0 0.0
    %615 = vmatprep.subr.mxu0 0.0
    %616 = vmatpush1.xpose.msra.mxu0 0.0
    %617 = vmatprep.subr.mxu0 0.0
    %618 = vmatpush1.xpose.msra.mxu0 0.0
    %619 = vmatprep.subr.mxu0 0.0
    %620 = vmatpush1.xpose.msra.mxu0 0.0
    %621 = vmatprep.subr.mxu0 0.0
    %622 = vmatpush1.xpose.msra.mxu0 0.0
    %623 = vmatprep.subr.mxu0 0.0
    %624 = vmatpush1.xpose.msra.mxu0 0.0
    %625 = vmatprep.subr.mxu0 0.0
    %626 = vmatpush1.xpose.msra.mxu0 0.0
    %627 = vmatprep.subr.mxu0 0.0
    %628 = vmatpush1.xpose.msra.mxu0 0.0
    %629 = vmatprep.subr.mxu0 0.0
    %630 = vmatpush1.xpose.msra.mxu0 0.0
    %631 = vmatprep.subr.mxu0 0.0
    %632 = vmatpush1.xpose.msra.mxu0 0.0
    %633 = vmatprep.subr.mxu0 0.0
    %634 = vmatpush1.xpose.msra.mxu0 0.0
    %635 = vmatprep.mubr.f32.mxu0 0.0
    %636 = vmatmul.mubr.f32.gmra.mrb[0].mxu0 %v567
    %v637 = vpop.f32.mrb[0].mxu0
    %v638 = vadd.f32 0.0, %v637
    %v639 = vpop.f32.mrb[0].mxu0
    %640 = vdwg.mxu0
    %v641 = vsel %vm566, %v475, 0
    %v643 = vsel %vm566, %v511, 0
    %645 = vmatprep.subr.mxu0 0.0
    %646 = vmatpush1.xpose.msra.mxu0 %v643
    %647 = vmatprep.subr.mxu0 0.0
    %648 = vmatpush1.xpose.msra.mxu0 0.0
    %649 = vmatprep.subr.mxu0 0.0
    %650 = vmatpush1.xpose.msra.mxu0 0.0
    %651 = vmatprep.subr.mxu0 0.0
    %652 = vmatpush1.xpose.msra.mxu0 0.0
    %653 = vmatprep.subr.mxu0 0.0
    %654 = vmatpush1.xpose.msra.mxu0 0.0
    %655 = vmatprep.subr.mxu0 0.0
    %656 = vmatpush1.xpose.msra.mxu0 0.0
    %657 = vmatprep.subr.mxu0 0.0
    %658 = vmatpush1.xpose.msra.mxu0 0.0
    %659 = vmatprep.subr.mxu0 0.0
    %660 = vmatpush1.xpose.msra.mxu0 0.0
    %661 = vmatprep.subr.mxu0 0.0
    %662 = vmatpush1.xpose.msra.mxu0 0.0
    %663 = vmatprep.subr.mxu0 0.0
    %664 = vmatpush1.xpose.msra.mxu0 0.0
    %665 = vmatprep.subr.mxu0 0.0
    %666 = vmatpush1.xpose.msra.mxu0 0.0
    %667 = vmatprep.subr.mxu0 0.0
    %668 = vmatpush1.xpose.msra.mxu0 0.0
    %669 = vmatprep.subr.mxu0 0.0
    %670 = vmatpush1.xpose.msra.mxu0 0.0
    %671 = vmatprep.subr.mxu0 0.0
    %672 = vmatpush1.xpose.msra.mxu0 0.0
    %673 = vmatprep.subr.mxu0 0.0
    %674 = vmatpush1.xpose.msra.mxu0 0.0
    %675 = vmatprep.subr.mxu0 0.0
    %676 = vmatpush1.xpose.msra.mxu0 0.0
    %677 = vmatprep.subr.mxu0 0.0
    %678 = vmatpush1.xpose.msra.mxu0 0.0
    %679 = vmatprep.subr.mxu0 0.0
    %680 = vmatpush1.xpose.msra.mxu0 0.0
    %681 = vmatprep.subr.mxu0 0.0
    %682 = vmatpush1.xpose.msra.mxu0 0.0
    %683 = vmatprep.subr.mxu0 0.0
    %684 = vmatpush1.xpose.msra.mxu0 0.0
    %685 = vmatprep.subr.mxu0 0.0
    %686 = vmatpush1.xpose.msra.mxu0 0.0
    %687 = vmatprep.subr.mxu0 0.0
    %688 = vmatpush1.xpose.msra.mxu0 0.0
    %689 = vmatprep.subr.mxu0 0.0
    %690 = vmatpush1.xpose.msra.mxu0 0.0
    %691 = vmatprep.subr.mxu0 0.0
    %692 = vmatpush1.xpose.msra.mxu0 0.0
    %693 = vmatprep.subr.mxu0 0.0
    %694 = vmatpush1.xpose.msra.mxu0 0.0
    %695 = vmatprep.subr.mxu0 0.0
    %696 = vmatpush1.xpose.msra.mxu0 0.0
    %697 = vmatprep.subr.mxu0 0.0
    %698 = vmatpush1.xpose.msra.mxu0 0.0
    %699 = vmatprep.subr.mxu0 0.0
    %700 = vmatpush1.xpose.msra.mxu0 0.0
    %701 = vmatprep.subr.mxu0 0.0
    %702 = vmatpush1.xpose.msra.mxu0 0.0
    %703 = vmatprep.subr.mxu0 0.0
    %704 = vmatpush1.xpose.msra.mxu0 0.0
    %705 = vmatprep.subr.mxu0 0.0
    %706 = vmatpush1.xpose.msra.mxu0 0.0
    %707 = vmatprep.subr.mxu0 0.0
    %708 = vmatpush1.xpose.msra.mxu0 0.0
    %709 = vmatprep.mubr.f32.mxu0 0.0
    %710 = vmatmul.mubr.f32.gmra.mrb[0].mxu0 %v641
    %v711 = vpop.f32.mrb[0].mxu0
    %v712 = vadd.f32 0.0, %v711
    %v713 = vpop.f32.mrb[0].mxu0
    %714 = vdwg.mxu0
    %v715 = vsel %vm566, %v474, 0
    %v717 = vsel %vm566, %v510, 0
    %719 = vmatprep.subr.mxu0 0.0
    %720 = vmatpush1.xpose.msra.mxu0 %v717
    %721 = vmatprep.subr.mxu0 0.0
    %722 = vmatpush1.xpose.msra.mxu0 0.0
    %723 = vmatprep.subr.mxu0 0.0
    %724 = vmatpush1.xpose.msra.mxu0 0.0
    %725 = vmatprep.subr.mxu0 0.0
    %726 = vmatpush1.xpose.msra.mxu0 0.0
    %727 = vmatprep.subr.mxu0 0.0
    %728 = vmatpush1.xpose.msra.mxu0 0.0
    %729 = vmatprep.subr.mxu0 0.0
    %730 = vmatpush1.xpose.msra.mxu0 0.0
    %731 = vmatprep.subr.mxu0 0.0
    %732 = vmatpush1.xpose.msra.mxu0 0.0
    %733 = vmatprep.subr.mxu0 0.0
    %734 = vmatpush1.xpose.msra.mxu0 0.0
    %735 = vmatprep.subr.mxu0 0.0
    %736 = vmatpush1.xpose.msra.mxu0 0.0
    %737 = vmatprep.subr.mxu0 0.0
    %738 = vmatpush1.xpose.msra.mxu0 0.0
    %739 = vmatprep.subr.mxu0 0.0
    %740 = vmatpush1.xpose.msra.mxu0 0.0
    %741 = vmatprep.subr.mxu0 0.0
    %742 = vmatpush1.xpose.msra.mxu0 0.0
    %743 = vmatprep.subr.mxu0 0.0
    %744 = vmatpush1.xpose.msra.mxu0 0.0
    %745 = vmatprep.subr.mxu0 0.0
    %746 = vmatpush1.xpose.msra.mxu0 0.0
    %747 = vmatprep.subr.mxu0 0.0
    %748 = vmatpush1.xpose.msra.mxu0 0.0
    %749 = vmatprep.subr.mxu0 0.0
    %750 = vmatpush1.xpose.msra.mxu0 0.0
    %751 = vmatprep.subr.mxu0 0.0
    %752 = vmatpush1.xpose.msra.mxu0 0.0
    %753 = vmatprep.subr.mxu0 0.0
    %754 = vmatpush1.xpose.msra.mxu0 0.0
    %755 = vmatprep.subr.mxu0 0.0
    %756 = vmatpush1.xpose.msra.mxu0 0.0
    %757 = vmatprep.subr.mxu0 0.0
    %758 = vmatpush1.xpose.msra.mxu0 0.0
    %759 = vmatprep.subr.mxu0 0.0
    %760 = vmatpush1.xpose.msra.mxu0 0.0
    %761 = vmatprep.subr.mxu0 0.0
    %762 = vmatpush1.xpose.msra.mxu0 0.0
    %763 = vmatprep.subr.mxu0 0.0
    %764 = vmatpush1.xpose.msra.mxu0 0.0
    %765 = vmatprep.subr.mxu0 0.0
    %766 = vmatpush1.xpose.msra.mxu0 0.0
    %767 = vmatprep.subr.mxu0 0.0
    %768 = vmatpush1.xpose.msra.mxu0 0.0
    %769 = vmatprep.subr.mxu0 0.0
    %770 = vmatpush1.xpose.msra.mxu0 0.0
    %771 = vmatprep.subr.mxu0 0.0
    %772 = vmatpush1.xpose.msra.mxu0 0.0
    %773 = vmatprep.subr.mxu0 0.0
    %774 = vmatpush1.xpose.msra.mxu0 0.0
    %775 = vmatprep.subr.mxu0 0.0
    %776 = vmatpush1.xpose.msra.mxu0 0.0
    %777 = vmatprep.subr.mxu0 0.0
    %778 = vmatpush1.xpose.msra.mxu0 0.0
    %779 = vmatprep.subr.mxu0 0.0
    %780 = vmatpush1.xpose.msra.mxu0 0.0
    %781 = vmatprep.subr.mxu0 0.0
    %782 = vmatpush1.xpose.msra.mxu0 0.0
    %783 = vmatprep.mubr.f32.mxu0 0.0
    %784 = vmatmul.mubr.f32.gmra.mrb[0].mxu0 %v715
    %v785 = vpop.f32.mrb[0].mxu0
    %v786 = vadd.f32 0.0, %v785
    %v787 = vpop.f32.mrb[0].mxu0
    %788 = vdwg.mxu0
    %v789 = vsel %vm566, %v476, 0
    %v791 = vsel %vm566, %v512, 0
    %793 = vmatprep.subr.mxu0 0.0
    %794 = vmatpush1.xpose.msra.mxu0 %v791
    %795 = vmatprep.subr.mxu0 0.0
    %796 = vmatpush1.xpose.msra.mxu0 0.0
    %797 = vmatprep.subr.mxu0 0.0
    %798 = vmatpush1.xpose.msra.mxu0 0.0
    %799 = vmatprep.subr.mxu0 0.0
    %800 = vmatpush1.xpose.msra.mxu0 0.0
    %801 = vmatprep.subr.mxu0 0.0
    %802 = vmatpush1.xpose.msra.mxu0 0.0
    %803 = vmatprep.subr.mxu0 0.0
    %804 = vmatpush1.xpose.msra.mxu0 0.0
    %805 = vmatprep.subr.mxu0 0.0
    %806 = vmatpush1.xpose.msra.mxu0 0.0
    %807 = vmatprep.subr.mxu0 0.0
    %808 = vmatpush1.xpose.msra.mxu0 0.0
    %809 = vmatprep.subr.mxu0 0.0
    %810 = vmatpush1.xpose.msra.mxu0 0.0
    %811 = vmatprep.subr.mxu0 0.0
    %812 = vmatpush1.xpose.msra.mxu0 0.0
    %813 = vmatprep.subr.mxu0 0.0
    %814 = vmatpush1.xpose.msra.mxu0 0.0
    %815 = vmatprep.subr.mxu0 0.0
    %816 = vmatpush1.xpose.msra.mxu0 0.0
    %817 = vmatprep.subr.mxu0 0.0
    %818 = vmatpush1.xpose.msra.mxu0 0.0
    %819 = vmatprep.subr.mxu0 0.0
    %820 = vmatpush1.xpose.msra.mxu0 0.0
    %821 = vmatprep.subr.mxu0 0.0
    %822 = vmatpush1.xpose.msra.mxu0 0.0
    %823 = vmatprep.subr.mxu0 0.0
    %824 = vmatpush1.xpose.msra.mxu0 0.0
    %825 = vmatprep.subr.mxu0 0.0
    %826 = vmatpush1.xpose.msra.mxu0 0.0
    %827 = vmatprep.subr.mxu0 0.0
    %828 = vmatpush1.xpose.msra.mxu0 0.0
    %829 = vmatprep.subr.mxu0 0.0
    %830 = vmatpush1.xpose.msra.mxu0 0.0
    %831 = vmatprep.subr.mxu0 0.0
    %832 = vmatpush1.xpose.msra.mxu0 0.0
    %833 = vmatprep.subr.mxu0 0.0
    %834 = vmatpush1.xpose.msra.mxu0 0.0
    %835 = vmatprep.subr.mxu0 0.0
    %836 = vmatpush1.xpose.msra.mxu0 0.0
    %837 = vmatprep.subr.mxu0 0.0
    %838 = vmatpush1.xpose.msra.mxu0 0.0
    %839 = vmatprep.subr.mxu0 0.0
    %840 = vmatpush1.xpose.msra.mxu0 0.0
    %841 = vmatprep.subr.mxu0 0.0
    %842 = vmatpush1.xpose.msra.mxu0 0.0
    %843 = vmatprep.subr.mxu0 0.0
    %844 = vmatpush1.xpose.msra.mxu0 0.0
    %845 = vmatprep.subr.mxu0 0.0
    %846 = vmatpush1.xpose.msra.mxu0 0.0
    %847 = vmatprep.subr.mxu0 0.0
    %848 = vmatpush1.xpose.msra.mxu0 0.0
    %849 = vmatprep.subr.mxu0 0.0
    %850 = vmatpush1.xpose.msra.mxu0 0.0
    %851 = vmatprep.subr.mxu0 0.0
    %852 = vmatpush1.xpose.msra.mxu0 0.0
    %853 = vmatprep.subr.mxu0 0.0
    %854 = vmatpush1.xpose.msra.mxu0 0.0
    %855 = vmatprep.subr.mxu0 0.0
    %856 = vmatpush1.xpose.msra.mxu0 0.0
    %857 = vmatprep.mubr.f32.mxu0 0.0
    %858 = vmatmul.mubr.f32.gmra.mrb[0].mxu0 %v789
    %v859 = vpop.f32.mrb[0].mxu0
    %v860 = vadd.f32 0.0, %v859
    %v861 = vpop.f32.mrb[0].mxu0
    %862 = vdwg.mxu0
    %v863 = vsel %vm566, %v484, 0
    %v865 = vsel %vm566, %v520, 0
    %867 = vmatprep.subr.mxu0 0.0
    %868 = vmatpush1.xpose.msra.mxu0 %v865
    %869 = vmatprep.subr.mxu0 0.0
    %870 = vmatpush1.xpose.msra.mxu0 0.0
    %871 = vmatprep.subr.mxu0 0.0
    %872 = vmatpush1.xpose.msra.mxu0 0.0
    %873 = vmatprep.subr.mxu0 0.0
    %874 = vmatpush1.xpose.msra.mxu0 0.0
    %875 = vmatprep.subr.mxu0 0.0
    %876 = vmatpush1.xpose.msra.mxu0 0.0
    %877 = vmatprep.subr.mxu0 0.0
    %878 = vmatpush1.xpose.msra.mxu0 0.0
    %879 = vmatprep.subr.mxu0 0.0
    %880 = vmatpush1.xpose.msra.mxu0 0.0
    %881 = vmatprep.subr.mxu0 0.0
    %882 = vmatpush1.xpose.msra.mxu0 0.0
    %883 = vmatprep.subr.mxu0 0.0
    %884 = vmatpush1.xpose.msra.mxu0 0.0
    %885 = vmatprep.subr.mxu0 0.0
    %886 = vmatpush1.xpose.msra.mxu0 0.0
    %887 = vmatprep.subr.mxu0 0.0
    %888 = vmatpush1.xpose.msra.mxu0 0.0
    %889 = vmatprep.subr.mxu0 0.0
    %890 = vmatpush1.xpose.msra.mxu0 0.0
    %891 = vmatprep.subr.mxu0 0.0
    %892 = vmatpush1.xpose.msra.mxu0 0.0
    %893 = vmatprep.subr.mxu0 0.0
    %894 = vmatpush1.xpose.msra.mxu0 0.0
    %895 = vmatprep.subr.mxu0 0.0
    %896 = vmatpush1.xpose.msra.mxu0 0.0
    %897 = vmatprep.subr.mxu0 0.0
    %898 = vmatpush1.xpose.msra.mxu0 0.0
    %899 = vmatprep.subr.mxu0 0.0
    %900 = vmatpush1.xpose.msra.mxu0 0.0
    %901 = vmatprep.subr.mxu0 0.0
    %902 = vmatpush1.xpose.msra.mxu0 0.0
    %903 = vmatprep.subr.mxu0 0.0
    %904 = vmatpush1.xpose.msra.mxu0 0.0
    %905 = vmatprep.subr.mxu0 0.0
    %906 = vmatpush1.xpose.msra.mxu0 0.0
    %907 = vmatprep.subr.mxu0 0.0
    %908 = vmatpush1.xpose.msra.mxu0 0.0
    %909 = vmatprep.subr.mxu0 0.0
    %910 = vmatpush1.xpose.msra.mxu0 0.0
    %911 = vmatprep.subr.mxu0 0.0
    %912 = vmatpush1.xpose.msra.mxu0 0.0
    %913 = vmatprep.subr.mxu0 0.0
    %914 = vmatpush1.xpose.msra.mxu0 0.0
    %915 = vmatprep.subr.mxu0 0.0
    %916 = vmatpush1.xpose.msra.mxu0 0.0
    %917 = vmatprep.subr.mxu0 0.0
    %918 = vmatpush1.xpose.msra.mxu0 0.0
    %919 = vmatprep.subr.mxu0 0.0
    %920 = vmatpush1.xpose.msra.mxu0 0.0
    %921 = vmatprep.subr.mxu0 0.0
    %922 = vmatpush1.xpose.msra.mxu0 0.0
    %923 = vmatprep.subr.mxu0 0.0
    %924 = vmatpush1.xpose.msra.mxu0 0.0
    %925 = vmatprep.subr.mxu0 0.0
    %926 = vmatpush1.xpose.msra.mxu0 0.0
    %927 = vmatprep.subr.mxu0 0.0
    %928 = vmatpush1.xpose.msra.mxu0 0.0
    %929 = vmatprep.subr.mxu0 0.0
    %930 = vmatpush1.xpose.msra.mxu0 0.0
    %931 = vmatprep.mubr.f32.mxu0 0.0
    %932 = vmatmul.mubr.f32.gmra.mrb[0].mxu0 %v863
    %v933 = vpop.f32.mrb[0].mxu0
    %v934 = vadd.f32 0.0, %v933
    %v935 = vpop.f32.mrb[0].mxu0
    %936 = vdwg.mxu0
    %v937 = vsel %vm566, %v492, 0
    %v939 = vsel %vm566, %v528, 0
    %941 = vmatprep.subr.mxu0 0.0
    %942 = vmatpush1.xpose.msra.mxu0 %v939
    %943 = vmatprep.subr.mxu0 0.0
    %944 = vmatpush1.xpose.msra.mxu0 0.0
    %945 = vmatprep.subr.mxu0 0.0
    %946 = vmatpush1.xpose.msra.mxu0 0.0
    %947 = vmatprep.subr.mxu0 0.0
    %948 = vmatpush1.xpose.msra.mxu0 0.0
    %949 = vmatprep.subr.mxu0 0.0
    %950 = vmatpush1.xpose.msra.mxu0 0.0
    %951 = vmatprep.subr.mxu0 0.0
    %952 = vmatpush1.xpose.msra.mxu0 0.0
    %953 = vmatprep.subr.mxu0 0.0
    %954 = vmatpush1.xpose.msra.mxu0 0.0
    %955 = vmatprep.subr.mxu0 0.0
    %956 = vmatpush1.xpose.msra.mxu0 0.0
    %957 = vmatprep.subr.mxu0 0.0
    %958 = vmatpush1.xpose.msra.mxu0 0.0
    %959 = vmatprep.subr.mxu0 0.0
    %960 = vmatpush1.xpose.msra.mxu0 0.0
    %961 = vmatprep.subr.mxu0 0.0
    %962 = vmatpush1.xpose.msra.mxu0 0.0
    %963 = vmatprep.subr.mxu0 0.0
    %964 = vmatpush1.xpose.msra.mxu0 0.0
    %965 = vmatprep.subr.mxu0 0.0
    %966 = vmatpush1.xpose.msra.mxu0 0.0
    %967 = vmatprep.subr.mxu0 0.0
    %968 = vmatpush1.xpose.msra.mxu0 0.0
    %969 = vmatprep.subr.mxu0 0.0
    %970 = vmatpush1.xpose.msra.mxu0 0.0
    %971 = vmatprep.subr.mxu0 0.0
    %972 = vmatpush1.xpose.msra.mxu0 0.0
    %973 = vmatprep.subr.mxu0 0.0
    %974 = vmatpush1.xpose.msra.mxu0 0.0
    %975 = vmatprep.subr.mxu0 0.0
    %976 = vmatpush1.xpose.msra.mxu0 0.0
    %977 = vmatprep.subr.mxu0 0.0
    %978 = vmatpush1.xpose.msra.mxu0 0.0
    %979 = vmatprep.subr.mxu0 0.0
    %980 = vmatpush1.xpose.msra.mxu0 0.0
    %981 = vmatprep.subr.mxu0 0.0
    %982 = vmatpush1.xpose.msra.mxu0 0.0
    %983 = vmatprep.subr.mxu0 0.0
    %984 = vmatpush1.xpose.msra.mxu0 0.0
    %985 = vmatprep.subr.mxu0 0.0
    %986 = vmatpush1.xpose.msra.mxu0 0.0
    %987 = vmatprep.subr.mxu0 0.0
    %988 = vmatpush1.xpose.msra.mxu0 0.0
    %989 = vmatprep.subr.mxu0 0.0
    %990 = vmatpush1.xpose.msra.mxu0 0.0
    %991 = vmatprep.subr.mxu0 0.0
    %992 = vmatpush1.xpose.msra.mxu0 0.0
    %993 = vmatprep.subr.mxu0 0.0
    %994 = vmatpush1.xpose.msra.mxu0 0.0
    %995 = vmatprep.subr.mxu0 0.0
    %996 = vmatpush1.xpose.msra.mxu0 0.0
    %997 = vmatprep.subr.mxu0 0.0
    %998 = vmatpush1.xpose.msra.mxu0 0.0
    %999 = vmatprep.subr.mxu0 0.0
    %1000 = vmatpush1.xpose.msra.mxu0 0.0
    %1001 = vmatprep.subr.mxu0 0.0
    %1002 = vmatpush1.xpose.msra.mxu0 0.0
    %1003 = vmatprep.subr.mxu0 0.0
    %1004 = vmatpush1.xpose.msra.mxu0 0.0
    %1005 = vmatprep.mubr.f32.mxu0 0.0
    %1006 = vmatmul.mubr.f32.gmra.mrb[0].mxu0 %v937
    %v1007 = vpop.f32.mrb[0].mxu0
    %v1008 = vadd.f32 0.0, %v1007
    %v1009 = vpop.f32.mrb[0].mxu0
    %1010 = vdwg.mxu0
    %v1011 = vsel %vm566, %v491, 0
    %v1013 = vsel %vm566, %v527, 0
    %1015 = vmatprep.subr.mxu0 0.0
    %1016 = vmatpush1.xpose.msra.mxu0 %v1013
    %1017 = vmatprep.subr.mxu0 0.0
    %1018 = vmatpush1.xpose.msra.mxu0 0.0
    %1019 = vmatprep.subr.mxu0 0.0
    %1020 = vmatpush1.xpose.msra.mxu0 0.0
    %1021 = vmatprep.subr.mxu0 0.0
    %1022 = vmatpush1.xpose.msra.mxu0 0.0
    %1023 = vmatprep.subr.mxu0 0.0
    %1024 = vmatpush1.xpose.msra.mxu0 0.0
    %1025 = vmatprep.subr.mxu0 0.0
    %1026 = vmatpush1.xpose.msra.mxu0 0.0
    %1027 = vmatprep.subr.mxu0 0.0
    %1028 = vmatpush1.xpose.msra.mxu0 0.0
    %1029 = vmatprep.subr.mxu0 0.0
    %1030 = vmatpush1.xpose.msra.mxu0 0.0
    %1031 = vmatprep.subr.mxu0 0.0
    %1032 = vmatpush1.xpose.msra.mxu0 0.0
    %1033 = vmatprep.subr.mxu0 0.0
    %1034 = vmatpush1.xpose.msra.mxu0 0.0
    %1035 = vmatprep.subr.mxu0 0.0
    %1036 = vmatpush1.xpose.msra.mxu0 0.0
    %1037 = vmatprep.subr.mxu0 0.0
    %1038 = vmatpush1.xpose.msra.mxu0 0.0
    %1039 = vmatprep.subr.mxu0 0.0
    %1040 = vmatpush1.xpose.msra.mxu0 0.0
    %1041 = vmatprep.subr.mxu0 0.0
    %1042 = vmatpush1.xpose.msra.mxu0 0.0
    %1043 = vmatprep.subr.mxu0 0.0
    %1044 = vmatpush1.xpose.msra.mxu0 0.0
    %1045 = vmatprep.subr.mxu0 0.0
    %1046 = vmatpush1.xpose.msra.mxu0 0.0
    %1047 = vmatprep.subr.mxu0 0.0
    %1048 = vmatpush1.xpose.msra.mxu0 0.0
    %1049 = vmatprep.subr.mxu0 0.0
    %1050 = vmatpush1.xpose.msra.mxu0 0.0
    %1051 = vmatprep.subr.mxu0 0.0
    %1052 = vmatpush1.xpose.msra.mxu0 0.0
    %1053 = vmatprep.subr.mxu0 0.0
    %1054 = vmatpush1.xpose.msra.mxu0 0.0
    %1055 = vmatprep.subr.mxu0 0.0
    %1056 = vmatpush1.xpose.msra.mxu0 0.0
    %1057 = vmatprep.subr.mxu0 0.0
    %1058 = vmatpush1.xpose.msra.mxu0 0.0
    %1059 = vmatprep.subr.mxu0 0.0
    %1060 = vmatpush1.xpose.msra.mxu0 0.0
    %1061 = vmatprep.subr.mxu0 0.0
    %1062 = vmatpush1.xpose.msra.mxu0 0.0
    %1063 = vmatprep.subr.mxu0 0.0
    %1064 = vmatpush1.xpose.msra.mxu0 0.0
    %1065 = vmatprep.subr.mxu0 0.0
    %1066 = vmatpush1.xpose.msra.mxu0 0.0
    %1067 = vmatprep.subr.mxu0 0.0
    %1068 = vmatpush1.xpose.msra.mxu0 0.0
    %1069 = vmatprep.subr.mxu0 0.0
    %1070 = vmatpush1.xpose.msra.mxu0 0.0
    %1071 = vmatprep.subr.mxu0 0.0
    %1072 = vmatpush1.xpose.msra.mxu0 0.0
    %1073 = vmatprep.subr.mxu0 0.0
    %1074 = vmatpush1.xpose.msra.mxu0 0.0
    %1075 = vmatprep.subr.mxu0 0.0
    %1076 = vmatpush1.xpose.msra.mxu0 0.0
    %1077 = vmatprep.subr.mxu0 0.0
    %1078 = vmatpush1.xpose.msra.mxu0 0.0
    %1079 = vmatprep.mubr.f32.mxu0 0.0
    %1080 = vmatmul.mubr.f32.gmra.mrb[0].mxu0 %v1011
    %v1081 = vpop.f32.mrb[0].mxu0
    %v1082 = vadd.f32 0.0, %v1081
    %v1083 = vpop.f32.mrb[0].mxu0
    %1084 = vdwg.mxu0
    %v1085 = vsel %vm566, %v493, 0
    %v1087 = vsel %vm566, %v529, 0
    %1089 = vmatprep.subr.mxu0 0.0
    %1090 = vmatpush1.xpose.msra.mxu0 %v1087
    %1091 = vmatprep.subr.mxu0 0.0
    %1092 = vmatpush1.xpose.msra.mxu0 0.0
    %1093 = vmatprep.subr.mxu0 0.0
    %1094 = vmatpush1.xpose.msra.mxu0 0.0
    %1095 = vmatprep.subr.mxu0 0.0
    %1096 = vmatpush1.xpose.msra.mxu0 0.0
    %1097 = vmatprep.subr.mxu0 0.0
    %1098 = vmatpush1.xpose.msra.mxu0 0.0
    %1099 = vmatprep.subr.mxu0 0.0
    %1100 = vmatpush1.xpose.msra.mxu0 0.0
    %1101 = vmatprep.subr.mxu0 0.0
    %1102 = vmatpush1.xpose.msra.mxu0 0.0
    %1103 = vmatprep.subr.mxu0 0.0
    %1104 = vmatpush1.xpose.msra.mxu0 0.0
    %1105 = vmatprep.subr.mxu0 0.0
    %1106 = vmatpush1.xpose.msra.mxu0 0.0
    %1107 = vmatprep.subr.mxu0 0.0
    %1108 = vmatpush1.xpose.msra.mxu0 0.0
    %1109 = vmatprep.subr.mxu0 0.0
    %1110 = vmatpush1.xpose.msra.mxu0 0.0
    %1111 = vmatprep.subr.mxu0 0.0
    %1112 = vmatpush1.xpose.msra.mxu0 0.0
    %1113 = vmatprep.subr.mxu0 0.0
    %1114 = vmatpush1.xpose.msra.mxu0 0.0
    %1115 = vmatprep.subr.mxu0 0.0
    %1116 = vmatpush1.xpose.msra.mxu0 0.0
    %1117 = vmatprep.subr.mxu0 0.0
    %1118 = vmatpush1.xpose.msra.mxu0 0.0
    %1119 = vmatprep.subr.mxu0 0.0
    %1120 = vmatpush1.xpose.msra.mxu0 0.0
    %1121 = vmatprep.subr.mxu0 0.0
    %1122 = vmatpush1.xpose.msra.mxu0 0.0
    %1123 = vmatprep.subr.mxu0 0.0
    %1124 = vmatpush1.xpose.msra.mxu0 0.0
    %1125 = vmatprep.subr.mxu0 0.0
    %1126 = vmatpush1.xpose.msra.mxu0 0.0
    %1127 = vmatprep.subr.mxu0 0.0
    %1128 = vmatpush1.xpose.msra.mxu0 0.0
    %1129 = vmatprep.subr.mxu0 0.0
    %1130 = vmatpush1.xpose.msra.mxu0 0.0
    %1131 = vmatprep.subr.mxu0 0.0
    %1132 = vmatpush1.xpose.msra.mxu0 0.0
    %1133 = vmatprep.subr.mxu0 0.0
    %1134 = vmatpush1.xpose.msra.mxu0 0.0
    %1135 = vmatprep.subr.mxu0 0.0
    %1136 = vmatpush1.xpose.msra.mxu0 0.0
    %1137 = vmatprep.subr.mxu0 0.0
    %1138 = vmatpush1.xpose.msra.mxu0 0.0
    %1139 = vmatprep.subr.mxu0 0.0
    %1140 = vmatpush1.xpose.msra.mxu0 0.0
    %1141 = vmatprep.subr.mxu0 0.0
    %1142 = vmatpush1.xpose.msra.mxu0 0.0
    %1143 = vmatprep.subr.mxu0 0.0
    %1144 = vmatpush1.xpose.msra.mxu0 0.0
    %1145 = vmatprep.subr.mxu0 0.0
    %1146 = vmatpush1.xpose.msra.mxu0 0.0
    %1147 = vmatprep.subr.mxu0 0.0
    %1148 = vmatpush1.xpose.msra.mxu0 0.0
    %1149 = vmatprep.subr.mxu0 0.0
    %1150 = vmatpush1.xpose.msra.mxu0 0.0
    %1151 = vmatprep.subr.mxu0 0.0
    %1152 = vmatpush1.xpose.msra.mxu0 0.0
    %1153 = vmatprep.mubr.f32.mxu0 0.0
    %1154 = vmatmul.mubr.f32.gmra.mrb[0].mxu0 %v1085
    %v1155 = vpop.f32.mrb[0].mxu0
    %v1156 = vadd.f32 0.0, %v1155
    %v1157 = vpop.f32.mrb[0].mxu0
    %1158 = vdwg.mxu0
    %vm1159 = vcmask 9216
    %v1160 = vsel %vm1159, %v638, -inf
    %1161 = vmax.xlane.f32.xlu0 %v1160
    %v1162 = vpop.xlane.xlu0 %1161
    %v1163 = vsel %vm1159, %v712, -inf
    %1164 = vmax.xlane.f32.xlu0 %v1163
    %v1165 = vpop.xlane.xlu0 %1164
    %v1166 = vsel %vm1159, %v786, -inf
    %1167 = vmax.xlane.f32.xlu0 %v1166
    %v1168 = vpop.xlane.xlu0 %1167
    %v1169 = vsel %vm1159, %v860, -inf
    %1170 = vmax.xlane.f32.xlu0 %v1169
    %v1171 = vpop.xlane.xlu0 %1170
    %v1172 = vsel %vm1159, %v934, -inf
    %1173 = vmax.xlane.f32.xlu0 %v1172
    %v1174 = vpop.xlane.xlu0 %1173
    %v1175 = vsel %vm1159, %v1008, -inf
    %1176 = vmax.xlane.f32.xlu0 %v1175
    %v1177 = vpop.xlane.xlu0 %1176
    %v1178 = vsel %vm1159, %v1082, -inf
    %1179 = vmax.xlane.f32.xlu0 %v1178
    %v1180 = vpop.xlane.xlu0 %1179
    %v1181 = vsel %vm1159, %v1156, -inf
    %1182 = vmax.xlane.f32.xlu0 %v1181
    %v1183 = vpop.xlane.xlu0 %1182
    %v1184 = vsub.f32 %v638, %v1162
    %v1185 = vsub.f32 %v712, %v1165
    %v1186 = vsub.f32 %v786, %v1168
    %v1187 = vsub.f32 %v860, %v1171
    %v1188 = vsub.f32 %v934, %v1174
    %v1189 = vsub.f32 %v1008, %v1177
    %v1190 = vsub.f32 %v1082, %v1180
    %v1191 = vsub.f32 %v1156, %v1183
    %v1192 = vmul.f32 %v1184, 1.442695
    %v1193 = vpow.pop %v1192
    %v1194 = vmul.f32 %v1185, 1.442695
    %v1195 = vpow.pop %v1194
    %v1196 = vmul.f32 %v1186, 1.442695
    %v1197 = vpow.pop %v1196
    %v1198 = vmul.f32 %v1187, 1.442695
    %v1199 = vpow.pop %v1198
    %v1200 = vmul.f32 %v1188, 1.442695
    %v1201 = vpow.pop %v1200
    %v1202 = vmul.f32 %v1189, 1.442695
    %v1203 = vpow.pop %v1202
    %v1204 = vmul.f32 %v1190, 1.442695
    %v1205 = vpow.pop %v1204
    %v1206 = vmul.f32 %v1191, 1.442695
    %v1207 = vpow.pop %v1206
    %v1208 = vsel %vm1159, %v1193, 0.0
    %1209 = vadd.xlane.f32.xlu0 %v1208
    %v1210 = vpop.xlane.xlu0 %1209
    %v1211 = vsel %vm1159, %v1195, 0.0
    %1212 = vadd.xlane.f32.xlu0 %v1211
    %v1213 = vpop.xlane.xlu0 %1212
    %v1214 = vsel %vm1159, %v1197, 0.0
    %1215 = vadd.xlane.f32.xlu0 %v1214
    %v1216 = vpop.xlane.xlu0 %1215
    %v1217 = vsel %vm1159, %v1199, 0.0
    %1218 = vadd.xlane.f32.xlu0 %v1217
    %v1219 = vpop.xlane.xlu0 %1218
    %v1220 = vsel %vm1159, %v1201, 0.0
    %1221 = vadd.xlane.f32.xlu0 %v1220
    %v1222 = vpop.xlane.xlu0 %1221
    %v1223 = vsel %vm1159, %v1203, 0.0
    %1224 = vadd.xlane.f32.xlu0 %v1223
    %v1225 = vpop.xlane.xlu0 %1224
    %v1226 = vsel %vm1159, %v1205, 0.0
    %1227 = vadd.xlane.f32.xlu0 %v1226
    %v1228 = vpop.xlane.xlu0 %1227
    %v1229 = vsel %vm1159, %v1207, 0.0
    %1230 = vadd.xlane.f32.xlu0 %v1229
    %v1231 = vpop.xlane.xlu0 %1230
    %v1232 = vrcp.pop %v1210
    %v1233 = vrcp.pop %v1213
    %v1234 = vrcp.pop %v1216
    %v1235 = vrcp.pop %v1219
    %v1236 = vrcp.pop %v1222
    %v1237 = vrcp.pop %v1225
    %v1238 = vrcp.pop %v1228
    %v1239 = vrcp.pop %v1231
    %v1240 = vmul.f32 %v1193, %v1232
    %v1241 = vmul.f32 %v1195, %v1233
    %v1242 = vmul.f32 %v1197, %v1234
    %v1243 = vmul.f32 %v1199, %v1235
    %v1244 = vmul.f32 %v1201, %v1236
    %v1245 = vmul.f32 %v1203, %v1237
    %v1246 = vmul.f32 %v1205, %v1238
    %v1247 = vmul.f32 %v1207, %v1239
    %vm1248 = vcmask 15360
    %v1250 = vsel %vm1248, %v1240, 0
    %vm1252 = vcmask 1041408
    %v1253 = vsel %vm1252, %v539, 0
    %1255 = vmatprep.subr.mxu0 0.0
    %1256 = vmatpush1.msra.mxu0 %v1253
    %1257 = vmatprep.subr.mxu0 0.0
    %1258 = vmatpush1.msra.mxu0 0.0
    %1259 = vmatprep.subr.mxu0 0.0
    %1260 = vmatpush1.msra.mxu0 0.0
    %1261 = vmatprep.subr.mxu0 0.0
    %1262 = vmatpush1.msra.mxu0 0.0
    %1263 = vmatprep.subr.mxu0 0.0
    %1264 = vmatpush1.msra.mxu0 0.0
    %1265 = vmatprep.subr.mxu0 0.0
    %1266 = vmatpush1.msra.mxu0 0.0
    %1267 = vmatprep.subr.mxu0 0.0
    %1268 = vmatpush1.msra.mxu0 0.0
    %1269 = vmatprep.subr.mxu0 0.0
    %1270 = vmatpush1.msra.mxu0 0.0
    %1271 = vmatprep.subr.mxu0 0.0
    %1272 = vmatpush1.msra.mxu0 0.0
    %1273 = vmatprep.subr.mxu0 0.0
    %1274 = vmatpush1.msra.mxu0 0.0
    %1275 = vmatprep.subr.mxu0 0.0
    %1276 = vmatpush1.msra.mxu0 0.0
    %1277 = vmatprep.subr.mxu0 0.0
    %1278 = vmatpush1.msra.mxu0 0.0
    %1279 = vmatprep.subr.mxu0 0.0
    %1280 = vmatpush1.msra.mxu0 0.0
    %1281 = vmatprep.subr.mxu0 0.0
    %1282 = vmatpush1.msra.mxu0 0.0
    %1283 = vmatprep.subr.mxu0 0.0
    %1284 = vmatpush1.msra.mxu0 0.0
    %1285 = vmatprep.subr.mxu0 0.0
    %1286 = vmatpush1.msra.mxu0 0.0
    %1287 = vmatprep.subr.mxu0 0.0
    %1288 = vmatpush1.msra.mxu0 0.0
    %1289 = vmatprep.subr.mxu0 0.0
    %1290 = vmatpush1.msra.mxu0 0.0
    %1291 = vmatprep.subr.mxu0 0.0
    %1292 = vmatpush1.msra.mxu0 0.0
    %1293 = vmatprep.subr.mxu0 0.0
    %1294 = vmatpush1.msra.mxu0 0.0
    %1295 = vmatprep.subr.mxu0 0.0
    %1296 = vmatpush1.msra.mxu0 0.0
    %1297 = vmatprep.subr.mxu0 0.0
    %1298 = vmatpush1.msra.mxu0 0.0
    %1299 = vmatprep.subr.mxu0 0.0
    %1300 = vmatpush1.msra.mxu0 0.0
    %1301 = vmatprep.subr.mxu0 0.0
    %1302 = vmatpush1.msra.mxu0 0.0
    %1303 = vmatprep.subr.mxu0 0.0
    %1304 = vmatpush1.msra.mxu0 0.0
    %1305 = vmatprep.subr.mxu0 0.0
    %1306 = vmatpush1.msra.mxu0 0.0
    %1307 = vmatprep.subr.mxu0 0.0
    %1308 = vmatpush1.msra.mxu0 0.0
    %1309 = vmatprep.subr.mxu0 0.0
    %1310 = vmatpush1.msra.mxu0 0.0
    %1311 = vmatprep.subr.mxu0 0.0
    %1312 = vmatpush1.msra.mxu0 0.0
    %1313 = vmatprep.subr.mxu0 0.0
    %1314 = vmatpush1.msra.mxu0 0.0
    %1315 = vmatprep.subr.mxu0 0.0
    %1316 = vmatpush1.msra.mxu0 0.0
    %1317 = vmatprep.subr.mxu0 0.0
    %1318 = vmatpush1.msra.mxu0 0.0
    %1319 = vmatprep.mubr.f32.mxu0 0.0
    %1320 = vmatmul.mubr.f32.gmra.mrb[0].mxu0 %v1250
    %v1321 = vpop.f32.mrb[0].mxu0
    %v1322 = vadd.f32 0.0, %v1321
    %v1323 = vpop.f32.mrb[0].mxu0
    %1324 = vdwg.mxu0
    %v1326 = vsel %vm1248, %v1241, 0
    %v1328 = vsel %vm1252, %v547, 0
    %1330 = vmatprep.subr.mxu0 0.0
    %1331 = vmatpush1.msra.mxu0 %v1328
    %1332 = vmatprep.subr.mxu0 0.0
    %1333 = vmatpush1.msra.mxu0 0.0
    %1334 = vmatprep.subr.mxu0 0.0
    %1335 = vmatpush1.msra.mxu0 0.0
    %1336 = vmatprep.subr.mxu0 0.0
    %1337 = vmatpush1.msra.mxu0 0.0
    %1338 = vmatprep.subr.mxu0 0.0
    %1339 = vmatpush1.msra.mxu0 0.0
    %1340 = vmatprep.subr.mxu0 0.0
    %1341 = vmatpush1.msra.mxu0 0.0
    %1342 = vmatprep.subr.mxu0 0.0
    %1343 = vmatpush1.msra.mxu0 0.0
    %1344 = vmatprep.subr.mxu0 0.0
    %1345 = vmatpush1.msra.mxu0 0.0
    %1346 = vmatprep.subr.mxu0 0.0
    %1347 = vmatpush1.msra.mxu0 0.0
    %1348 = vmatprep.subr.mxu0 0.0
    %1349 = vmatpush1.msra.mxu0 0.0
    %1350 = vmatprep.subr.mxu0 0.0
    %1351 = vmatpush1.msra.mxu0 0.0
    %1352 = vmatprep.subr.mxu0 0.0
    %1353 = vmatpush1.msra.mxu0 0.0
    %1354 = vmatprep.subr.mxu0 0.0
    %1355 = vmatpush1.msra.mxu0 0.0
    %1356 = vmatprep.subr.mxu0 0.0
    %1357 = vmatpush1.msra.mxu0 0.0
    %1358 = vmatprep.subr.mxu0 0.0
    %1359 = vmatpush1.msra.mxu0 0.0
    %1360 = vmatprep.subr.mxu0 0.0
    %1361 = vmatpush1.msra.mxu0 0.0
    %1362 = vmatprep.subr.mxu0 0.0
    %1363 = vmatpush1.msra.mxu0 0.0
    %1364 = vmatprep.subr.mxu0 0.0
    %1365 = vmatpush1.msra.mxu0 0.0
    %1366 = vmatprep.subr.mxu0 0.0
    %1367 = vmatpush1.msra.mxu0 0.0
    %1368 = vmatprep.subr.mxu0 0.0
    %1369 = vmatpush1.msra.mxu0 0.0
    %1370 = vmatprep.subr.mxu0 0.0
    %1371 = vmatpush1.msra.mxu0 0.0
    %1372 = vmatprep.subr.mxu0 0.0
    %1373 = vmatpush1.msra.mxu0 0.0
    %1374 = vmatprep.subr.mxu0 0.0
    %1375 = vmatpush1.msra.mxu0 0.0
    %1376 = vmatprep.subr.mxu0 0.0
    %1377 = vmatpush1.msra.mxu0 0.0
    %1378 = vmatprep.subr.mxu0 0.0
    %1379 = vmatpush1.msra.mxu0 0.0
    %1380 = vmatprep.subr.mxu0 0.0
    %1381 = vmatpush1.msra.mxu0 0.0
    %1382 = vmatprep.subr.mxu0 0.0
    %1383 = vmatpush1.msra.mxu0 0.0
    %1384 = vmatprep.subr.mxu0 0.0
    %1385 = vmatpush1.msra.mxu0 0.0
    %1386 = vmatprep.subr.mxu0 0.0
    %1387 = vmatpush1.msra.mxu0 0.0
    %1388 = vmatprep.subr.mxu0 0.0
    %1389 = vmatpush1.msra.mxu0 0.0
    %1390 = vmatprep.subr.mxu0 0.0
    %1391 = vmatpush1.msra.mxu0 0.0
    %1392 = vmatprep.subr.mxu0 0.0
    %1393 = vmatpush1.msra.mxu0 0.0
    %1394 = vmatprep.mubr.f32.mxu0 0.0
    %1395 = vmatmul.mubr.f32.gmra.mrb[0].mxu0 %v1326
    %v1396 = vpop.f32.mrb[0].mxu0
    %v1397 = vadd.f32 0.0, %v1396
    %v1398 = vpop.f32.mrb[0].mxu0
    %1399 = vdwg.mxu0
    %v1401 = vsel %vm1248, %v1242, 0
    %v1403 = vsel %vm1252, %v546, 0
    %1405 = vmatprep.subr.mxu0 0.0
    %1406 = vmatpush1.msra.mxu0 %v1403
    %1407 = vmatprep.subr.mxu0 0.0
    %1408 = vmatpush1.msra.mxu0 0.0
    %1409 = vmatprep.subr.mxu0 0.0
    %1410 = vmatpush1.msra.mxu0 0.0
    %1411 = vmatprep.subr.mxu0 0.0
    %1412 = vmatpush1.msra.mxu0 0.0
    %1413 = vmatprep.subr.mxu0 0.0
    %1414 = vmatpush1.msra.mxu0 0.0
    %1415 = vmatprep.subr.mxu0 0.0
    %1416 = vmatpush1.msra.mxu0 0.0
    %1417 = vmatprep.subr.mxu0 0.0
    %1418 = vmatpush1.msra.mxu0 0.0
    %1419 = vmatprep.subr.mxu0 0.0
    %1420 = vmatpush1.msra.mxu0 0.0
    %1421 = vmatprep.subr.mxu0 0.0
    %1422 = vmatpush1.msra.mxu0 0.0
    %1423 = vmatprep.subr.mxu0 0.0
    %1424 = vmatpush1.msra.mxu0 0.0
    %1425 = vmatprep.subr.mxu0 0.0
    %1426 = vmatpush1.msra.mxu0 0.0
    %1427 = vmatprep.subr.mxu0 0.0
    %1428 = vmatpush1.msra.mxu0 0.0
    %1429 = vmatprep.subr.mxu0 0.0
    %1430 = vmatpush1.msra.mxu0 0.0
    %1431 = vmatprep.subr.mxu0 0.0
    %1432 = vmatpush1.msra.mxu0 0.0
    %1433 = vmatprep.subr.mxu0 0.0
    %1434 = vmatpush1.msra.mxu0 0.0
    %1435 = vmatprep.subr.mxu0 0.0
    %1436 = vmatpush1.msra.mxu0 0.0
    %1437 = vmatprep.subr.mxu0 0.0
    %1438 = vmatpush1.msra.mxu0 0.0
    %1439 = vmatprep.subr.mxu0 0.0
    %1440 = vmatpush1.msra.mxu0 0.0
    %1441 = vmatprep.subr.mxu0 0.0
    %1442 = vmatpush1.msra.mxu0 0.0
    %1443 = vmatprep.subr.mxu0 0.0
    %1444 = vmatpush1.msra.mxu0 0.0
    %1445 = vmatprep.subr.mxu0 0.0
    %1446 = vmatpush1.msra.mxu0 0.0
    %1447 = vmatprep.subr.mxu0 0.0
    %1448 = vmatpush1.msra.mxu0 0.0
    %1449 = vmatprep.subr.mxu0 0.0
    %1450 = vmatpush1.msra.mxu0 0.0
    %1451 = vmatprep.subr.mxu0 0.0
    %1452 = vmatpush1.msra.mxu0 0.0
    %1453 = vmatprep.subr.mxu0 0.0
    %1454 = vmatpush1.msra.mxu0 0.0
    %1455 = vmatprep.subr.mxu0 0.0
    %1456 = vmatpush1.msra.mxu0 0.0
    %1457 = vmatprep.subr.mxu0 0.0
    %1458 = vmatpush1.msra.mxu0 0.0
    %1459 = vmatprep.subr.mxu0 0.0
    %1460 = vmatpush1.msra.mxu0 0.0
    %1461 = vmatprep.subr.mxu0 0.0
    %1462 = vmatpush1.msra.mxu0 0.0
    %1463 = vmatprep.subr.mxu0 0.0
    %1464 = vmatpush1.msra.mxu0 0.0
    %1465 = vmatprep.subr.mxu0 0.0
    %1466 = vmatpush1.msra.mxu0 0.0
    %1467 = vmatprep.subr.mxu0 0.0
    %1468 = vmatpush1.msra.mxu0 0.0
    %1469 = vmatprep.mubr.f32.mxu0 0.0
    %1470 = vmatmul.mubr.f32.gmra.mrb[0].mxu0 %v1401
    %v1471 = vpop.f32.mrb[0].mxu0
    %v1472 = vadd.f32 0.0, %v1471
    %v1473 = vpop.f32.mrb[0].mxu0
    %1474 = vdwg.mxu0
    %v1476 = vsel %vm1248, %v1243, 0
    %v1478 = vsel %vm1252, %v548, 0
    %1480 = vmatprep.subr.mxu0 0.0
    %1481 = vmatpush1.msra.mxu0 %v1478
    %1482 = vmatprep.subr.mxu0 0.0
    %1483 = vmatpush1.msra.mxu0 0.0
    %1484 = vmatprep.subr.mxu0 0.0
    %1485 = vmatpush1.msra.mxu0 0.0
    %1486 = vmatprep.subr.mxu0 0.0
    %1487 = vmatpush1.msra.mxu0 0.0
    %1488 = vmatprep.subr.mxu0 0.0
    %1489 = vmatpush1.msra.mxu0 0.0
    %1490 = vmatprep.subr.mxu0 0.0
    %1491 = vmatpush1.msra.mxu0 0.0
    %1492 = vmatprep.subr.mxu0 0.0
    %1493 = vmatpush1.msra.mxu0 0.0
    %1494 = vmatprep.subr.mxu0 0.0
    %1495 = vmatpush1.msra.mxu0 0.0
    %1496 = vmatprep.subr.mxu0 0.0
    %1497 = vmatpush1.msra.mxu0 0.0
    %1498 = vmatprep.subr.mxu0 0.0
    %1499 = vmatpush1.msra.mxu0 0.0
    %1500 = vmatprep.subr.mxu0 0.0
    %1501 = vmatpush1.msra.mxu0 0.0
    %1502 = vmatprep.subr.mxu0 0.0
    %1503 = vmatpush1.msra.mxu0 0.0
    %1504 = vmatprep.subr.mxu0 0.0
    %1505 = vmatpush1.msra.mxu0 0.0
    %1506 = vmatprep.subr.mxu0 0.0
    %1507 = vmatpush1.msra.mxu0 0.0
    %1508 = vmatprep.subr.mxu0 0.0
    %1509 = vmatpush1.msra.mxu0 0.0
    %1510 = vmatprep.subr.mxu0 0.0
    %1511 = vmatpush1.msra.mxu0 0.0
    %1512 = vmatprep.subr.mxu0 0.0
    %1513 = vmatpush1.msra.mxu0 0.0
    %1514 = vmatprep.subr.mxu0 0.0
    %1515 = vmatpush1.msra.mxu0 0.0
    %1516 = vmatprep.subr.mxu0 0.0
    %1517 = vmatpush1.msra.mxu0 0.0
    %1518 = vmatprep.subr.mxu0 0.0
    %1519 = vmatpush1.msra.mxu0 0.0
    %1520 = vmatprep.subr.mxu0 0.0
    %1521 = vmatpush1.msra.mxu0 0.0
    %1522 = vmatprep.subr.mxu0 0.0
    %1523 = vmatpush1.msra.mxu0 0.0
    %1524 = vmatprep.subr.mxu0 0.0
    %1525 = vmatpush1.msra.mxu0 0.0
    %1526 = vmatprep.subr.mxu0 0.0
    %1527 = vmatpush1.msra.mxu0 0.0
    %1528 = vmatprep.subr.mxu0 0.0
    %1529 = vmatpush1.msra.mxu0 0.0
    %1530 = vmatprep.subr.mxu0 0.0
    %1531 = vmatpush1.msra.mxu0 0.0
    %1532 = vmatprep.subr.mxu0 0.0
    %1533 = vmatpush1.msra.mxu0 0.0
    %1534 = vmatprep.subr.mxu0 0.0
    %1535 = vmatpush1.msra.mxu0 0.0
    %1536 = vmatprep.subr.mxu0 0.0
    %1537 = vmatpush1.msra.mxu0 0.0
    %1538 = vmatprep.subr.mxu0 0.0
    %1539 = vmatpush1.msra.mxu0 0.0
    %1540 = vmatprep.subr.mxu0 0.0
    %1541 = vmatpush1.msra.mxu0 0.0
    %1542 = vmatprep.subr.mxu0 0.0
    %1543 = vmatpush1.msra.mxu0 0.0
    %1544 = vmatprep.mubr.f32.mxu0 0.0
    %1545 = vmatmul.mubr.f32.gmra.mrb[0].mxu0 %v1476
    %v1546 = vpop.f32.mrb[0].mxu0
    %v1547 = vadd.f32 0.0, %v1546
    %v1548 = vpop.f32.mrb[0].mxu0
    %1549 = vdwg.mxu0
    %v1551 = vsel %vm1248, %v1244, 0
    %v1553 = vsel %vm1252, %v556, 0
    %1555 = vmatprep.subr.mxu0 0.0
    %1556 = vmatpush1.msra.mxu0 %v1553
    %1557 = vmatprep.subr.mxu0 0.0
    %1558 = vmatpush1.msra.mxu0 0.0
    %1559 = vmatprep.subr.mxu0 0.0
    %1560 = vmatpush1.msra.mxu0 0.0
    %1561 = vmatprep.subr.mxu0 0.0
    %1562 = vmatpush1.msra.mxu0 0.0
    %1563 = vmatprep.subr.mxu0 0.0
    %1564 = vmatpush1.msra.mxu0 0.0
    %1565 = vmatprep.subr.mxu0 0.0
    %1566 = vmatpush1.msra.mxu0 0.0
    %1567 = vmatprep.subr.mxu0 0.0
    %1568 = vmatpush1.msra.mxu0 0.0
    %1569 = vmatprep.subr.mxu0 0.0
    %1570 = vmatpush1.msra.mxu0 0.0
    %1571 = vmatprep.subr.mxu0 0.0
    %1572 = vmatpush1.msra.mxu0 0.0
    %1573 = vmatprep.subr.mxu0 0.0
    %1574 = vmatpush1.msra.mxu0 0.0
    %1575 = vmatprep.subr.mxu0 0.0
    %1576 = vmatpush1.msra.mxu0 0.0
    %1577 = vmatprep.subr.mxu0 0.0
    %1578 = vmatpush1.msra.mxu0 0.0
    %1579 = vmatprep.subr.mxu0 0.0
    %1580 = vmatpush1.msra.mxu0 0.0
    %1581 = vmatprep.subr.mxu0 0.0
    %1582 = vmatpush1.msra.mxu0 0.0
    %1583 = vmatprep.subr.mxu0 0.0
    %1584 = vmatpush1.msra.mxu0 0.0
    %1585 = vmatprep.subr.mxu0 0.0
    %1586 = vmatpush1.msra.mxu0 0.0
    %1587 = vmatprep.subr.mxu0 0.0
    %1588 = vmatpush1.msra.mxu0 0.0
    %1589 = vmatprep.subr.mxu0 0.0
    %1590 = vmatpush1.msra.mxu0 0.0
    %1591 = vmatprep.subr.mxu0 0.0
    %1592 = vmatpush1.msra.mxu0 0.0
    %1593 = vmatprep.subr.mxu0 0.0
    %1594 = vmatpush1.msra.mxu0 0.0
    %1595 = vmatprep.subr.mxu0 0.0
    %1596 = vmatpush1.msra.mxu0 0.0
    %1597 = vmatprep.subr.mxu0 0.0
    %1598 = vmatpush1.msra.mxu0 0.0
    %1599 = vmatprep.subr.mxu0 0.0
    %1600 = vmatpush1.msra.mxu0 0.0
    %1601 = vmatprep.subr.mxu0 0.0
    %1602 = vmatpush1.msra.mxu0 0.0
    %1603 = vmatprep.subr.mxu0 0.0
    %1604 = vmatpush1.msra.mxu0 0.0
    %1605 = vmatprep.subr.mxu0 0.0
    %1606 = vmatpush1.msra.mxu0 0.0
    %1607 = vmatprep.subr.mxu0 0.0
    %1608 = vmatpush1.msra.mxu0 0.0
    %1609 = vmatprep.subr.mxu0 0.0
    %1610 = vmatpush1.msra.mxu0 0.0
    %1611 = vmatprep.subr.mxu0 0.0
    %1612 = vmatpush1.msra.mxu0 0.0
    %1613 = vmatprep.subr.mxu0 0.0
    %1614 = vmatpush1.msra.mxu0 0.0
    %1615 = vmatprep.subr.mxu0 0.0
    %1616 = vmatpush1.msra.mxu0 0.0
    %1617 = vmatprep.subr.mxu0 0.0
    %1618 = vmatpush1.msra.mxu0 0.0
    %1619 = vmatprep.mubr.f32.mxu0 0.0
    %1620 = vmatmul.mubr.f32.gmra.mrb[0].mxu0 %v1551
    %v1621 = vpop.f32.mrb[0].mxu0
    %v1622 = vadd.f32 0.0, %v1621
    %v1623 = vpop.f32.mrb[0].mxu0
    %1624 = vdwg.mxu0
    %v1626 = vsel %vm1248, %v1245, 0
    %v1628 = vsel %vm1252, %v564, 0
    %1630 = vmatprep.subr.mxu0 0.0
    %1631 = vmatpush1.msra.mxu0 %v1628
    %1632 = vmatprep.subr.mxu0 0.0
    %1633 = vmatpush1.msra.mxu0 0.0
    %1634 = vmatprep.subr.mxu0 0.0
    %1635 = vmatpush1.msra.mxu0 0.0
    %1636 = vmatprep.subr.mxu0 0.0
    %1637 = vmatpush1.msra.mxu0 0.0
    %1638 = vmatprep.subr.mxu0 0.0
    %1639 = vmatpush1.msra.mxu0 0.0
    %1640 = vmatprep.subr.mxu0 0.0
    %1641 = vmatpush1.msra.mxu0 0.0
    %1642 = vmatprep.subr.mxu0 0.0
    %1643 = vmatpush1.msra.mxu0 0.0
    %1644 = vmatprep.subr.mxu0 0.0
    %1645 = vmatpush1.msra.mxu0 0.0
    %1646 = vmatprep.subr.mxu0 0.0
    %1647 = vmatpush1.msra.mxu0 0.0
    %1648 = vmatprep.subr.mxu0 0.0
    %1649 = vmatpush1.msra.mxu0 0.0
    %1650 = vmatprep.subr.mxu0 0.0
    %1651 = vmatpush1.msra.mxu0 0.0
    %1652 = vmatprep.subr.mxu0 0.0
    %1653 = vmatpush1.msra.mxu0 0.0
    %1654 = vmatprep.subr.mxu0 0.0
    %1655 = vmatpush1.msra.mxu0 0.0
    %1656 = vmatprep.subr.mxu0 0.0
    %1657 = vmatpush1.msra.mxu0 0.0
    %1658 = vmatprep.subr.mxu0 0.0
    %1659 = vmatpush1.msra.mxu0 0.0
    %1660 = vmatprep.subr.mxu0 0.0
    %1661 = vmatpush1.msra.mxu0 0.0
    %1662 = vmatprep.subr.mxu0 0.0
    %1663 = vmatpush1.msra.mxu0 0.0
    %1664 = vmatprep.subr.mxu0 0.0
    %1665 = vmatpush1.msra.mxu0 0.0
    %1666 = vmatprep.subr.mxu0 0.0
    %1667 = vmatpush1.msra.mxu0 0.0
    %1668 = vmatprep.subr.mxu0 0.0
    %1669 = vmatpush1.msra.mxu0 0.0
    %1670 = vmatprep.subr.mxu0 0.0
    %1671 = vmatpush1.msra.mxu0 0.0
    %1672 = vmatprep.subr.mxu0 0.0
    %1673 = vmatpush1.msra.mxu0 0.0
    %1674 = vmatprep.subr.mxu0 0.0
    %1675 = vmatpush1.msra.mxu0 0.0
    %1676 = vmatprep.subr.mxu0 0.0
    %1677 = vmatpush1.msra.mxu0 0.0
    %1678 = vmatprep.subr.mxu0 0.0
    %1679 = vmatpush1.msra.mxu0 0.0
    %1680 = vmatprep.subr.mxu0 0.0
    %1681 = vmatpush1.msra.mxu0 0.0
    %1682 = vmatprep.subr.mxu0 0.0
    %1683 = vmatpush1.msra.mxu0 0.0
    %1684 = vmatprep.subr.mxu0 0.0
    %1685 = vmatpush1.msra.mxu0 0.0
    %1686 = vmatprep.subr.mxu0 0.0
    %1687 = vmatpush1.msra.mxu0 0.0
    %1688 = vmatprep.subr.mxu0 0.0
    %1689 = vmatpush1.msra.mxu0 0.0
    %1690 = vmatprep.subr.mxu0 0.0
    %1691 = vmatpush1.msra.mxu0 0.0
    %1692 = vmatprep.subr.mxu0 0.0
    %1693 = vmatpush1.msra.mxu0 0.0
    %1694 = vmatprep.mubr.f32.mxu0 0.0
    %1695 = vmatmul.mubr.f32.gmra.mrb[0].mxu0 %v1626
    %v1696 = vpop.f32.mrb[0].mxu0
    %v1697 = vadd.f32 0.0, %v1696
    %v1698 = vpop.f32.mrb[0].mxu0
    %1699 = vdwg.mxu0
    %v1701 = vsel %vm1248, %v1246, 0
    %v1703 = vsel %vm1252, %v563, 0
    %1705 = vmatprep.subr.mxu0 0.0
    %1706 = vmatpush1.msra.mxu0 %v1703
    %1707 = vmatprep.subr.mxu0 0.0
    %1708 = vmatpush1.msra.mxu0 0.0
    %1709 = vmatprep.subr.mxu0 0.0
    %1710 = vmatpush1.msra.mxu0 0.0
    %1711 = vmatprep.subr.mxu0 0.0
    %1712 = vmatpush1.msra.mxu0 0.0
    %1713 = vmatprep.subr.mxu0 0.0
    %1714 = vmatpush1.msra.mxu0 0.0
    %1715 = vmatprep.subr.mxu0 0.0
    %1716 = vmatpush1.msra.mxu0 0.0
    %1717 = vmatprep.subr.mxu0 0.0
    %1718 = vmatpush1.msra.mxu0 0.0
    %1719 = vmatprep.subr.mxu0 0.0
    %1720 = vmatpush1.msra.mxu0 0.0
    %1721 = vmatprep.subr.mxu0 0.0
    %1722 = vmatpush1.msra.mxu0 0.0
    %1723 = vmatprep.subr.mxu0 0.0
    %1724 = vmatpush1.msra.mxu0 0.0
    %1725 = vmatprep.subr.mxu0 0.0
    %1726 = vmatpush1.msra.mxu0 0.0
    %1727 = vmatprep.subr.mxu0 0.0
    %1728 = vmatpush1.msra.mxu0 0.0
    %1729 = vmatprep.subr.mxu0 0.0
    %1730 = vmatpush1.msra.mxu0 0.0
    %1731 = vmatprep.subr.mxu0 0.0
    %1732 = vmatpush1.msra.mxu0 0.0
    %1733 = vmatprep.subr.mxu0 0.0
    %1734 = vmatpush1.msra.mxu0 0.0
    %1735 = vmatprep.subr.mxu0 0.0
    %1736 = vmatpush1.msra.mxu0 0.0
    %1737 = vmatprep.subr.mxu0 0.0
    %1738 = vmatpush1.msra.mxu0 0.0
    %1739 = vmatprep.subr.mxu0 0.0
    %1740 = vmatpush1.msra.mxu0 0.0
    %1741 = vmatprep.subr.mxu0 0.0
    %1742 = vmatpush1.msra.mxu0 0.0
    %1743 = vmatprep.subr.mxu0 0.0
    %1744 = vmatpush1.msra.mxu0 0.0
    %1745 = vmatprep.subr.mxu0 0.0
    %1746 = vmatpush1.msra.mxu0 0.0
    %1747 = vmatprep.subr.mxu0 0.0
    %1748 = vmatpush1.msra.mxu0 0.0
    %1749 = vmatprep.subr.mxu0 0.0
    %1750 = vmatpush1.msra.mxu0 0.0
    %1751 = vmatprep.subr.mxu0 0.0
    %1752 = vmatpush1.msra.mxu0 0.0
    %1753 = vmatprep.subr.mxu0 0.0
    %1754 = vmatpush1.msra.mxu0 0.0
    %1755 = vmatprep.subr.mxu0 0.0
    %1756 = vmatpush1.msra.mxu0 0.0
    %1757 = vmatprep.subr.mxu0 0.0
    %1758 = vmatpush1.msra.mxu0 0.0
    %1759 = vmatprep.subr.mxu0 0.0
    %1760 = vmatpush1.msra.mxu0 0.0
    %1761 = vmatprep.subr.mxu0 0.0
    %1762 = vmatpush1.msra.mxu0 0.0
    %1763 = vmatprep.subr.mxu0 0.0
    %1764 = vmatpush1.msra.mxu0 0.0
    %1765 = vmatprep.subr.mxu0 0.0
    %1766 = vmatpush1.msra.mxu0 0.0
    %1767 = vmatprep.subr.mxu0 0.0
    %1768 = vmatpush1.msra.mxu0 0.0
    %1769 = vmatprep.mubr.f32.mxu0 0.0
    %1770 = vmatmul.mubr.f32.gmra.mrb[0].mxu0 %v1701
    %v1771 = vpop.f32.mrb[0].mxu0
    %v1772 = vadd.f32 0.0, %v1771
    %v1773 = vpop.f32.mrb[0].mxu0
    %1774 = vdwg.mxu0
    %v1776 = vsel %vm1248, %v1247, 0
    %v1778 = vsel %vm1252, %v565, 0
    %1780 = vmatprep.subr.mxu0 0.0
    %1781 = vmatpush1.msra.mxu0 %v1778
    %1782 = vmatprep.subr.mxu0 0.0
    %1783 = vmatpush1.msra.mxu0 0.0
    %1784 = vmatprep.subr.mxu0 0.0
    %1785 = vmatpush1.msra.mxu0 0.0
    %1786 = vmatprep.subr.mxu0 0.0
    %1787 = vmatpush1.msra.mxu0 0.0
    %1788 = vmatprep.subr.mxu0 0.0
    %1789 = vmatpush1.msra.mxu0 0.0
    %1790 = vmatprep.subr.mxu0 0.0
    %1791 = vmatpush1.msra.mxu0 0.0
    %1792 = vmatprep.subr.mxu0 0.0
    %1793 = vmatpush1.msra.mxu0 0.0
    %1794 = vmatprep.subr.mxu0 0.0
    %1795 = vmatpush1.msra.mxu0 0.0
    %1796 = vmatprep.subr.mxu0 0.0
    %1797 = vmatpush1.msra.mxu0 0.0
    %1798 = vmatprep.subr.mxu0 0.0
    %1799 = vmatpush1.msra.mxu0 0.0
    %1800 = vmatprep.subr.mxu0 0.0
    %1801 = vmatpush1.msra.mxu0 0.0
    %1802 = vmatprep.subr.mxu0 0.0
    %1803 = vmatpush1.msra.mxu0 0.0
    %1804 = vmatprep.subr.mxu0 0.0
    %1805 = vmatpush1.msra.mxu0 0.0
    %1806 = vmatprep.subr.mxu0 0.0
    %1807 = vmatpush1.msra.mxu0 0.0
    %1808 = vmatprep.subr.mxu0 0.0
    %1809 = vmatpush1.msra.mxu0 0.0
    %1810 = vmatprep.subr.mxu0 0.0
    %1811 = vmatpush1.msra.mxu0 0.0
    %1812 = vmatprep.subr.mxu0 0.0
    %1813 = vmatpush1.msra.mxu0 0.0
    %1814 = vmatprep.subr.mxu0 0.0
    %1815 = vmatpush1.msra.mxu0 0.0
    %1816 = vmatprep.subr.mxu0 0.0
    %1817 = vmatpush1.msra.mxu0 0.0
    %1818 = vmatprep.subr.mxu0 0.0
    %1819 = vmatpush1.msra.mxu0 0.0
    %1820 = vmatprep.subr.mxu0 0.0
    %1821 = vmatpush1.msra.mxu0 0.0
    %1822 = vmatprep.subr.mxu0 0.0
    %1823 = vmatpush1.msra.mxu0 0.0
    %1824 = vmatprep.subr.mxu0 0.0
    %1825 = vmatpush1.msra.mxu0 0.0
    %1826 = vmatprep.subr.mxu0 0.0
    %1827 = vmatpush1.msra.mxu0 0.0
    %1828 = vmatprep.subr.mxu0 0.0
    %1829 = vmatpush1.msra.mxu0 0.0
    %1830 = vmatprep.subr.mxu0 0.0
    %1831 = vmatpush1.msra.mxu0 0.0
    %1832 = vmatprep.subr.mxu0 0.0
    %1833 = vmatpush1.msra.mxu0 0.0
    %1834 = vmatprep.subr.mxu0 0.0
    %1835 = vmatpush1.msra.mxu0 0.0
    %1836 = vmatprep.subr.mxu0 0.0
    %1837 = vmatpush1.msra.mxu0 0.0
    %1838 = vmatprep.subr.mxu0 0.0
    %1839 = vmatpush1.msra.mxu0 0.0
    %1840 = vmatprep.subr.mxu0 0.0
    %1841 = vmatpush1.msra.mxu0 0.0
    %1842 = vmatprep.subr.mxu0 0.0
    %1843 = vmatpush1.msra.mxu0 0.0
    %1844 = vmatprep.mubr.f32.mxu0 0.0
    %1845 = vmatmul.mubr.f32.gmra.mrb[0].mxu0 %v1776
    %v1846 = vpop.f32.mrb[0].mxu0
    %v1847 = vadd.f32 0.0, %v1846
    %v1848 = vpop.f32.mrb[0].mxu0
    %1849 = vdwg.mxu0
    %v1850 = vld [vmem:[%s6] sm:$0xff]
    %s1851 = scalar_lea.vmem %s3, 32
    %v1852 = vld [vmem:[%s1851] sm:$0xff]
    %v1853 = vld [vmem:[%s1851 + $0x8] sm:$0xff]
    %v1854 = vld [vmem:[%s1851 + $0x10] sm:$0xff]
    %v1855 = vld [vmem:[%s1851 + $0x18] sm:$0xff]
    %1856 = vmatprep.subr.mxu0 0.0
    %1857 = vmatpush1.msra.mxu0 %v1852
    %1858 = vmatprep.subr.mxu0 0.0
    %1859 = vmatpush1.msra.mxu0 %v1853
    %1860 = vmatprep.subr.mxu0 0.0
    %1861 = vmatpush1.msra.mxu0 %v1854
    %1862 = vmatprep.subr.mxu0 0.0
    %1863 = vmatpush1.msra.mxu0 %v1855
    %1864 = vmatprep.subr.mxu0 0.0
    %1865 = vmatpush1.msra.mxu0 0.0
    %1866 = vmatprep.subr.mxu0 0.0
    %1867 = vmatpush1.msra.mxu0 0.0
    %1868 = vmatprep.subr.mxu0 0.0
    %1869 = vmatpush1.msra.mxu0 0.0
    %1870 = vmatprep.subr.mxu0 0.0
    %1871 = vmatpush1.msra.mxu0 0.0
    %1872 = vmatprep.subr.mxu0 0.0
    %1873 = vmatpush1.msra.mxu0 0.0
    %1874 = vmatprep.subr.mxu0 0.0
    %1875 = vmatpush1.msra.mxu0 0.0
    %1876 = vmatprep.subr.mxu0 0.0
    %1877 = vmatpush1.msra.mxu0 0.0
    %1878 = vmatprep.subr.mxu0 0.0
    %1879 = vmatpush1.msra.mxu0 0.0
    %1880 = vmatprep.subr.mxu0 0.0
    %1881 = vmatpush1.msra.mxu0 0.0
    %1882 = vmatprep.subr.mxu0 0.0
    %1883 = vmatpush1.msra.mxu0 0.0
    %1884 = vmatprep.subr.mxu0 0.0
    %1885 = vmatpush1.msra.mxu0 0.0
    %1886 = vmatprep.subr.mxu0 0.0
    %1887 = vmatpush1.msra.mxu0 0.0
    %1888 = vmatprep.subr.mxu0 0.0
    %1889 = vmatpush1.msra.mxu0 0.0
    %1890 = vmatprep.subr.mxu0 0.0
    %1891 = vmatpush1.msra.mxu0 0.0
    %1892 = vmatprep.subr.mxu0 0.0
    %1893 = vmatpush1.msra.mxu0 0.0
    %1894 = vmatprep.subr.mxu0 0.0
    %1895 = vmatpush1.msra.mxu0 0.0
    %1896 = vmatprep.subr.mxu0 0.0
    %1897 = vmatpush1.msra.mxu0 0.0
    %1898 = vmatprep.subr.mxu0 0.0
    %1899 = vmatpush1.msra.mxu0 0.0
    %1900 = vmatprep.subr.mxu0 0.0
    %1901 = vmatpush1.msra.mxu0 0.0
    %1902 = vmatprep.subr.mxu0 0.0
    %1903 = vmatpush1.msra.mxu0 0.0
    %1904 = vmatprep.subr.mxu0 0.0
    %1905 = vmatpush1.msra.mxu0 0.0
    %1906 = vmatprep.subr.mxu0 0.0
    %1907 = vmatpush1.msra.mxu0 0.0
    %1908 = vmatprep.subr.mxu0 0.0
    %1909 = vmatpush1.msra.mxu0 0.0
    %1910 = vmatprep.subr.mxu0 0.0
    %1911 = vmatpush1.msra.mxu0 0.0
    %1912 = vmatprep.subr.mxu0 0.0
    %1913 = vmatpush1.msra.mxu0 0.0
    %1914 = vmatprep.subr.mxu0 0.0
    %1915 = vmatpush1.msra.mxu0 0.0
    %1916 = vmatprep.subr.mxu0 0.0
    %1917 = vmatpush1.msra.mxu0 0.0
    %1918 = vmatprep.subr.mxu0 0.0
    %1919 = vmatpush1.msra.mxu0 0.0
    %1920 = vmatprep.mubr.f32.mxu0 0.0
    %1921 = vmatmul.mubr.f32.gmra.mrb[0].mxu0 %v221
    %v1922 = vpop.f32.mrb[0].mxu0
    %v1923 = vadd.f32 0.0, %v1922
    %v1924 = vpop.f32.mrb[0].mxu0
    %1925 = vmatprep.mubr.f32.mxu0 0.0
    %1926 = vmatmul.mubr.f32.gmra.mrb[0].mxu0 %v223
    %v1927 = vpop.f32.mrb[0].mxu0
    %v1928 = vadd.f32 0.0, %v1927
    %v1929 = vpop.f32.mrb[0].mxu0
    %1930 = vdwg.mxu0
    %s1931 = scalar_lea.vmem %s4, 32
    %v1932 = vld [vmem:[%s1931] sm:$0xff]
    %v1933 = vld [vmem:[%s1931 + $0x8] sm:$0xff]
    %v1934 = vld [vmem:[%s1931 + $0x10] sm:$0xff]
    %v1935 = vld [vmem:[%s1931 + $0x18] sm:$0xff]
    %1936 = vmatprep.subr.mxu0 0.0
    %1937 = vmatpush1.msra.mxu0 %v1932
    %1938 = vmatprep.subr.mxu0 0.0
    %1939 = vmatpush1.msra.mxu0 %v1933
    %1940 = vmatprep.subr.mxu0 0.0
    %1941 = vmatpush1.msra.mxu0 %v1934
    %1942 = vmatprep.subr.mxu0 0.0
    %1943 = vmatpush1.msra.mxu0 %v1935
    %1944 = vmatprep.subr.mxu0 0.0
    %1945 = vmatpush1.msra.mxu0 0.0
    %1946 = vmatprep.subr.mxu0 0.0
    %1947 = vmatpush1.msra.mxu0 0.0
    %1948 = vmatprep.subr.mxu0 0.0
    %1949 = vmatpush1.msra.mxu0 0.0
    %1950 = vmatprep.subr.mxu0 0.0
    %1951 = vmatpush1.msra.mxu0 0.0
    %1952 = vmatprep.subr.mxu0 0.0
    %1953 = vmatpush1.msra.mxu0 0.0
    %1954 = vmatprep.subr.mxu0 0.0
    %1955 = vmatpush1.msra.mxu0 0.0
    %1956 = vmatprep.subr.mxu0 0.0
    %1957 = vmatpush1.msra.mxu0 0.0
    %1958 = vmatprep.subr.mxu0 0.0
    %1959 = vmatpush1.msra.mxu0 0.0
    %1960 = vmatprep.subr.mxu0 0.0
    %1961 = vmatpush1.msra.mxu0 0.0
    %1962 = vmatprep.subr.mxu0 0.0
    %1963 = vmatpush1.msra.mxu0 0.0
    %1964 = vmatprep.subr.mxu0 0.0
    %1965 = vmatpush1.msra.mxu0 0.0
    %1966 = vmatprep.subr.mxu0 0.0
    %1967 = vmatpush1.msra.mxu0 0.0
    %1968 = vmatprep.subr.mxu0 0.0
    %1969 = vmatpush1.msra.mxu0 0.0
    %1970 = vmatprep.subr.mxu0 0.0
    %1971 = vmatpush1.msra.mxu0 0.0
    %1972 = vmatprep.subr.mxu0 0.0
    %1973 = vmatpush1.msra.mxu0 0.0
    %1974 = vmatprep.subr.mxu0 0.0
    %1975 = vmatpush1.msra.mxu0 0.0
    %1976 = vmatprep.subr.mxu0 0.0
    %1977 = vmatpush1.msra.mxu0 0.0
    %1978 = vmatprep.subr.mxu0 0.0
    %1979 = vmatpush1.msra.mxu0 0.0
    %1980 = vmatprep.subr.mxu0 0.0
    %1981 = vmatpush1.msra.mxu0 0.0
    %1982 = vmatprep.subr.mxu0 0.0
    %1983 = vmatpush1.msra.mxu0 0.0
    %1984 = vmatprep.subr.mxu0 0.0
    %1985 = vmatpush1.msra.mxu0 0.0
    %1986 = vmatprep.subr.mxu0 0.0
    %1987 = vmatpush1.msra.mxu0 0.0
    %1988 = vmatprep.subr.mxu0 0.0
    %1989 = vmatpush1.msra.mxu0 0.0
    %1990 = vmatprep.subr.mxu0 0.0
    %1991 = vmatpush1.msra.mxu0 0.0
    %1992 = vmatprep.subr.mxu0 0.0
    %1993 = vmatpush1.msra.mxu0 0.0
    %1994 = vmatprep.subr.mxu0 0.0
    %1995 = vmatpush1.msra.mxu0 0.0
    %1996 = vmatprep.subr.mxu0 0.0
    %1997 = vmatpush1.msra.mxu0 0.0
    %1998 = vmatprep.subr.mxu0 0.0
    %1999 = vmatpush1.msra.mxu0 0.0
    %2000 = vmatprep.mubr.f32.mxu0 0.0
    %2001 = vmatmul.mubr.f32.gmra.mrb[0].mxu0 %v221
    %v2002 = vpop.f32.mrb[0].mxu0
    %v2003 = vadd.f32 0.0, %v2002
    %v2004 = vpop.f32.mrb[0].mxu0
    %2005 = vmatprep.mubr.f32.mxu0 0.0
    %2006 = vmatmul.mubr.f32.gmra.mrb[0].mxu0 %v223
    %v2007 = vpop.f32.mrb[0].mxu0
    %v2008 = vadd.f32 0.0, %v2007
    %v2009 = vpop.f32.mrb[0].mxu0
    %2010 = vdwg.mxu0
    %s2011 = scalar_lea.vmem %s5, 32
    %v2012 = vld [vmem:[%s2011] sm:$0xff]
    %v2013 = vld [vmem:[%s2011 + $0x8] sm:$0xff]
    %v2014 = vld [vmem:[%s2011 + $0x10] sm:$0xff]
    %v2015 = vld [vmem:[%s2011 + $0x18] sm:$0xff]
    %2016 = vmatprep.subr.mxu0 0.0
    %2017 = vmatpush1.msra.mxu0 %v2012
    %2018 = vmatprep.subr.mxu0 0.0
    %2019 = vmatpush1.msra.mxu0 %v2013
    %2020 = vmatprep.subr.mxu0 0.0
    %2021 = vmatpush1.msra.mxu0 %v2014
    %2022 = vmatprep.subr.mxu0 0.0
    %2023 = vmatpush1.msra.mxu0 %v2015
    %2024 = vmatprep.subr.mxu0 0.0
    %2025 = vmatpush1.msra.mxu0 0.0
    %2026 = vmatprep.subr.mxu0 0.0
    %2027 = vmatpush1.msra.mxu0 0.0
    %2028 = vmatprep.subr.mxu0 0.0
    %2029 = vmatpush1.msra.mxu0 0.0
    %2030 = vmatprep.subr.mxu0 0.0
    %2031 = vmatpush1.msra.mxu0 0.0
    %2032 = vmatprep.subr.mxu0 0.0
    %2033 = vmatpush1.msra.mxu0 0.0
    %2034 = vmatprep.subr.mxu0 0.0
    %2035 = vmatpush1.msra.mxu0 0.0
    %2036 = vmatprep.subr.mxu0 0.0
    %2037 = vmatpush1.msra.mxu0 0.0
    %2038 = vmatprep.subr.mxu0 0.0
    %2039 = vmatpush1.msra.mxu0 0.0
    %2040 = vmatprep.subr.mxu0 0.0
    %2041 = vmatpush1.msra.mxu0 0.0
    %2042 = vmatprep.subr.mxu0 0.0
    %2043 = vmatpush1.msra.mxu0 0.0
    %2044 = vmatprep.subr.mxu0 0.0
    %2045 = vmatpush1.msra.mxu0 0.0
    %2046 = vmatprep.subr.mxu0 0.0
    %2047 = vmatpush1.msra.mxu0 0.0
    %2048 = vmatprep.subr.mxu0 0.0
    %2049 = vmatpush1.msra.mxu0 0.0
    %2050 = vmatprep.subr.mxu0 0.0
    %2051 = vmatpush1.msra.mxu0 0.0
    %2052 = vmatprep.subr.mxu0 0.0
    %2053 = vmatpush1.msra.mxu0 0.0
    %2054 = vmatprep.subr.mxu0 0.0
    %2055 = vmatpush1.msra.mxu0 0.0
    %2056 = vmatprep.subr.mxu0 0.0
    %2057 = vmatpush1.msra.mxu0 0.0
    %2058 = vmatprep.subr.mxu0 0.0
    %2059 = vmatpush1.msra.mxu0 0.0
    %2060 = vmatprep.subr.mxu0 0.0
    %2061 = vmatpush1.msra.mxu0 0.0
    %2062 = vmatprep.subr.mxu0 0.0
    %2063 = vmatpush1.msra.mxu0 0.0
    %2064 = vmatprep.subr.mxu0 0.0
    %2065 = vmatpush1.msra.mxu0 0.0
    %2066 = vmatprep.subr.mxu0 0.0
    %2067 = vmatpush1.msra.mxu0 0.0
    %2068 = vmatprep.subr.mxu0 0.0
    %2069 = vmatpush1.msra.mxu0 0.0
    %2070 = vmatprep.subr.mxu0 0.0
    %2071 = vmatpush1.msra.mxu0 0.0
    %2072 = vmatprep.subr.mxu0 0.0
    %2073 = vmatpush1.msra.mxu0 0.0
    %2074 = vmatprep.subr.mxu0 0.0
    %2075 = vmatpush1.msra.mxu0 0.0
    %2076 = vmatprep.subr.mxu0 0.0
    %2077 = vmatpush1.msra.mxu0 0.0
    %2078 = vmatprep.subr.mxu0 0.0
    %2079 = vmatpush1.msra.mxu0 0.0
    %2080 = vmatprep.mubr.f32.mxu0 0.0
    %2081 = vmatmul.mubr.f32.gmra.mrb[0].mxu0 %v221
    %v2082 = vpop.f32.mrb[0].mxu0
    %v2083 = vadd.f32 0.0, %v2082
    %v2084 = vpop.f32.mrb[0].mxu0
    %2085 = vmatprep.mubr.f32.mxu0 0.0
    %2086 = vmatmul.mubr.f32.gmra.mrb[0].mxu0 %v223
    %v2087 = vpop.f32.mrb[0].mxu0
    %v2088 = vadd.f32 0.0, %v2087
    %v2089 = vpop.f32.mrb[0].mxu0
    %2090 = vdwg.mxu0
    %v2093 = vcombine.high %v1923, %v1923
    %v2095 = vunpack.c.l.s4 1983009808
    %v2096 = vunpack.c.0.s8 %v2095
    %v2097 = vlaneseq
    %v2098 = vshrl.u32 %v2097, 7
    %v2099 = vsub.s32 %v2096, %v2098
    %v2100 = vrot.slane %v1923, %v2099
    %v2102 = vunpack.c.l.s4 1983009808
    %v2103 = vunpack.c.0.s8 %v2102
    %v2104 = vlaneseq
    %v2105 = vshrl.u32 %v2104, 7
    %v2106 = vsub.s32 %v2103, %v2105
    %v2107 = vrot.slane %v2093, %v2106
    %v2108 = vcombine.high %v2100, %v2100
    %v2109 = vcombine.high %v2107, %v2107
    %v2110 = vcombine.high %v1928, %v1928
    %v2112 = vunpack.c.l.s4 1983009808
    %v2113 = vunpack.c.0.s8 %v2112
    %v2114 = vlaneseq
    %v2115 = vshrl.u32 %v2114, 7
    %v2116 = vsub.s32 %v2113, %v2115
    %v2117 = vrot.slane %v1928, %v2116
    %v2119 = vunpack.c.l.s4 1983009808
    %v2120 = vunpack.c.0.s8 %v2119
    %v2121 = vlaneseq
    %v2122 = vshrl.u32 %v2121, 7
    %v2123 = vsub.s32 %v2120, %v2122
    %v2124 = vrot.slane %v2110, %v2123
    %v2125 = vcombine.high %v2117, %v2117
    %v2126 = vcombine.high %v2124, %v2124
    %v2129 = vcombine.high %v2003, %v2003
    %v2131 = vunpack.c.l.s4 1983009808
    %v2132 = vunpack.c.0.s8 %v2131
    %v2133 = vlaneseq
    %v2134 = vshrl.u32 %v2133, 7
    %v2135 = vsub.s32 %v2132, %v2134
    %v2136 = vrot.slane %v2003, %v2135
    %v2138 = vunpack.c.l.s4 1983009808
    %v2139 = vunpack.c.0.s8 %v2138
    %v2140 = vlaneseq
    %v2141 = vshrl.u32 %v2140, 7
    %v2142 = vsub.s32 %v2139, %v2141
    %v2143 = vrot.slane %v2129, %v2142
    %v2144 = vcombine.high %v2136, %v2136
    %v2145 = vcombine.high %v2143, %v2143
    %v2146 = vcombine.high %v2008, %v2008
    %v2148 = vunpack.c.l.s4 1983009808
    %v2149 = vunpack.c.0.s8 %v2148
    %v2150 = vlaneseq
    %v2151 = vshrl.u32 %v2150, 7
    %v2152 = vsub.s32 %v2149, %v2151
    %v2153 = vrot.slane %v2008, %v2152
    %v2155 = vunpack.c.l.s4 1983009808
    %v2156 = vunpack.c.0.s8 %v2155
    %v2157 = vlaneseq
    %v2158 = vshrl.u32 %v2157, 7
    %v2159 = vsub.s32 %v2156, %v2158
    %v2160 = vrot.slane %v2146, %v2159
    %v2161 = vcombine.high %v2153, %v2153
    %v2162 = vcombine.high %v2160, %v2160
    %v2165 = vcombine.high %v2083, %v2083
    %v2167 = vunpack.c.l.s4 1983009808
    %v2168 = vunpack.c.0.s8 %v2167
    %v2169 = vlaneseq
    %v2170 = vshrl.u32 %v2169, 7
    %v2171 = vsub.s32 %v2168, %v2170
    %v2172 = vrot.slane %v2083, %v2171
    %v2174 = vunpack.c.l.s4 1983009808
    %v2175 = vunpack.c.0.s8 %v2174
    %v2176 = vlaneseq
    %v2177 = vshrl.u32 %v2176, 7
    %v2178 = vsub.s32 %v2175, %v2177
    %v2179 = vrot.slane %v2165, %v2178
    %v2180 = vcombine.high %v2172, %v2172
    %v2181 = vcombine.high %v2179, %v2179
    %v2182 = vcombine.high %v2088, %v2088
    %v2184 = vunpack.c.l.s4 1983009808
    %v2185 = vunpack.c.0.s8 %v2184
    %v2186 = vlaneseq
    %v2187 = vshrl.u32 %v2186, 7
    %v2188 = vsub.s32 %v2185, %v2187
    %v2189 = vrot.slane %v2088, %v2188
    %v2191 = vunpack.c.l.s4 1983009808
    %v2192 = vunpack.c.0.s8 %v2191
    %v2193 = vlaneseq
    %v2194 = vshrl.u32 %v2193, 7
    %v2195 = vsub.s32 %v2192, %v2194
    %v2196 = vrot.slane %v2182, %v2195
    %v2197 = vcombine.high %v2189, %v2189
    %v2198 = vcombine.high %v2196, %v2196
    %v2199 = vsel %vm566, %v2100, 0
    %v2201 = vsel %vm566, %v2136, 0
    %2203 = vmatprep.subr.mxu0 0.0
    %2204 = vmatpush1.xpose.msra.mxu0 %v2201
    %2205 = vmatprep.subr.mxu0 0.0
    %2206 = vmatpush1.xpose.msra.mxu0 0.0
    %2207 = vmatprep.subr.mxu0 0.0
    %2208 = vmatpush1.xpose.msra.mxu0 0.0
    %2209 = vmatprep.subr.mxu0 0.0
    %2210 = vmatpush1.xpose.msra.mxu0 0.0
    %2211 = vmatprep.subr.mxu0 0.0
    %2212 = vmatpush1.xpose.msra.mxu0 0.0
    %2213 = vmatprep.subr.mxu0 0.0
    %2214 = vmatpush1.xpose.msra.mxu0 0.0
    %2215 = vmatprep.subr.mxu0 0.0
    %2216 = vmatpush1.xpose.msra.mxu0 0.0
    %2217 = vmatprep.subr.mxu0 0.0
    %2218 = vmatpush1.xpose.msra.mxu0 0.0
    %2219 = vmatprep.subr.mxu0 0.0
    %2220 = vmatpush1.xpose.msra.mxu0 0.0
    %2221 = vmatprep.subr.mxu0 0.0
    %2222 = vmatpush1.xpose.msra.mxu0 0.0
    %2223 = vmatprep.subr.mxu0 0.0
    %2224 = vmatpush1.xpose.msra.mxu0 0.0
    %2225 = vmatprep.subr.mxu0 0.0
    %2226 = vmatpush1.xpose.msra.mxu0 0.0
    %2227 = vmatprep.subr.mxu0 0.0
    %2228 = vmatpush1.xpose.msra.mxu0 0.0
    %2229 = vmatprep.subr.mxu0 0.0
    %2230 = vmatpush1.xpose.msra.mxu0 0.0
    %2231 = vmatprep.subr.mxu0 0.0
    %2232 = vmatpush1.xpose.msra.mxu0 0.0
    %2233 = vmatprep.subr.mxu0 0.0
    %2234 = vmatpush1.xpose.msra.mxu0 0.0
    %2235 = vmatprep.subr.mxu0 0.0
    %2236 = vmatpush1.xpose.msra.mxu0 0.0
    %2237 = vmatprep.subr.mxu0 0.0
    %2238 = vmatpush1.xpose.msra.mxu0 0.0
    %2239 = vmatprep.subr.mxu0 0.0
    %2240 = vmatpush1.xpose.msra.mxu0 0.0
    %2241 = vmatprep.subr.mxu0 0.0
    %2242 = vmatpush1.xpose.msra.mxu0 0.0
    %2243 = vmatprep.subr.mxu0 0.0
    %2244 = vmatpush1.xpose.msra.mxu0 0.0
    %2245 = vmatprep.subr.mxu0 0.0
    %2246 = vmatpush1.xpose.msra.mxu0 0.0
    %2247 = vmatprep.subr.mxu0 0.0
    %2248 = vmatpush1.xpose.msra.mxu0 0.0
    %2249 = vmatprep.subr.mxu0 0.0
    %2250 = vmatpush1.xpose.msra.mxu0 0.0
    %2251 = vmatprep.subr.mxu0 0.0
    %2252 = vmatpush1.xpose.msra.mxu0 0.0
    %2253 = vmatprep.subr.mxu0 0.0
    %2254 = vmatpush1.xpose.msra.mxu0 0.0
    %2255 = vmatprep.subr.mxu0 0.0
    %2256 = vmatpush1.xpose.msra.mxu0 0.0
    %2257 = vmatprep.subr.mxu0 0.0
    %2258 = vmatpush1.xpose.msra.mxu0 0.0
    %2259 = vmatprep.subr.mxu0 0.0
    %2260 = vmatpush1.xpose.msra.mxu0 0.0
    %2261 = vmatprep.subr.mxu0 0.0
    %2262 = vmatpush1.xpose.msra.mxu0 0.0
    %2263 = vmatprep.subr.mxu0 0.0
    %2264 = vmatpush1.xpose.msra.mxu0 0.0
    %2265 = vmatprep.subr.mxu0 0.0
    %2266 = vmatpush1.xpose.msra.mxu0 0.0
    %2267 = vmatprep.mubr.f32.mxu0 0.0
    %2268 = vmatmul.mubr.f32.gmra.mrb[0].mxu0 %v2199
    %v2269 = vpop.f32.mrb[0].mxu0
    %v2270 = vadd.f32 0.0, %v2269
    %v2271 = vpop.f32.mrb[0].mxu0
    %2272 = vdwg.mxu0
    %v2273 = vsel %vm566, %v2108, 0
    %v2275 = vsel %vm566, %v2144, 0
    %2277 = vmatprep.subr.mxu0 0.0
    %2278 = vmatpush1.xpose.msra.mxu0 %v2275
    %2279 = vmatprep.subr.mxu0 0.0
    %2280 = vmatpush1.xpose.msra.mxu0 0.0
    %2281 = vmatprep.subr.mxu0 0.0
    %2282 = vmatpush1.xpose.msra.mxu0 0.0
    %2283 = vmatprep.subr.mxu0 0.0
    %2284 = vmatpush1.xpose.msra.mxu0 0.0
    %2285 = vmatprep.subr.mxu0 0.0
    %2286 = vmatpush1.xpose.msra.mxu0 0.0
    %2287 = vmatprep.subr.mxu0 0.0
    %2288 = vmatpush1.xpose.msra.mxu0 0.0
    %2289 = vmatprep.subr.mxu0 0.0
    %2290 = vmatpush1.xpose.msra.mxu0 0.0
    %2291 = vmatprep.subr.mxu0 0.0
    %2292 = vmatpush1.xpose.msra.mxu0 0.0
    %2293 = vmatprep.subr.mxu0 0.0
    %2294 = vmatpush1.xpose.msra.mxu0 0.0
    %2295 = vmatprep.subr.mxu0 0.0
    %2296 = vmatpush1.xpose.msra.mxu0 0.0
    %2297 = vmatprep.subr.mxu0 0.0
    %2298 = vmatpush1.xpose.msra.mxu0 0.0
    %2299 = vmatprep.subr.mxu0 0.0
    %2300 = vmatpush1.xpose.msra.mxu0 0.0
    %2301 = vmatprep.subr.mxu0 0.0
    %2302 = vmatpush1.xpose.msra.mxu0 0.0
    %2303 = vmatprep.subr.mxu0 0.0
    %2304 = vmatpush1.xpose.msra.mxu0 0.0
    %2305 = vmatprep.subr.mxu0 0.0
    %2306 = vmatpush1.xpose.msra.mxu0 0.0
    %2307 = vmatprep.subr.mxu0 0.0
    %2308 = vmatpush1.xpose.msra.mxu0 0.0
    %2309 = vmatprep.subr.mxu0 0.0
    %2310 = vmatpush1.xpose.msra.mxu0 0.0
    %2311 = vmatprep.subr.mxu0 0.0
    %2312 = vmatpush1.xpose.msra.mxu0 0.0
    %2313 = vmatprep.subr.mxu0 0.0
    %2314 = vmatpush1.xpose.msra.mxu0 0.0
    %2315 = vmatprep.subr.mxu0 0.0
    %2316 = vmatpush1.xpose.msra.mxu0 0.0
    %2317 = vmatprep.subr.mxu0 0.0
    %2318 = vmatpush1.xpose.msra.mxu0 0.0
    %2319 = vmatprep.subr.mxu0 0.0
    %2320 = vmatpush1.xpose.msra.mxu0 0.0
    %2321 = vmatprep.subr.mxu0 0.0
    %2322 = vmatpush1.xpose.msra.mxu0 0.0
    %2323 = vmatprep.subr.mxu0 0.0
    %2324 = vmatpush1.xpose.msra.mxu0 0.0
    %2325 = vmatprep.subr.mxu0 0.0
    %2326 = vmatpush1.xpose.msra.mxu0 0.0
    %2327 = vmatprep.subr.mxu0 0.0
    %2328 = vmatpush1.xpose.msra.mxu0 0.0
    %2329 = vmatprep.subr.mxu0 0.0
    %2330 = vmatpush1.xpose.msra.mxu0 0.0
    %2331 = vmatprep.subr.mxu0 0.0
    %2332 = vmatpush1.xpose.msra.mxu0 0.0
    %2333 = vmatprep.subr.mxu0 0.0
    %2334 = vmatpush1.xpose.msra.mxu0 0.0
    %2335 = vmatprep.subr.mxu0 0.0
    %2336 = vmatpush1.xpose.msra.mxu0 0.0
    %2337 = vmatprep.subr.mxu0 0.0
    %2338 = vmatpush1.xpose.msra.mxu0 0.0
    %2339 = vmatprep.subr.mxu0 0.0
    %2340 = vmatpush1.xpose.msra.mxu0 0.0
    %2341 = vmatprep.mubr.f32.mxu0 0.0
    %2342 = vmatmul.mubr.f32.gmra.mrb[0].mxu0 %v2273
    %v2343 = vpop.f32.mrb[0].mxu0
    %v2344 = vadd.f32 0.0, %v2343
    %v2345 = vpop.f32.mrb[0].mxu0
    %2346 = vdwg.mxu0
    %v2347 = vsel %vm566, %v2107, 0
    %v2349 = vsel %vm566, %v2143, 0
    %2351 = vmatprep.subr.mxu0 0.0
    %2352 = vmatpush1.xpose.msra.mxu0 %v2349
    %2353 = vmatprep.subr.mxu0 0.0
    %2354 = vmatpush1.xpose.msra.mxu0 0.0
    %2355 = vmatprep.subr.mxu0 0.0
    %2356 = vmatpush1.xpose.msra.mxu0 0.0
    %2357 = vmatprep.subr.mxu0 0.0
    %2358 = vmatpush1.xpose.msra.mxu0 0.0
    %2359 = vmatprep.subr.mxu0 0.0
    %2360 = vmatpush1.xpose.msra.mxu0 0.0
    %2361 = vmatprep.subr.mxu0 0.0
    %2362 = vmatpush1.xpose.msra.mxu0 0.0
    %2363 = vmatprep.subr.mxu0 0.0
    %2364 = vmatpush1.xpose.msra.mxu0 0.0
    %2365 = vmatprep.subr.mxu0 0.0
    %2366 = vmatpush1.xpose.msra.mxu0 0.0
    %2367 = vmatprep.subr.mxu0 0.0
    %2368 = vmatpush1.xpose.msra.mxu0 0.0
    %2369 = vmatprep.subr.mxu0 0.0
    %2370 = vmatpush1.xpose.msra.mxu0 0.0
    %2371 = vmatprep.subr.mxu0 0.0
    %2372 = vmatpush1.xpose.msra.mxu0 0.0
    %2373 = vmatprep.subr.mxu0 0.0
    %2374 = vmatpush1.xpose.msra.mxu0 0.0
    %2375 = vmatprep.subr.mxu0 0.0
    %2376 = vmatpush1.xpose.msra.mxu0 0.0
    %2377 = vmatprep.subr.mxu0 0.0
    %2378 = vmatpush1.xpose.msra.mxu0 0.0
    %2379 = vmatprep.subr.mxu0 0.0
    %2380 = vmatpush1.xpose.msra.mxu0 0.0
    %2381 = vmatprep.subr.mxu0 0.0
    %2382 = vmatpush1.xpose.msra.mxu0 0.0
    %2383 = vmatprep.subr.mxu0 0.0
    %2384 = vmatpush1.xpose.msra.mxu0 0.0
    %2385 = vmatprep.subr.mxu0 0.0
    %2386 = vmatpush1.xpose.msra.mxu0 0.0
    %2387 = vmatprep.subr.mxu0 0.0
    %2388 = vmatpush1.xpose.msra.mxu0 0.0
    %2389 = vmatprep.subr.mxu0 0.0
    %2390 = vmatpush1.xpose.msra.mxu0 0.0
    %2391 = vmatprep.subr.mxu0 0.0
    %2392 = vmatpush1.xpose.msra.mxu0 0.0
    %2393 = vmatprep.subr.mxu0 0.0
    %2394 = vmatpush1.xpose.msra.mxu0 0.0
    %2395 = vmatprep.subr.mxu0 0.0
    %2396 = vmatpush1.xpose.msra.mxu0 0.0
    %2397 = vmatprep.subr.mxu0 0.0
    %2398 = vmatpush1.xpose.msra.mxu0 0.0
    %2399 = vmatprep.subr.mxu0 0.0
    %2400 = vmatpush1.xpose.msra.mxu0 0.0
    %2401 = vmatprep.subr.mxu0 0.0
    %2402 = vmatpush1.xpose.msra.mxu0 0.0
    %2403 = vmatprep.subr.mxu0 0.0
    %2404 = vmatpush1.xpose.msra.mxu0 0.0
    %2405 = vmatprep.subr.mxu0 0.0
    %2406 = vmatpush1.xpose.msra.mxu0 0.0
    %2407 = vmatprep.subr.mxu0 0.0
    %2408 = vmatpush1.xpose.msra.mxu0 0.0
    %2409 = vmatprep.subr.mxu0 0.0
    %2410 = vmatpush1.xpose.msra.mxu0 0.0
    %2411 = vmatprep.subr.mxu0 0.0
    %2412 = vmatpush1.xpose.msra.mxu0 0.0
    %2413 = vmatprep.subr.mxu0 0.0
    %2414 = vmatpush1.xpose.msra.mxu0 0.0
    %2415 = vmatprep.mubr.f32.mxu0 0.0
    %2416 = vmatmul.mubr.f32.gmra.mrb[0].mxu0 %v2347
    %v2417 = vpop.f32.mrb[0].mxu0
    %v2418 = vadd.f32 0.0, %v2417
    %v2419 = vpop.f32.mrb[0].mxu0
    %2420 = vdwg.mxu0
    %v2421 = vsel %vm566, %v2109, 0
    %v2423 = vsel %vm566, %v2145, 0
    %2425 = vmatprep.subr.mxu0 0.0
    %2426 = vmatpush1.xpose.msra.mxu0 %v2423
    %2427 = vmatprep.subr.mxu0 0.0
    %2428 = vmatpush1.xpose.msra.mxu0 0.0
    %2429 = vmatprep.subr.mxu0 0.0
    %2430 = vmatpush1.xpose.msra.mxu0 0.0
    %2431 = vmatprep.subr.mxu0 0.0
    %2432 = vmatpush1.xpose.msra.mxu0 0.0
    %2433 = vmatprep.subr.mxu0 0.0
    %2434 = vmatpush1.xpose.msra.mxu0 0.0
    %2435 = vmatprep.subr.mxu0 0.0
    %2436 = vmatpush1.xpose.msra.mxu0 0.0
    %2437 = vmatprep.subr.mxu0 0.0
    %2438 = vmatpush1.xpose.msra.mxu0 0.0
    %2439 = vmatprep.subr.mxu0 0.0
    %2440 = vmatpush1.xpose.msra.mxu0 0.0
    %2441 = vmatprep.subr.mxu0 0.0
    %2442 = vmatpush1.xpose.msra.mxu0 0.0
    %2443 = vmatprep.subr.mxu0 0.0
    %2444 = vmatpush1.xpose.msra.mxu0 0.0
    %2445 = vmatprep.subr.mxu0 0.0
    %2446 = vmatpush1.xpose.msra.mxu0 0.0
    %2447 = vmatprep.subr.mxu0 0.0
    %2448 = vmatpush1.xpose.msra.mxu0 0.0
    %2449 = vmatprep.subr.mxu0 0.0
    %2450 = vmatpush1.xpose.msra.mxu0 0.0
    %2451 = vmatprep.subr.mxu0 0.0
    %2452 = vmatpush1.xpose.msra.mxu0 0.0
    %2453 = vmatprep.subr.mxu0 0.0
    %2454 = vmatpush1.xpose.msra.mxu0 0.0
    %2455 = vmatprep.subr.mxu0 0.0
    %2456 = vmatpush1.xpose.msra.mxu0 0.0
    %2457 = vmatprep.subr.mxu0 0.0
    %2458 = vmatpush1.xpose.msra.mxu0 0.0
    %2459 = vmatprep.subr.mxu0 0.0
    %2460 = vmatpush1.xpose.msra.mxu0 0.0
    %2461 = vmatprep.subr.mxu0 0.0
    %2462 = vmatpush1.xpose.msra.mxu0 0.0
    %2463 = vmatprep.subr.mxu0 0.0
    %2464 = vmatpush1.xpose.msra.mxu0 0.0
    %2465 = vmatprep.subr.mxu0 0.0
    %2466 = vmatpush1.xpose.msra.mxu0 0.0
    %2467 = vmatprep.subr.mxu0 0.0
    %2468 = vmatpush1.xpose.msra.mxu0 0.0
    %2469 = vmatprep.subr.mxu0 0.0
    %2470 = vmatpush1.xpose.msra.mxu0 0.0
    %2471 = vmatprep.subr.mxu0 0.0
    %2472 = vmatpush1.xpose.msra.mxu0 0.0
    %2473 = vmatprep.subr.mxu0 0.0
    %2474 = vmatpush1.xpose.msra.mxu0 0.0
    %2475 = vmatprep.subr.mxu0 0.0
    %2476 = vmatpush1.xpose.msra.mxu0 0.0
    %2477 = vmatprep.subr.mxu0 0.0
    %2478 = vmatpush1.xpose.msra.mxu0 0.0
    %2479 = vmatprep.subr.mxu0 0.0
    %2480 = vmatpush1.xpose.msra.mxu0 0.0
    %2481 = vmatprep.subr.mxu0 0.0
    %2482 = vmatpush1.xpose.msra.mxu0 0.0
    %2483 = vmatprep.subr.mxu0 0.0
    %2484 = vmatpush1.xpose.msra.mxu0 0.0
    %2485 = vmatprep.subr.mxu0 0.0
    %2486 = vmatpush1.xpose.msra.mxu0 0.0
    %2487 = vmatprep.subr.mxu0 0.0
    %2488 = vmatpush1.xpose.msra.mxu0 0.0
    %2489 = vmatprep.mubr.f32.mxu0 0.0
    %2490 = vmatmul.mubr.f32.gmra.mrb[0].mxu0 %v2421
    %v2491 = vpop.f32.mrb[0].mxu0
    %v2492 = vadd.f32 0.0, %v2491
    %v2493 = vpop.f32.mrb[0].mxu0
    %2494 = vdwg.mxu0
    %v2495 = vsel %vm566, %v2117, 0
    %v2497 = vsel %vm566, %v2153, 0
    %2499 = vmatprep.subr.mxu0 0.0
    %2500 = vmatpush1.xpose.msra.mxu0 %v2497
    %2501 = vmatprep.subr.mxu0 0.0
    %2502 = vmatpush1.xpose.msra.mxu0 0.0
    %2503 = vmatprep.subr.mxu0 0.0
    %2504 = vmatpush1.xpose.msra.mxu0 0.0
    %2505 = vmatprep.subr.mxu0 0.0
    %2506 = vmatpush1.xpose.msra.mxu0 0.0
    %2507 = vmatprep.subr.mxu0 0.0
    %2508 = vmatpush1.xpose.msra.mxu0 0.0
    %2509 = vmatprep.subr.mxu0 0.0
    %2510 = vmatpush1.xpose.msra.mxu0 0.0
    %2511 = vmatprep.subr.mxu0 0.0
    %2512 = vmatpush1.xpose.msra.mxu0 0.0
    %2513 = vmatprep.subr.mxu0 0.0
    %2514 = vmatpush1.xpose.msra.mxu0 0.0
    %2515 = vmatprep.subr.mxu0 0.0
    %2516 = vmatpush1.xpose.msra.mxu0 0.0
    %2517 = vmatprep.subr.mxu0 0.0
    %2518 = vmatpush1.xpose.msra.mxu0 0.0
    %2519 = vmatprep.subr.mxu0 0.0
    %2520 = vmatpush1.xpose.msra.mxu0 0.0
    %2521 = vmatprep.subr.mxu0 0.0
    %2522 = vmatpush1.xpose.msra.mxu0 0.0
    %2523 = vmatprep.subr.mxu0 0.0
    %2524 = vmatpush1.xpose.msra.mxu0 0.0
    %2525 = vmatprep.subr.mxu0 0.0
    %2526 = vmatpush1.xpose.msra.mxu0 0.0
    %2527 = vmatprep.subr.mxu0 0.0
    %2528 = vmatpush1.xpose.msra.mxu0 0.0
    %2529 = vmatprep.subr.mxu0 0.0
    %2530 = vmatpush1.xpose.msra.mxu0 0.0
    %2531 = vmatprep.subr.mxu0 0.0
    %2532 = vmatpush1.xpose.msra.mxu0 0.0
    %2533 = vmatprep.subr.mxu0 0.0
    %2534 = vmatpush1.xpose.msra.mxu0 0.0
    %2535 = vmatprep.subr.mxu0 0.0
    %2536 = vmatpush1.xpose.msra.mxu0 0.0
    %2537 = vmatprep.subr.mxu0 0.0
    %2538 = vmatpush1.xpose.msra.mxu0 0.0
    %2539 = vmatprep.subr.mxu0 0.0
    %2540 = vmatpush1.xpose.msra.mxu0 0.0
    %2541 = vmatprep.subr.mxu0 0.0
    %2542 = vmatpush1.xpose.msra.mxu0 0.0
    %2543 = vmatprep.subr.mxu0 0.0
    %2544 = vmatpush1.xpose.msra.mxu0 0.0
    %2545 = vmatprep.subr.mxu0 0.0
    %2546 = vmatpush1.xpose.msra.mxu0 0.0
    %2547 = vmatprep.subr.mxu0 0.0
    %2548 = vmatpush1.xpose.msra.mxu0 0.0
    %2549 = vmatprep.subr.mxu0 0.0
    %2550 = vmatpush1.xpose.msra.mxu0 0.0
    %2551 = vmatprep.subr.mxu0 0.0
    %2552 = vmatpush1.xpose.msra.mxu0 0.0
    %2553 = vmatprep.subr.mxu0 0.0
    %2554 = vmatpush1.xpose.msra.mxu0 0.0
    %2555 = vmatprep.subr.mxu0 0.0
    %2556 = vmatpush1.xpose.msra.mxu0 0.0
    %2557 = vmatprep.subr.mxu0 0.0
    %2558 = vmatpush1.xpose.msra.mxu0 0.0
    %2559 = vmatprep.subr.mxu0 0.0
    %2560 = vmatpush1.xpose.msra.mxu0 0.0
    %2561 = vmatprep.subr.mxu0 0.0
    %2562 = vmatpush1.xpose.msra.mxu0 0.0
    %2563 = vmatprep.mubr.f32.mxu0 0.0
    %2564 = vmatmul.mubr.f32.gmra.mrb[0].mxu0 %v2495
    %v2565 = vpop.f32.mrb[0].mxu0
    %v2566 = vadd.f32 0.0, %v2565
    %v2567 = vpop.f32.mrb[0].mxu0
    %2568 = vdwg.mxu0
    %v2569 = vsel %vm566, %v2125, 0
    %v2571 = vsel %vm566, %v2161, 0
    %2573 = vmatprep.subr.mxu0 0.0
    %2574 = vmatpush1.xpose.msra.mxu0 %v2571
    %2575 = vmatprep.subr.mxu0 0.0
    %2576 = vmatpush1.xpose.msra.mxu0 0.0
    %2577 = vmatprep.subr.mxu0 0.0
    %2578 = vmatpush1.xpose.msra.mxu0 0.0
    %2579 = vmatprep.subr.mxu0 0.0
    %2580 = vmatpush1.xpose.msra.mxu0 0.0
    %2581 = vmatprep.subr.mxu0 0.0
    %2582 = vmatpush1.xpose.msra.mxu0 0.0
    %2583 = vmatprep.subr.mxu0 0.0
    %2584 = vmatpush1.xpose.msra.mxu0 0.0
    %2585 = vmatprep.subr.mxu0 0.0
    %2586 = vmatpush1.xpose.msra.mxu0 0.0
    %2587 = vmatprep.subr.mxu0 0.0
    %2588 = vmatpush1.xpose.msra.mxu0 0.0
    %2589 = vmatprep.subr.mxu0 0.0
    %2590 = vmatpush1.xpose.msra.mxu0 0.0
    %2591 = vmatprep.subr.mxu0 0.0
    %2592 = vmatpush1.xpose.msra.mxu0 0.0
    %2593 = vmatprep.subr.mxu0 0.0
    %2594 = vmatpush1.xpose.msra.mxu0 0.0
    %2595 = vmatprep.subr.mxu0 0.0
    %2596 = vmatpush1.xpose.msra.mxu0 0.0
    %2597 = vmatprep.subr.mxu0 0.0
    %2598 = vmatpush1.xpose.msra.mxu0 0.0
    %2599 = vmatprep.subr.mxu0 0.0
    %2600 = vmatpush1.xpose.msra.mxu0 0.0
    %2601 = vmatprep.subr.mxu0 0.0
    %2602 = vmatpush1.xpose.msra.mxu0 0.0
    %2603 = vmatprep.subr.mxu0 0.0
    %2604 = vmatpush1.xpose.msra.mxu0 0.0
    %2605 = vmatprep.subr.mxu0 0.0
    %2606 = vmatpush1.xpose.msra.mxu0 0.0
    %2607 = vmatprep.subr.mxu0 0.0
    %2608 = vmatpush1.xpose.msra.mxu0 0.0
    %2609 = vmatprep.subr.mxu0 0.0
    %2610 = vmatpush1.xpose.msra.mxu0 0.0
    %2611 = vmatprep.subr.mxu0 0.0
    %2612 = vmatpush1.xpose.msra.mxu0 0.0
    %2613 = vmatprep.subr.mxu0 0.0
    %2614 = vmatpush1.xpose.msra.mxu0 0.0
    %2615 = vmatprep.subr.mxu0 0.0
    %2616 = vmatpush1.xpose.msra.mxu0 0.0
    %2617 = vmatprep.subr.mxu0 0.0
    %2618 = vmatpush1.xpose.msra.mxu0 0.0
    %2619 = vmatprep.subr.mxu0 0.0
    %2620 = vmatpush1.xpose.msra.mxu0 0.0
    %2621 = vmatprep.subr.mxu0 0.0
    %2622 = vmatpush1.xpose.msra.mxu0 0.0
    %2623 = vmatprep.subr.mxu0 0.0
    %2624 = vmatpush1.xpose.msra.mxu0 0.0
    %2625 = vmatprep.subr.mxu0 0.0
    %2626 = vmatpush1.xpose.msra.mxu0 0.0
    %2627 = vmatprep.subr.mxu0 0.0
    %2628 = vmatpush1.xpose.msra.mxu0 0.0
    %2629 = vmatprep.subr.mxu0 0.0
    %2630 = vmatpush1.xpose.msra.mxu0 0.0
    %2631 = vmatprep.subr.mxu0 0.0
    %2632 = vmatpush1.xpose.msra.mxu0 0.0
    %2633 = vmatprep.subr.mxu0 0.0
    %2634 = vmatpush1.xpose.msra.mxu0 0.0
    %2635 = vmatprep.subr.mxu0 0.0
    %2636 = vmatpush1.xpose.msra.mxu0 0.0
    %2637 = vmatprep.mubr.f32.mxu0 0.0
    %2638 = vmatmul.mubr.f32.gmra.mrb[0].mxu0 %v2569
    %v2639 = vpop.f32.mrb[0].mxu0
    %v2640 = vadd.f32 0.0, %v2639
    %v2641 = vpop.f32.mrb[0].mxu0
    %2642 = vdwg.mxu0
    %v2643 = vsel %vm566, %v2124, 0
    %v2645 = vsel %vm566, %v2160, 0
    %2647 = vmatprep.subr.mxu0 0.0
    %2648 = vmatpush1.xpose.msra.mxu0 %v2645
    %2649 = vmatprep.subr.mxu0 0.0
    %2650 = vmatpush1.xpose.msra.mxu0 0.0
    %2651 = vmatprep.subr.mxu0 0.0
    %2652 = vmatpush1.xpose.msra.mxu0 0.0
    %2653 = vmatprep.subr.mxu0 0.0
    %2654 = vmatpush1.xpose.msra.mxu0 0.0
    %2655 = vmatprep.subr.mxu0 0.0
    %2656 = vmatpush1.xpose.msra.mxu0 0.0
    %2657 = vmatprep.subr.mxu0 0.0
    %2658 = vmatpush1.xpose.msra.mxu0 0.0
    %2659 = vmatprep.subr.mxu0 0.0
    %2660 = vmatpush1.xpose.msra.mxu0 0.0
    %2661 = vmatprep.subr.mxu0 0.0
    %2662 = vmatpush1.xpose.msra.mxu0 0.0
    %2663 = vmatprep.subr.mxu0 0.0
    %2664 = vmatpush1.xpose.msra.mxu0 0.0
    %2665 = vmatprep.subr.mxu0 0.0
    %2666 = vmatpush1.xpose.msra.mxu0 0.0
    %2667 = vmatprep.subr.mxu0 0.0
    %2668 = vmatpush1.xpose.msra.mxu0 0.0
    %2669 = vmatprep.subr.mxu0 0.0
    %2670 = vmatpush1.xpose.msra.mxu0 0.0
    %2671 = vmatprep.subr.mxu0 0.0
    %2672 = vmatpush1.xpose.msra.mxu0 0.0
    %2673 = vmatprep.subr.mxu0 0.0
    %2674 = vmatpush1.xpose.msra.mxu0 0.0
    %2675 = vmatprep.subr.mxu0 0.0
    %2676 = vmatpush1.xpose.msra.mxu0 0.0
    %2677 = vmatprep.subr.mxu0 0.0
    %2678 = vmatpush1.xpose.msra.mxu0 0.0
    %2679 = vmatprep.subr.mxu0 0.0
    %2680 = vmatpush1.xpose.msra.mxu0 0.0
    %2681 = vmatprep.subr.mxu0 0.0
    %2682 = vmatpush1.xpose.msra.mxu0 0.0
    %2683 = vmatprep.subr.mxu0 0.0
    %2684 = vmatpush1.xpose.msra.mxu0 0.0
    %2685 = vmatprep.subr.mxu0 0.0
    %2686 = vmatpush1.xpose.msra.mxu0 0.0
    %2687 = vmatprep.subr.mxu0 0.0
    %2688 = vmatpush1.xpose.msra.mxu0 0.0
    %2689 = vmatprep.subr.mxu0 0.0
    %2690 = vmatpush1.xpose.msra.mxu0 0.0
    %2691 = vmatprep.subr.mxu0 0.0
    %2692 = vmatpush1.xpose.msra.mxu0 0.0
    %2693 = vmatprep.subr.mxu0 0.0
    %2694 = vmatpush1.xpose.msra.mxu0 0.0
    %2695 = vmatprep.subr.mxu0 0.0
    %2696 = vmatpush1.xpose.msra.mxu0 0.0
    %2697 = vmatprep.subr.mxu0 0.0
    %2698 = vmatpush1.xpose.msra.mxu0 0.0
    %2699 = vmatprep.subr.mxu0 0.0
    %2700 = vmatpush1.xpose.msra.mxu0 0.0
    %2701 = vmatprep.subr.mxu0 0.0
    %2702 = vmatpush1.xpose.msra.mxu0 0.0
    %2703 = vmatprep.subr.mxu0 0.0
    %2704 = vmatpush1.xpose.msra.mxu0 0.0
    %2705 = vmatprep.subr.mxu0 0.0
    %2706 = vmatpush1.xpose.msra.mxu0 0.0
    %2707 = vmatprep.subr.mxu0 0.0
    %2708 = vmatpush1.xpose.msra.mxu0 0.0
    %2709 = vmatprep.subr.mxu0 0.0
    %2710 = vmatpush1.xpose.msra.mxu0 0.0
    %2711 = vmatprep.mubr.f32.mxu0 0.0
    %2712 = vmatmul.mubr.f32.gmra.mrb[0].mxu0 %v2643
    %v2713 = vpop.f32.mrb[0].mxu0
    %v2714 = vadd.f32 0.0, %v2713
    %v2715 = vpop.f32.mrb[0].mxu0
    %2716 = vdwg.mxu0
    %v2717 = vsel %vm566, %v2126, 0
    %v2719 = vsel %vm566, %v2162, 0
    %2721 = vmatprep.subr.mxu0 0.0
    %2722 = vmatpush1.xpose.msra.mxu0 %v2719
    %2723 = vmatprep.subr.mxu0 0.0
    %2724 = vmatpush1.xpose.msra.mxu0 0.0
    %2725 = vmatprep.subr.mxu0 0.0
    %2726 = vmatpush1.xpose.msra.mxu0 0.0
    %2727 = vmatprep.subr.mxu0 0.0
    %2728 = vmatpush1.xpose.msra.mxu0 0.0
    %2729 = vmatprep.subr.mxu0 0.0
    %2730 = vmatpush1.xpose.msra.mxu0 0.0
    %2731 = vmatprep.subr.mxu0 0.0
    %2732 = vmatpush1.xpose.msra.mxu0 0.0
    %2733 = vmatprep.subr.mxu0 0.0
    %2734 = vmatpush1.xpose.msra.mxu0 0.0
    %2735 = vmatprep.subr.mxu0 0.0
    %2736 = vmatpush1.xpose.msra.mxu0 0.0
    %2737 = vmatprep.subr.mxu0 0.0
    %2738 = vmatpush1.xpose.msra.mxu0 0.0
    %2739 = vmatprep.subr.mxu0 0.0
    %2740 = vmatpush1.xpose.msra.mxu0 0.0
    %2741 = vmatprep.subr.mxu0 0.0
    %2742 = vmatpush1.xpose.msra.mxu0 0.0
    %2743 = vmatprep.subr.mxu0 0.0
    %2744 = vmatpush1.xpose.msra.mxu0 0.0
    %2745 = vmatprep.subr.mxu0 0.0
    %2746 = vmatpush1.xpose.msra.mxu0 0.0
    %2747 = vmatprep.subr.mxu0 0.0
    %2748 = vmatpush1.xpose.msra.mxu0 0.0
    %2749 = vmatprep.subr.mxu0 0.0
    %2750 = vmatpush1.xpose.msra.mxu0 0.0
    %2751 = vmatprep.subr.mxu0 0.0
    %2752 = vmatpush1.xpose.msra.mxu0 0.0
    %2753 = vmatprep.subr.mxu0 0.0
    %2754 = vmatpush1.xpose.msra.mxu0 0.0
    %2755 = vmatprep.subr.mxu0 0.0
    %2756 = vmatpush1.xpose.msra.mxu0 0.0
    %2757 = vmatprep.subr.mxu0 0.0
    %2758 = vmatpush1.xpose.msra.mxu0 0.0
    %2759 = vmatprep.subr.mxu0 0.0
    %2760 = vmatpush1.xpose.msra.mxu0 0.0
    %2761 = vmatprep.subr.mxu0 0.0
    %2762 = vmatpush1.xpose.msra.mxu0 0.0
    %2763 = vmatprep.subr.mxu0 0.0
    %2764 = vmatpush1.xpose.msra.mxu0 0.0
    %2765 = vmatprep.subr.mxu0 0.0
    %2766 = vmatpush1.xpose.msra.mxu0 0.0
    %2767 = vmatprep.subr.mxu0 0.0
    %2768 = vmatpush1.xpose.msra.mxu0 0.0
    %2769 = vmatprep.subr.mxu0 0.0
    %2770 = vmatpush1.xpose.msra.mxu0 0.0
    %2771 = vmatprep.subr.mxu0 0.0
    %2772 = vmatpush1.xpose.msra.mxu0 0.0
    %2773 = vmatprep.subr.mxu0 0.0
    %2774 = vmatpush1.xpose.msra.mxu0 0.0
    %2775 = vmatprep.subr.mxu0 0.0
    %2776 = vmatpush1.xpose.msra.mxu0 0.0
    %2777 = vmatprep.subr.mxu0 0.0
    %2778 = vmatpush1.xpose.msra.mxu0 0.0
    %2779 = vmatprep.subr.mxu0 0.0
    %2780 = vmatpush1.xpose.msra.mxu0 0.0
    %2781 = vmatprep.subr.mxu0 0.0
    %2782 = vmatpush1.xpose.msra.mxu0 0.0
    %2783 = vmatprep.subr.mxu0 0.0
    %2784 = vmatpush1.xpose.msra.mxu0 0.0
    %2785 = vmatprep.mubr.f32.mxu0 0.0
    %2786 = vmatmul.mubr.f32.gmra.mrb[0].mxu0 %v2717
    %v2787 = vpop.f32.mrb[0].mxu0
    %v2788 = vadd.f32 0.0, %v2787
    %v2789 = vpop.f32.mrb[0].mxu0
    %2790 = vdwg.mxu0
    %v2791 = vsel %vm1159, %v2270, -inf
    %2792 = vmax.xlane.f32.xlu0 %v2791
    %v2793 = vpop.xlane.xlu0 %2792
    %v2794 = vsel %vm1159, %v2344, -inf
    %2795 = vmax.xlane.f32.xlu0 %v2794
    %v2796 = vpop.xlane.xlu0 %2795
    %v2797 = vsel %vm1159, %v2418, -inf
    %2798 = vmax.xlane.f32.xlu0 %v2797
    %v2799 = vpop.xlane.xlu0 %2798
    %v2800 = vsel %vm1159, %v2492, -inf
    %2801 = vmax.xlane.f32.xlu0 %v2800
    %v2802 = vpop.xlane.xlu0 %2801
    %v2803 = vsel %vm1159, %v2566, -inf
    %2804 = vmax.xlane.f32.xlu0 %v2803
    %v2805 = vpop.xlane.xlu0 %2804
    %v2806 = vsel %vm1159, %v2640, -inf
    %2807 = vmax.xlane.f32.xlu0 %v2806
    %v2808 = vpop.xlane.xlu0 %2807
    %v2809 = vsel %vm1159, %v2714, -inf
    %2810 = vmax.xlane.f32.xlu0 %v2809
    %v2811 = vpop.xlane.xlu0 %2810
    %v2812 = vsel %vm1159, %v2788, -inf
    %2813 = vmax.xlane.f32.xlu0 %v2812
    %v2814 = vpop.xlane.xlu0 %2813
    %v2815 = vsub.f32 %v2270, %v2793
    %v2816 = vsub.f32 %v2344, %v2796
    %v2817 = vsub.f32 %v2418, %v2799
    %v2818 = vsub.f32 %v2492, %v2802
    %v2819 = vsub.f32 %v2566, %v2805
    %v2820 = vsub.f32 %v2640, %v2808
    %v2821 = vsub.f32 %v2714, %v2811
    %v2822 = vsub.f32 %v2788, %v2814
    %v2823 = vmul.f32 %v2815, 1.442695
    %v2824 = vpow.pop %v2823
    %v2825 = vmul.f32 %v2816, 1.442695
    %v2826 = vpow.pop %v2825
    %v2827 = vmul.f32 %v2817, 1.442695
    %v2828 = vpow.pop %v2827
    %v2829 = vmul.f32 %v2818, 1.442695
    %v2830 = vpow.pop %v2829
    %v2831 = vmul.f32 %v2819, 1.442695
    %v2832 = vpow.pop %v2831
    %v2833 = vmul.f32 %v2820, 1.442695
    %v2834 = vpow.pop %v2833
    %v2835 = vmul.f32 %v2821, 1.442695
    %v2836 = vpow.pop %v2835
    %v2837 = vmul.f32 %v2822, 1.442695
    %v2838 = vpow.pop %v2837
    %v2839 = vsel %vm1159, %v2824, 0.0
    %2840 = vadd.xlane.f32.xlu0 %v2839
    %v2841 = vpop.xlane.xlu0 %2840
    %v2842 = vsel %vm1159, %v2826, 0.0
    %2843 = vadd.xlane.f32.xlu0 %v2842
    %v2844 = vpop.xlane.xlu0 %2843
    %v2845 = vsel %vm1159, %v2828, 0.0
    %2846 = vadd.xlane.f32.xlu0 %v2845
    %v2847 = vpop.xlane.xlu0 %2846
    %v2848 = vsel %vm1159, %v2830, 0.0
    %2849 = vadd.xlane.f32.xlu0 %v2848
    %v2850 = vpop.xlane.xlu0 %2849
    %v2851 = vsel %vm1159, %v2832, 0.0
    %2852 = vadd.xlane.f32.xlu0 %v2851
    %v2853 = vpop.xlane.xlu0 %2852
    %v2854 = vsel %vm1159, %v2834, 0.0
    %2855 = vadd.xlane.f32.xlu0 %v2854
    %v2856 = vpop.xlane.xlu0 %2855
    %v2857 = vsel %vm1159, %v2836, 0.0
    %2858 = vadd.xlane.f32.xlu0 %v2857
    %v2859 = vpop.xlane.xlu0 %2858
    %v2860 = vsel %vm1159, %v2838, 0.0
    %2861 = vadd.xlane.f32.xlu0 %v2860
    %v2862 = vpop.xlane.xlu0 %2861
    %v2863 = vrcp.pop %v2841
    %v2864 = vrcp.pop %v2844
    %v2865 = vrcp.pop %v2847
    %v2866 = vrcp.pop %v2850
    %v2867 = vrcp.pop %v2853
    %v2868 = vrcp.pop %v2856
    %v2869 = vrcp.pop %v2859
    %v2870 = vrcp.pop %v2862
    %v2871 = vmul.f32 %v2824, %v2863
    %v2872 = vmul.f32 %v2826, %v2864
    %v2873 = vmul.f32 %v2828, %v2865
    %v2874 = vmul.f32 %v2830, %v2866
    %v2875 = vmul.f32 %v2832, %v2867
    %v2876 = vmul.f32 %v2834, %v2868
    %v2877 = vmul.f32 %v2836, %v2869
    %v2878 = vmul.f32 %v2838, %v2870
    %v2880 = vsel %vm1248, %v2871, 0
    %v2882 = vsel %vm1252, %v2172, 0
    %2884 = vmatprep.subr.mxu0 0.0
    %2885 = vmatpush1.msra.mxu0 %v2882
    %2886 = vmatprep.subr.mxu0 0.0
    %2887 = vmatpush1.msra.mxu0 0.0
    %2888 = vmatprep.subr.mxu0 0.0
    %2889 = vmatpush1.msra.mxu0 0.0
    %2890 = vmatprep.subr.mxu0 0.0
    %2891 = vmatpush1.msra.mxu0 0.0
    %2892 = vmatprep.subr.mxu0 0.0
    %2893 = vmatpush1.msra.mxu0 0.0
    %2894 = vmatprep.subr.mxu0 0.0
    %2895 = vmatpush1.msra.mxu0 0.0
    %2896 = vmatprep.subr.mxu0 0.0
    %2897 = vmatpush1.msra.mxu0 0.0
    %2898 = vmatprep.subr.mxu0 0.0
    %2899 = vmatpush1.msra.mxu0 0.0
    %2900 = vmatprep.subr.mxu0 0.0
    %2901 = vmatpush1.msra.mxu0 0.0
    %2902 = vmatprep.subr.mxu0 0.0
    %2903 = vmatpush1.msra.mxu0 0.0
    %2904 = vmatprep.subr.mxu0 0.0
    %2905 = vmatpush1.msra.mxu0 0.0
    %2906 = vmatprep.subr.mxu0 0.0
    %2907 = vmatpush1.msra.mxu0 0.0
    %2908 = vmatprep.subr.mxu0 0.0
    %2909 = vmatpush1.msra.mxu0 0.0
    %2910 = vmatprep.subr.mxu0 0.0
    %2911 = vmatpush1.msra.mxu0 0.0
    %2912 = vmatprep.subr.mxu0 0.0
    %2913 = vmatpush1.msra.mxu0 0.0
    %2914 = vmatprep.subr.mxu0 0.0
    %2915 = vmatpush1.msra.mxu0 0.0
    %2916 = vmatprep.subr.mxu0 0.0
    %2917 = vmatpush1.msra.mxu0 0.0
    %2918 = vmatprep.subr.mxu0 0.0
    %2919 = vmatpush1.msra.mxu0 0.0
    %2920 = vmatprep.subr.mxu0 0.0
    %2921 = vmatpush1.msra.mxu0 0.0
    %2922 = vmatprep.subr.mxu0 0.0
    %2923 = vmatpush1.msra.mxu0 0.0
    %2924 = vmatprep.subr.mxu0 0.0
    %2925 = vmatpush1.msra.mxu0 0.0
    %2926 = vmatprep.subr.mxu0 0.0
    %2927 = vmatpush1.msra.mxu0 0.0
    %2928 = vmatprep.subr.mxu0 0.0
    %2929 = vmatpush1.msra.mxu0 0.0
    %2930 = vmatprep.subr.mxu0 0.0
    %2931 = vmatpush1.msra.mxu0 0.0
    %2932 = vmatprep.subr.mxu0 0.0
    %2933 = vmatpush1.msra.mxu0 0.0
    %2934 = vmatprep.subr.mxu0 0.0
    %2935 = vmatpush1.msra.mxu0 0.0
    %2936 = vmatprep.subr.mxu0 0.0
    %2937 = vmatpush1.msra.mxu0 0.0
    %2938 = vmatprep.subr.mxu0 0.0
    %2939 = vmatpush1.msra.mxu0 0.0
    %2940 = vmatprep.subr.mxu0 0.0
    %2941 = vmatpush1.msra.mxu0 0.0
    %2942 = vmatprep.subr.mxu0 0.0
    %2943 = vmatpush1.msra.mxu0 0.0
    %2944 = vmatprep.subr.mxu0 0.0
    %2945 = vmatpush1.msra.mxu0 0.0
    %2946 = vmatprep.subr.mxu0 0.0
    %2947 = vmatpush1.msra.mxu0 0.0
    %2948 = vmatprep.mubr.f32.mxu0 0.0
    %2949 = vmatmul.mubr.f32.gmra.mrb[0].mxu0 %v2880
    %v2950 = vpop.f32.mrb[0].mxu0
    %v2951 = vadd.f32 0.0, %v2950
    %v2952 = vpop.f32.mrb[0].mxu0
    %2953 = vdwg.mxu0
    %v2955 = vsel %vm1248, %v2872, 0
    %v2957 = vsel %vm1252, %v2180, 0
    %2959 = vmatprep.subr.mxu0 0.0
    %2960 = vmatpush1.msra.mxu0 %v2957
    %2961 = vmatprep.subr.mxu0 0.0
    %2962 = vmatpush1.msra.mxu0 0.0
    %2963 = vmatprep.subr.mxu0 0.0
    %2964 = vmatpush1.msra.mxu0 0.0
    %2965 = vmatprep.subr.mxu0 0.0
    %2966 = vmatpush1.msra.mxu0 0.0
    %2967 = vmatprep.subr.mxu0 0.0
    %2968 = vmatpush1.msra.mxu0 0.0
    %2969 = vmatprep.subr.mxu0 0.0
    %2970 = vmatpush1.msra.mxu0 0.0
    %2971 = vmatprep.subr.mxu0 0.0
    %2972 = vmatpush1.msra.mxu0 0.0
    %2973 = vmatprep.subr.mxu0 0.0
    %2974 = vmatpush1.msra.mxu0 0.0
    %2975 = vmatprep.subr.mxu0 0.0
    %2976 = vmatpush1.msra.mxu0 0.0
    %2977 = vmatprep.subr.mxu0 0.0
    %2978 = vmatpush1.msra.mxu0 0.0
    %2979 = vmatprep.subr.mxu0 0.0
    %2980 = vmatpush1.msra.mxu0 0.0
    %2981 = vmatprep.subr.mxu0 0.0
    %2982 = vmatpush1.msra.mxu0 0.0
    %2983 = vmatprep.subr.mxu0 0.0
    %2984 = vmatpush1.msra.mxu0 0.0
    %2985 = vmatprep.subr.mxu0 0.0
    %2986 = vmatpush1.msra.mxu0 0.0
    %2987 = vmatprep.subr.mxu0 0.0
    %2988 = vmatpush1.msra.mxu0 0.0
    %2989 = vmatprep.subr.mxu0 0.0
    %2990 = vmatpush1.msra.mxu0 0.0
    %2991 = vmatprep.subr.mxu0 0.0
    %2992 = vmatpush1.msra.mxu0 0.0
    %2993 = vmatprep.subr.mxu0 0.0
    %2994 = vmatpush1.msra.mxu0 0.0
    %2995 = vmatprep.subr.mxu0 0.0
    %2996 = vmatpush1.msra.mxu0 0.0
    %2997 = vmatprep.subr.mxu0 0.0
    %2998 = vmatpush1.msra.mxu0 0.0
    %2999 = vmatprep.subr.mxu0 0.0
    %3000 = vmatpush1.msra.mxu0 0.0
    %3001 = vmatprep.subr.mxu0 0.0
    %3002 = vmatpush1.msra.mxu0 0.0
    %3003 = vmatprep.subr.mxu0 0.0
    %3004 = vmatpush1.msra.mxu0 0.0
    %3005 = vmatprep.subr.mxu0 0.0
    %3006 = vmatpush1.msra.mxu0 0.0
    %3007 = vmatprep.subr.mxu0 0.0
    %3008 = vmatpush1.msra.mxu0 0.0
    %3009 = vmatprep.subr.mxu0 0.0
    %3010 = vmatpush1.msra.mxu0 0.0
    %3011 = vmatprep.subr.mxu0 0.0
    %3012 = vmatpush1.msra.mxu0 0.0
    %3013 = vmatprep.subr.mxu0 0.0
    %3014 = vmatpush1.msra.mxu0 0.0
    %3015 = vmatprep.subr.mxu0 0.0
    %3016 = vmatpush1.msra.mxu0 0.0
    %3017 = vmatprep.subr.mxu0 0.0
    %3018 = vmatpush1.msra.mxu0 0.0
    %3019 = vmatprep.subr.mxu0 0.0
    %3020 = vmatpush1.msra.mxu0 0.0
    %3021 = vmatprep.subr.mxu0 0.0
    %3022 = vmatpush1.msra.mxu0 0.0
    %3023 = vmatprep.mubr.f32.mxu0 0.0
    %3024 = vmatmul.mubr.f32.gmra.mrb[0].mxu0 %v2955
    %v3025 = vpop.f32.mrb[0].mxu0
    %v3026 = vadd.f32 0.0, %v3025
    %v3027 = vpop.f32.mrb[0].mxu0
    %3028 = vdwg.mxu0
    %v3030 = vsel %vm1248, %v2873, 0
    %v3032 = vsel %vm1252, %v2179, 0
    %3034 = vmatprep.subr.mxu0 0.0
    %3035 = vmatpush1.msra.mxu0 %v3032
    %3036 = vmatprep.subr.mxu0 0.0
    %3037 = vmatpush1.msra.mxu0 0.0
    %3038 = vmatprep.subr.mxu0 0.0
    %3039 = vmatpush1.msra.mxu0 0.0
    %3040 = vmatprep.subr.mxu0 0.0
    %3041 = vmatpush1.msra.mxu0 0.0
    %3042 = vmatprep.subr.mxu0 0.0
    %3043 = vmatpush1.msra.mxu0 0.0
    %3044 = vmatprep.subr.mxu0 0.0
    %3045 = vmatpush1.msra.mxu0 0.0
    %3046 = vmatprep.subr.mxu0 0.0
    %3047 = vmatpush1.msra.mxu0 0.0
    %3048 = vmatprep.subr.mxu0 0.0
    %3049 = vmatpush1.msra.mxu0 0.0
    %3050 = vmatprep.subr.mxu0 0.0
    %3051 = vmatpush1.msra.mxu0 0.0
    %3052 = vmatprep.subr.mxu0 0.0
    %3053 = vmatpush1.msra.mxu0 0.0
    %3054 = vmatprep.subr.mxu0 0.0
    %3055 = vmatpush1.msra.mxu0 0.0
    %3056 = vmatprep.subr.mxu0 0.0
    %3057 = vmatpush1.msra.mxu0 0.0
    %3058 = vmatprep.subr.mxu0 0.0
    %3059 = vmatpush1.msra.mxu0 0.0
    %3060 = vmatprep.subr.mxu0 0.0
    %3061 = vmatpush1.msra.mxu0 0.0
    %3062 = vmatprep.subr.mxu0 0.0
    %3063 = vmatpush1.msra.mxu0 0.0
    %3064 = vmatprep.subr.mxu0 0.0
    %3065 = vmatpush1.msra.mxu0 0.0
    %3066 = vmatprep.subr.mxu0 0.0
    %3067 = vmatpush1.msra.mxu0 0.0
    %3068 = vmatprep.subr.mxu0 0.0
    %3069 = vmatpush1.msra.mxu0 0.0
    %3070 = vmatprep.subr.mxu0 0.0
    %3071 = vmatpush1.msra.mxu0 0.0
    %3072 = vmatprep.subr.mxu0 0.0
    %3073 = vmatpush1.msra.mxu0 0.0
    %3074 = vmatprep.subr.mxu0 0.0
    %3075 = vmatpush1.msra.mxu0 0.0
    %3076 = vmatprep.subr.mxu0 0.0
    %3077 = vmatpush1.msra.mxu0 0.0
    %3078 = vmatprep.subr.mxu0 0.0
    %3079 = vmatpush1.msra.mxu0 0.0
    %3080 = vmatprep.subr.mxu0 0.0
    %3081 = vmatpush1.msra.mxu0 0.0
    %3082 = vmatprep.subr.mxu0 0.0
    %3083 = vmatpush1.msra.mxu0 0.0
    %3084 = vmatprep.subr.mxu0 0.0
    %3085 = vmatpush1.msra.mxu0 0.0
    %3086 = vmatprep.subr.mxu0 0.0
    %3087 = vmatpush1.msra.mxu0 0.0
    %3088 = vmatprep.subr.mxu0 0.0
    %3089 = vmatpush1.msra.mxu0 0.0
    %3090 = vmatprep.subr.mxu0 0.0
    %3091 = vmatpush1.msra.mxu0 0.0
    %3092 = vmatprep.subr.mxu0 0.0
    %3093 = vmatpush1.msra.mxu0 0.0
    %3094 = vmatprep.subr.mxu0 0.0
    %3095 = vmatpush1.msra.mxu0 0.0
    %3096 = vmatprep.subr.mxu0 0.0
    %3097 = vmatpush1.msra.mxu0 0.0
    %3098 = vmatprep.mubr.f32.mxu0 0.0
    %3099 = vmatmul.mubr.f32.gmra.mrb[0].mxu0 %v3030
    %v3100 = vpop.f32.mrb[0].mxu0
    %v3101 = vadd.f32 0.0, %v3100
    %v3102 = vpop.f32.mrb[0].mxu0
    %3103 = vdwg.mxu0
    %v3105 = vsel %vm1248, %v2874, 0
    %v3107 = vsel %vm1252, %v2181, 0
    %3109 = vmatprep.subr.mxu0 0.0
    %3110 = vmatpush1.msra.mxu0 %v3107
    %3111 = vmatprep.subr.mxu0 0.0
    %3112 = vmatpush1.msra.mxu0 0.0
    %3113 = vmatprep.subr.mxu0 0.0
    %3114 = vmatpush1.msra.mxu0 0.0
    %3115 = vmatprep.subr.mxu0 0.0
    %3116 = vmatpush1.msra.mxu0 0.0
    %3117 = vmatprep.subr.mxu0 0.0
    %3118 = vmatpush1.msra.mxu0 0.0
    %3119 = vmatprep.subr.mxu0 0.0
    %3120 = vmatpush1.msra.mxu0 0.0
    %3121 = vmatprep.subr.mxu0 0.0
    %3122 = vmatpush1.msra.mxu0 0.0
    %3123 = vmatprep.subr.mxu0 0.0
    %3124 = vmatpush1.msra.mxu0 0.0
    %3125 = vmatprep.subr.mxu0 0.0
    %3126 = vmatpush1.msra.mxu0 0.0
    %3127 = vmatprep.subr.mxu0 0.0
    %3128 = vmatpush1.msra.mxu0 0.0
    %3129 = vmatprep.subr.mxu0 0.0
    %3130 = vmatpush1.msra.mxu0 0.0
    %3131 = vmatprep.subr.mxu0 0.0
    %3132 = vmatpush1.msra.mxu0 0.0
    %3133 = vmatprep.subr.mxu0 0.0
    %3134 = vmatpush1.msra.mxu0 0.0
    %3135 = vmatprep.subr.mxu0 0.0
    %3136 = vmatpush1.msra.mxu0 0.0
    %3137 = vmatprep.subr.mxu0 0.0
    %3138 = vmatpush1.msra.mxu0 0.0
    %3139 = vmatprep.subr.mxu0 0.0
    %3140 = vmatpush1.msra.mxu0 0.0
    %3141 = vmatprep.subr.mxu0 0.0
    %3142 = vmatpush1.msra.mxu0 0.0
    %3143 = vmatprep.subr.mxu0 0.0
    %3144 = vmatpush1.msra.mxu0 0.0
    %3145 = vmatprep.subr.mxu0 0.0
    %3146 = vmatpush1.msra.mxu0 0.0
    %3147 = vmatprep.subr.mxu0 0.0
    %3148 = vmatpush1.msra.mxu0 0.0
    %3149 = vmatprep.subr.mxu0 0.0
    %3150 = vmatpush1.msra.mxu0 0.0
    %3151 = vmatprep.subr.mxu0 0.0
    %3152 = vmatpush1.msra.mxu0 0.0
    %3153 = vmatprep.subr.mxu0 0.0
    %3154 = vmatpush1.msra.mxu0 0.0
    %3155 = vmatprep.subr.mxu0 0.0
    %3156 = vmatpush1.msra.mxu0 0.0
    %3157 = vmatprep.subr.mxu0 0.0
    %3158 = vmatpush1.msra.mxu0 0.0
    %3159 = vmatprep.subr.mxu0 0.0
    %3160 = vmatpush1.msra.mxu0 0.0
    %3161 = vmatprep.subr.mxu0 0.0
    %3162 = vmatpush1.msra.mxu0 0.0
    %3163 = vmatprep.subr.mxu0 0.0
    %3164 = vmatpush1.msra.mxu0 0.0
    %3165 = vmatprep.subr.mxu0 0.0
    %3166 = vmatpush1.msra.mxu0 0.0
    %3167 = vmatprep.subr.mxu0 0.0
    %3168 = vmatpush1.msra.mxu0 0.0
    %3169 = vmatprep.subr.mxu0 0.0
    %3170 = vmatpush1.msra.mxu0 0.0
    %3171 = vmatprep.subr.mxu0 0.0
    %3172 = vmatpush1.msra.mxu0 0.0
    %3173 = vmatprep.mubr.f32.mxu0 0.0
    %3174 = vmatmul.mubr.f32.gmra.mrb[0].mxu0 %v3105
    %v3175 = vpop.f32.mrb[0].mxu0
    %v3176 = vadd.f32 0.0, %v3175
    %v3177 = vpop.f32.mrb[0].mxu0
    %3178 = vdwg.mxu0
    %v3180 = vsel %vm1248, %v2875, 0
    %v3182 = vsel %vm1252, %v2189, 0
    %3184 = vmatprep.subr.mxu0 0.0
    %3185 = vmatpush1.msra.mxu0 %v3182
    %3186 = vmatprep.subr.mxu0 0.0
    %3187 = vmatpush1.msra.mxu0 0.0
    %3188 = vmatprep.subr.mxu0 0.0
    %3189 = vmatpush1.msra.mxu0 0.0
    %3190 = vmatprep.subr.mxu0 0.0
    %3191 = vmatpush1.msra.mxu0 0.0
    %3192 = vmatprep.subr.mxu0 0.0
    %3193 = vmatpush1.msra.mxu0 0.0
    %3194 = vmatprep.subr.mxu0 0.0
    %3195 = vmatpush1.msra.mxu0 0.0
    %3196 = vmatprep.subr.mxu0 0.0
    %3197 = vmatpush1.msra.mxu0 0.0
    %3198 = vmatprep.subr.mxu0 0.0
    %3199 = vmatpush1.msra.mxu0 0.0
    %3200 = vmatprep.subr.mxu0 0.0
    %3201 = vmatpush1.msra.mxu0 0.0
    %3202 = vmatprep.subr.mxu0 0.0
    %3203 = vmatpush1.msra.mxu0 0.0
    %3204 = vmatprep.subr.mxu0 0.0
    %3205 = vmatpush1.msra.mxu0 0.0
    %3206 = vmatprep.subr.mxu0 0.0
    %3207 = vmatpush1.msra.mxu0 0.0
    %3208 = vmatprep.subr.mxu0 0.0
    %3209 = vmatpush1.msra.mxu0 0.0
    %3210 = vmatprep.subr.mxu0 0.0
    %3211 = vmatpush1.msra.mxu0 0.0
    %3212 = vmatprep.subr.mxu0 0.0
    %3213 = vmatpush1.msra.mxu0 0.0
    %3214 = vmatprep.subr.mxu0 0.0
    %3215 = vmatpush1.msra.mxu0 0.0
    %3216 = vmatprep.subr.mxu0 0.0
    %3217 = vmatpush1.msra.mxu0 0.0
    %3218 = vmatprep.subr.mxu0 0.0
    %3219 = vmatpush1.msra.mxu0 0.0
    %3220 = vmatprep.subr.mxu0 0.0
    %3221 = vmatpush1.msra.mxu0 0.0
    %3222 = vmatprep.subr.mxu0 0.0
    %3223 = vmatpush1.msra.mxu0 0.0
    %3224 = vmatprep.subr.mxu0 0.0
    %3225 = vmatpush1.msra.mxu0 0.0
    %3226 = vmatprep.subr.mxu0 0.0
    %3227 = vmatpush1.msra.mxu0 0.0
    %3228 = vmatprep.subr.mxu0 0.0
    %3229 = vmatpush1.msra.mxu0 0.0
    %3230 = vmatprep.subr.mxu0 0.0
    %3231 = vmatpush1.msra.mxu0 0.0
    %3232 = vmatprep.subr.mxu0 0.0
    %3233 = vmatpush1.msra.mxu0 0.0
    %3234 = vmatprep.subr.mxu0 0.0
    %3235 = vmatpush1.msra.mxu0 0.0
    %3236 = vmatprep.subr.mxu0 0.0
    %3237 = vmatpush1.msra.mxu0 0.0
    %3238 = vmatprep.subr.mxu0 0.0
    %3239 = vmatpush1.msra.mxu0 0.0
    %3240 = vmatprep.subr.mxu0 0.0
    %3241 = vmatpush1.msra.mxu0 0.0
    %3242 = vmatprep.subr.mxu0 0.0
    %3243 = vmatpush1.msra.mxu0 0.0
    %3244 = vmatprep.subr.mxu0 0.0
    %3245 = vmatpush1.msra.mxu0 0.0
    %3246 = vmatprep.subr.mxu0 0.0
    %3247 = vmatpush1.msra.mxu0 0.0
    %3248 = vmatprep.mubr.f32.mxu0 0.0
    %3249 = vmatmul.mubr.f32.gmra.mrb[0].mxu0 %v3180
    %v3250 = vpop.f32.mrb[0].mxu0
    %v3251 = vadd.f32 0.0, %v3250
    %v3252 = vpop.f32.mrb[0].mxu0
    %3253 = vdwg.mxu0
    %v3255 = vsel %vm1248, %v2876, 0
    %v3257 = vsel %vm1252, %v2197, 0
    %3259 = vmatprep.subr.mxu0 0.0
    %3260 = vmatpush1.msra.mxu0 %v3257
    %3261 = vmatprep.subr.mxu0 0.0
    %3262 = vmatpush1.msra.mxu0 0.0
    %3263 = vmatprep.subr.mxu0 0.0
    %3264 = vmatpush1.msra.mxu0 0.0
    %3265 = vmatprep.subr.mxu0 0.0
    %3266 = vmatpush1.msra.mxu0 0.0
    %3267 = vmatprep.subr.mxu0 0.0
    %3268 = vmatpush1.msra.mxu0 0.0
    %3269 = vmatprep.subr.mxu0 0.0
    %3270 = vmatpush1.msra.mxu0 0.0
    %3271 = vmatprep.subr.mxu0 0.0
    %3272 = vmatpush1.msra.mxu0 0.0
    %3273 = vmatprep.subr.mxu0 0.0
    %3274 = vmatpush1.msra.mxu0 0.0
    %3275 = vmatprep.subr.mxu0 0.0
    %3276 = vmatpush1.msra.mxu0 0.0
    %3277 = vmatprep.subr.mxu0 0.0
    %3278 = vmatpush1.msra.mxu0 0.0
    %3279 = vmatprep.subr.mxu0 0.0
    %3280 = vmatpush1.msra.mxu0 0.0
    %3281 = vmatprep.subr.mxu0 0.0
    %3282 = vmatpush1.msra.mxu0 0.0
    %3283 = vmatprep.subr.mxu0 0.0
    %3284 = vmatpush1.msra.mxu0 0.0
    %3285 = vmatprep.subr.mxu0 0.0
    %3286 = vmatpush1.msra.mxu0 0.0
    %3287 = vmatprep.subr.mxu0 0.0
    %3288 = vmatpush1.msra.mxu0 0.0
    %3289 = vmatprep.subr.mxu0 0.0
    %3290 = vmatpush1.msra.mxu0 0.0
    %3291 = vmatprep.subr.mxu0 0.0
    %3292 = vmatpush1.msra.mxu0 0.0
    %3293 = vmatprep.subr.mxu0 0.0
    %3294 = vmatpush1.msra.mxu0 0.0
    %3295 = vmatprep.subr.mxu0 0.0
    %3296 = vmatpush1.msra.mxu0 0.0
    %3297 = vmatprep.subr.mxu0 0.0
    %3298 = vmatpush1.msra.mxu0 0.0
    %3299 = vmatprep.subr.mxu0 0.0
    %3300 = vmatpush1.msra.mxu0 0.0
    %3301 = vmatprep.subr.mxu0 0.0
    %3302 = vmatpush1.msra.mxu0 0.0
    %3303 = vmatprep.subr.mxu0 0.0
    %3304 = vmatpush1.msra.mxu0 0.0
    %3305 = vmatprep.subr.mxu0 0.0
    %3306 = vmatpush1.msra.mxu0 0.0
    %3307 = vmatprep.subr.mxu0 0.0
    %3308 = vmatpush1.msra.mxu0 0.0
    %3309 = vmatprep.subr.mxu0 0.0
    %3310 = vmatpush1.msra.mxu0 0.0
    %3311 = vmatprep.subr.mxu0 0.0
    %3312 = vmatpush1.msra.mxu0 0.0
    %3313 = vmatprep.subr.mxu0 0.0
    %3314 = vmatpush1.msra.mxu0 0.0
    %3315 = vmatprep.subr.mxu0 0.0
    %3316 = vmatpush1.msra.mxu0 0.0
    %3317 = vmatprep.subr.mxu0 0.0
    %3318 = vmatpush1.msra.mxu0 0.0
    %3319 = vmatprep.subr.mxu0 0.0
    %3320 = vmatpush1.msra.mxu0 0.0
    %3321 = vmatprep.subr.mxu0 0.0
    %3322 = vmatpush1.msra.mxu0 0.0
    %3323 = vmatprep.mubr.f32.mxu0 0.0
    %3324 = vmatmul.mubr.f32.gmra.mrb[0].mxu0 %v3255
    %v3325 = vpop.f32.mrb[0].mxu0
    %v3326 = vadd.f32 0.0, %v3325
    %v3327 = vpop.f32.mrb[0].mxu0
    %3328 = vdwg.mxu0
    %v3330 = vsel %vm1248, %v2877, 0
    %v3332 = vsel %vm1252, %v2196, 0
    %3334 = vmatprep.subr.mxu0 0.0
    %3335 = vmatpush1.msra.mxu0 %v3332
    %3336 = vmatprep.subr.mxu0 0.0
    %3337 = vmatpush1.msra.mxu0 0.0
    %3338 = vmatprep.subr.mxu0 0.0
    %3339 = vmatpush1.msra.mxu0 0.0
    %3340 = vmatprep.subr.mxu0 0.0
    %3341 = vmatpush1.msra.mxu0 0.0
    %3342 = vmatprep.subr.mxu0 0.0
    %3343 = vmatpush1.msra.mxu0 0.0
    %3344 = vmatprep.subr.mxu0 0.0
    %3345 = vmatpush1.msra.mxu0 0.0
    %3346 = vmatprep.subr.mxu0 0.0
    %3347 = vmatpush1.msra.mxu0 0.0
    %3348 = vmatprep.subr.mxu0 0.0
    %3349 = vmatpush1.msra.mxu0 0.0
    %3350 = vmatprep.subr.mxu0 0.0
    %3351 = vmatpush1.msra.mxu0 0.0
    %3352 = vmatprep.subr.mxu0 0.0
    %3353 = vmatpush1.msra.mxu0 0.0
    %3354 = vmatprep.subr.mxu0 0.0
    %3355 = vmatpush1.msra.mxu0 0.0
    %3356 = vmatprep.subr.mxu0 0.0
    %3357 = vmatpush1.msra.mxu0 0.0
    %3358 = vmatprep.subr.mxu0 0.0
    %3359 = vmatpush1.msra.mxu0 0.0
    %3360 = vmatprep.subr.mxu0 0.0
    %3361 = vmatpush1.msra.mxu0 0.0
    %3362 = vmatprep.subr.mxu0 0.0
    %3363 = vmatpush1.msra.mxu0 0.0
    %3364 = vmatprep.subr.mxu0 0.0
    %3365 = vmatpush1.msra.mxu0 0.0
    %3366 = vmatprep.subr.mxu0 0.0
    %3367 = vmatpush1.msra.mxu0 0.0
    %3368 = vmatprep.subr.mxu0 0.0
    %3369 = vmatpush1.msra.mxu0 0.0
    %3370 = vmatprep.subr.mxu0 0.0
    %3371 = vmatpush1.msra.mxu0 0.0
    %3372 = vmatprep.subr.mxu0 0.0
    %3373 = vmatpush1.msra.mxu0 0.0
    %3374 = vmatprep.subr.mxu0 0.0
    %3375 = vmatpush1.msra.mxu0 0.0
    %3376 = vmatprep.subr.mxu0 0.0
    %3377 = vmatpush1.msra.mxu0 0.0
    %3378 = vmatprep.subr.mxu0 0.0
    %3379 = vmatpush1.msra.mxu0 0.0
    %3380 = vmatprep.subr.mxu0 0.0
    %3381 = vmatpush1.msra.mxu0 0.0
    %3382 = vmatprep.subr.mxu0 0.0
    %3383 = vmatpush1.msra.mxu0 0.0
    %3384 = vmatprep.subr.mxu0 0.0
    %3385 = vmatpush1.msra.mxu0 0.0
    %3386 = vmatprep.subr.mxu0 0.0
    %3387 = vmatpush1.msra.mxu0 0.0
    %3388 = vmatprep.subr.mxu0 0.0
    %3389 = vmatpush1.msra.mxu0 0.0
    %3390 = vmatprep.subr.mxu0 0.0
    %3391 = vmatpush1.msra.mxu0 0.0
    %3392 = vmatprep.subr.mxu0 0.0
    %3393 = vmatpush1.msra.mxu0 0.0
    %3394 = vmatprep.subr.mxu0 0.0
    %3395 = vmatpush1.msra.mxu0 0.0
    %3396 = vmatprep.subr.mxu0 0.0
    %3397 = vmatpush1.msra.mxu0 0.0
    %3398 = vmatprep.mubr.f32.mxu0 0.0
    %3399 = vmatmul.mubr.f32.gmra.mrb[0].mxu0 %v3330
    %v3400 = vpop.f32.mrb[0].mxu0
    %v3401 = vadd.f32 0.0, %v3400
    %v3402 = vpop.f32.mrb[0].mxu0
    %3403 = vdwg.mxu0
    %v3405 = vsel %vm1248, %v2878, 0
    %v3407 = vsel %vm1252, %v2198, 0
    %3409 = vmatprep.subr.mxu0 0.0
    %3410 = vmatpush1.msra.mxu0 %v3407
    %3411 = vmatprep.subr.mxu0 0.0
    %3412 = vmatpush1.msra.mxu0 0.0
    %3413 = vmatprep.subr.mxu0 0.0
    %3414 = vmatpush1.msra.mxu0 0.0
    %3415 = vmatprep.subr.mxu0 0.0
    %3416 = vmatpush1.msra.mxu0 0.0
    %3417 = vmatprep.subr.mxu0 0.0
    %3418 = vmatpush1.msra.mxu0 0.0
    %3419 = vmatprep.subr.mxu0 0.0
    %3420 = vmatpush1.msra.mxu0 0.0
    %3421 = vmatprep.subr.mxu0 0.0
    %3422 = vmatpush1.msra.mxu0 0.0
    %3423 = vmatprep.subr.mxu0 0.0
    %3424 = vmatpush1.msra.mxu0 0.0
    %3425 = vmatprep.subr.mxu0 0.0
    %3426 = vmatpush1.msra.mxu0 0.0
    %3427 = vmatprep.subr.mxu0 0.0
    %3428 = vmatpush1.msra.mxu0 0.0
    %3429 = vmatprep.subr.mxu0 0.0
    %3430 = vmatpush1.msra.mxu0 0.0
    %3431 = vmatprep.subr.mxu0 0.0
    %3432 = vmatpush1.msra.mxu0 0.0
    %3433 = vmatprep.subr.mxu0 0.0
    %3434 = vmatpush1.msra.mxu0 0.0
    %3435 = vmatprep.subr.mxu0 0.0
    %3436 = vmatpush1.msra.mxu0 0.0
    %3437 = vmatprep.subr.mxu0 0.0
    %3438 = vmatpush1.msra.mxu0 0.0
    %3439 = vmatprep.subr.mxu0 0.0
    %3440 = vmatpush1.msra.mxu0 0.0
    %3441 = vmatprep.subr.mxu0 0.0
    %3442 = vmatpush1.msra.mxu0 0.0
    %3443 = vmatprep.subr.mxu0 0.0
    %3444 = vmatpush1.msra.mxu0 0.0
    %3445 = vmatprep.subr.mxu0 0.0
    %3446 = vmatpush1.msra.mxu0 0.0
    %3447 = vmatprep.subr.mxu0 0.0
    %3448 = vmatpush1.msra.mxu0 0.0
    %3449 = vmatprep.subr.mxu0 0.0
    %3450 = vmatpush1.msra.mxu0 0.0
    %3451 = vmatprep.subr.mxu0 0.0
    %3452 = vmatpush1.msra.mxu0 0.0
    %3453 = vmatprep.subr.mxu0 0.0
    %3454 = vmatpush1.msra.mxu0 0.0
    %3455 = vmatprep.subr.mxu0 0.0
    %3456 = vmatpush1.msra.mxu0 0.0
    %3457 = vmatprep.subr.mxu0 0.0
    %3458 = vmatpush1.msra.mxu0 0.0
    %3459 = vmatprep.subr.mxu0 0.0
    %3460 = vmatpush1.msra.mxu0 0.0
    %3461 = vmatprep.subr.mxu0 0.0
    %3462 = vmatpush1.msra.mxu0 0.0
    %3463 = vmatprep.subr.mxu0 0.0
    %3464 = vmatpush1.msra.mxu0 0.0
    %3465 = vmatprep.subr.mxu0 0.0
    %3466 = vmatpush1.msra.mxu0 0.0
    %3467 = vmatprep.subr.mxu0 0.0
    %3468 = vmatpush1.msra.mxu0 0.0
    %3469 = vmatprep.subr.mxu0 0.0
    %3470 = vmatpush1.msra.mxu0 0.0
    %3471 = vmatprep.subr.mxu0 0.0
    %3472 = vmatpush1.msra.mxu0 0.0
    %3473 = vmatprep.mubr.f32.mxu0 0.0
    %3474 = vmatmul.mubr.f32.gmra.mrb[0].mxu0 %v3405
    %v3475 = vpop.f32.mrb[0].mxu0
    %v3476 = vadd.f32 0.0, %v3475
    %v3477 = vpop.f32.mrb[0].mxu0
    %3478 = vdwg.mxu0
    %v3479 = vld [vmem:[%s6 + $0x8] sm:$0xff]
    %v3488 = vcombine.low %v2951, %v3026
    %v3489 = vcombine.low %v3101, %v3176
    %v3491 = vunpack.c.l.s4 1983009808
    %v3492 = vunpack.c.0.s8 %v3491
    %v3493 = vlaneseq
    %v3494 = vshrl.u32 %v3493, 7
    %v3495 = vsub.s32 %v3492, %v3494
    %v3496 = vrot.slane %v3488, %v3495
    %v3498 = vunpack.c.l.s4 1983009808
    %v3499 = vunpack.c.0.s8 %v3498
    %v3500 = vlaneseq
    %v3501 = vshrl.u32 %v3500, 7
    %v3502 = vsub.s32 %v3499, %v3501
    %v3503 = vrot.slane %v3489, %v3502
    %v3504 = vcombine.low %v3496, %v3503
    %v3505 = vcombine.low %v3251, %v3326
    %v3506 = vcombine.low %v3401, %v3476
    %v3508 = vunpack.c.l.s4 1983009808
    %v3509 = vunpack.c.0.s8 %v3508
    %v3510 = vlaneseq
    %v3511 = vshrl.u32 %v3510, 7
    %v3512 = vsub.s32 %v3509, %v3511
    %v3513 = vrot.slane %v3505, %v3512
    %v3515 = vunpack.c.l.s4 1983009808
    %v3516 = vunpack.c.0.s8 %v3515
    %v3517 = vlaneseq
    %v3518 = vshrl.u32 %v3517, 7
    %v3519 = vsub.s32 %v3516, %v3518
    %v3520 = vrot.slane %v3506, %v3519
    %v3521 = vcombine.low %v3513, %v3520
    %v3522 = vsel %vm566, %v3504, 0
    %v3524 = vsel %vm566, %v3521, 0
    %3526 = vmatprep.subr.mxu0 0.0
    %3527 = vmatpush1.msra.mxu0 %v3479
    %3528 = vmatprep.subr.mxu0 0.0
    %3529 = vmatpush1.msra.mxu0 0.0
    %3530 = vmatprep.subr.mxu0 0.0
    %3531 = vmatpush1.msra.mxu0 0.0
    %3532 = vmatprep.subr.mxu0 0.0
    %3533 = vmatpush1.msra.mxu0 0.0
    %3534 = vmatprep.subr.mxu0 0.0
    %3535 = vmatpush1.msra.mxu0 0.0
    %3536 = vmatprep.subr.mxu0 0.0
    %3537 = vmatpush1.msra.mxu0 0.0
    %3538 = vmatprep.subr.mxu0 0.0
    %3539 = vmatpush1.msra.mxu0 0.0
    %3540 = vmatprep.subr.mxu0 0.0
    %3541 = vmatpush1.msra.mxu0 0.0
    %3542 = vmatprep.subr.mxu0 0.0
    %3543 = vmatpush1.msra.mxu0 0.0
    %3544 = vmatprep.subr.mxu0 0.0
    %3545 = vmatpush1.msra.mxu0 0.0
    %3546 = vmatprep.subr.mxu0 0.0
    %3547 = vmatpush1.msra.mxu0 0.0
    %3548 = vmatprep.subr.mxu0 0.0
    %3549 = vmatpush1.msra.mxu0 0.0
    %3550 = vmatprep.subr.mxu0 0.0
    %3551 = vmatpush1.msra.mxu0 0.0
    %3552 = vmatprep.subr.mxu0 0.0
    %3553 = vmatpush1.msra.mxu0 0.0
    %3554 = vmatprep.subr.mxu0 0.0
    %3555 = vmatpush1.msra.mxu0 0.0
    %3556 = vmatprep.subr.mxu0 0.0
    %3557 = vmatpush1.msra.mxu0 0.0
    %3558 = vmatprep.subr.mxu0 0.0
    %3559 = vmatpush1.msra.mxu0 0.0
    %3560 = vmatprep.subr.mxu0 0.0
    %3561 = vmatpush1.msra.mxu0 0.0
    %3562 = vmatprep.subr.mxu0 0.0
    %3563 = vmatpush1.msra.mxu0 0.0
    %3564 = vmatprep.subr.mxu0 0.0
    %3565 = vmatpush1.msra.mxu0 0.0
    %3566 = vmatprep.subr.mxu0 0.0
    %3567 = vmatpush1.msra.mxu0 0.0
    %3568 = vmatprep.subr.mxu0 0.0
    %3569 = vmatpush1.msra.mxu0 0.0
    %3570 = vmatprep.subr.mxu0 0.0
    %3571 = vmatpush1.msra.mxu0 0.0
    %3572 = vmatprep.subr.mxu0 0.0
    %3573 = vmatpush1.msra.mxu0 0.0
    %3574 = vmatprep.subr.mxu0 0.0
    %3575 = vmatpush1.msra.mxu0 0.0
    %3576 = vmatprep.subr.mxu0 0.0
    %3577 = vmatpush1.msra.mxu0 0.0
    %3578 = vmatprep.subr.mxu0 0.0
    %3579 = vmatpush1.msra.mxu0 0.0
    %3580 = vmatprep.subr.mxu0 0.0
    %3581 = vmatpush1.msra.mxu0 0.0
    %3582 = vmatprep.subr.mxu0 0.0
    %3583 = vmatpush1.msra.mxu0 0.0
    %3584 = vmatprep.subr.mxu0 0.0
    %3585 = vmatpush1.msra.mxu0 0.0
    %3586 = vmatprep.subr.mxu0 0.0
    %3587 = vmatpush1.msra.mxu0 0.0
    %3588 = vmatprep.subr.mxu0 0.0
    %3589 = vmatpush1.msra.mxu0 0.0
    %3590 = vmatprep.mubr.f32.mxu0 0.0
    %3591 = vmatmul.mubr.f32.gmra.mrb[0].mxu0 %v3522
    %v3592 = vpop.f32.mrb[0].mxu0
    %v3593 = vadd.f32 0.0, %v3592
    %v3594 = vpop.f32.mrb[0].mxu0
    %3595 = vmatprep.mubr.f32.mxu0 0.0
    %3596 = vmatmul.mubr.f32.gmra.mrb[0].mxu0 %v3524
    %v3597 = vpop.f32.mrb[0].mxu0
    %v3598 = vadd.f32 0.0, %v3597
    %v3599 = vpop.f32.mrb[0].mxu0
    %3600 = vdwg.mxu0
    %v3609 = vcombine.low %v1322, %v1397
    %v3610 = vcombine.low %v1472, %v1547
    %v3612 = vunpack.c.l.s4 1983009808
    %v3613 = vunpack.c.0.s8 %v3612
    %v3614 = vlaneseq
    %v3615 = vshrl.u32 %v3614, 7
    %v3616 = vsub.s32 %v3613, %v3615
    %v3617 = vrot.slane %v3609, %v3616
    %v3619 = vunpack.c.l.s4 1983009808
    %v3620 = vunpack.c.0.s8 %v3619
    %v3621 = vlaneseq
    %v3622 = vshrl.u32 %v3621, 7
    %v3623 = vsub.s32 %v3620, %v3622
    %v3624 = vrot.slane %v3610, %v3623
    %v3625 = vcombine.low %v3617, %v3624
    %v3626 = vcombine.low %v1622, %v1697
    %v3627 = vcombine.low %v1772, %v1847
    %v3629 = vunpack.c.l.s4 1983009808
    %v3630 = vunpack.c.0.s8 %v3629
    %v3631 = vlaneseq
    %v3632 = vshrl.u32 %v3631, 7
    %v3633 = vsub.s32 %v3630, %v3632
    %v3634 = vrot.slane %v3626, %v3633
    %v3636 = vunpack.c.l.s4 1983009808
    %v3637 = vunpack.c.0.s8 %v3636
    %v3638 = vlaneseq
    %v3639 = vshrl.u32 %v3638, 7
    %v3640 = vsub.s32 %v3637, %v3639
    %v3641 = vrot.slane %v3627, %v3640
    %v3642 = vcombine.low %v3634, %v3641
    %v3643 = vsel %vm566, %v3625, 0
    %v3645 = vsel %vm566, %v3642, 0
    %3647 = vmatprep.subr.mxu0 0.0
    %3648 = vmatpush1.msra.mxu0 %v1850
    %3649 = vmatprep.subr.mxu0 0.0
    %3650 = vmatpush1.msra.mxu0 0.0
    %3651 = vmatprep.subr.mxu0 0.0
    %3652 = vmatpush1.msra.mxu0 0.0
    %3653 = vmatprep.subr.mxu0 0.0
    %3654 = vmatpush1.msra.mxu0 0.0
    %3655 = vmatprep.subr.mxu0 0.0
    %3656 = vmatpush1.msra.mxu0 0.0
    %3657 = vmatprep.subr.mxu0 0.0
    %3658 = vmatpush1.msra.mxu0 0.0
    %3659 = vmatprep.subr.mxu0 0.0
    %3660 = vmatpush1.msra.mxu0 0.0
    %3661 = vmatprep.subr.mxu0 0.0
    %3662 = vmatpush1.msra.mxu0 0.0
    %3663 = vmatprep.subr.mxu0 0.0
    %3664 = vmatpush1.msra.mxu0 0.0
    %3665 = vmatprep.subr.mxu0 0.0
    %3666 = vmatpush1.msra.mxu0 0.0
    %3667 = vmatprep.subr.mxu0 0.0
    %3668 = vmatpush1.msra.mxu0 0.0
    %3669 = vmatprep.subr.mxu0 0.0
    %3670 = vmatpush1.msra.mxu0 0.0
    %3671 = vmatprep.subr.mxu0 0.0
    %3672 = vmatpush1.msra.mxu0 0.0
    %3673 = vmatprep.subr.mxu0 0.0
    %3674 = vmatpush1.msra.mxu0 0.0
    %3675 = vmatprep.subr.mxu0 0.0
    %3676 = vmatpush1.msra.mxu0 0.0
    %3677 = vmatprep.subr.mxu0 0.0
    %3678 = vmatpush1.msra.mxu0 0.0
    %3679 = vmatprep.subr.mxu0 0.0
    %3680 = vmatpush1.msra.mxu0 0.0
    %3681 = vmatprep.subr.mxu0 0.0
    %3682 = vmatpush1.msra.mxu0 0.0
    %3683 = vmatprep.subr.mxu0 0.0
    %3684 = vmatpush1.msra.mxu0 0.0
    %3685 = vmatprep.subr.mxu0 0.0
    %3686 = vmatpush1.msra.mxu0 0.0
    %3687 = vmatprep.subr.mxu0 0.0
    %3688 = vmatpush1.msra.mxu0 0.0
    %3689 = vmatprep.subr.mxu0 0.0
    %3690 = vmatpush1.msra.mxu0 0.0
    %3691 = vmatprep.subr.mxu0 0.0
    %3692 = vmatpush1.msra.mxu0 0.0
    %3693 = vmatprep.subr.mxu0 0.0
    %3694 = vmatpush1.msra.mxu0 0.0
    %3695 = vmatprep.subr.mxu0 0.0
    %3696 = vmatpush1.msra.mxu0 0.0
    %3697 = vmatprep.subr.mxu0 0.0
    %3698 = vmatpush1.msra.mxu0 0.0
    %3699 = vmatprep.subr.mxu0 0.0
    %3700 = vmatpush1.msra.mxu0 0.0
    %3701 = vmatprep.subr.mxu0 0.0
    %3702 = vmatpush1.msra.mxu0 0.0
    %3703 = vmatprep.subr.mxu0 0.0
    %3704 = vmatpush1.msra.mxu0 0.0
    %3705 = vmatprep.subr.mxu0 0.0
    %3706 = vmatpush1.msra.mxu0 0.0
    %3707 = vmatprep.subr.mxu0 0.0
    %3708 = vmatpush1.msra.mxu0 0.0
    %3709 = vmatprep.subr.mxu0 0.0
    %3710 = vmatpush1.msra.mxu0 0.0
    %3711 = vmatprep.mubr.f32.mxu0 0.0
    %3712 = vmatmul.mubr.f32.gmra.mrb[0].mxu0 %v3643
    %v3713 = vpop.f32.mrb[0].mxu0
    %v3714 = vadd.f32 %v3593, %v3713
    %v3715 = vpop.f32.mrb[0].mxu0
    %3716 = vmatprep.mubr.f32.mxu0 0.0
    %3717 = vmatmul.mubr.f32.gmra.mrb[0].mxu0 %v3645
    %v3718 = vpop.f32.mrb[0].mxu0
    %v3719 = vadd.f32 %v3598, %v3718
    %v3720 = vpop.f32.mrb[0].mxu0
    %3721 = vdwg.mxu0
    %s3722 = scalar_lea.vmem %s3, 64
    %v3723 = vld [vmem:[%s3722] sm:$0xff]
    %v3724 = vld [vmem:[%s3722 + $0x8] sm:$0xff]
    %v3725 = vld [vmem:[%s3722 + $0x10] sm:$0xff]
    %v3726 = vld [vmem:[%s3722 + $0x18] sm:$0xff]
    %3727 = vmatprep.subr.mxu0 0.0
    %3728 = vmatpush1.msra.mxu0 %v3723
    %3729 = vmatprep.subr.mxu0 0.0
    %3730 = vmatpush1.msra.mxu0 %v3724
    %3731 = vmatprep.subr.mxu0 0.0
    %3732 = vmatpush1.msra.mxu0 %v3725
    %3733 = vmatprep.subr.mxu0 0.0
    %3734 = vmatpush1.msra.mxu0 %v3726
    %3735 = vmatprep.subr.mxu0 0.0
    %3736 = vmatpush1.msra.mxu0 0.0
    %3737 = vmatprep.subr.mxu0 0.0
    %3738 = vmatpush1.msra.mxu0 0.0
    %3739 = vmatprep.subr.mxu0 0.0
    %3740 = vmatpush1.msra.mxu0 0.0
    %3741 = vmatprep.subr.mxu0 0.0
    %3742 = vmatpush1.msra.mxu0 0.0
    %3743 = vmatprep.subr.mxu0 0.0
    %3744 = vmatpush1.msra.mxu0 0.0
    %3745 = vmatprep.subr.mxu0 0.0
    %3746 = vmatpush1.msra.mxu0 0.0
    %3747 = vmatprep.subr.mxu0 0.0
    %3748 = vmatpush1.msra.mxu0 0.0
    %3749 = vmatprep.subr.mxu0 0.0
    %3750 = vmatpush1.msra.mxu0 0.0
    %3751 = vmatprep.subr.mxu0 0.0
    %3752 = vmatpush1.msra.mxu0 0.0
    %3753 = vmatprep.subr.mxu0 0.0
    %3754 = vmatpush1.msra.mxu0 0.0
    %3755 = vmatprep.subr.mxu0 0.0
    %3756 = vmatpush1.msra.mxu0 0.0
    %3757 = vmatprep.subr.mxu0 0.0
    %3758 = vmatpush1.msra.mxu0 0.0
    %3759 = vmatprep.subr.mxu0 0.0
    %3760 = vmatpush1.msra.mxu0 0.0
    %3761 = vmatprep.subr.mxu0 0.0
    %3762 = vmatpush1.msra.mxu0 0.0
    %3763 = vmatprep.subr.mxu0 0.0
    %3764 = vmatpush1.msra.mxu0 0.0
    %3765 = vmatprep.subr.mxu0 0.0
    %3766 = vmatpush1.msra.mxu0 0.0
    %3767 = vmatprep.subr.mxu0 0.0
    %3768 = vmatpush1.msra.mxu0 0.0
    %3769 = vmatprep.subr.mxu0 0.0
    %3770 = vmatpush1.msra.mxu0 0.0
    %3771 = vmatprep.subr.mxu0 0.0
    %3772 = vmatpush1.msra.mxu0 0.0
    %3773 = vmatprep.subr.mxu0 0.0
    %3774 = vmatpush1.msra.mxu0 0.0
    %3775 = vmatprep.subr.mxu0 0.0
    %3776 = vmatpush1.msra.mxu0 0.0
    %3777 = vmatprep.subr.mxu0 0.0
    %3778 = vmatpush1.msra.mxu0 0.0
    %3779 = vmatprep.subr.mxu0 0.0
    %3780 = vmatpush1.msra.mxu0 0.0
    %3781 = vmatprep.subr.mxu0 0.0
    %3782 = vmatpush1.msra.mxu0 0.0
    %3783 = vmatprep.subr.mxu0 0.0
    %3784 = vmatpush1.msra.mxu0 0.0
    %3785 = vmatprep.subr.mxu0 0.0
    %3786 = vmatpush1.msra.mxu0 0.0
    %3787 = vmatprep.subr.mxu0 0.0
    %3788 = vmatpush1.msra.mxu0 0.0
    %3789 = vmatprep.subr.mxu0 0.0
    %3790 = vmatpush1.msra.mxu0 0.0
    %3791 = vmatprep.mubr.f32.mxu0 0.0
    %3792 = vmatmul.mubr.f32.gmra.mrb[0].mxu0 %v221
    %v3793 = vpop.f32.mrb[0].mxu0
    %v3794 = vadd.f32 0.0, %v3793
    %v3795 = vpop.f32.mrb[0].mxu0
    %3796 = vmatprep.mubr.f32.mxu0 0.0
    %3797 = vmatmul.mubr.f32.gmra.mrb[0].mxu0 %v223
    %v3798 = vpop.f32.mrb[0].mxu0
    %v3799 = vadd.f32 0.0, %v3798
    %v3800 = vpop.f32.mrb[0].mxu0
    %3801 = vdwg.mxu0
    %s3802 = scalar_lea.vmem %s4, 64
    %v3803 = vld [vmem:[%s3802] sm:$0xff]
    %v3804 = vld [vmem:[%s3802 + $0x8] sm:$0xff]
    %v3805 = vld [vmem:[%s3802 + $0x10] sm:$0xff]
    %v3806 = vld [vmem:[%s3802 + $0x18] sm:$0xff]
    %3807 = vmatprep.subr.mxu0 0.0
    %3808 = vmatpush1.msra.mxu0 %v3803
    %3809 = vmatprep.subr.mxu0 0.0
    %3810 = vmatpush1.msra.mxu0 %v3804
    %3811 = vmatprep.subr.mxu0 0.0
    %3812 = vmatpush1.msra.mxu0 %v3805
    %3813 = vmatprep.subr.mxu0 0.0
    %3814 = vmatpush1.msra.mxu0 %v3806
    %3815 = vmatprep.subr.mxu0 0.0
    %3816 = vmatpush1.msra.mxu0 0.0
    %3817 = vmatprep.subr.mxu0 0.0
    %3818 = vmatpush1.msra.mxu0 0.0
    %3819 = vmatprep.subr.mxu0 0.0
    %3820 = vmatpush1.msra.mxu0 0.0
    %3821 = vmatprep.subr.mxu0 0.0
    %3822 = vmatpush1.msra.mxu0 0.0
    %3823 = vmatprep.subr.mxu0 0.0
    %3824 = vmatpush1.msra.mxu0 0.0
    %3825 = vmatprep.subr.mxu0 0.0
    %3826 = vmatpush1.msra.mxu0 0.0
    %3827 = vmatprep.subr.mxu0 0.0
    %3828 = vmatpush1.msra.mxu0 0.0
    %3829 = vmatprep.subr.mxu0 0.0
    %3830 = vmatpush1.msra.mxu0 0.0
    %3831 = vmatprep.subr.mxu0 0.0
    %3832 = vmatpush1.msra.mxu0 0.0
    %3833 = vmatprep.subr.mxu0 0.0
    %3834 = vmatpush1.msra.mxu0 0.0
    %3835 = vmatprep.subr.mxu0 0.0
    %3836 = vmatpush1.msra.mxu0 0.0
    %3837 = vmatprep.subr.mxu0 0.0
    %3838 = vmatpush1.msra.mxu0 0.0
    %3839 = vmatprep.subr.mxu0 0.0
    %3840 = vmatpush1.msra.mxu0 0.0
    %3841 = vmatprep.subr.mxu0 0.0
    %3842 = vmatpush1.msra.mxu0 0.0
    %3843 = vmatprep.subr.mxu0 0.0
    %3844 = vmatpush1.msra.mxu0 0.0
    %3845 = vmatprep.subr.mxu0 0.0
    %3846 = vmatpush1.msra.mxu0 0.0
    %3847 = vmatprep.subr.mxu0 0.0
    %3848 = vmatpush1.msra.mxu0 0.0
    %3849 = vmatprep.subr.mxu0 0.0
    %3850 = vmatpush1.msra.mxu0 0.0
    %3851 = vmatprep.subr.mxu0 0.0
    %3852 = vmatpush1.msra.mxu0 0.0
    %3853 = vmatprep.subr.mxu0 0.0
    %3854 = vmatpush1.msra.mxu0 0.0
    %3855 = vmatprep.subr.mxu0 0.0
    %3856 = vmatpush1.msra.mxu0 0.0
    %3857 = vmatprep.subr.mxu0 0.0
    %3858 = vmatpush1.msra.mxu0 0.0
    %3859 = vmatprep.subr.mxu0 0.0
    %3860 = vmatpush1.msra.mxu0 0.0
    %3861 = vmatprep.subr.mxu0 0.0
    %3862 = vmatpush1.msra.mxu0 0.0
    %3863 = vmatprep.subr.mxu0 0.0
    %3864 = vmatpush1.msra.mxu0 0.0
    %3865 = vmatprep.subr.mxu0 0.0
    %3866 = vmatpush1.msra.mxu0 0.0
    %3867 = vmatprep.subr.mxu0 0.0
    %3868 = vmatpush1.msra.mxu0 0.0
    %3869 = vmatprep.subr.mxu0 0.0
    %3870 = vmatpush1.msra.mxu0 0.0
    %3871 = vmatprep.mubr.f32.mxu0 0.0
    %3872 = vmatmul.mubr.f32.gmra.mrb[0].mxu0 %v221
    %v3873 = vpop.f32.mrb[0].mxu0
    %v3874 = vadd.f32 0.0, %v3873
    %v3875 = vpop.f32.mrb[0].mxu0
    %3876 = vmatprep.mubr.f32.mxu0 0.0
    %3877 = vmatmul.mubr.f32.gmra.mrb[0].mxu0 %v223
    %v3878 = vpop.f32.mrb[0].mxu0
    %v3879 = vadd.f32 0.0, %v3878
    %v3880 = vpop.f32.mrb[0].mxu0
    %3881 = vdwg.mxu0
    %s3882 = scalar_lea.vmem %s5, 64
    %v3883 = vld [vmem:[%s3882] sm:$0xff]
    %v3884 = vld [vmem:[%s3882 + $0x8] sm:$0xff]
    %v3885 = vld [vmem:[%s3882 + $0x10] sm:$0xff]
    %v3886 = vld [vmem:[%s3882 + $0x18] sm:$0xff]
    %3887 = vmatprep.subr.mxu0 0.0
    %3888 = vmatpush1.msra.mxu0 %v3883
    %3889 = vmatprep.subr.mxu0 0.0
    %3890 = vmatpush1.msra.mxu0 %v3884
    %3891 = vmatprep.subr.mxu0 0.0
    %3892 = vmatpush1.msra.mxu0 %v3885
    %3893 = vmatprep.subr.mxu0 0.0
    %3894 = vmatpush1.msra.mxu0 %v3886
    %3895 = vmatprep.subr.mxu0 0.0
    %3896 = vmatpush1.msra.mxu0 0.0
    %3897 = vmatprep.subr.mxu0 0.0
    %3898 = vmatpush1.msra.mxu0 0.0
    %3899 = vmatprep.subr.mxu0 0.0
    %3900 = vmatpush1.msra.mxu0 0.0
    %3901 = vmatprep.subr.mxu0 0.0
    %3902 = vmatpush1.msra.mxu0 0.0
    %3903 = vmatprep.subr.mxu0 0.0
    %3904 = vmatpush1.msra.mxu0 0.0
    %3905 = vmatprep.subr.mxu0 0.0
    %3906 = vmatpush1.msra.mxu0 0.0
    %3907 = vmatprep.subr.mxu0 0.0
    %3908 = vmatpush1.msra.mxu0 0.0
    %3909 = vmatprep.subr.mxu0 0.0
    %3910 = vmatpush1.msra.mxu0 0.0
    %3911 = vmatprep.subr.mxu0 0.0
    %3912 = vmatpush1.msra.mxu0 0.0
    %3913 = vmatprep.subr.mxu0 0.0
    %3914 = vmatpush1.msra.mxu0 0.0
    %3915 = vmatprep.subr.mxu0 0.0
    %3916 = vmatpush1.msra.mxu0 0.0
    %3917 = vmatprep.subr.mxu0 0.0
    %3918 = vmatpush1.msra.mxu0 0.0
    %3919 = vmatprep.subr.mxu0 0.0
    %3920 = vmatpush1.msra.mxu0 0.0
    %3921 = vmatprep.subr.mxu0 0.0
    %3922 = vmatpush1.msra.mxu0 0.0
    %3923 = vmatprep.subr.mxu0 0.0
    %3924 = vmatpush1.msra.mxu0 0.0
    %3925 = vmatprep.subr.mxu0 0.0
    %3926 = vmatpush1.msra.mxu0 0.0
    %3927 = vmatprep.subr.mxu0 0.0
    %3928 = vmatpush1.msra.mxu0 0.0
    %3929 = vmatprep.subr.mxu0 0.0
    %3930 = vmatpush1.msra.mxu0 0.0
    %3931 = vmatprep.subr.mxu0 0.0
    %3932 = vmatpush1.msra.mxu0 0.0
    %3933 = vmatprep.subr.mxu0 0.0
    %3934 = vmatpush1.msra.mxu0 0.0
    %3935 = vmatprep.subr.mxu0 0.0
    %3936 = vmatpush1.msra.mxu0 0.0
    %3937 = vmatprep.subr.mxu0 0.0
    %3938 = vmatpush1.msra.mxu0 0.0
    %3939 = vmatprep.subr.mxu0 0.0
    %3940 = vmatpush1.msra.mxu0 0.0
    %3941 = vmatprep.subr.mxu0 0.0
    %3942 = vmatpush1.msra.mxu0 0.0
    %3943 = vmatprep.subr.mxu0 0.0
    %3944 = vmatpush1.msra.mxu0 0.0
    %3945 = vmatprep.subr.mxu0 0.0
    %3946 = vmatpush1.msra.mxu0 0.0
    %3947 = vmatprep.subr.mxu0 0.0
    %3948 = vmatpush1.msra.mxu0 0.0
    %3949 = vmatprep.subr.mxu0 0.0
    %3950 = vmatpush1.msra.mxu0 0.0
    %3951 = vmatprep.mubr.f32.mxu0 0.0
    %3952 = vmatmul.mubr.f32.gmra.mrb[0].mxu0 %v221
    %v3953 = vpop.f32.mrb[0].mxu0
    %v3954 = vadd.f32 0.0, %v3953
    %v3955 = vpop.f32.mrb[0].mxu0
    %3956 = vmatprep.mubr.f32.mxu0 0.0
    %3957 = vmatmul.mubr.f32.gmra.mrb[0].mxu0 %v223
    %v3958 = vpop.f32.mrb[0].mxu0
    %v3959 = vadd.f32 0.0, %v3958
    %v3960 = vpop.f32.mrb[0].mxu0
    %3961 = vdwg.mxu0
    %v3964 = vcombine.high %v3794, %v3794
    %v3966 = vunpack.c.l.s4 1983009808
    %v3967 = vunpack.c.0.s8 %v3966
    %v3968 = vlaneseq
    %v3969 = vshrl.u32 %v3968, 7
    %v3970 = vsub.s32 %v3967, %v3969
    %v3971 = vrot.slane %v3794, %v3970
    %v3973 = vunpack.c.l.s4 1983009808
    %v3974 = vunpack.c.0.s8 %v3973
    %v3975 = vlaneseq
    %v3976 = vshrl.u32 %v3975, 7
    %v3977 = vsub.s32 %v3974, %v3976
    %v3978 = vrot.slane %v3964, %v3977
    %v3979 = vcombine.high %v3971, %v3971
    %v3980 = vcombine.high %v3978, %v3978
    %v3981 = vcombine.high %v3799, %v3799
    %v3983 = vunpack.c.l.s4 1983009808
    %v3984 = vunpack.c.0.s8 %v3983
    %v3985 = vlaneseq
    %v3986 = vshrl.u32 %v3985, 7
    %v3987 = vsub.s32 %v3984, %v3986
    %v3988 = vrot.slane %v3799, %v3987
    %v3990 = vunpack.c.l.s4 1983009808
    %v3991 = vunpack.c.0.s8 %v3990
    %v3992 = vlaneseq
    %v3993 = vshrl.u32 %v3992, 7
    %v3994 = vsub.s32 %v3991, %v3993
    %v3995 = vrot.slane %v3981, %v3994
    %v3996 = vcombine.high %v3988, %v3988
    %v3997 = vcombine.high %v3995, %v3995
    %v4000 = vcombine.high %v3874, %v3874
    %v4002 = vunpack.c.l.s4 1983009808
    %v4003 = vunpack.c.0.s8 %v4002
    %v4004 = vlaneseq
    %v4005 = vshrl.u32 %v4004, 7
    %v4006 = vsub.s32 %v4003, %v4005
    %v4007 = vrot.slane %v3874, %v4006
    %v4009 = vunpack.c.l.s4 1983009808
    %v4010 = vunpack.c.0.s8 %v4009
    %v4011 = vlaneseq
    %v4012 = vshrl.u32 %v4011, 7
    %v4013 = vsub.s32 %v4010, %v4012
    %v4014 = vrot.slane %v4000, %v4013
    %v4015 = vcombine.high %v4007, %v4007
    %v4016 = vcombine.high %v4014, %v4014
    %v4017 = vcombine.high %v3879, %v3879
    %v4019 = vunpack.c.l.s4 1983009808
    %v4020 = vunpack.c.0.s8 %v4019
    %v4021 = vlaneseq
    %v4022 = vshrl.u32 %v4021, 7
    %v4023 = vsub.s32 %v4020, %v4022
    %v4024 = vrot.slane %v3879, %v4023
    %v4026 = vunpack.c.l.s4 1983009808
    %v4027 = vunpack.c.0.s8 %v4026
    %v4028 = vlaneseq
    %v4029 = vshrl.u32 %v4028, 7
    %v4030 = vsub.s32 %v4027, %v4029
    %v4031 = vrot.slane %v4017, %v4030
    %v4032 = vcombine.high %v4024, %v4024
    %v4033 = vcombine.high %v4031, %v4031
    %v4036 = vcombine.high %v3954, %v3954
    %v4038 = vunpack.c.l.s4 1983009808
    %v4039 = vunpack.c.0.s8 %v4038
    %v4040 = vlaneseq
    %v4041 = vshrl.u32 %v4040, 7
    %v4042 = vsub.s32 %v4039, %v4041
    %v4043 = vrot.slane %v3954, %v4042
    %v4045 = vunpack.c.l.s4 1983009808
    %v4046 = vunpack.c.0.s8 %v4045
    %v4047 = vlaneseq
    %v4048 = vshrl.u32 %v4047, 7
    %v4049 = vsub.s32 %v4046, %v4048
    %v4050 = vrot.slane %v4036, %v4049
    %v4051 = vcombine.high %v4043, %v4043
    %v4052 = vcombine.high %v4050, %v4050
    %v4053 = vcombine.high %v3959, %v3959
    %v4055 = vunpack.c.l.s4 1983009808
    %v4056 = vunpack.c.0.s8 %v4055
    %v4057 = vlaneseq
    %v4058 = vshrl.u32 %v4057, 7
    %v4059 = vsub.s32 %v4056, %v4058
    %v4060 = vrot.slane %v3959, %v4059
    %v4062 = vunpack.c.l.s4 1983009808
    %v4063 = vunpack.c.0.s8 %v4062
    %v4064 = vlaneseq
    %v4065 = vshrl.u32 %v4064, 7
    %v4066 = vsub.s32 %v4063, %v4065
    %v4067 = vrot.slane %v4053, %v4066
    %v4068 = vcombine.high %v4060, %v4060
    %v4069 = vcombine.high %v4067, %v4067
    %v4070 = vsel %vm566, %v3971, 0
    %v4072 = vsel %vm566, %v4007, 0
    %4074 = vmatprep.subr.mxu0 0.0
    %4075 = vmatpush1.xpose.msra.mxu0 %v4072
    %4076 = vmatprep.subr.mxu0 0.0
    %4077 = vmatpush1.xpose.msra.mxu0 0.0
    %4078 = vmatprep.subr.mxu0 0.0
    %4079 = vmatpush1.xpose.msra.mxu0 0.0
    %4080 = vmatprep.subr.mxu0 0.0
    %4081 = vmatpush1.xpose.msra.mxu0 0.0
    %4082 = vmatprep.subr.mxu0 0.0
    %4083 = vmatpush1.xpose.msra.mxu0 0.0
    %4084 = vmatprep.subr.mxu0 0.0
    %4085 = vmatpush1.xpose.msra.mxu0 0.0
    %4086 = vmatprep.subr.mxu0 0.0
    %4087 = vmatpush1.xpose.msra.mxu0 0.0
    %4088 = vmatprep.subr.mxu0 0.0
    %4089 = vmatpush1.xpose.msra.mxu0 0.0
    %4090 = vmatprep.subr.mxu0 0.0
    %4091 = vmatpush1.xpose.msra.mxu0 0.0
    %4092 = vmatprep.subr.mxu0 0.0
    %4093 = vmatpush1.xpose.msra.mxu0 0.0
    %4094 = vmatprep.subr.mxu0 0.0
    %4095 = vmatpush1.xpose.msra.mxu0 0.0
    %4096 = vmatprep.subr.mxu0 0.0
    %4097 = vmatpush1.xpose.msra.mxu0 0.0
    %4098 = vmatprep.subr.mxu0 0.0
    %4099 = vmatpush1.xpose.msra.mxu0 0.0
    %4100 = vmatprep.subr.mxu0 0.0
    %4101 = vmatpush1.xpose.msra.mxu0 0.0
    %4102 = vmatprep.subr.mxu0 0.0
    %4103 = vmatpush1.xpose.msra.mxu0 0.0
    %4104 = vmatprep.subr.mxu0 0.0
    %4105 = vmatpush1.xpose.msra.mxu0 0.0
    %4106 = vmatprep.subr.mxu0 0.0
    %4107 = vmatpush1.xpose.msra.mxu0 0.0
    %4108 = vmatprep.subr.mxu0 0.0
    %4109 = vmatpush1.xpose.msra.mxu0 0.0
    %4110 = vmatprep.subr.mxu0 0.0
    %4111 = vmatpush1.xpose.msra.mxu0 0.0
    %4112 = vmatprep.subr.mxu0 0.0
    %4113 = vmatpush1.xpose.msra.mxu0 0.0
    %4114 = vmatprep.subr.mxu0 0.0
    %4115 = vmatpush1.xpose.msra.mxu0 0.0
    %4116 = vmatprep.subr.mxu0 0.0
    %4117 = vmatpush1.xpose.msra.mxu0 0.0
    %4118 = vmatprep.subr.mxu0 0.0
    %4119 = vmatpush1.xpose.msra.mxu0 0.0
    %4120 = vmatprep.subr.mxu0 0.0
    %4121 = vmatpush1.xpose.msra.mxu0 0.0
    %4122 = vmatprep.subr.mxu0 0.0
    %4123 = vmatpush1.xpose.msra.mxu0 0.0
    %4124 = vmatprep.subr.mxu0 0.0
    %4125 = vmatpush1.xpose.msra.mxu0 0.0
    %4126 = vmatprep.subr.mxu0 0.0
    %4127 = vmatpush1.xpose.msra.mxu0 0.0
    %4128 = vmatprep.subr.mxu0 0.0
    %4129 = vmatpush1.xpose.msra.mxu0 0.0
    %4130 = vmatprep.subr.mxu0 0.0
    %4131 = vmatpush1.xpose.msra.mxu0 0.0
    %4132 = vmatprep.subr.mxu0 0.0
    %4133 = vmatpush1.xpose.msra.mxu0 0.0
    %4134 = vmatprep.subr.mxu0 0.0
    %4135 = vmatpush1.xpose.msra.mxu0 0.0
    %4136 = vmatprep.subr.mxu0 0.0
    %4137 = vmatpush1.xpose.msra.mxu0 0.0
    %4138 = vmatprep.mubr.f32.mxu0 0.0
    %4139 = vmatmul.mubr.f32.gmra.mrb[0].mxu0 %v4070
    %v4140 = vpop.f32.mrb[0].mxu0
    %v4141 = vadd.f32 0.0, %v4140
    %v4142 = vpop.f32.mrb[0].mxu0
    %4143 = vdwg.mxu0
    %v4144 = vsel %vm566, %v3979, 0
    %v4146 = vsel %vm566, %v4015, 0
    %4148 = vmatprep.subr.mxu0 0.0
    %4149 = vmatpush1.xpose.msra.mxu0 %v4146
    %4150 = vmatprep.subr.mxu0 0.0
    %4151 = vmatpush1.xpose.msra.mxu0 0.0
    %4152 = vmatprep.subr.mxu0 0.0
    %4153 = vmatpush1.xpose.msra.mxu0 0.0
    %4154 = vmatprep.subr.mxu0 0.0
    %4155 = vmatpush1.xpose.msra.mxu0 0.0
    %4156 = vmatprep.subr.mxu0 0.0
    %4157 = vmatpush1.xpose.msra.mxu0 0.0
    %4158 = vmatprep.subr.mxu0 0.0
    %4159 = vmatpush1.xpose.msra.mxu0 0.0
    %4160 = vmatprep.subr.mxu0 0.0
    %4161 = vmatpush1.xpose.msra.mxu0 0.0
    %4162 = vmatprep.subr.mxu0 0.0
    %4163 = vmatpush1.xpose.msra.mxu0 0.0
    %4164 = vmatprep.subr.mxu0 0.0
    %4165 = vmatpush1.xpose.msra.mxu0 0.0
    %4166 = vmatprep.subr.mxu0 0.0
    %4167 = vmatpush1.xpose.msra.mxu0 0.0
    %4168 = vmatprep.subr.mxu0 0.0
    %4169 = vmatpush1.xpose.msra.mxu0 0.0
    %4170 = vmatprep.subr.mxu0 0.0
    %4171 = vmatpush1.xpose.msra.mxu0 0.0
    %4172 = vmatprep.subr.mxu0 0.0
    %4173 = vmatpush1.xpose.msra.mxu0 0.0
    %4174 = vmatprep.subr.mxu0 0.0
    %4175 = vmatpush1.xpose.msra.mxu0 0.0
    %4176 = vmatprep.subr.mxu0 0.0
    %4177 = vmatpush1.xpose.msra.mxu0 0.0
    %4178 = vmatprep.subr.mxu0 0.0
    %4179 = vmatpush1.xpose.msra.mxu0 0.0
    %4180 = vmatprep.subr.mxu0 0.0
    %4181 = vmatpush1.xpose.msra.mxu0 0.0
    %4182 = vmatprep.subr.mxu0 0.0
    %4183 = vmatpush1.xpose.msra.mxu0 0.0
    %4184 = vmatprep.subr.mxu0 0.0
    %4185 = vmatpush1.xpose.msra.mxu0 0.0
    %4186 = vmatprep.subr.mxu0 0.0
    %4187 = vmatpush1.xpose.msra.mxu0 0.0
    %4188 = vmatprep.subr.mxu0 0.0
    %4189 = vmatpush1.xpose.msra.mxu0 0.0
    %4190 = vmatprep.subr.mxu0 0.0
    %4191 = vmatpush1.xpose.msra.mxu0 0.0
    %4192 = vmatprep.subr.mxu0 0.0
    %4193 = vmatpush1.xpose.msra.mxu0 0.0
    %4194 = vmatprep.subr.mxu0 0.0
    %4195 = vmatpush1.xpose.msra.mxu0 0.0
    %4196 = vmatprep.subr.mxu0 0.0
    %4197 = vmatpush1.xpose.msra.mxu0 0.0
    %4198 = vmatprep.subr.mxu0 0.0
    %4199 = vmatpush1.xpose.msra.mxu0 0.0
    %4200 = vmatprep.subr.mxu0 0.0
    %4201 = vmatpush1.xpose.msra.mxu0 0.0
    %4202 = vmatprep.subr.mxu0 0.0
    %4203 = vmatpush1.xpose.msra.mxu0 0.0
    %4204 = vmatprep.subr.mxu0 0.0
    %4205 = vmatpush1.xpose.msra.mxu0 0.0
    %4206 = vmatprep.subr.mxu0 0.0
    %4207 = vmatpush1.xpose.msra.mxu0 0.0
    %4208 = vmatprep.subr.mxu0 0.0
    %4209 = vmatpush1.xpose.msra.mxu0 0.0
    %4210 = vmatprep.subr.mxu0 0.0
    %4211 = vmatpush1.xpose.msra.mxu0 0.0
    %4212 = vmatprep.mubr.f32.mxu0 0.0
    %4213 = vmatmul.mubr.f32.gmra.mrb[0].mxu0 %v4144
    %v4214 = vpop.f32.mrb[0].mxu0
    %v4215 = vadd.f32 0.0, %v4214
    %v4216 = vpop.f32.mrb[0].mxu0
    %4217 = vdwg.mxu0
    %v4218 = vsel %vm566, %v3978, 0
    %v4220 = vsel %vm566, %v4014, 0
    %4222 = vmatprep.subr.mxu0 0.0
    %4223 = vmatpush1.xpose.msra.mxu0 %v4220
    %4224 = vmatprep.subr.mxu0 0.0
    %4225 = vmatpush1.xpose.msra.mxu0 0.0
    %4226 = vmatprep.subr.mxu0 0.0
    %4227 = vmatpush1.xpose.msra.mxu0 0.0
    %4228 = vmatprep.subr.mxu0 0.0
    %4229 = vmatpush1.xpose.msra.mxu0 0.0
    %4230 = vmatprep.subr.mxu0 0.0
    %4231 = vmatpush1.xpose.msra.mxu0 0.0
    %4232 = vmatprep.subr.mxu0 0.0
    %4233 = vmatpush1.xpose.msra.mxu0 0.0
    %4234 = vmatprep.subr.mxu0 0.0
    %4235 = vmatpush1.xpose.msra.mxu0 0.0
    %4236 = vmatprep.subr.mxu0 0.0
    %4237 = vmatpush1.xpose.msra.mxu0 0.0
    %4238 = vmatprep.subr.mxu0 0.0
    %4239 = vmatpush1.xpose.msra.mxu0 0.0
    %4240 = vmatprep.subr.mxu0 0.0
    %4241 = vmatpush1.xpose.msra.mxu0 0.0
    %4242 = vmatprep.subr.mxu0 0.0
    %4243 = vmatpush1.xpose.msra.mxu0 0.0
    %4244 = vmatprep.subr.mxu0 0.0
    %4245 = vmatpush1.xpose.msra.mxu0 0.0
    %4246 = vmatprep.subr.mxu0 0.0
    %4247 = vmatpush1.xpose.msra.mxu0 0.0
    %4248 = vmatprep.subr.mxu0 0.0
    %4249 = vmatpush1.xpose.msra.mxu0 0.0
    %4250 = vmatprep.subr.mxu0 0.0
    %4251 = vmatpush1.xpose.msra.mxu0 0.0
    %4252 = vmatprep.subr.mxu0 0.0
    %4253 = vmatpush1.xpose.msra.mxu0 0.0
    %4254 = vmatprep.subr.mxu0 0.0
    %4255 = vmatpush1.xpose.msra.mxu0 0.0
    %4256 = vmatprep.subr.mxu0 0.0
    %4257 = vmatpush1.xpose.msra.mxu0 0.0
    %4258 = vmatprep.subr.mxu0 0.0
    %4259 = vmatpush1.xpose.msra.mxu0 0.0
    %4260 = vmatprep.subr.mxu0 0.0
    %4261 = vmatpush1.xpose.msra.mxu0 0.0
    %4262 = vmatprep.subr.mxu0 0.0
    %4263 = vmatpush1.xpose.msra.mxu0 0.0
    %4264 = vmatprep.subr.mxu0 0.0
    %4265 = vmatpush1.xpose.msra.mxu0 0.0
    %4266 = vmatprep.subr.mxu0 0.0
    %4267 = vmatpush1.xpose.msra.mxu0 0.0
    %4268 = vmatprep.subr.mxu0 0.0
    %4269 = vmatpush1.xpose.msra.mxu0 0.0
    %4270 = vmatprep.subr.mxu0 0.0
    %4271 = vmatpush1.xpose.msra.mxu0 0.0
    %4272 = vmatprep.subr.mxu0 0.0
    %4273 = vmatpush1.xpose.msra.mxu0 0.0
    %4274 = vmatprep.subr.mxu0 0.0
    %4275 = vmatpush1.xpose.msra.mxu0 0.0
    %4276 = vmatprep.subr.mxu0 0.0
    %4277 = vmatpush1.xpose.msra.mxu0 0.0
    %4278 = vmatprep.subr.mxu0 0.0
    %4279 = vmatpush1.xpose.msra.mxu0 0.0
    %4280 = vmatprep.subr.mxu0 0.0
    %4281 = vmatpush1.xpose.msra.mxu0 0.0
    %4282 = vmatprep.subr.mxu0 0.0
    %4283 = vmatpush1.xpose.msra.mxu0 0.0
    %4284 = vmatprep.subr.mxu0 0.0
    %4285 = vmatpush1.xpose.msra.mxu0 0.0
    %4286 = vmatprep.mubr.f32.mxu0 0.0
    %4287 = vmatmul.mubr.f32.gmra.mrb[0].mxu0 %v4218
    %v4288 = vpop.f32.mrb[0].mxu0
    %v4289 = vadd.f32 0.0, %v4288
    %v4290 = vpop.f32.mrb[0].mxu0
    %4291 = vdwg.mxu0
    %v4292 = vsel %vm566, %v3980, 0
    %v4294 = vsel %vm566, %v4016, 0
    %4296 = vmatprep.subr.mxu0 0.0
    %4297 = vmatpush1.xpose.msra.mxu0 %v4294
    %4298 = vmatprep.subr.mxu0 0.0
    %4299 = vmatpush1.xpose.msra.mxu0 0.0
    %4300 = vmatprep.subr.mxu0 0.0
    %4301 = vmatpush1.xpose.msra.mxu0 0.0
    %4302 = vmatprep.subr.mxu0 0.0
    %4303 = vmatpush1.xpose.msra.mxu0 0.0
    %4304 = vmatprep.subr.mxu0 0.0
    %4305 = vmatpush1.xpose.msra.mxu0 0.0
    %4306 = vmatprep.subr.mxu0 0.0
    %4307 = vmatpush1.xpose.msra.mxu0 0.0
    %4308 = vmatprep.subr.mxu0 0.0
    %4309 = vmatpush1.xpose.msra.mxu0 0.0
    %4310 = vmatprep.subr.mxu0 0.0
    %4311 = vmatpush1.xpose.msra.mxu0 0.0
    %4312 = vmatprep.subr.mxu0 0.0
    %4313 = vmatpush1.xpose.msra.mxu0 0.0
    %4314 = vmatprep.subr.mxu0 0.0
    %4315 = vmatpush1.xpose.msra.mxu0 0.0
    %4316 = vmatprep.subr.mxu0 0.0
    %4317 = vmatpush1.xpose.msra.mxu0 0.0
    %4318 = vmatprep.subr.mxu0 0.0
    %4319 = vmatpush1.xpose.msra.mxu0 0.0
    %4320 = vmatprep.subr.mxu0 0.0
    %4321 = vmatpush1.xpose.msra.mxu0 0.0
    %4322 = vmatprep.subr.mxu0 0.0
    %4323 = vmatpush1.xpose.msra.mxu0 0.0
    %4324 = vmatprep.subr.mxu0 0.0
    %4325 = vmatpush1.xpose.msra.mxu0 0.0
    %4326 = vmatprep.subr.mxu0 0.0
    %4327 = vmatpush1.xpose.msra.mxu0 0.0
    %4328 = vmatprep.subr.mxu0 0.0
    %4329 = vmatpush1.xpose.msra.mxu0 0.0
    %4330 = vmatprep.subr.mxu0 0.0
    %4331 = vmatpush1.xpose.msra.mxu0 0.0
    %4332 = vmatprep.subr.mxu0 0.0
    %4333 = vmatpush1.xpose.msra.mxu0 0.0
    %4334 = vmatprep.subr.mxu0 0.0
    %4335 = vmatpush1.xpose.msra.mxu0 0.0
    %4336 = vmatprep.subr.mxu0 0.0
    %4337 = vmatpush1.xpose.msra.mxu0 0.0
    %4338 = vmatprep.subr.mxu0 0.0
    %4339 = vmatpush1.xpose.msra.mxu0 0.0
    %4340 = vmatprep.subr.mxu0 0.0
    %4341 = vmatpush1.xpose.msra.mxu0 0.0
    %4342 = vmatprep.subr.mxu0 0.0
    %4343 = vmatpush1.xpose.msra.mxu0 0.0
    %4344 = vmatprep.subr.mxu0 0.0
    %4345 = vmatpush1.xpose.msra.mxu0 0.0
    %4346 = vmatprep.subr.mxu0 0.0
    %4347 = vmatpush1.xpose.msra.mxu0 0.0
    %4348 = vmatprep.subr.mxu0 0.0
    %4349 = vmatpush1.xpose.msra.mxu0 0.0
    %4350 = vmatprep.subr.mxu0 0.0
    %4351 = vmatpush1.xpose.msra.mxu0 0.0
    %4352 = vmatprep.subr.mxu0 0.0
    %4353 = vmatpush1.xpose.msra.mxu0 0.0
    %4354 = vmatprep.subr.mxu0 0.0
    %4355 = vmatpush1.xpose.msra.mxu0 0.0
    %4356 = vmatprep.subr.mxu0 0.0
    %4357 = vmatpush1.xpose.msra.mxu0 0.0
    %4358 = vmatprep.subr.mxu0 0.0
    %4359 = vmatpush1.xpose.msra.mxu0 0.0
    %4360 = vmatprep.mubr.f32.mxu0 0.0
    %4361 = vmatmul.mubr.f32.gmra.mrb[0].mxu0 %v4292
    %v4362 = vpop.f32.mrb[0].mxu0
    %v4363 = vadd.f32 0.0, %v4362
    %v4364 = vpop.f32.mrb[0].mxu0
    %4365 = vdwg.mxu0
    %v4366 = vsel %vm566, %v3988, 0
    %v4368 = vsel %vm566, %v4024, 0
    %4370 = vmatprep.subr.mxu0 0.0
    %4371 = vmatpush1.xpose.msra.mxu0 %v4368
    %4372 = vmatprep.subr.mxu0 0.0
    %4373 = vmatpush1.xpose.msra.mxu0 0.0
    %4374 = vmatprep.subr.mxu0 0.0
    %4375 = vmatpush1.xpose.msra.mxu0 0.0
    %4376 = vmatprep.subr.mxu0 0.0
    %4377 = vmatpush1.xpose.msra.mxu0 0.0
    %4378 = vmatprep.subr.mxu0 0.0
    %4379 = vmatpush1.xpose.msra.mxu0 0.0
    %4380 = vmatprep.subr.mxu0 0.0
    %4381 = vmatpush1.xpose.msra.mxu0 0.0
    %4382 = vmatprep.subr.mxu0 0.0
    %4383 = vmatpush1.xpose.msra.mxu0 0.0
    %4384 = vmatprep.subr.mxu0 0.0
    %4385 = vmatpush1.xpose.msra.mxu0 0.0
    %4386 = vmatprep.subr.mxu0 0.0
    %4387 = vmatpush1.xpose.msra.mxu0 0.0
    %4388 = vmatprep.subr.mxu0 0.0
    %4389 = vmatpush1.xpose.msra.mxu0 0.0
    %4390 = vmatprep.subr.mxu0 0.0
    %4391 = vmatpush1.xpose.msra.mxu0 0.0
    %4392 = vmatprep.subr.mxu0 0.0
    %4393 = vmatpush1.xpose.msra.mxu0 0.0
    %4394 = vmatprep.subr.mxu0 0.0
    %4395 = vmatpush1.xpose.msra.mxu0 0.0
    %4396 = vmatprep.subr.mxu0 0.0
    %4397 = vmatpush1.xpose.msra.mxu0 0.0
    %4398 = vmatprep.subr.mxu0 0.0
    %4399 = vmatpush1.xpose.msra.mxu0 0.0
    %4400 = vmatprep.subr.mxu0 0.0
    %4401 = vmatpush1.xpose.msra.mxu0 0.0
    %4402 = vmatprep.subr.mxu0 0.0
    %4403 = vmatpush1.xpose.msra.mxu0 0.0
    %4404 = vmatprep.subr.mxu0 0.0
    %4405 = vmatpush1.xpose.msra.mxu0 0.0
    %4406 = vmatprep.subr.mxu0 0.0
    %4407 = vmatpush1.xpose.msra.mxu0 0.0
    %4408 = vmatprep.subr.mxu0 0.0
    %4409 = vmatpush1.xpose.msra.mxu0 0.0
    %4410 = vmatprep.subr.mxu0 0.0
    %4411 = vmatpush1.xpose.msra.mxu0 0.0
    %4412 = vmatprep.subr.mxu0 0.0
    %4413 = vmatpush1.xpose.msra.mxu0 0.0
    %4414 = vmatprep.subr.mxu0 0.0
    %4415 = vmatpush1.xpose.msra.mxu0 0.0
    %4416 = vmatprep.subr.mxu0 0.0
    %4417 = vmatpush1.xpose.msra.mxu0 0.0
    %4418 = vmatprep.subr.mxu0 0.0
    %4419 = vmatpush1.xpose.msra.mxu0 0.0
    %4420 = vmatprep.subr.mxu0 0.0
    %4421 = vmatpush1.xpose.msra.mxu0 0.0
    %4422 = vmatprep.subr.mxu0 0.0
    %4423 = vmatpush1.xpose.msra.mxu0 0.0
    %4424 = vmatprep.subr.mxu0 0.0
    %4425 = vmatpush1.xpose.msra.mxu0 0.0
    %4426 = vmatprep.subr.mxu0 0.0
    %4427 = vmatpush1.xpose.msra.mxu0 0.0
    %4428 = vmatprep.subr.mxu0 0.0
    %4429 = vmatpush1.xpose.msra.mxu0 0.0
    %4430 = vmatprep.subr.mxu0 0.0
    %4431 = vmatpush1.xpose.msra.mxu0 0.0
    %4432 = vmatprep.subr.mxu0 0.0
    %4433 = vmatpush1.xpose.msra.mxu0 0.0
    %4434 = vmatprep.mubr.f32.mxu0 0.0
    %4435 = vmatmul.mubr.f32.gmra.mrb[0].mxu0 %v4366
    %v4436 = vpop.f32.mrb[0].mxu0
    %v4437 = vadd.f32 0.0, %v4436
    %v4438 = vpop.f32.mrb[0].mxu0
    %4439 = vdwg.mxu0
    %v4440 = vsel %vm566, %v3996, 0
    %v4442 = vsel %vm566, %v4032, 0
    %4444 = vmatprep.subr.mxu0 0.0
    %4445 = vmatpush1.xpose.msra.mxu0 %v4442
    %4446 = vmatprep.subr.mxu0 0.0
    %4447 = vmatpush1.xpose.msra.mxu0 0.0
    %4448 = vmatprep.subr.mxu0 0.0
    %4449 = vmatpush1.xpose.msra.mxu0 0.0
    %4450 = vmatprep.subr.mxu0 0.0
    %4451 = vmatpush1.xpose.msra.mxu0 0.0
    %4452 = vmatprep.subr.mxu0 0.0
    %4453 = vmatpush1.xpose.msra.mxu0 0.0
    %4454 = vmatprep.subr.mxu0 0.0
    %4455 = vmatpush1.xpose.msra.mxu0 0.0
    %4456 = vmatprep.subr.mxu0 0.0
    %4457 = vmatpush1.xpose.msra.mxu0 0.0
    %4458 = vmatprep.subr.mxu0 0.0
    %4459 = vmatpush1.xpose.msra.mxu0 0.0
    %4460 = vmatprep.subr.mxu0 0.0
    %4461 = vmatpush1.xpose.msra.mxu0 0.0
    %4462 = vmatprep.subr.mxu0 0.0
    %4463 = vmatpush1.xpose.msra.mxu0 0.0
    %4464 = vmatprep.subr.mxu0 0.0
    %4465 = vmatpush1.xpose.msra.mxu0 0.0
    %4466 = vmatprep.subr.mxu0 0.0
    %4467 = vmatpush1.xpose.msra.mxu0 0.0
    %4468 = vmatprep.subr.mxu0 0.0
    %4469 = vmatpush1.xpose.msra.mxu0 0.0
    %4470 = vmatprep.subr.mxu0 0.0
    %4471 = vmatpush1.xpose.msra.mxu0 0.0
    %4472 = vmatprep.subr.mxu0 0.0
    %4473 = vmatpush1.xpose.msra.mxu0 0.0
    %4474 = vmatprep.subr.mxu0 0.0
    %4475 = vmatpush1.xpose.msra.mxu0 0.0
    %4476 = vmatprep.subr.mxu0 0.0
    %4477 = vmatpush1.xpose.msra.mxu0 0.0
    %4478 = vmatprep.subr.mxu0 0.0
    %4479 = vmatpush1.xpose.msra.mxu0 0.0
    %4480 = vmatprep.subr.mxu0 0.0
    %4481 = vmatpush1.xpose.msra.mxu0 0.0
    %4482 = vmatprep.subr.mxu0 0.0
    %4483 = vmatpush1.xpose.msra.mxu0 0.0
    %4484 = vmatprep.subr.mxu0 0.0
    %4485 = vmatpush1.xpose.msra.mxu0 0.0
    %4486 = vmatprep.subr.mxu0 0.0
    %4487 = vmatpush1.xpose.msra.mxu0 0.0
    %4488 = vmatprep.subr.mxu0 0.0
    %4489 = vmatpush1.xpose.msra.mxu0 0.0
    %4490 = vmatprep.subr.mxu0 0.0
    %4491 = vmatpush1.xpose.msra.mxu0 0.0
    %4492 = vmatprep.subr.mxu0 0.0
    %4493 = vmatpush1.xpose.msra.mxu0 0.0
    %4494 = vmatprep.subr.mxu0 0.0
    %4495 = vmatpush1.xpose.msra.mxu0 0.0
    %4496 = vmatprep.subr.mxu0 0.0
    %4497 = vmatpush1.xpose.msra.mxu0 0.0
    %4498 = vmatprep.subr.mxu0 0.0
    %4499 = vmatpush1.xpose.msra.mxu0 0.0
    %4500 = vmatprep.subr.mxu0 0.0
    %4501 = vmatpush1.xpose.msra.mxu0 0.0
    %4502 = vmatprep.subr.mxu0 0.0
    %4503 = vmatpush1.xpose.msra.mxu0 0.0
    %4504 = vmatprep.subr.mxu0 0.0
    %4505 = vmatpush1.xpose.msra.mxu0 0.0
    %4506 = vmatprep.subr.mxu0 0.0
    %4507 = vmatpush1.xpose.msra.mxu0 0.0
    %4508 = vmatprep.mubr.f32.mxu0 0.0
    %4509 = vmatmul.mubr.f32.gmra.mrb[0].mxu0 %v4440
    %v4510 = vpop.f32.mrb[0].mxu0
    %v4511 = vadd.f32 0.0, %v4510
    %v4512 = vpop.f32.mrb[0].mxu0
    %4513 = vdwg.mxu0
    %v4514 = vsel %vm566, %v3995, 0
    %v4516 = vsel %vm566, %v4031, 0
    %4518 = vmatprep.subr.mxu0 0.0
    %4519 = vmatpush1.xpose.msra.mxu0 %v4516
    %4520 = vmatprep.subr.mxu0 0.0
    %4521 = vmatpush1.xpose.msra.mxu0 0.0
    %4522 = vmatprep.subr.mxu0 0.0
    %4523 = vmatpush1.xpose.msra.mxu0 0.0
    %4524 = vmatprep.subr.mxu0 0.0
    %4525 = vmatpush1.xpose.msra.mxu0 0.0
    %4526 = vmatprep.subr.mxu0 0.0
    %4527 = vmatpush1.xpose.msra.mxu0 0.0
    %4528 = vmatprep.subr.mxu0 0.0
    %4529 = vmatpush1.xpose.msra.mxu0 0.0
    %4530 = vmatprep.subr.mxu0 0.0
    %4531 = vmatpush1.xpose.msra.mxu0 0.0
    %4532 = vmatprep.subr.mxu0 0.0
    %4533 = vmatpush1.xpose.msra.mxu0 0.0
    %4534 = vmatprep.subr.mxu0 0.0
    %4535 = vmatpush1.xpose.msra.mxu0 0.0
    %4536 = vmatprep.subr.mxu0 0.0
    %4537 = vmatpush1.xpose.msra.mxu0 0.0
    %4538 = vmatprep.subr.mxu0 0.0
    %4539 = vmatpush1.xpose.msra.mxu0 0.0
    %4540 = vmatprep.subr.mxu0 0.0
    %4541 = vmatpush1.xpose.msra.mxu0 0.0
    %4542 = vmatprep.subr.mxu0 0.0
    %4543 = vmatpush1.xpose.msra.mxu0 0.0
    %4544 = vmatprep.subr.mxu0 0.0
    %4545 = vmatpush1.xpose.msra.mxu0 0.0
    %4546 = vmatprep.subr.mxu0 0.0
    %4547 = vmatpush1.xpose.msra.mxu0 0.0
    %4548 = vmatprep.subr.mxu0 0.0
    %4549 = vmatpush1.xpose.msra.mxu0 0.0
    %4550 = vmatprep.subr.mxu0 0.0
    %4551 = vmatpush1.xpose.msra.mxu0 0.0
    %4552 = vmatprep.subr.mxu0 0.0
    %4553 = vmatpush1.xpose.msra.mxu0 0.0
    %4554 = vmatprep.subr.mxu0 0.0
    %4555 = vmatpush1.xpose.msra.mxu0 0.0
    %4556 = vmatprep.subr.mxu0 0.0
    %4557 = vmatpush1.xpose.msra.mxu0 0.0
    %4558 = vmatprep.subr.mxu0 0.0
    %4559 = vmatpush1.xpose.msra.mxu0 0.0
    %4560 = vmatprep.subr.mxu0 0.0
    %4561 = vmatpush1.xpose.msra.mxu0 0.0
    %4562 = vmatprep.subr.mxu0 0.0
    %4563 = vmatpush1.xpose.msra.mxu0 0.0
    %4564 = vmatprep.subr.mxu0 0.0
    %4565 = vmatpush1.xpose.msra.mxu0 0.0
    %4566 = vmatprep.subr.mxu0 0.0
    %4567 = vmatpush1.xpose.msra.mxu0 0.0
    %4568 = vmatprep.subr.mxu0 0.0
    %4569 = vmatpush1.xpose.msra.mxu0 0.0
    %4570 = vmatprep.subr.mxu0 0.0
    %4571 = vmatpush1.xpose.msra.mxu0 0.0
    %4572 = vmatprep.subr.mxu0 0.0
    %4573 = vmatpush1.xpose.msra.mxu0 0.0
    %4574 = vmatprep.subr.mxu0 0.0
    %4575 = vmatpush1.xpose.msra.mxu0 0.0
    %4576 = vmatprep.subr.mxu0 0.0
    %4577 = vmatpush1.xpose.msra.mxu0 0.0
    %4578 = vmatprep.subr.mxu0 0.0
    %4579 = vmatpush1.xpose.msra.mxu0 0.0
    %4580 = vmatprep.subr.mxu0 0.0
    %4581 = vmatpush1.xpose.msra.mxu0 0.0
    %4582 = vmatprep.mubr.f32.mxu0 0.0
    %4583 = vmatmul.mubr.f32.gmra.mrb[0].mxu0 %v4514
    %v4584 = vpop.f32.mrb[0].mxu0
    %v4585 = vadd.f32 0.0, %v4584
    %v4586 = vpop.f32.mrb[0].mxu0
    %4587 = vdwg.mxu0
    %v4588 = vsel %vm566, %v3997, 0
    %v4590 = vsel %vm566, %v4033, 0
    %4592 = vmatprep.subr.mxu0 0.0
    %4593 = vmatpush1.xpose.msra.mxu0 %v4590
    %4594 = vmatprep.subr.mxu0 0.0
    %4595 = vmatpush1.xpose.msra.mxu0 0.0
    %4596 = vmatprep.subr.mxu0 0.0
    %4597 = vmatpush1.xpose.msra.mxu0 0.0
    %4598 = vmatprep.subr.mxu0 0.0
    %4599 = vmatpush1.xpose.msra.mxu0 0.0
    %4600 = vmatprep.subr.mxu0 0.0
    %4601 = vmatpush1.xpose.msra.mxu0 0.0
    %4602 = vmatprep.subr.mxu0 0.0
    %4603 = vmatpush1.xpose.msra.mxu0 0.0
    %4604 = vmatprep.subr.mxu0 0.0
    %4605 = vmatpush1.xpose.msra.mxu0 0.0
    %4606 = vmatprep.subr.mxu0 0.0
    %4607 = vmatpush1.xpose.msra.mxu0 0.0
    %4608 = vmatprep.subr.mxu0 0.0
    %4609 = vmatpush1.xpose.msra.mxu0 0.0
    %4610 = vmatprep.subr.mxu0 0.0
    %4611 = vmatpush1.xpose.msra.mxu0 0.0
    %4612 = vmatprep.subr.mxu0 0.0
    %4613 = vmatpush1.xpose.msra.mxu0 0.0
    %4614 = vmatprep.subr.mxu0 0.0
    %4615 = vmatpush1.xpose.msra.mxu0 0.0
    %4616 = vmatprep.subr.mxu0 0.0
    %4617 = vmatpush1.xpose.msra.mxu0 0.0
    %4618 = vmatprep.subr.mxu0 0.0
    %4619 = vmatpush1.xpose.msra.mxu0 0.0
    %4620 = vmatprep.subr.mxu0 0.0
    %4621 = vmatpush1.xpose.msra.mxu0 0.0
    %4622 = vmatprep.subr.mxu0 0.0
    %4623 = vmatpush1.xpose.msra.mxu0 0.0
    %4624 = vmatprep.subr.mxu0 0.0
    %4625 = vmatpush1.xpose.msra.mxu0 0.0
    %4626 = vmatprep.subr.mxu0 0.0
    %4627 = vmatpush1.xpose.msra.mxu0 0.0
    %4628 = vmatprep.subr.mxu0 0.0
    %4629 = vmatpush1.xpose.msra.mxu0 0.0
    %4630 = vmatprep.subr.mxu0 0.0
    %4631 = vmatpush1.xpose.msra.mxu0 0.0
    %4632 = vmatprep.subr.mxu0 0.0
    %4633 = vmatpush1.xpose.msra.mxu0 0.0
    %4634 = vmatprep.subr.mxu0 0.0
    %4635 = vmatpush1.xpose.msra.mxu0 0.0
    %4636 = vmatprep.subr.mxu0 0.0
    %4637 = vmatpush1.xpose.msra.mxu0 0.0
    %4638 = vmatprep.subr.mxu0 0.0
    %4639 = vmatpush1.xpose.msra.mxu0 0.0
    %4640 = vmatprep.subr.mxu0 0.0
    %4641 = vmatpush1.xpose.msra.mxu0 0.0
    %4642 = vmatprep.subr.mxu0 0.0
    %4643 = vmatpush1.xpose.msra.mxu0 0.0
    %4644 = vmatprep.subr.mxu0 0.0
    %4645 = vmatpush1.xpose.msra.mxu0 0.0
    %4646 = vmatprep.subr.mxu0 0.0
    %4647 = vmatpush1.xpose.msra.mxu0 0.0
    %4648 = vmatprep.subr.mxu0 0.0
    %4649 = vmatpush1.xpose.msra.mxu0 0.0
    %4650 = vmatprep.subr.mxu0 0.0
    %4651 = vmatpush1.xpose.msra.mxu0 0.0
    %4652 = vmatprep.subr.mxu0 0.0
    %4653 = vmatpush1.xpose.msra.mxu0 0.0
    %4654 = vmatprep.subr.mxu0 0.0
    %4655 = vmatpush1.xpose.msra.mxu0 0.0
    %4656 = vmatprep.mubr.f32.mxu0 0.0
    %4657 = vmatmul.mubr.f32.gmra.mrb[0].mxu0 %v4588
    %v4658 = vpop.f32.mrb[0].mxu0
    %v4659 = vadd.f32 0.0, %v4658
    %v4660 = vpop.f32.mrb[0].mxu0
    %4661 = vdwg.mxu0
    %v4662 = vsel %vm1159, %v4141, -inf
    %4663 = vmax.xlane.f32.xlu0 %v4662
    %v4664 = vpop.xlane.xlu0 %4663
    %v4665 = vsel %vm1159, %v4215, -inf
    %4666 = vmax.xlane.f32.xlu0 %v4665
    %v4667 = vpop.xlane.xlu0 %4666
    %v4668 = vsel %vm1159, %v4289, -inf
    %4669 = vmax.xlane.f32.xlu0 %v4668
    %v4670 = vpop.xlane.xlu0 %4669
    %v4671 = vsel %vm1159, %v4363, -inf
    %4672 = vmax.xlane.f32.xlu0 %v4671
    %v4673 = vpop.xlane.xlu0 %4672
    %v4674 = vsel %vm1159, %v4437, -inf
    %4675 = vmax.xlane.f32.xlu0 %v4674
    %v4676 = vpop.xlane.xlu0 %4675
    %v4677 = vsel %vm1159, %v4511, -inf
    %4678 = vmax.xlane.f32.xlu0 %v4677
    %v4679 = vpop.xlane.xlu0 %4678
    %v4680 = vsel %vm1159, %v4585, -inf
    %4681 = vmax.xlane.f32.xlu0 %v4680
    %v4682 = vpop.xlane.xlu0 %4681
    %v4683 = vsel %vm1159, %v4659, -inf
    %4684 = vmax.xlane.f32.xlu0 %v4683
    %v4685 = vpop.xlane.xlu0 %4684
    %v4686 = vsub.f32 %v4141, %v4664
    %v4687 = vsub.f32 %v4215, %v4667
    %v4688 = vsub.f32 %v4289, %v4670
    %v4689 = vsub.f32 %v4363, %v4673
    %v4690 = vsub.f32 %v4437, %v4676
    %v4691 = vsub.f32 %v4511, %v4679
    %v4692 = vsub.f32 %v4585, %v4682
    %v4693 = vsub.f32 %v4659, %v4685
    %v4694 = vmul.f32 %v4686, 1.442695
    %v4695 = vpow.pop %v4694
    %v4696 = vmul.f32 %v4687, 1.442695
    %v4697 = vpow.pop %v4696
    %v4698 = vmul.f32 %v4688, 1.442695
    %v4699 = vpow.pop %v4698
    %v4700 = vmul.f32 %v4689, 1.442695
    %v4701 = vpow.pop %v4700
    %v4702 = vmul.f32 %v4690, 1.442695
    %v4703 = vpow.pop %v4702
    %v4704 = vmul.f32 %v4691, 1.442695
    %v4705 = vpow.pop %v4704
    %v4706 = vmul.f32 %v4692, 1.442695
    %v4707 = vpow.pop %v4706
    %v4708 = vmul.f32 %v4693, 1.442695
    %v4709 = vpow.pop %v4708
    %v4710 = vsel %vm1159, %v4695, 0.0
    %4711 = vadd.xlane.f32.xlu0 %v4710
    %v4712 = vpop.xlane.xlu0 %4711
    %v4713 = vsel %vm1159, %v4697, 0.0
    %4714 = vadd.xlane.f32.xlu0 %v4713
    %v4715 = vpop.xlane.xlu0 %4714
    %v4716 = vsel %vm1159, %v4699, 0.0
    %4717 = vadd.xlane.f32.xlu0 %v4716
    %v4718 = vpop.xlane.xlu0 %4717
    %v4719 = vsel %vm1159, %v4701, 0.0
    %4720 = vadd.xlane.f32.xlu0 %v4719
    %v4721 = vpop.xlane.xlu0 %4720
    %v4722 = vsel %vm1159, %v4703, 0.0
    %4723 = vadd.xlane.f32.xlu0 %v4722
    %v4724 = vpop.xlane.xlu0 %4723
    %v4725 = vsel %vm1159, %v4705, 0.0
    %4726 = vadd.xlane.f32.xlu0 %v4725
    %v4727 = vpop.xlane.xlu0 %4726
    %v4728 = vsel %vm1159, %v4707, 0.0
    %4729 = vadd.xlane.f32.xlu0 %v4728
    %v4730 = vpop.xlane.xlu0 %4729
    %v4731 = vsel %vm1159, %v4709, 0.0
    %4732 = vadd.xlane.f32.xlu0 %v4731
    %v4733 = vpop.xlane.xlu0 %4732
    %v4734 = vrcp.pop %v4712
    %v4735 = vrcp.pop %v4715
    %v4736 = vrcp.pop %v4718
    %v4737 = vrcp.pop %v4721
    %v4738 = vrcp.pop %v4724
    %v4739 = vrcp.pop %v4727
    %v4740 = vrcp.pop %v4730
    %v4741 = vrcp.pop %v4733
    %v4742 = vmul.f32 %v4695, %v4734
    %v4743 = vmul.f32 %v4697, %v4735
    %v4744 = vmul.f32 %v4699, %v4736
    %v4745 = vmul.f32 %v4701, %v4737
    %v4746 = vmul.f32 %v4703, %v4738
    %v4747 = vmul.f32 %v4705, %v4739
    %v4748 = vmul.f32 %v4707, %v4740
    %v4749 = vmul.f32 %v4709, %v4741
    %v4751 = vsel %vm1248, %v4742, 0
    %v4753 = vsel %vm1252, %v4043, 0
    %4755 = vmatprep.subr.mxu0 0.0
    %4756 = vmatpush1.msra.mxu0 %v4753
    %4757 = vmatprep.subr.mxu0 0.0
    %4758 = vmatpush1.msra.mxu0 0.0
    %4759 = vmatprep.subr.mxu0 0.0
    %4760 = vmatpush1.msra.mxu0 0.0
    %4761 = vmatprep.subr.mxu0 0.0
    %4762 = vmatpush1.msra.mxu0 0.0
    %4763 = vmatprep.subr.mxu0 0.0
    %4764 = vmatpush1.msra.mxu0 0.0
    %4765 = vmatprep.subr.mxu0 0.0
    %4766 = vmatpush1.msra.mxu0 0.0
    %4767 = vmatprep.subr.mxu0 0.0
    %4768 = vmatpush1.msra.mxu0 0.0
    %4769 = vmatprep.subr.mxu0 0.0
    %4770 = vmatpush1.msra.mxu0 0.0
    %4771 = vmatprep.subr.mxu0 0.0
    %4772 = vmatpush1.msra.mxu0 0.0
    %4773 = vmatprep.subr.mxu0 0.0
    %4774 = vmatpush1.msra.mxu0 0.0
    %4775 = vmatprep.subr.mxu0 0.0
    %4776 = vmatpush1.msra.mxu0 0.0
    %4777 = vmatprep.subr.mxu0 0.0
    %4778 = vmatpush1.msra.mxu0 0.0
    %4779 = vmatprep.subr.mxu0 0.0
    %4780 = vmatpush1.msra.mxu0 0.0
    %4781 = vmatprep.subr.mxu0 0.0
    %4782 = vmatpush1.msra.mxu0 0.0
    %4783 = vmatprep.subr.mxu0 0.0
    %4784 = vmatpush1.msra.mxu0 0.0
    %4785 = vmatprep.subr.mxu0 0.0
    %4786 = vmatpush1.msra.mxu0 0.0
    %4787 = vmatprep.subr.mxu0 0.0
    %4788 = vmatpush1.msra.mxu0 0.0
    %4789 = vmatprep.subr.mxu0 0.0
    %4790 = vmatpush1.msra.mxu0 0.0
    %4791 = vmatprep.subr.mxu0 0.0
    %4792 = vmatpush1.msra.mxu0 0.0
    %4793 = vmatprep.subr.mxu0 0.0
    %4794 = vmatpush1.msra.mxu0 0.0
    %4795 = vmatprep.subr.mxu0 0.0
    %4796 = vmatpush1.msra.mxu0 0.0
    %4797 = vmatprep.subr.mxu0 0.0
    %4798 = vmatpush1.msra.mxu0 0.0
    %4799 = vmatprep.subr.mxu0 0.0
    %4800 = vmatpush1.msra.mxu0 0.0
    %4801 = vmatprep.subr.mxu0 0.0
    %4802 = vmatpush1.msra.mxu0 0.0
    %4803 = vmatprep.subr.mxu0 0.0
    %4804 = vmatpush1.msra.mxu0 0.0
    %4805 = vmatprep.subr.mxu0 0.0
    %4806 = vmatpush1.msra.mxu0 0.0
    %4807 = vmatprep.subr.mxu0 0.0
    %4808 = vmatpush1.msra.mxu0 0.0
    %4809 = vmatprep.subr.mxu0 0.0
    %4810 = vmatpush1.msra.mxu0 0.0
    %4811 = vmatprep.subr.mxu0 0.0
    %4812 = vmatpush1.msra.mxu0 0.0
    %4813 = vmatprep.subr.mxu0 0.0
    %4814 = vmatpush1.msra.mxu0 0.0
    %4815 = vmatprep.subr.mxu0 0.0
    %4816 = vmatpush1.msra.mxu0 0.0
    %4817 = vmatprep.subr.mxu0 0.0
    %4818 = vmatpush1.msra.mxu0 0.0
    %4819 = vmatprep.mubr.f32.mxu0 0.0
    %4820 = vmatmul.mubr.f32.gmra.mrb[0].mxu0 %v4751
    %v4821 = vpop.f32.mrb[0].mxu0
    %v4822 = vadd.f32 0.0, %v4821
    %v4823 = vpop.f32.mrb[0].mxu0
    %4824 = vdwg.mxu0
    %v4826 = vsel %vm1248, %v4743, 0
    %v4828 = vsel %vm1252, %v4051, 0
    %4830 = vmatprep.subr.mxu0 0.0
    %4831 = vmatpush1.msra.mxu0 %v4828
    %4832 = vmatprep.subr.mxu0 0.0
    %4833 = vmatpush1.msra.mxu0 0.0
    %4834 = vmatprep.subr.mxu0 0.0
    %4835 = vmatpush1.msra.mxu0 0.0
    %4836 = vmatprep.subr.mxu0 0.0
    %4837 = vmatpush1.msra.mxu0 0.0
    %4838 = vmatprep.subr.mxu0 0.0
    %4839 = vmatpush1.msra.mxu0 0.0
    %4840 = vmatprep.subr.mxu0 0.0
    %4841 = vmatpush1.msra.mxu0 0.0
    %4842 = vmatprep.subr.mxu0 0.0
    %4843 = vmatpush1.msra.mxu0 0.0
    %4844 = vmatprep.subr.mxu0 0.0
    %4845 = vmatpush1.msra.mxu0 0.0
    %4846 = vmatprep.subr.mxu0 0.0
    %4847 = vmatpush1.msra.mxu0 0.0
    %4848 = vmatprep.subr.mxu0 0.0
    %4849 = vmatpush1.msra.mxu0 0.0
    %4850 = vmatprep.subr.mxu0 0.0
    %4851 = vmatpush1.msra.mxu0 0.0
    %4852 = vmatprep.subr.mxu0 0.0
    %4853 = vmatpush1.msra.mxu0 0.0
    %4854 = vmatprep.subr.mxu0 0.0
    %4855 = vmatpush1.msra.mxu0 0.0
    %4856 = vmatprep.subr.mxu0 0.0
    %4857 = vmatpush1.msra.mxu0 0.0
    %4858 = vmatprep.subr.mxu0 0.0
    %4859 = vmatpush1.msra.mxu0 0.0
    %4860 = vmatprep.subr.mxu0 0.0
    %4861 = vmatpush1.msra.mxu0 0.0
    %4862 = vmatprep.subr.mxu0 0.0
    %4863 = vmatpush1.msra.mxu0 0.0
    %4864 = vmatprep.subr.mxu0 0.0
    %4865 = vmatpush1.msra.mxu0 0.0
    %4866 = vmatprep.subr.mxu0 0.0
    %4867 = vmatpush1.msra.mxu0 0.0
    %4868 = vmatprep.subr.mxu0 0.0
    %4869 = vmatpush1.msra.mxu0 0.0
    %4870 = vmatprep.subr.mxu0 0.0
    %4871 = vmatpush1.msra.mxu0 0.0
    %4872 = vmatprep.subr.mxu0 0.0
    %4873 = vmatpush1.msra.mxu0 0.0
    %4874 = vmatprep.subr.mxu0 0.0
    %4875 = vmatpush1.msra.mxu0 0.0
    %4876 = vmatprep.subr.mxu0 0.0
    %4877 = vmatpush1.msra.mxu0 0.0
    %4878 = vmatprep.subr.mxu0 0.0
    %4879 = vmatpush1.msra.mxu0 0.0
    %4880 = vmatprep.subr.mxu0 0.0
    %4881 = vmatpush1.msra.mxu0 0.0
    %4882 = vmatprep.subr.mxu0 0.0
    %4883 = vmatpush1.msra.mxu0 0.0
    %4884 = vmatprep.subr.mxu0 0.0
    %4885 = vmatpush1.msra.mxu0 0.0
    %4886 = vmatprep.subr.mxu0 0.0
    %4887 = vmatpush1.msra.mxu0 0.0
    %4888 = vmatprep.subr.mxu0 0.0
    %4889 = vmatpush1.msra.mxu0 0.0
    %4890 = vmatprep.subr.mxu0 0.0
    %4891 = vmatpush1.msra.mxu0 0.0
    %4892 = vmatprep.subr.mxu0 0.0
    %4893 = vmatpush1.msra.mxu0 0.0
    %4894 = vmatprep.mubr.f32.mxu0 0.0
    %4895 = vmatmul.mubr.f32.gmra.mrb[0].mxu0 %v4826
    %v4896 = vpop.f32.mrb[0].mxu0
    %v4897 = vadd.f32 0.0, %v4896
    %v4898 = vpop.f32.mrb[0].mxu0
    %4899 = vdwg.mxu0
    %v4901 = vsel %vm1248, %v4744, 0
    %v4903 = vsel %vm1252, %v4050, 0
    %4905 = vmatprep.subr.mxu0 0.0
    %4906 = vmatpush1.msra.mxu0 %v4903
    %4907 = vmatprep.subr.mxu0 0.0
    %4908 = vmatpush1.msra.mxu0 0.0
    %4909 = vmatprep.subr.mxu0 0.0
    %4910 = vmatpush1.msra.mxu0 0.0
    %4911 = vmatprep.subr.mxu0 0.0
    %4912 = vmatpush1.msra.mxu0 0.0
    %4913 = vmatprep.subr.mxu0 0.0
    %4914 = vmatpush1.msra.mxu0 0.0
    %4915 = vmatprep.subr.mxu0 0.0
    %4916 = vmatpush1.msra.mxu0 0.0
    %4917 = vmatprep.subr.mxu0 0.0
    %4918 = vmatpush1.msra.mxu0 0.0
    %4919 = vmatprep.subr.mxu0 0.0
    %4920 = vmatpush1.msra.mxu0 0.0
    %4921 = vmatprep.subr.mxu0 0.0
    %4922 = vmatpush1.msra.mxu0 0.0
    %4923 = vmatprep.subr.mxu0 0.0
    %4924 = vmatpush1.msra.mxu0 0.0
    %4925 = vmatprep.subr.mxu0 0.0
    %4926 = vmatpush1.msra.mxu0 0.0
    %4927 = vmatprep.subr.mxu0 0.0
    %4928 = vmatpush1.msra.mxu0 0.0
    %4929 = vmatprep.subr.mxu0 0.0
    %4930 = vmatpush1.msra.mxu0 0.0
    %4931 = vmatprep.subr.mxu0 0.0
    %4932 = vmatpush1.msra.mxu0 0.0
    %4933 = vmatprep.subr.mxu0 0.0
    %4934 = vmatpush1.msra.mxu0 0.0
    %4935 = vmatprep.subr.mxu0 0.0
    %4936 = vmatpush1.msra.mxu0 0.0
    %4937 = vmatprep.subr.mxu0 0.0
    %4938 = vmatpush1.msra.mxu0 0.0
    %4939 = vmatprep.subr.mxu0 0.0
    %4940 = vmatpush1.msra.mxu0 0.0
    %4941 = vmatprep.subr.mxu0 0.0
    %4942 = vmatpush1.msra.mxu0 0.0
    %4943 = vmatprep.subr.mxu0 0.0
    %4944 = vmatpush1.msra.mxu0 0.0
    %4945 = vmatprep.subr.mxu0 0.0
    %4946 = vmatpush1.msra.mxu0 0.0
    %4947 = vmatprep.subr.mxu0 0.0
    %4948 = vmatpush1.msra.mxu0 0.0
    %4949 = vmatprep.subr.mxu0 0.0
    %4950 = vmatpush1.msra.mxu0 0.0
    %4951 = vmatprep.subr.mxu0 0.0
    %4952 = vmatpush1.msra.mxu0 0.0
    %4953 = vmatprep.subr.mxu0 0.0
    %4954 = vmatpush1.msra.mxu0 0.0
    %4955 = vmatprep.subr.mxu0 0.0
    %4956 = vmatpush1.msra.mxu0 0.0
    %4957 = vmatprep.subr.mxu0 0.0
    %4958 = vmatpush1.msra.mxu0 0.0
    %4959 = vmatprep.subr.mxu0 0.0
    %4960 = vmatpush1.msra.mxu0 0.0
    %4961 = vmatprep.subr.mxu0 0.0
    %4962 = vmatpush1.msra.mxu0 0.0
    %4963 = vmatprep.subr.mxu0 0.0
    %4964 = vmatpush1.msra.mxu0 0.0
    %4965 = vmatprep.subr.mxu0 0.0
    %4966 = vmatpush1.msra.mxu0 0.0
    %4967 = vmatprep.subr.mxu0 0.0
    %4968 = vmatpush1.msra.mxu0 0.0
    %4969 = vmatprep.mubr.f32.mxu0 0.0
    %4970 = vmatmul.mubr.f32.gmra.mrb[0].mxu0 %v4901
    %v4971 = vpop.f32.mrb[0].mxu0
    %v4972 = vadd.f32 0.0, %v4971
    %v4973 = vpop.f32.mrb[0].mxu0
    %4974 = vdwg.mxu0
    %v4976 = vsel %vm1248, %v4745, 0
    %v4978 = vsel %vm1252, %v4052, 0
    %4980 = vmatprep.subr.mxu0 0.0
    %4981 = vmatpush1.msra.mxu0 %v4978
    %4982 = vmatprep.subr.mxu0 0.0
    %4983 = vmatpush1.msra.mxu0 0.0
    %4984 = vmatprep.subr.mxu0 0.0
    %4985 = vmatpush1.msra.mxu0 0.0
    %4986 = vmatprep.subr.mxu0 0.0
    %4987 = vmatpush1.msra.mxu0 0.0
    %4988 = vmatprep.subr.mxu0 0.0
    %4989 = vmatpush1.msra.mxu0 0.0
    %4990 = vmatprep.subr.mxu0 0.0
    %4991 = vmatpush1.msra.mxu0 0.0
    %4992 = vmatprep.subr.mxu0 0.0
    %4993 = vmatpush1.msra.mxu0 0.0
    %4994 = vmatprep.subr.mxu0 0.0
    %4995 = vmatpush1.msra.mxu0 0.0
    %4996 = vmatprep.subr.mxu0 0.0
    %4997 = vmatpush1.msra.mxu0 0.0
    %4998 = vmatprep.subr.mxu0 0.0
    %4999 = vmatpush1.msra.mxu0 0.0
    %5000 = vmatprep.subr.mxu0 0.0
    %5001 = vmatpush1.msra.mxu0 0.0
    %5002 = vmatprep.subr.mxu0 0.0
    %5003 = vmatpush1.msra.mxu0 0.0
    %5004 = vmatprep.subr.mxu0 0.0
    %5005 = vmatpush1.msra.mxu0 0.0
    %5006 = vmatprep.subr.mxu0 0.0
    %5007 = vmatpush1.msra.mxu0 0.0
    %5008 = vmatprep.subr.mxu0 0.0
    %5009 = vmatpush1.msra.mxu0 0.0
    %5010 = vmatprep.subr.mxu0 0.0
    %5011 = vmatpush1.msra.mxu0 0.0
    %5012 = vmatprep.subr.mxu0 0.0
    %5013 = vmatpush1.msra.mxu0 0.0
    %5014 = vmatprep.subr.mxu0 0.0
    %5015 = vmatpush1.msra.mxu0 0.0
    %5016 = vmatprep.subr.mxu0 0.0
    %5017 = vmatpush1.msra.mxu0 0.0
    %5018 = vmatprep.subr.mxu0 0.0
    %5019 = vmatpush1.msra.mxu0 0.0
    %5020 = vmatprep.subr.mxu0 0.0
    %5021 = vmatpush1.msra.mxu0 0.0
    %5022 = vmatprep.subr.mxu0 0.0
    %5023 = vmatpush1.msra.mxu0 0.0
    %5024 = vmatprep.subr.mxu0 0.0
    %5025 = vmatpush1.msra.mxu0 0.0
    %5026 = vmatprep.subr.mxu0 0.0
    %5027 = vmatpush1.msra.mxu0 0.0
    %5028 = vmatprep.subr.mxu0 0.0
    %5029 = vmatpush1.msra.mxu0 0.0
    %5030 = vmatprep.subr.mxu0 0.0
    %5031 = vmatpush1.msra.mxu0 0.0
    %5032 = vmatprep.subr.mxu0 0.0
    %5033 = vmatpush1.msra.mxu0 0.0
    %5034 = vmatprep.subr.mxu0 0.0
    %5035 = vmatpush1.msra.mxu0 0.0
    %5036 = vmatprep.subr.mxu0 0.0
    %5037 = vmatpush1.msra.mxu0 0.0
    %5038 = vmatprep.subr.mxu0 0.0
    %5039 = vmatpush1.msra.mxu0 0.0
    %5040 = vmatprep.subr.mxu0 0.0
    %5041 = vmatpush1.msra.mxu0 0.0
    %5042 = vmatprep.subr.mxu0 0.0
    %5043 = vmatpush1.msra.mxu0 0.0
    %5044 = vmatprep.mubr.f32.mxu0 0.0
    %5045 = vmatmul.mubr.f32.gmra.mrb[0].mxu0 %v4976
    %v5046 = vpop.f32.mrb[0].mxu0
    %v5047 = vadd.f32 0.0, %v5046
    %v5048 = vpop.f32.mrb[0].mxu0
    %5049 = vdwg.mxu0
    %v5051 = vsel %vm1248, %v4746, 0
    %v5053 = vsel %vm1252, %v4060, 0
    %5055 = vmatprep.subr.mxu0 0.0
    %5056 = vmatpush1.msra.mxu0 %v5053
    %5057 = vmatprep.subr.mxu0 0.0
    %5058 = vmatpush1.msra.mxu0 0.0
    %5059 = vmatprep.subr.mxu0 0.0
    %5060 = vmatpush1.msra.mxu0 0.0
    %5061 = vmatprep.subr.mxu0 0.0
    %5062 = vmatpush1.msra.mxu0 0.0
    %5063 = vmatprep.subr.mxu0 0.0
    %5064 = vmatpush1.msra.mxu0 0.0
    %5065 = vmatprep.subr.mxu0 0.0
    %5066 = vmatpush1.msra.mxu0 0.0
    %5067 = vmatprep.subr.mxu0 0.0
    %5068 = vmatpush1.msra.mxu0 0.0
    %5069 = vmatprep.subr.mxu0 0.0
    %5070 = vmatpush1.msra.mxu0 0.0
    %5071 = vmatprep.subr.mxu0 0.0
    %5072 = vmatpush1.msra.mxu0 0.0
    %5073 = vmatprep.subr.mxu0 0.0
    %5074 = vmatpush1.msra.mxu0 0.0
    %5075 = vmatprep.subr.mxu0 0.0
    %5076 = vmatpush1.msra.mxu0 0.0
    %5077 = vmatprep.subr.mxu0 0.0
    %5078 = vmatpush1.msra.mxu0 0.0
    %5079 = vmatprep.subr.mxu0 0.0
    %5080 = vmatpush1.msra.mxu0 0.0
    %5081 = vmatprep.subr.mxu0 0.0
    %5082 = vmatpush1.msra.mxu0 0.0
    %5083 = vmatprep.subr.mxu0 0.0
    %5084 = vmatpush1.msra.mxu0 0.0
    %5085 = vmatprep.subr.mxu0 0.0
    %5086 = vmatpush1.msra.mxu0 0.0
    %5087 = vmatprep.subr.mxu0 0.0
    %5088 = vmatpush1.msra.mxu0 0.0
    %5089 = vmatprep.subr.mxu0 0.0
    %5090 = vmatpush1.msra.mxu0 0.0
    %5091 = vmatprep.subr.mxu0 0.0
    %5092 = vmatpush1.msra.mxu0 0.0
    %5093 = vmatprep.subr.mxu0 0.0
    %5094 = vmatpush1.msra.mxu0 0.0
    %5095 = vmatprep.subr.mxu0 0.0
    %5096 = vmatpush1.msra.mxu0 0.0
    %5097 = vmatprep.subr.mxu0 0.0
    %5098 = vmatpush1.msra.mxu0 0.0
    %5099 = vmatprep.subr.mxu0 0.0
    %5100 = vmatpush1.msra.mxu0 0.0
    %5101 = vmatprep.subr.mxu0 0.0
    %5102 = vmatpush1.msra.mxu0 0.0
    %5103 = vmatprep.subr.mxu0 0.0
    %5104 = vmatpush1.msra.mxu0 0.0
    %5105 = vmatprep.subr.mxu0 0.0
    %5106 = vmatpush1.msra.mxu0 0.0
    %5107 = vmatprep.subr.mxu0 0.0
    %5108 = vmatpush1.msra.mxu0 0.0
    %5109 = vmatprep.subr.mxu0 0.0
    %5110 = vmatpush1.msra.mxu0 0.0
    %5111 = vmatprep.subr.mxu0 0.0
    %5112 = vmatpush1.msra.mxu0 0.0
    %5113 = vmatprep.subr.mxu0 0.0
    %5114 = vmatpush1.msra.mxu0 0.0
    %5115 = vmatprep.subr.mxu0 0.0
    %5116 = vmatpush1.msra.mxu0 0.0
    %5117 = vmatprep.subr.mxu0 0.0
    %5118 = vmatpush1.msra.mxu0 0.0
    %5119 = vmatprep.mubr.f32.mxu0 0.0
    %5120 = vmatmul.mubr.f32.gmra.mrb[0].mxu0 %v5051
    %v5121 = vpop.f32.mrb[0].mxu0
    %v5122 = vadd.f32 0.0, %v5121
    %v5123 = vpop.f32.mrb[0].mxu0
    %5124 = vdwg.mxu0
    %v5126 = vsel %vm1248, %v4747, 0
    %v5128 = vsel %vm1252, %v4068, 0
    %5130 = vmatprep.subr.mxu0 0.0
    %5131 = vmatpush1.msra.mxu0 %v5128
    %5132 = vmatprep.subr.mxu0 0.0
    %5133 = vmatpush1.msra.mxu0 0.0
    %5134 = vmatprep.subr.mxu0 0.0
    %5135 = vmatpush1.msra.mxu0 0.0
    %5136 = vmatprep.subr.mxu0 0.0
    %5137 = vmatpush1.msra.mxu0 0.0
    %5138 = vmatprep.subr.mxu0 0.0
    %5139 = vmatpush1.msra.mxu0 0.0
    %5140 = vmatprep.subr.mxu0 0.0
    %5141 = vmatpush1.msra.mxu0 0.0
    %5142 = vmatprep.subr.mxu0 0.0
    %5143 = vmatpush1.msra.mxu0 0.0
    %5144 = vmatprep.subr.mxu0 0.0
    %5145 = vmatpush1.msra.mxu0 0.0
    %5146 = vmatprep.subr.mxu0 0.0
    %5147 = vmatpush1.msra.mxu0 0.0
    %5148 = vmatprep.subr.mxu0 0.0
    %5149 = vmatpush1.msra.mxu0 0.0
    %5150 = vmatprep.subr.mxu0 0.0
    %5151 = vmatpush1.msra.mxu0 0.0
    %5152 = vmatprep.subr.mxu0 0.0
    %5153 = vmatpush1.msra.mxu0 0.0
    %5154 = vmatprep.subr.mxu0 0.0
    %5155 = vmatpush1.msra.mxu0 0.0
    %5156 = vmatprep.subr.mxu0 0.0
    %5157 = vmatpush1.msra.mxu0 0.0
    %5158 = vmatprep.subr.mxu0 0.0
    %5159 = vmatpush1.msra.mxu0 0.0
    %5160 = vmatprep.subr.mxu0 0.0
    %5161 = vmatpush1.msra.mxu0 0.0
    %5162 = vmatprep.subr.mxu0 0.0
    %5163 = vmatpush1.msra.mxu0 0.0
    %5164 = vmatprep.subr.mxu0 0.0
    %5165 = vmatpush1.msra.mxu0 0.0
    %5166 = vmatprep.subr.mxu0 0.0
    %5167 = vmatpush1.msra.mxu0 0.0
    %5168 = vmatprep.subr.mxu0 0.0
    %5169 = vmatpush1.msra.mxu0 0.0
    %5170 = vmatprep.subr.mxu0 0.0
    %5171 = vmatpush1.msra.mxu0 0.0
    %5172 = vmatprep.subr.mxu0 0.0
    %5173 = vmatpush1.msra.mxu0 0.0
    %5174 = vmatprep.subr.mxu0 0.0
    %5175 = vmatpush1.msra.mxu0 0.0
    %5176 = vmatprep.subr.mxu0 0.0
    %5177 = vmatpush1.msra.mxu0 0.0
    %5178 = vmatprep.subr.mxu0 0.0
    %5179 = vmatpush1.msra.mxu0 0.0
    %5180 = vmatprep.subr.mxu0 0.0
    %5181 = vmatpush1.msra.mxu0 0.0
    %5182 = vmatprep.subr.mxu0 0.0
    %5183 = vmatpush1.msra.mxu0 0.0
    %5184 = vmatprep.subr.mxu0 0.0
    %5185 = vmatpush1.msra.mxu0 0.0
    %5186 = vmatprep.subr.mxu0 0.0
    %5187 = vmatpush1.msra.mxu0 0.0
    %5188 = vmatprep.subr.mxu0 0.0
    %5189 = vmatpush1.msra.mxu0 0.0
    %5190 = vmatprep.subr.mxu0 0.0
    %5191 = vmatpush1.msra.mxu0 0.0
    %5192 = vmatprep.subr.mxu0 0.0
    %5193 = vmatpush1.msra.mxu0 0.0
    %5194 = vmatprep.mubr.f32.mxu0 0.0
    %5195 = vmatmul.mubr.f32.gmra.mrb[0].mxu0 %v5126
    %v5196 = vpop.f32.mrb[0].mxu0
    %v5197 = vadd.f32 0.0, %v5196
    %v5198 = vpop.f32.mrb[0].mxu0
    %5199 = vdwg.mxu0
    %v5201 = vsel %vm1248, %v4748, 0
    %v5203 = vsel %vm1252, %v4067, 0
    %5205 = vmatprep.subr.mxu0 0.0
    %5206 = vmatpush1.msra.mxu0 %v5203
    %5207 = vmatprep.subr.mxu0 0.0
    %5208 = vmatpush1.msra.mxu0 0.0
    %5209 = vmatprep.subr.mxu0 0.0
    %5210 = vmatpush1.msra.mxu0 0.0
    %5211 = vmatprep.subr.mxu0 0.0
    %5212 = vmatpush1.msra.mxu0 0.0
    %5213 = vmatprep.subr.mxu0 0.0
    %5214 = vmatpush1.msra.mxu0 0.0
    %5215 = vmatprep.subr.mxu0 0.0
    %5216 = vmatpush1.msra.mxu0 0.0
    %5217 = vmatprep.subr.mxu0 0.0
    %5218 = vmatpush1.msra.mxu0 0.0
    %5219 = vmatprep.subr.mxu0 0.0
    %5220 = vmatpush1.msra.mxu0 0.0
    %5221 = vmatprep.subr.mxu0 0.0
    %5222 = vmatpush1.msra.mxu0 0.0
    %5223 = vmatprep.subr.mxu0 0.0
    %5224 = vmatpush1.msra.mxu0 0.0
    %5225 = vmatprep.subr.mxu0 0.0
    %5226 = vmatpush1.msra.mxu0 0.0
    %5227 = vmatprep.subr.mxu0 0.0
    %5228 = vmatpush1.msra.mxu0 0.0
    %5229 = vmatprep.subr.mxu0 0.0
    %5230 = vmatpush1.msra.mxu0 0.0
    %5231 = vmatprep.subr.mxu0 0.0
    %5232 = vmatpush1.msra.mxu0 0.0
    %5233 = vmatprep.subr.mxu0 0.0
    %5234 = vmatpush1.msra.mxu0 0.0
    %5235 = vmatprep.subr.mxu0 0.0
    %5236 = vmatpush1.msra.mxu0 0.0
    %5237 = vmatprep.subr.mxu0 0.0
    %5238 = vmatpush1.msra.mxu0 0.0
    %5239 = vmatprep.subr.mxu0 0.0
    %5240 = vmatpush1.msra.mxu0 0.0
    %5241 = vmatprep.subr.mxu0 0.0
    %5242 = vmatpush1.msra.mxu0 0.0
    %5243 = vmatprep.subr.mxu0 0.0
    %5244 = vmatpush1.msra.mxu0 0.0
    %5245 = vmatprep.subr.mxu0 0.0
    %5246 = vmatpush1.msra.mxu0 0.0
    %5247 = vmatprep.subr.mxu0 0.0
    %5248 = vmatpush1.msra.mxu0 0.0
    %5249 = vmatprep.subr.mxu0 0.0
    %5250 = vmatpush1.msra.mxu0 0.0
    %5251 = vmatprep.subr.mxu0 0.0
    %5252 = vmatpush1.msra.mxu0 0.0
    %5253 = vmatprep.subr.mxu0 0.0
    %5254 = vmatpush1.msra.mxu0 0.0
    %5255 = vmatprep.subr.mxu0 0.0
    %5256 = vmatpush1.msra.mxu0 0.0
    %5257 = vmatprep.subr.mxu0 0.0
    %5258 = vmatpush1.msra.mxu0 0.0
    %5259 = vmatprep.subr.mxu0 0.0
    %5260 = vmatpush1.msra.mxu0 0.0
    %5261 = vmatprep.subr.mxu0 0.0
    %5262 = vmatpush1.msra.mxu0 0.0
    %5263 = vmatprep.subr.mxu0 0.0
    %5264 = vmatpush1.msra.mxu0 0.0
    %5265 = vmatprep.subr.mxu0 0.0
    %5266 = vmatpush1.msra.mxu0 0.0
    %5267 = vmatprep.subr.mxu0 0.0
    %5268 = vmatpush1.msra.mxu0 0.0
    %5269 = vmatprep.mubr.f32.mxu0 0.0
    %5270 = vmatmul.mubr.f32.gmra.mrb[0].mxu0 %v5201
    %v5271 = vpop.f32.mrb[0].mxu0
    %v5272 = vadd.f32 0.0, %v5271
    %v5273 = vpop.f32.mrb[0].mxu0
    %5274 = vdwg.mxu0
    %v5276 = vsel %vm1248, %v4749, 0
    %v5278 = vsel %vm1252, %v4069, 0
    %5280 = vmatprep.subr.mxu0 0.0
    %5281 = vmatpush1.msra.mxu0 %v5278
    %5282 = vmatprep.subr.mxu0 0.0
    %5283 = vmatpush1.msra.mxu0 0.0
    %5284 = vmatprep.subr.mxu0 0.0
    %5285 = vmatpush1.msra.mxu0 0.0
    %5286 = vmatprep.subr.mxu0 0.0
    %5287 = vmatpush1.msra.mxu0 0.0
    %5288 = vmatprep.subr.mxu0 0.0
    %5289 = vmatpush1.msra.mxu0 0.0
    %5290 = vmatprep.subr.mxu0 0.0
    %5291 = vmatpush1.msra.mxu0 0.0
    %5292 = vmatprep.subr.mxu0 0.0
    %5293 = vmatpush1.msra.mxu0 0.0
    %5294 = vmatprep.subr.mxu0 0.0
    %5295 = vmatpush1.msra.mxu0 0.0
    %5296 = vmatprep.subr.mxu0 0.0
    %5297 = vmatpush1.msra.mxu0 0.0
    %5298 = vmatprep.subr.mxu0 0.0
    %5299 = vmatpush1.msra.mxu0 0.0
    %5300 = vmatprep.subr.mxu0 0.0
    %5301 = vmatpush1.msra.mxu0 0.0
    %5302 = vmatprep.subr.mxu0 0.0
    %5303 = vmatpush1.msra.mxu0 0.0
    %5304 = vmatprep.subr.mxu0 0.0
    %5305 = vmatpush1.msra.mxu0 0.0
    %5306 = vmatprep.subr.mxu0 0.0
    %5307 = vmatpush1.msra.mxu0 0.0
    %5308 = vmatprep.subr.mxu0 0.0
    %5309 = vmatpush1.msra.mxu0 0.0
    %5310 = vmatprep.subr.mxu0 0.0
    %5311 = vmatpush1.msra.mxu0 0.0
    %5312 = vmatprep.subr.mxu0 0.0
    %5313 = vmatpush1.msra.mxu0 0.0
    %5314 = vmatprep.subr.mxu0 0.0
    %5315 = vmatpush1.msra.mxu0 0.0
    %5316 = vmatprep.subr.mxu0 0.0
    %5317 = vmatpush1.msra.mxu0 0.0
    %5318 = vmatprep.subr.mxu0 0.0
    %5319 = vmatpush1.msra.mxu0 0.0
    %5320 = vmatprep.subr.mxu0 0.0
    %5321 = vmatpush1.msra.mxu0 0.0
    %5322 = vmatprep.subr.mxu0 0.0
    %5323 = vmatpush1.msra.mxu0 0.0
    %5324 = vmatprep.subr.mxu0 0.0
    %5325 = vmatpush1.msra.mxu0 0.0
    %5326 = vmatprep.subr.mxu0 0.0
    %5327 = vmatpush1.msra.mxu0 0.0
    %5328 = vmatprep.subr.mxu0 0.0
    %5329 = vmatpush1.msra.mxu0 0.0
    %5330 = vmatprep.subr.mxu0 0.0
    %5331 = vmatpush1.msra.mxu0 0.0
    %5332 = vmatprep.subr.mxu0 0.0
    %5333 = vmatpush1.msra.mxu0 0.0
    %5334 = vmatprep.subr.mxu0 0.0
    %5335 = vmatpush1.msra.mxu0 0.0
    %5336 = vmatprep.subr.mxu0 0.0
    %5337 = vmatpush1.msra.mxu0 0.0
    %5338 = vmatprep.subr.mxu0 0.0
    %5339 = vmatpush1.msra.mxu0 0.0
    %5340 = vmatprep.subr.mxu0 0.0
    %5341 = vmatpush1.msra.mxu0 0.0
    %5342 = vmatprep.subr.mxu0 0.0
    %5343 = vmatpush1.msra.mxu0 0.0
    %5344 = vmatprep.mubr.f32.mxu0 0.0
    %5345 = vmatmul.mubr.f32.gmra.mrb[0].mxu0 %v5276
    %v5346 = vpop.f32.mrb[0].mxu0
    %v5347 = vadd.f32 0.0, %v5346
    %v5348 = vpop.f32.mrb[0].mxu0
    %5349 = vdwg.mxu0
    %v5350 = vld [vmem:[%s6 + $0x10] sm:$0xff]
    %v5359 = vcombine.low %v4822, %v4897
    %v5360 = vcombine.low %v4972, %v5047
    %v5362 = vunpack.c.l.s4 1983009808
    %v5363 = vunpack.c.0.s8 %v5362
    %v5364 = vlaneseq
    %v5365 = vshrl.u32 %v5364, 7
    %v5366 = vsub.s32 %v5363, %v5365
    %v5367 = vrot.slane %v5359, %v5366
    %v5369 = vunpack.c.l.s4 1983009808
    %v5370 = vunpack.c.0.s8 %v5369
    %v5371 = vlaneseq
    %v5372 = vshrl.u32 %v5371, 7
    %v5373 = vsub.s32 %v5370, %v5372
    %v5374 = vrot.slane %v5360, %v5373
    %v5375 = vcombine.low %v5367, %v5374
    %v5376 = vcombine.low %v5122, %v5197
    %v5377 = vcombine.low %v5272, %v5347
    %v5379 = vunpack.c.l.s4 1983009808
    %v5380 = vunpack.c.0.s8 %v5379
    %v5381 = vlaneseq
    %v5382 = vshrl.u32 %v5381, 7
    %v5383 = vsub.s32 %v5380, %v5382
    %v5384 = vrot.slane %v5376, %v5383
    %v5386 = vunpack.c.l.s4 1983009808
    %v5387 = vunpack.c.0.s8 %v5386
    %v5388 = vlaneseq
    %v5389 = vshrl.u32 %v5388, 7
    %v5390 = vsub.s32 %v5387, %v5389
    %v5391 = vrot.slane %v5377, %v5390
    %v5392 = vcombine.low %v5384, %v5391
    %v5393 = vsel %vm566, %v5375, 0
    %v5395 = vsel %vm566, %v5392, 0
    %5397 = vmatprep.subr.mxu0 0.0
    %5398 = vmatpush1.msra.mxu0 %v5350
    %5399 = vmatprep.subr.mxu0 0.0
    %5400 = vmatpush1.msra.mxu0 0.0
    %5401 = vmatprep.subr.mxu0 0.0
    %5402 = vmatpush1.msra.mxu0 0.0
    %5403 = vmatprep.subr.mxu0 0.0
    %5404 = vmatpush1.msra.mxu0 0.0
    %5405 = vmatprep.subr.mxu0 0.0
    %5406 = vmatpush1.msra.mxu0 0.0
    %5407 = vmatprep.subr.mxu0 0.0
    %5408 = vmatpush1.msra.mxu0 0.0
    %5409 = vmatprep.subr.mxu0 0.0
    %5410 = vmatpush1.msra.mxu0 0.0
    %5411 = vmatprep.subr.mxu0 0.0
    %5412 = vmatpush1.msra.mxu0 0.0
    %5413 = vmatprep.subr.mxu0 0.0
    %5414 = vmatpush1.msra.mxu0 0.0
    %5415 = vmatprep.subr.mxu0 0.0
    %5416 = vmatpush1.msra.mxu0 0.0
    %5417 = vmatprep.subr.mxu0 0.0
    %5418 = vmatpush1.msra.mxu0 0.0
    %5419 = vmatprep.subr.mxu0 0.0
    %5420 = vmatpush1.msra.mxu0 0.0
    %5421 = vmatprep.subr.mxu0 0.0
    %5422 = vmatpush1.msra.mxu0 0.0
    %5423 = vmatprep.subr.mxu0 0.0
    %5424 = vmatpush1.msra.mxu0 0.0
    %5425 = vmatprep.subr.mxu0 0.0
    %5426 = vmatpush1.msra.mxu0 0.0
    %5427 = vmatprep.subr.mxu0 0.0
    %5428 = vmatpush1.msra.mxu0 0.0
    %5429 = vmatprep.subr.mxu0 0.0
    %5430 = vmatpush1.msra.mxu0 0.0
    %5431 = vmatprep.subr.mxu0 0.0
    %5432 = vmatpush1.msra.mxu0 0.0
    %5433 = vmatprep.subr.mxu0 0.0
    %5434 = vmatpush1.msra.mxu0 0.0
    %5435 = vmatprep.subr.mxu0 0.0
    %5436 = vmatpush1.msra.mxu0 0.0
    %5437 = vmatprep.subr.mxu0 0.0
    %5438 = vmatpush1.msra.mxu0 0.0
    %5439 = vmatprep.subr.mxu0 0.0
    %5440 = vmatpush1.msra.mxu0 0.0
    %5441 = vmatprep.subr.mxu0 0.0
    %5442 = vmatpush1.msra.mxu0 0.0
    %5443 = vmatprep.subr.mxu0 0.0
    %5444 = vmatpush1.msra.mxu0 0.0
    %5445 = vmatprep.subr.mxu0 0.0
    %5446 = vmatpush1.msra.mxu0 0.0
    %5447 = vmatprep.subr.mxu0 0.0
    %5448 = vmatpush1.msra.mxu0 0.0
    %5449 = vmatprep.subr.mxu0 0.0
    %5450 = vmatpush1.msra.mxu0 0.0
    %5451 = vmatprep.subr.mxu0 0.0
    %5452 = vmatpush1.msra.mxu0 0.0
    %5453 = vmatprep.subr.mxu0 0.0
    %5454 = vmatpush1.msra.mxu0 0.0
    %5455 = vmatprep.subr.mxu0 0.0
    %5456 = vmatpush1.msra.mxu0 0.0
    %5457 = vmatprep.subr.mxu0 0.0
    %5458 = vmatpush1.msra.mxu0 0.0
    %5459 = vmatprep.subr.mxu0 0.0
    %5460 = vmatpush1.msra.mxu0 0.0
    %5461 = vmatprep.mubr.f32.mxu0 0.0
    %5462 = vmatmul.mubr.f32.gmra.mrb[0].mxu0 %v5393
    %v5463 = vpop.f32.mrb[0].mxu0
    %v5464 = vadd.f32 0.0, %v5463
    %v5465 = vpop.f32.mrb[0].mxu0
    %5466 = vmatprep.mubr.f32.mxu0 0.0
    %5467 = vmatmul.mubr.f32.gmra.mrb[0].mxu0 %v5395
    %v5468 = vpop.f32.mrb[0].mxu0
    %v5469 = vadd.f32 0.0, %v5468
    %v5470 = vpop.f32.mrb[0].mxu0
    %5471 = vdwg.mxu0
    %v5472 = vadd.f32 %v3714, %v5464
    %v5473 = vadd.f32 %v3719, %v5469
    %s5474 = scalar_lea.vmem %s3, 96
    %v5475 = vld [vmem:[%s5474] sm:$0xff]
    %v5476 = vld [vmem:[%s5474 + $0x8] sm:$0xff]
    %v5477 = vld [vmem:[%s5474 + $0x10] sm:$0xff]
    %v5478 = vld [vmem:[%s5474 + $0x18] sm:$0xff]
    %5479 = vmatprep.subr.mxu0 0.0
    %5480 = vmatpush1.msra.mxu0 %v5475
    %5481 = vmatprep.subr.mxu0 0.0
    %5482 = vmatpush1.msra.mxu0 %v5476
    %5483 = vmatprep.subr.mxu0 0.0
    %5484 = vmatpush1.msra.mxu0 %v5477
    %5485 = vmatprep.subr.mxu0 0.0
    %5486 = vmatpush1.msra.mxu0 %v5478
    %5487 = vmatprep.subr.mxu0 0.0
    %5488 = vmatpush1.msra.mxu0 0.0
    %5489 = vmatprep.subr.mxu0 0.0
    %5490 = vmatpush1.msra.mxu0 0.0
    %5491 = vmatprep.subr.mxu0 0.0
    %5492 = vmatpush1.msra.mxu0 0.0
    %5493 = vmatprep.subr.mxu0 0.0
    %5494 = vmatpush1.msra.mxu0 0.0
    %5495 = vmatprep.subr.mxu0 0.0
    %5496 = vmatpush1.msra.mxu0 0.0
    %5497 = vmatprep.subr.mxu0 0.0
    %5498 = vmatpush1.msra.mxu0 0.0
    %5499 = vmatprep.subr.mxu0 0.0
    %5500 = vmatpush1.msra.mxu0 0.0
    %5501 = vmatprep.subr.mxu0 0.0
    %5502 = vmatpush1.msra.mxu0 0.0
    %5503 = vmatprep.subr.mxu0 0.0
    %5504 = vmatpush1.msra.mxu0 0.0
    %5505 = vmatprep.subr.mxu0 0.0
    %5506 = vmatpush1.msra.mxu0 0.0
    %5507 = vmatprep.subr.mxu0 0.0
    %5508 = vmatpush1.msra.mxu0 0.0
    %5509 = vmatprep.subr.mxu0 0.0
    %5510 = vmatpush1.msra.mxu0 0.0
    %5511 = vmatprep.subr.mxu0 0.0
    %5512 = vmatpush1.msra.mxu0 0.0
    %5513 = vmatprep.subr.mxu0 0.0
    %5514 = vmatpush1.msra.mxu0 0.0
    %5515 = vmatprep.subr.mxu0 0.0
    %5516 = vmatpush1.msra.mxu0 0.0
    %5517 = vmatprep.subr.mxu0 0.0
    %5518 = vmatpush1.msra.mxu0 0.0
    %5519 = vmatprep.subr.mxu0 0.0
    %5520 = vmatpush1.msra.mxu0 0.0
    %5521 = vmatprep.subr.mxu0 0.0
    %5522 = vmatpush1.msra.mxu0 0.0
    %5523 = vmatprep.subr.mxu0 0.0
    %5524 = vmatpush1.msra.mxu0 0.0
    %5525 = vmatprep.subr.mxu0 0.0
    %5526 = vmatpush1.msra.mxu0 0.0
    %5527 = vmatprep.subr.mxu0 0.0
    %5528 = vmatpush1.msra.mxu0 0.0
    %5529 = vmatprep.subr.mxu0 0.0
    %5530 = vmatpush1.msra.mxu0 0.0
    %5531 = vmatprep.subr.mxu0 0.0
    %5532 = vmatpush1.msra.mxu0 0.0
    %5533 = vmatprep.subr.mxu0 0.0
    %5534 = vmatpush1.msra.mxu0 0.0
    %5535 = vmatprep.subr.mxu0 0.0
    %5536 = vmatpush1.msra.mxu0 0.0
    %5537 = vmatprep.subr.mxu0 0.0
    %5538 = vmatpush1.msra.mxu0 0.0
    %5539 = vmatprep.subr.mxu0 0.0
    %5540 = vmatpush1.msra.mxu0 0.0
    %5541 = vmatprep.subr.mxu0 0.0
    %5542 = vmatpush1.msra.mxu0 0.0
    %5543 = vmatprep.mubr.f32.mxu0 0.0
    %5544 = vmatmul.mubr.f32.gmra.mrb[0].mxu0 %v221
    %v5545 = vpop.f32.mrb[0].mxu0
    %v5546 = vadd.f32 0.0, %v5545
    %v5547 = vpop.f32.mrb[0].mxu0
    %5548 = vmatprep.mubr.f32.mxu0 0.0
    %5549 = vmatmul.mubr.f32.gmra.mrb[0].mxu0 %v223
    %v5550 = vpop.f32.mrb[0].mxu0
    %v5551 = vadd.f32 0.0, %v5550
    %v5552 = vpop.f32.mrb[0].mxu0
    %5553 = vdwg.mxu0
    %s5554 = scalar_lea.vmem %s4, 96
    %v5555 = vld [vmem:[%s5554] sm:$0xff]
    %v5556 = vld [vmem:[%s5554 + $0x8] sm:$0xff]
    %v5557 = vld [vmem:[%s5554 + $0x10] sm:$0xff]
    %v5558 = vld [vmem:[%s5554 + $0x18] sm:$0xff]
    %5559 = vmatprep.subr.mxu0 0.0
    %5560 = vmatpush1.msra.mxu0 %v5555
    %5561 = vmatprep.subr.mxu0 0.0
    %5562 = vmatpush1.msra.mxu0 %v5556
    %5563 = vmatprep.subr.mxu0 0.0
    %5564 = vmatpush1.msra.mxu0 %v5557
    %5565 = vmatprep.subr.mxu0 0.0
    %5566 = vmatpush1.msra.mxu0 %v5558
    %5567 = vmatprep.subr.mxu0 0.0
    %5568 = vmatpush1.msra.mxu0 0.0
    %5569 = vmatprep.subr.mxu0 0.0
    %5570 = vmatpush1.msra.mxu0 0.0
    %5571 = vmatprep.subr.mxu0 0.0
    %5572 = vmatpush1.msra.mxu0 0.0
    %5573 = vmatprep.subr.mxu0 0.0
    %5574 = vmatpush1.msra.mxu0 0.0
    %5575 = vmatprep.subr.mxu0 0.0
    %5576 = vmatpush1.msra.mxu0 0.0
    %5577 = vmatprep.subr.mxu0 0.0
    %5578 = vmatpush1.msra.mxu0 0.0
    %5579 = vmatprep.subr.mxu0 0.0
    %5580 = vmatpush1.msra.mxu0 0.0
    %5581 = vmatprep.subr.mxu0 0.0
    %5582 = vmatpush1.msra.mxu0 0.0
    %5583 = vmatprep.subr.mxu0 0.0
    %5584 = vmatpush1.msra.mxu0 0.0
    %5585 = vmatprep.subr.mxu0 0.0
    %5586 = vmatpush1.msra.mxu0 0.0
    %5587 = vmatprep.subr.mxu0 0.0
    %5588 = vmatpush1.msra.mxu0 0.0
    %5589 = vmatprep.subr.mxu0 0.0
    %5590 = vmatpush1.msra.mxu0 0.0
    %5591 = vmatprep.subr.mxu0 0.0
    %5592 = vmatpush1.msra.mxu0 0.0
    %5593 = vmatprep.subr.mxu0 0.0
    %5594 = vmatpush1.msra.mxu0 0.0
    %5595 = vmatprep.subr.mxu0 0.0
    %5596 = vmatpush1.msra.mxu0 0.0
    %5597 = vmatprep.subr.mxu0 0.0
    %5598 = vmatpush1.msra.mxu0 0.0
    %5599 = vmatprep.subr.mxu0 0.0
    %5600 = vmatpush1.msra.mxu0 0.0
    %5601 = vmatprep.subr.mxu0 0.0
    %5602 = vmatpush1.msra.mxu0 0.0
    %5603 = vmatprep.subr.mxu0 0.0
    %5604 = vmatpush1.msra.mxu0 0.0
    %5605 = vmatprep.subr.mxu0 0.0
    %5606 = vmatpush1.msra.mxu0 0.0
    %5607 = vmatprep.subr.mxu0 0.0
    %5608 = vmatpush1.msra.mxu0 0.0
    %5609 = vmatprep.subr.mxu0 0.0
    %5610 = vmatpush1.msra.mxu0 0.0
    %5611 = vmatprep.subr.mxu0 0.0
    %5612 = vmatpush1.msra.mxu0 0.0
    %5613 = vmatprep.subr.mxu0 0.0
    %5614 = vmatpush1.msra.mxu0 0.0
    %5615 = vmatprep.subr.mxu0 0.0
    %5616 = vmatpush1.msra.mxu0 0.0
    %5617 = vmatprep.subr.mxu0 0.0
    %5618 = vmatpush1.msra.mxu0 0.0
    %5619 = vmatprep.subr.mxu0 0.0
    %5620 = vmatpush1.msra.mxu0 0.0
    %5621 = vmatprep.subr.mxu0 0.0
    %5622 = vmatpush1.msra.mxu0 0.0
    %5623 = vmatprep.mubr.f32.mxu0 0.0
    %5624 = vmatmul.mubr.f32.gmra.mrb[0].mxu0 %v221
    %v5625 = vpop.f32.mrb[0].mxu0
    %v5626 = vadd.f32 0.0, %v5625
    %v5627 = vpop.f32.mrb[0].mxu0
    %5628 = vmatprep.mubr.f32.mxu0 0.0
    %5629 = vmatmul.mubr.f32.gmra.mrb[0].mxu0 %v223
    %v5630 = vpop.f32.mrb[0].mxu0
    %v5631 = vadd.f32 0.0, %v5630
    %v5632 = vpop.f32.mrb[0].mxu0
    %5633 = vdwg.mxu0
    %s5634 = scalar_lea.vmem %s5, 96
    %v5635 = vld [vmem:[%s5634] sm:$0xff]
    %v5636 = vld [vmem:[%s5634 + $0x8] sm:$0xff]
    %v5637 = vld [vmem:[%s5634 + $0x10] sm:$0xff]
    %v5638 = vld [vmem:[%s5634 + $0x18] sm:$0xff]
    %5639 = vmatprep.subr.mxu0 0.0
    %5640 = vmatpush1.msra.mxu0 %v5635
    %5641 = vmatprep.subr.mxu0 0.0
    %5642 = vmatpush1.msra.mxu0 %v5636
    %5643 = vmatprep.subr.mxu0 0.0
    %5644 = vmatpush1.msra.mxu0 %v5637
    %5645 = vmatprep.subr.mxu0 0.0
    %5646 = vmatpush1.msra.mxu0 %v5638
    %5647 = vmatprep.subr.mxu0 0.0
    %5648 = vmatpush1.msra.mxu0 0.0
    %5649 = vmatprep.subr.mxu0 0.0
    %5650 = vmatpush1.msra.mxu0 0.0
    %5651 = vmatprep.subr.mxu0 0.0
    %5652 = vmatpush1.msra.mxu0 0.0
    %5653 = vmatprep.subr.mxu0 0.0
    %5654 = vmatpush1.msra.mxu0 0.0
    %5655 = vmatprep.subr.mxu0 0.0
    %5656 = vmatpush1.msra.mxu0 0.0
    %5657 = vmatprep.subr.mxu0 0.0
    %5658 = vmatpush1.msra.mxu0 0.0
    %5659 = vmatprep.subr.mxu0 0.0
    %5660 = vmatpush1.msra.mxu0 0.0
    %5661 = vmatprep.subr.mxu0 0.0
    %5662 = vmatpush1.msra.mxu0 0.0
    %5663 = vmatprep.subr.mxu0 0.0
    %5664 = vmatpush1.msra.mxu0 0.0
    %5665 = vmatprep.subr.mxu0 0.0
    %5666 = vmatpush1.msra.mxu0 0.0
    %5667 = vmatprep.subr.mxu0 0.0
    %5668 = vmatpush1.msra.mxu0 0.0
    %5669 = vmatprep.subr.mxu0 0.0
    %5670 = vmatpush1.msra.mxu0 0.0
    %5671 = vmatprep.subr.mxu0 0.0
    %5672 = vmatpush1.msra.mxu0 0.0
    %5673 = vmatprep.subr.mxu0 0.0
    %5674 = vmatpush1.msra.mxu0 0.0
    %5675 = vmatprep.subr.mxu0 0.0
    %5676 = vmatpush1.msra.mxu0 0.0
    %5677 = vmatprep.subr.mxu0 0.0
    %5678 = vmatpush1.msra.mxu0 0.0
    %5679 = vmatprep.subr.mxu0 0.0
    %5680 = vmatpush1.msra.mxu0 0.0
    %5681 = vmatprep.subr.mxu0 0.0
    %5682 = vmatpush1.msra.mxu0 0.0
    %5683 = vmatprep.subr.mxu0 0.0
    %5684 = vmatpush1.msra.mxu0 0.0
    %5685 = vmatprep.subr.mxu0 0.0
    %5686 = vmatpush1.msra.mxu0 0.0
    %5687 = vmatprep.subr.mxu0 0.0
    %5688 = vmatpush1.msra.mxu0 0.0
    %5689 = vmatprep.subr.mxu0 0.0
    %5690 = vmatpush1.msra.mxu0 0.0
    %5691 = vmatprep.subr.mxu0 0.0
    %5692 = vmatpush1.msra.mxu0 0.0
    %5693 = vmatprep.subr.mxu0 0.0
    %5694 = vmatpush1.msra.mxu0 0.0
    %5695 = vmatprep.subr.mxu0 0.0
    %5696 = vmatpush1.msra.mxu0 0.0
    %5697 = vmatprep.subr.mxu0 0.0
    %5698 = vmatpush1.msra.mxu0 0.0
    %5699 = vmatprep.subr.mxu0 0.0
    %5700 = vmatpush1.msra.mxu0 0.0
    %5701 = vmatprep.subr.mxu0 0.0
    %5702 = vmatpush1.msra.mxu0 0.0
    %5703 = vmatprep.mubr.f32.mxu0 0.0
    %5704 = vmatmul.mubr.f32.gmra.mrb[0].mxu0 %v221
    %v5705 = vpop.f32.mrb[0].mxu0
    %v5706 = vadd.f32 0.0, %v5705
    %v5707 = vpop.f32.mrb[0].mxu0
    %5708 = vmatprep.mubr.f32.mxu0 0.0
    %5709 = vmatmul.mubr.f32.gmra.mrb[0].mxu0 %v223
    %v5710 = vpop.f32.mrb[0].mxu0
    %v5711 = vadd.f32 0.0, %v5710
    %v5712 = vpop.f32.mrb[0].mxu0
    %5713 = vdwg.mxu0
    %v5716 = vcombine.high %v5546, %v5546
    %v5718 = vunpack.c.l.s4 1983009808
    %v5719 = vunpack.c.0.s8 %v5718
    %v5720 = vlaneseq
    %v5721 = vshrl.u32 %v5720, 7
    %v5722 = vsub.s32 %v5719, %v5721
    %v5723 = vrot.slane %v5546, %v5722
    %v5725 = vunpack.c.l.s4 1983009808
    %v5726 = vunpack.c.0.s8 %v5725
    %v5727 = vlaneseq
    %v5728 = vshrl.u32 %v5727, 7
    %v5729 = vsub.s32 %v5726, %v5728
    %v5730 = vrot.slane %v5716, %v5729
    %v5731 = vcombine.high %v5723, %v5723
    %v5732 = vcombine.high %v5730, %v5730
    %v5733 = vcombine.high %v5551, %v5551
    %v5735 = vunpack.c.l.s4 1983009808
    %v5736 = vunpack.c.0.s8 %v5735
    %v5737 = vlaneseq
    %v5738 = vshrl.u32 %v5737, 7
    %v5739 = vsub.s32 %v5736, %v5738
    %v5740 = vrot.slane %v5551, %v5739
    %v5742 = vunpack.c.l.s4 1983009808
    %v5743 = vunpack.c.0.s8 %v5742
    %v5744 = vlaneseq
    %v5745 = vshrl.u32 %v5744, 7
    %v5746 = vsub.s32 %v5743, %v5745
    %v5747 = vrot.slane %v5733, %v5746
    %v5748 = vcombine.high %v5740, %v5740
    %v5749 = vcombine.high %v5747, %v5747
    %v5752 = vcombine.high %v5626, %v5626
    %v5754 = vunpack.c.l.s4 1983009808
    %v5755 = vunpack.c.0.s8 %v5754
    %v5756 = vlaneseq
    %v5757 = vshrl.u32 %v5756, 7
    %v5758 = vsub.s32 %v5755, %v5757
    %v5759 = vrot.slane %v5626, %v5758
    %v5761 = vunpack.c.l.s4 1983009808
    %v5762 = vunpack.c.0.s8 %v5761
    %v5763 = vlaneseq
    %v5764 = vshrl.u32 %v5763, 7
    %v5765 = vsub.s32 %v5762, %v5764
    %v5766 = vrot.slane %v5752, %v5765
    %v5767 = vcombine.high %v5759, %v5759
    %v5768 = vcombine.high %v5766, %v5766
    %v5769 = vcombine.high %v5631, %v5631
    %v5771 = vunpack.c.l.s4 1983009808
    %v5772 = vunpack.c.0.s8 %v5771
    %v5773 = vlaneseq
    %v5774 = vshrl.u32 %v5773, 7
    %v5775 = vsub.s32 %v5772, %v5774
    %v5776 = vrot.slane %v5631, %v5775
    %v5778 = vunpack.c.l.s4 1983009808
    %v5779 = vunpack.c.0.s8 %v5778
    %v5780 = vlaneseq
    %v5781 = vshrl.u32 %v5780, 7
    %v5782 = vsub.s32 %v5779, %v5781
    %v5783 = vrot.slane %v5769, %v5782
    %v5784 = vcombine.high %v5776, %v5776
    %v5785 = vcombine.high %v5783, %v5783
    %v5788 = vcombine.high %v5706, %v5706
    %v5790 = vunpack.c.l.s4 1983009808
    %v5791 = vunpack.c.0.s8 %v5790
    %v5792 = vlaneseq
    %v5793 = vshrl.u32 %v5792, 7
    %v5794 = vsub.s32 %v5791, %v5793
    %v5795 = vrot.slane %v5706, %v5794
    %v5797 = vunpack.c.l.s4 1983009808
    %v5798 = vunpack.c.0.s8 %v5797
    %v5799 = vlaneseq
    %v5800 = vshrl.u32 %v5799, 7
    %v5801 = vsub.s32 %v5798, %v5800
    %v5802 = vrot.slane %v5788, %v5801
    %v5803 = vcombine.high %v5795, %v5795
    %v5804 = vcombine.high %v5802, %v5802
    %v5805 = vcombine.high %v5711, %v5711
    %v5807 = vunpack.c.l.s4 1983009808
    %v5808 = vunpack.c.0.s8 %v5807
    %v5809 = vlaneseq
    %v5810 = vshrl.u32 %v5809, 7
    %v5811 = vsub.s32 %v5808, %v5810
    %v5812 = vrot.slane %v5711, %v5811
    %v5814 = vunpack.c.l.s4 1983009808
    %v5815 = vunpack.c.0.s8 %v5814
    %v5816 = vlaneseq
    %v5817 = vshrl.u32 %v5816, 7
    %v5818 = vsub.s32 %v5815, %v5817
    %v5819 = vrot.slane %v5805, %v5818
    %v5820 = vcombine.high %v5812, %v5812
    %v5821 = vcombine.high %v5819, %v5819
    %v5822 = vsel %vm566, %v5723, 0
    %v5824 = vsel %vm566, %v5759, 0
    %5826 = vmatprep.subr.mxu0 0.0
    %5827 = vmatpush1.xpose.msra.mxu0 %v5824
    %5828 = vmatprep.subr.mxu0 0.0
    %5829 = vmatpush1.xpose.msra.mxu0 0.0
    %5830 = vmatprep.subr.mxu0 0.0
    %5831 = vmatpush1.xpose.msra.mxu0 0.0
    %5832 = vmatprep.subr.mxu0 0.0
    %5833 = vmatpush1.xpose.msra.mxu0 0.0
    %5834 = vmatprep.subr.mxu0 0.0
    %5835 = vmatpush1.xpose.msra.mxu0 0.0
    %5836 = vmatprep.subr.mxu0 0.0
    %5837 = vmatpush1.xpose.msra.mxu0 0.0
    %5838 = vmatprep.subr.mxu0 0.0
    %5839 = vmatpush1.xpose.msra.mxu0 0.0
    %5840 = vmatprep.subr.mxu0 0.0
    %5841 = vmatpush1.xpose.msra.mxu0 0.0
    %5842 = vmatprep.subr.mxu0 0.0
    %5843 = vmatpush1.xpose.msra.mxu0 0.0
    %5844 = vmatprep.subr.mxu0 0.0
    %5845 = vmatpush1.xpose.msra.mxu0 0.0
    %5846 = vmatprep.subr.mxu0 0.0
    %5847 = vmatpush1.xpose.msra.mxu0 0.0
    %5848 = vmatprep.subr.mxu0 0.0
    %5849 = vmatpush1.xpose.msra.mxu0 0.0
    %5850 = vmatprep.subr.mxu0 0.0
    %5851 = vmatpush1.xpose.msra.mxu0 0.0
    %5852 = vmatprep.subr.mxu0 0.0
    %5853 = vmatpush1.xpose.msra.mxu0 0.0
    %5854 = vmatprep.subr.mxu0 0.0
    %5855 = vmatpush1.xpose.msra.mxu0 0.0
    %5856 = vmatprep.subr.mxu0 0.0
    %5857 = vmatpush1.xpose.msra.mxu0 0.0
    %5858 = vmatprep.subr.mxu0 0.0
    %5859 = vmatpush1.xpose.msra.mxu0 0.0
    %5860 = vmatprep.subr.mxu0 0.0
    %5861 = vmatpush1.xpose.msra.mxu0 0.0
    %5862 = vmatprep.subr.mxu0 0.0
    %5863 = vmatpush1.xpose.msra.mxu0 0.0
    %5864 = vmatprep.subr.mxu0 0.0
    %5865 = vmatpush1.xpose.msra.mxu0 0.0
    %5866 = vmatprep.subr.mxu0 0.0
    %5867 = vmatpush1.xpose.msra.mxu0 0.0
    %5868 = vmatprep.subr.mxu0 0.0
    %5869 = vmatpush1.xpose.msra.mxu0 0.0
    %5870 = vmatprep.subr.mxu0 0.0
    %5871 = vmatpush1.xpose.msra.mxu0 0.0
    %5872 = vmatprep.subr.mxu0 0.0
    %5873 = vmatpush1.xpose.msra.mxu0 0.0
    %5874 = vmatprep.subr.mxu0 0.0
    %5875 = vmatpush1.xpose.msra.mxu0 0.0
    %5876 = vmatprep.subr.mxu0 0.0
    %5877 = vmatpush1.xpose.msra.mxu0 0.0
    %5878 = vmatprep.subr.mxu0 0.0
    %5879 = vmatpush1.xpose.msra.mxu0 0.0
    %5880 = vmatprep.subr.mxu0 0.0
    %5881 = vmatpush1.xpose.msra.mxu0 0.0
    %5882 = vmatprep.subr.mxu0 0.0
    %5883 = vmatpush1.xpose.msra.mxu0 0.0
    %5884 = vmatprep.subr.mxu0 0.0
    %5885 = vmatpush1.xpose.msra.mxu0 0.0
    %5886 = vmatprep.subr.mxu0 0.0
    %5887 = vmatpush1.xpose.msra.mxu0 0.0
    %5888 = vmatprep.subr.mxu0 0.0
    %5889 = vmatpush1.xpose.msra.mxu0 0.0
    %5890 = vmatprep.mubr.f32.mxu0 0.0
    %5891 = vmatmul.mubr.f32.gmra.mrb[0].mxu0 %v5822
    %v5892 = vpop.f32.mrb[0].mxu0
    %v5893 = vadd.f32 0.0, %v5892
    %v5894 = vpop.f32.mrb[0].mxu0
    %5895 = vdwg.mxu0
    %v5896 = vsel %vm566, %v5731, 0
    %v5898 = vsel %vm566, %v5767, 0
    %5900 = vmatprep.subr.mxu0 0.0
    %5901 = vmatpush1.xpose.msra.mxu0 %v5898
    %5902 = vmatprep.subr.mxu0 0.0
    %5903 = vmatpush1.xpose.msra.mxu0 0.0
    %5904 = vmatprep.subr.mxu0 0.0
    %5905 = vmatpush1.xpose.msra.mxu0 0.0
    %5906 = vmatprep.subr.mxu0 0.0
    %5907 = vmatpush1.xpose.msra.mxu0 0.0
    %5908 = vmatprep.subr.mxu0 0.0
    %5909 = vmatpush1.xpose.msra.mxu0 0.0
    %5910 = vmatprep.subr.mxu0 0.0
    %5911 = vmatpush1.xpose.msra.mxu0 0.0
    %5912 = vmatprep.subr.mxu0 0.0
    %5913 = vmatpush1.xpose.msra.mxu0 0.0
    %5914 = vmatprep.subr.mxu0 0.0
    %5915 = vmatpush1.xpose.msra.mxu0 0.0
    %5916 = vmatprep.subr.mxu0 0.0
    %5917 = vmatpush1.xpose.msra.mxu0 0.0
    %5918 = vmatprep.subr.mxu0 0.0
    %5919 = vmatpush1.xpose.msra.mxu0 0.0
    %5920 = vmatprep.subr.mxu0 0.0
    %5921 = vmatpush1.xpose.msra.mxu0 0.0
    %5922 = vmatprep.subr.mxu0 0.0
    %5923 = vmatpush1.xpose.msra.mxu0 0.0
    %5924 = vmatprep.subr.mxu0 0.0
    %5925 = vmatpush1.xpose.msra.mxu0 0.0
    %5926 = vmatprep.subr.mxu0 0.0
    %5927 = vmatpush1.xpose.msra.mxu0 0.0
    %5928 = vmatprep.subr.mxu0 0.0
    %5929 = vmatpush1.xpose.msra.mxu0 0.0
    %5930 = vmatprep.subr.mxu0 0.0
    %5931 = vmatpush1.xpose.msra.mxu0 0.0
    %5932 = vmatprep.subr.mxu0 0.0
    %5933 = vmatpush1.xpose.msra.mxu0 0.0
    %5934 = vmatprep.subr.mxu0 0.0
    %5935 = vmatpush1.xpose.msra.mxu0 0.0
    %5936 = vmatprep.subr.mxu0 0.0
    %5937 = vmatpush1.xpose.msra.mxu0 0.0
    %5938 = vmatprep.subr.mxu0 0.0
    %5939 = vmatpush1.xpose.msra.mxu0 0.0
    %5940 = vmatprep.subr.mxu0 0.0
    %5941 = vmatpush1.xpose.msra.mxu0 0.0
    %5942 = vmatprep.subr.mxu0 0.0
    %5943 = vmatpush1.xpose.msra.mxu0 0.0
    %5944 = vmatprep.subr.mxu0 0.0
    %5945 = vmatpush1.xpose.msra.mxu0 0.0
    %5946 = vmatprep.subr.mxu0 0.0
    %5947 = vmatpush1.xpose.msra.mxu0 0.0
    %5948 = vmatprep.subr.mxu0 0.0
    %5949 = vmatpush1.xpose.msra.mxu0 0.0
    %5950 = vmatprep.subr.mxu0 0.0
    %5951 = vmatpush1.xpose.msra.mxu0 0.0
    %5952 = vmatprep.subr.mxu0 0.0
    %5953 = vmatpush1.xpose.msra.mxu0 0.0
    %5954 = vmatprep.subr.mxu0 0.0
    %5955 = vmatpush1.xpose.msra.mxu0 0.0
    %5956 = vmatprep.subr.mxu0 0.0
    %5957 = vmatpush1.xpose.msra.mxu0 0.0
    %5958 = vmatprep.subr.mxu0 0.0
    %5959 = vmatpush1.xpose.msra.mxu0 0.0
    %5960 = vmatprep.subr.mxu0 0.0
    %5961 = vmatpush1.xpose.msra.mxu0 0.0
    %5962 = vmatprep.subr.mxu0 0.0
    %5963 = vmatpush1.xpose.msra.mxu0 0.0
    %5964 = vmatprep.mubr.f32.mxu0 0.0
    %5965 = vmatmul.mubr.f32.gmra.mrb[0].mxu0 %v5896
    %v5966 = vpop.f32.mrb[0].mxu0
    %v5967 = vadd.f32 0.0, %v5966
    %v5968 = vpop.f32.mrb[0].mxu0
    %5969 = vdwg.mxu0
    %v5970 = vsel %vm566, %v5730, 0
    %v5972 = vsel %vm566, %v5766, 0
    %5974 = vmatprep.subr.mxu0 0.0
    %5975 = vmatpush1.xpose.msra.mxu0 %v5972
    %5976 = vmatprep.subr.mxu0 0.0
    %5977 = vmatpush1.xpose.msra.mxu0 0.0
    %5978 = vmatprep.subr.mxu0 0.0
    %5979 = vmatpush1.xpose.msra.mxu0 0.0
    %5980 = vmatprep.subr.mxu0 0.0
    %5981 = vmatpush1.xpose.msra.mxu0 0.0
    %5982 = vmatprep.subr.mxu0 0.0
    %5983 = vmatpush1.xpose.msra.mxu0 0.0
    %5984 = vmatprep.subr.mxu0 0.0
    %5985 = vmatpush1.xpose.msra.mxu0 0.0
    %5986 = vmatprep.subr.mxu0 0.0
    %5987 = vmatpush1.xpose.msra.mxu0 0.0
    %5988 = vmatprep.subr.mxu0 0.0
    %5989 = vmatpush1.xpose.msra.mxu0 0.0
    %5990 = vmatprep.subr.mxu0 0.0
    %5991 = vmatpush1.xpose.msra.mxu0 0.0
    %5992 = vmatprep.subr.mxu0 0.0
    %5993 = vmatpush1.xpose.msra.mxu0 0.0
    %5994 = vmatprep.subr.mxu0 0.0
    %5995 = vmatpush1.xpose.msra.mxu0 0.0
    %5996 = vmatprep.subr.mxu0 0.0
    %5997 = vmatpush1.xpose.msra.mxu0 0.0
    %5998 = vmatprep.subr.mxu0 0.0
    %5999 = vmatpush1.xpose.msra.mxu0 0.0
    %6000 = vmatprep.subr.mxu0 0.0
    %6001 = vmatpush1.xpose.msra.mxu0 0.0
    %6002 = vmatprep.subr.mxu0 0.0
    %6003 = vmatpush1.xpose.msra.mxu0 0.0
    %6004 = vmatprep.subr.mxu0 0.0
    %6005 = vmatpush1.xpose.msra.mxu0 0.0
    %6006 = vmatprep.subr.mxu0 0.0
    %6007 = vmatpush1.xpose.msra.mxu0 0.0
    %6008 = vmatprep.subr.mxu0 0.0
    %6009 = vmatpush1.xpose.msra.mxu0 0.0
    %6010 = vmatprep.subr.mxu0 0.0
    %6011 = vmatpush1.xpose.msra.mxu0 0.0
    %6012 = vmatprep.subr.mxu0 0.0
    %6013 = vmatpush1.xpose.msra.mxu0 0.0
    %6014 = vmatprep.subr.mxu0 0.0
    %6015 = vmatpush1.xpose.msra.mxu0 0.0
    %6016 = vmatprep.subr.mxu0 0.0
    %6017 = vmatpush1.xpose.msra.mxu0 0.0
    %6018 = vmatprep.subr.mxu0 0.0
    %6019 = vmatpush1.xpose.msra.mxu0 0.0
    %6020 = vmatprep.subr.mxu0 0.0
    %6021 = vmatpush1.xpose.msra.mxu0 0.0
    %6022 = vmatprep.subr.mxu0 0.0
    %6023 = vmatpush1.xpose.msra.mxu0 0.0
    %6024 = vmatprep.subr.mxu0 0.0
    %6025 = vmatpush1.xpose.msra.mxu0 0.0
    %6026 = vmatprep.subr.mxu0 0.0
    %6027 = vmatpush1.xpose.msra.mxu0 0.0
    %6028 = vmatprep.subr.mxu0 0.0
    %6029 = vmatpush1.xpose.msra.mxu0 0.0
    %6030 = vmatprep.subr.mxu0 0.0
    %6031 = vmatpush1.xpose.msra.mxu0 0.0
    %6032 = vmatprep.subr.mxu0 0.0
    %6033 = vmatpush1.xpose.msra.mxu0 0.0
    %6034 = vmatprep.subr.mxu0 0.0
    %6035 = vmatpush1.xpose.msra.mxu0 0.0
    %6036 = vmatprep.subr.mxu0 0.0
    %6037 = vmatpush1.xpose.msra.mxu0 0.0
    %6038 = vmatprep.mubr.f32.mxu0 0.0
    %6039 = vmatmul.mubr.f32.gmra.mrb[0].mxu0 %v5970
    %v6040 = vpop.f32.mrb[0].mxu0
    %v6041 = vadd.f32 0.0, %v6040
    %v6042 = vpop.f32.mrb[0].mxu0
    %6043 = vdwg.mxu0
    %v6044 = vsel %vm566, %v5732, 0
    %v6046 = vsel %vm566, %v5768, 0
    %6048 = vmatprep.subr.mxu0 0.0
    %6049 = vmatpush1.xpose.msra.mxu0 %v6046
    %6050 = vmatprep.subr.mxu0 0.0
    %6051 = vmatpush1.xpose.msra.mxu0 0.0
    %6052 = vmatprep.subr.mxu0 0.0
    %6053 = vmatpush1.xpose.msra.mxu0 0.0
    %6054 = vmatprep.subr.mxu0 0.0
    %6055 = vmatpush1.xpose.msra.mxu0 0.0
    %6056 = vmatprep.subr.mxu0 0.0
    %6057 = vmatpush1.xpose.msra.mxu0 0.0
    %6058 = vmatprep.subr.mxu0 0.0
    %6059 = vmatpush1.xpose.msra.mxu0 0.0
    %6060 = vmatprep.subr.mxu0 0.0
    %6061 = vmatpush1.xpose.msra.mxu0 0.0
    %6062 = vmatprep.subr.mxu0 0.0
    %6063 = vmatpush1.xpose.msra.mxu0 0.0
    %6064 = vmatprep.subr.mxu0 0.0
    %6065 = vmatpush1.xpose.msra.mxu0 0.0
    %6066 = vmatprep.subr.mxu0 0.0
    %6067 = vmatpush1.xpose.msra.mxu0 0.0
    %6068 = vmatprep.subr.mxu0 0.0
    %6069 = vmatpush1.xpose.msra.mxu0 0.0
    %6070 = vmatprep.subr.mxu0 0.0
    %6071 = vmatpush1.xpose.msra.mxu0 0.0
    %6072 = vmatprep.subr.mxu0 0.0
    %6073 = vmatpush1.xpose.msra.mxu0 0.0
    %6074 = vmatprep.subr.mxu0 0.0
    %6075 = vmatpush1.xpose.msra.mxu0 0.0
    %6076 = vmatprep.subr.mxu0 0.0
    %6077 = vmatpush1.xpose.msra.mxu0 0.0
    %6078 = vmatprep.subr.mxu0 0.0
    %6079 = vmatpush1.xpose.msra.mxu0 0.0
    %6080 = vmatprep.subr.mxu0 0.0
    %6081 = vmatpush1.xpose.msra.mxu0 0.0
    %6082 = vmatprep.subr.mxu0 0.0
    %6083 = vmatpush1.xpose.msra.mxu0 0.0
    %6084 = vmatprep.subr.mxu0 0.0
    %6085 = vmatpush1.xpose.msra.mxu0 0.0
    %6086 = vmatprep.subr.mxu0 0.0
    %6087 = vmatpush1.xpose.msra.mxu0 0.0
    %6088 = vmatprep.subr.mxu0 0.0
    %6089 = vmatpush1.xpose.msra.mxu0 0.0
    %6090 = vmatprep.subr.mxu0 0.0
    %6091 = vmatpush1.xpose.msra.mxu0 0.0
    %6092 = vmatprep.subr.mxu0 0.0
    %6093 = vmatpush1.xpose.msra.mxu0 0.0
    %6094 = vmatprep.subr.mxu0 0.0
    %6095 = vmatpush1.xpose.msra.mxu0 0.0
    %6096 = vmatprep.subr.mxu0 0.0
    %6097 = vmatpush1.xpose.msra.mxu0 0.0
    %6098 = vmatprep.subr.mxu0 0.0
    %6099 = vmatpush1.xpose.msra.mxu0 0.0
    %6100 = vmatprep.subr.mxu0 0.0
    %6101 = vmatpush1.xpose.msra.mxu0 0.0
    %6102 = vmatprep.subr.mxu0 0.0
    %6103 = vmatpush1.xpose.msra.mxu0 0.0
    %6104 = vmatprep.subr.mxu0 0.0
    %6105 = vmatpush1.xpose.msra.mxu0 0.0
    %6106 = vmatprep.subr.mxu0 0.0
    %6107 = vmatpush1.xpose.msra.mxu0 0.0
    %6108 = vmatprep.subr.mxu0 0.0
    %6109 = vmatpush1.xpose.msra.mxu0 0.0
    %6110 = vmatprep.subr.mxu0 0.0
    %6111 = vmatpush1.xpose.msra.mxu0 0.0
    %6112 = vmatprep.mubr.f32.mxu0 0.0
    %6113 = vmatmul.mubr.f32.gmra.mrb[0].mxu0 %v6044
    %v6114 = vpop.f32.mrb[0].mxu0
    %v6115 = vadd.f32 0.0, %v6114
    %v6116 = vpop.f32.mrb[0].mxu0
    %6117 = vdwg.mxu0
    %v6118 = vsel %vm566, %v5740, 0
    %v6120 = vsel %vm566, %v5776, 0
    %6122 = vmatprep.subr.mxu0 0.0
    %6123 = vmatpush1.xpose.msra.mxu0 %v6120
    %6124 = vmatprep.subr.mxu0 0.0
    %6125 = vmatpush1.xpose.msra.mxu0 0.0
    %6126 = vmatprep.subr.mxu0 0.0
    %6127 = vmatpush1.xpose.msra.mxu0 0.0
    %6128 = vmatprep.subr.mxu0 0.0
    %6129 = vmatpush1.xpose.msra.mxu0 0.0
    %6130 = vmatprep.subr.mxu0 0.0
    %6131 = vmatpush1.xpose.msra.mxu0 0.0
    %6132 = vmatprep.subr.mxu0 0.0
    %6133 = vmatpush1.xpose.msra.mxu0 0.0
    %6134 = vmatprep.subr.mxu0 0.0
    %6135 = vmatpush1.xpose.msra.mxu0 0.0
    %6136 = vmatprep.subr.mxu0 0.0
    %6137 = vmatpush1.xpose.msra.mxu0 0.0
    %6138 = vmatprep.subr.mxu0 0.0
    %6139 = vmatpush1.xpose.msra.mxu0 0.0
    %6140 = vmatprep.subr.mxu0 0.0
    %6141 = vmatpush1.xpose.msra.mxu0 0.0
    %6142 = vmatprep.subr.mxu0 0.0
    %6143 = vmatpush1.xpose.msra.mxu0 0.0
    %6144 = vmatprep.subr.mxu0 0.0
    %6145 = vmatpush1.xpose.msra.mxu0 0.0
    %6146 = vmatprep.subr.mxu0 0.0
    %6147 = vmatpush1.xpose.msra.mxu0 0.0
    %6148 = vmatprep.subr.mxu0 0.0
    %6149 = vmatpush1.xpose.msra.mxu0 0.0
    %6150 = vmatprep.subr.mxu0 0.0
    %6151 = vmatpush1.xpose.msra.mxu0 0.0
    %6152 = vmatprep.subr.mxu0 0.0
    %6153 = vmatpush1.xpose.msra.mxu0 0.0
    %6154 = vmatprep.subr.mxu0 0.0
    %6155 = vmatpush1.xpose.msra.mxu0 0.0
    %6156 = vmatprep.subr.mxu0 0.0
    %6157 = vmatpush1.xpose.msra.mxu0 0.0
    %6158 = vmatprep.subr.mxu0 0.0
    %6159 = vmatpush1.xpose.msra.mxu0 0.0
    %6160 = vmatprep.subr.mxu0 0.0
    %6161 = vmatpush1.xpose.msra.mxu0 0.0
    %6162 = vmatprep.subr.mxu0 0.0
    %6163 = vmatpush1.xpose.msra.mxu0 0.0
    %6164 = vmatprep.subr.mxu0 0.0
    %6165 = vmatpush1.xpose.msra.mxu0 0.0
    %6166 = vmatprep.subr.mxu0 0.0
    %6167 = vmatpush1.xpose.msra.mxu0 0.0
    %6168 = vmatprep.subr.mxu0 0.0
    %6169 = vmatpush1.xpose.msra.mxu0 0.0
    %6170 = vmatprep.subr.mxu0 0.0
    %6171 = vmatpush1.xpose.msra.mxu0 0.0
    %6172 = vmatprep.subr.mxu0 0.0
    %6173 = vmatpush1.xpose.msra.mxu0 0.0
    %6174 = vmatprep.subr.mxu0 0.0
    %6175 = vmatpush1.xpose.msra.mxu0 0.0
    %6176 = vmatprep.subr.mxu0 0.0
    %6177 = vmatpush1.xpose.msra.mxu0 0.0
    %6178 = vmatprep.subr.mxu0 0.0
    %6179 = vmatpush1.xpose.msra.mxu0 0.0
    %6180 = vmatprep.subr.mxu0 0.0
    %6181 = vmatpush1.xpose.msra.mxu0 0.0
    %6182 = vmatprep.subr.mxu0 0.0
    %6183 = vmatpush1.xpose.msra.mxu0 0.0
    %6184 = vmatprep.subr.mxu0 0.0
    %6185 = vmatpush1.xpose.msra.mxu0 0.0
    %6186 = vmatprep.mubr.f32.mxu0 0.0
    %6187 = vmatmul.mubr.f32.gmra.mrb[0].mxu0 %v6118
    %v6188 = vpop.f32.mrb[0].mxu0
    %v6189 = vadd.f32 0.0, %v6188
    %v6190 = vpop.f32.mrb[0].mxu0
    %6191 = vdwg.mxu0
    %v6192 = vsel %vm566, %v5748, 0
    %v6194 = vsel %vm566, %v5784, 0
    %6196 = vmatprep.subr.mxu0 0.0
    %6197 = vmatpush1.xpose.msra.mxu0 %v6194
    %6198 = vmatprep.subr.mxu0 0.0
    %6199 = vmatpush1.xpose.msra.mxu0 0.0
    %6200 = vmatprep.subr.mxu0 0.0
    %6201 = vmatpush1.xpose.msra.mxu0 0.0
    %6202 = vmatprep.subr.mxu0 0.0
    %6203 = vmatpush1.xpose.msra.mxu0 0.0
    %6204 = vmatprep.subr.mxu0 0.0
    %6205 = vmatpush1.xpose.msra.mxu0 0.0
    %6206 = vmatprep.subr.mxu0 0.0
    %6207 = vmatpush1.xpose.msra.mxu0 0.0
    %6208 = vmatprep.subr.mxu0 0.0
    %6209 = vmatpush1.xpose.msra.mxu0 0.0
    %6210 = vmatprep.subr.mxu0 0.0
    %6211 = vmatpush1.xpose.msra.mxu0 0.0
    %6212 = vmatprep.subr.mxu0 0.0
    %6213 = vmatpush1.xpose.msra.mxu0 0.0
    %6214 = vmatprep.subr.mxu0 0.0
    %6215 = vmatpush1.xpose.msra.mxu0 0.0
    %6216 = vmatprep.subr.mxu0 0.0
    %6217 = vmatpush1.xpose.msra.mxu0 0.0
    %6218 = vmatprep.subr.mxu0 0.0
    %6219 = vmatpush1.xpose.msra.mxu0 0.0
    %6220 = vmatprep.subr.mxu0 0.0
    %6221 = vmatpush1.xpose.msra.mxu0 0.0
    %6222 = vmatprep.subr.mxu0 0.0
    %6223 = vmatpush1.xpose.msra.mxu0 0.0
    %6224 = vmatprep.subr.mxu0 0.0
    %6225 = vmatpush1.xpose.msra.mxu0 0.0
    %6226 = vmatprep.subr.mxu0 0.0
    %6227 = vmatpush1.xpose.msra.mxu0 0.0
    %6228 = vmatprep.subr.mxu0 0.0
    %6229 = vmatpush1.xpose.msra.mxu0 0.0
    %6230 = vmatprep.subr.mxu0 0.0
    %6231 = vmatpush1.xpose.msra.mxu0 0.0
    %6232 = vmatprep.subr.mxu0 0.0
    %6233 = vmatpush1.xpose.msra.mxu0 0.0
    %6234 = vmatprep.subr.mxu0 0.0
    %6235 = vmatpush1.xpose.msra.mxu0 0.0
    %6236 = vmatprep.subr.mxu0 0.0
    %6237 = vmatpush1.xpose.msra.mxu0 0.0
    %6238 = vmatprep.subr.mxu0 0.0
    %6239 = vmatpush1.xpose.msra.mxu0 0.0
    %6240 = vmatprep.subr.mxu0 0.0
    %6241 = vmatpush1.xpose.msra.mxu0 0.0
    %6242 = vmatprep.subr.mxu0 0.0
    %6243 = vmatpush1.xpose.msra.mxu0 0.0
    %6244 = vmatprep.subr.mxu0 0.0
    %6245 = vmatpush1.xpose.msra.mxu0 0.0
    %6246 = vmatprep.subr.mxu0 0.0
    %6247 = vmatpush1.xpose.msra.mxu0 0.0
    %6248 = vmatprep.subr.mxu0 0.0
    %6249 = vmatpush1.xpose.msra.mxu0 0.0
    %6250 = vmatprep.subr.mxu0 0.0
    %6251 = vmatpush1.xpose.msra.mxu0 0.0
    %6252 = vmatprep.subr.mxu0 0.0
    %6253 = vmatpush1.xpose.msra.mxu0 0.0
    %6254 = vmatprep.subr.mxu0 0.0
    %6255 = vmatpush1.xpose.msra.mxu0 0.0
    %6256 = vmatprep.subr.mxu0 0.0
    %6257 = vmatpush1.xpose.msra.mxu0 0.0
    %6258 = vmatprep.subr.mxu0 0.0
    %6259 = vmatpush1.xpose.msra.mxu0 0.0
    %6260 = vmatprep.mubr.f32.mxu0 0.0
    %6261 = vmatmul.mubr.f32.gmra.mrb[0].mxu0 %v6192
    %v6262 = vpop.f32.mrb[0].mxu0
    %v6263 = vadd.f32 0.0, %v6262
    %v6264 = vpop.f32.mrb[0].mxu0
    %6265 = vdwg.mxu0
    %v6266 = vsel %vm566, %v5747, 0
    %v6268 = vsel %vm566, %v5783, 0
    %6270 = vmatprep.subr.mxu0 0.0
    %6271 = vmatpush1.xpose.msra.mxu0 %v6268
    %6272 = vmatprep.subr.mxu0 0.0
    %6273 = vmatpush1.xpose.msra.mxu0 0.0
    %6274 = vmatprep.subr.mxu0 0.0
    %6275 = vmatpush1.xpose.msra.mxu0 0.0
    %6276 = vmatprep.subr.mxu0 0.0
    %6277 = vmatpush1.xpose.msra.mxu0 0.0
    %6278 = vmatprep.subr.mxu0 0.0
    %6279 = vmatpush1.xpose.msra.mxu0 0.0
    %6280 = vmatprep.subr.mxu0 0.0
    %6281 = vmatpush1.xpose.msra.mxu0 0.0
    %6282 = vmatprep.subr.mxu0 0.0
    %6283 = vmatpush1.xpose.msra.mxu0 0.0
    %6284 = vmatprep.subr.mxu0 0.0
    %6285 = vmatpush1.xpose.msra.mxu0 0.0
    %6286 = vmatprep.subr.mxu0 0.0
    %6287 = vmatpush1.xpose.msra.mxu0 0.0
    %6288 = vmatprep.subr.mxu0 0.0
    %6289 = vmatpush1.xpose.msra.mxu0 0.0
    %6290 = vmatprep.subr.mxu0 0.0
    %6291 = vmatpush1.xpose.msra.mxu0 0.0
    %6292 = vmatprep.subr.mxu0 0.0
    %6293 = vmatpush1.xpose.msra.mxu0 0.0
    %6294 = vmatprep.subr.mxu0 0.0
    %6295 = vmatpush1.xpose.msra.mxu0 0.0
    %6296 = vmatprep.subr.mxu0 0.0
    %6297 = vmatpush1.xpose.msra.mxu0 0.0
    %6298 = vmatprep.subr.mxu0 0.0
    %6299 = vmatpush1.xpose.msra.mxu0 0.0
    %6300 = vmatprep.subr.mxu0 0.0
    %6301 = vmatpush1.xpose.msra.mxu0 0.0
    %6302 = vmatprep.subr.mxu0 0.0
    %6303 = vmatpush1.xpose.msra.mxu0 0.0
    %6304 = vmatprep.subr.mxu0 0.0
    %6305 = vmatpush1.xpose.msra.mxu0 0.0
    %6306 = vmatprep.subr.mxu0 0.0
    %6307 = vmatpush1.xpose.msra.mxu0 0.0
    %6308 = vmatprep.subr.mxu0 0.0
    %6309 = vmatpush1.xpose.msra.mxu0 0.0
    %6310 = vmatprep.subr.mxu0 0.0
    %6311 = vmatpush1.xpose.msra.mxu0 0.0
    %6312 = vmatprep.subr.mxu0 0.0
    %6313 = vmatpush1.xpose.msra.mxu0 0.0
    %6314 = vmatprep.subr.mxu0 0.0
    %6315 = vmatpush1.xpose.msra.mxu0 0.0
    %6316 = vmatprep.subr.mxu0 0.0
    %6317 = vmatpush1.xpose.msra.mxu0 0.0
    %6318 = vmatprep.subr.mxu0 0.0
    %6319 = vmatpush1.xpose.msra.mxu0 0.0
    %6320 = vmatprep.subr.mxu0 0.0
    %6321 = vmatpush1.xpose.msra.mxu0 0.0
    %6322 = vmatprep.subr.mxu0 0.0
    %6323 = vmatpush1.xpose.msra.mxu0 0.0
    %6324 = vmatprep.subr.mxu0 0.0
    %6325 = vmatpush1.xpose.msra.mxu0 0.0
    %6326 = vmatprep.subr.mxu0 0.0
    %6327 = vmatpush1.xpose.msra.mxu0 0.0
    %6328 = vmatprep.subr.mxu0 0.0
    %6329 = vmatpush1.xpose.msra.mxu0 0.0
    %6330 = vmatprep.subr.mxu0 0.0
    %6331 = vmatpush1.xpose.msra.mxu0 0.0
    %6332 = vmatprep.subr.mxu0 0.0
    %6333 = vmatpush1.xpose.msra.mxu0 0.0
    %6334 = vmatprep.mubr.f32.mxu0 0.0
    %6335 = vmatmul.mubr.f32.gmra.mrb[0].mxu0 %v6266
    %v6336 = vpop.f32.mrb[0].mxu0
    %v6337 = vadd.f32 0.0, %v6336
    %v6338 = vpop.f32.mrb[0].mxu0
    %6339 = vdwg.mxu0
    %v6340 = vsel %vm566, %v5749, 0
    %v6342 = vsel %vm566, %v5785, 0
    %6344 = vmatprep.subr.mxu0 0.0
    %6345 = vmatpush1.xpose.msra.mxu0 %v6342
    %6346 = vmatprep.subr.mxu0 0.0
    %6347 = vmatpush1.xpose.msra.mxu0 0.0
    %6348 = vmatprep.subr.mxu0 0.0
    %6349 = vmatpush1.xpose.msra.mxu0 0.0
    %6350 = vmatprep.subr.mxu0 0.0
    %6351 = vmatpush1.xpose.msra.mxu0 0.0
    %6352 = vmatprep.subr.mxu0 0.0
    %6353 = vmatpush1.xpose.msra.mxu0 0.0
    %6354 = vmatprep.subr.mxu0 0.0
    %6355 = vmatpush1.xpose.msra.mxu0 0.0
    %6356 = vmatprep.subr.mxu0 0.0
    %6357 = vmatpush1.xpose.msra.mxu0 0.0
    %6358 = vmatprep.subr.mxu0 0.0
    %6359 = vmatpush1.xpose.msra.mxu0 0.0
    %6360 = vmatprep.subr.mxu0 0.0
    %6361 = vmatpush1.xpose.msra.mxu0 0.0
    %6362 = vmatprep.subr.mxu0 0.0
    %6363 = vmatpush1.xpose.msra.mxu0 0.0
    %6364 = vmatprep.subr.mxu0 0.0
    %6365 = vmatpush1.xpose.msra.mxu0 0.0
    %6366 = vmatprep.subr.mxu0 0.0
    %6367 = vmatpush1.xpose.msra.mxu0 0.0
    %6368 = vmatprep.subr.mxu0 0.0
    %6369 = vmatpush1.xpose.msra.mxu0 0.0
    %6370 = vmatprep.subr.mxu0 0.0
    %6371 = vmatpush1.xpose.msra.mxu0 0.0
    %6372 = vmatprep.subr.mxu0 0.0
    %6373 = vmatpush1.xpose.msra.mxu0 0.0
    %6374 = vmatprep.subr.mxu0 0.0
    %6375 = vmatpush1.xpose.msra.mxu0 0.0
    %6376 = vmatprep.subr.mxu0 0.0
    %6377 = vmatpush1.xpose.msra.mxu0 0.0
    %6378 = vmatprep.subr.mxu0 0.0
    %6379 = vmatpush1.xpose.msra.mxu0 0.0
    %6380 = vmatprep.subr.mxu0 0.0
    %6381 = vmatpush1.xpose.msra.mxu0 0.0
    %6382 = vmatprep.subr.mxu0 0.0
    %6383 = vmatpush1.xpose.msra.mxu0 0.0
    %6384 = vmatprep.subr.mxu0 0.0
    %6385 = vmatpush1.xpose.msra.mxu0 0.0
    %6386 = vmatprep.subr.mxu0 0.0
    %6387 = vmatpush1.xpose.msra.mxu0 0.0
    %6388 = vmatprep.subr.mxu0 0.0
    %6389 = vmatpush1.xpose.msra.mxu0 0.0
    %6390 = vmatprep.subr.mxu0 0.0
    %6391 = vmatpush1.xpose.msra.mxu0 0.0
    %6392 = vmatprep.subr.mxu0 0.0
    %6393 = vmatpush1.xpose.msra.mxu0 0.0
    %6394 = vmatprep.subr.mxu0 0.0
    %6395 = vmatpush1.xpose.msra.mxu0 0.0
    %6396 = vmatprep.subr.mxu0 0.0
    %6397 = vmatpush1.xpose.msra.mxu0 0.0
    %6398 = vmatprep.subr.mxu0 0.0
    %6399 = vmatpush1.xpose.msra.mxu0 0.0
    %6400 = vmatprep.subr.mxu0 0.0
    %6401 = vmatpush1.xpose.msra.mxu0 0.0
    %6402 = vmatprep.subr.mxu0 0.0
    %6403 = vmatpush1.xpose.msra.mxu0 0.0
    %6404 = vmatprep.subr.mxu0 0.0
    %6405 = vmatpush1.xpose.msra.mxu0 0.0
    %6406 = vmatprep.subr.mxu0 0.0
    %6407 = vmatpush1.xpose.msra.mxu0 0.0
    %6408 = vmatprep.mubr.f32.mxu0 0.0
    %6409 = vmatmul.mubr.f32.gmra.mrb[0].mxu0 %v6340
    %v6410 = vpop.f32.mrb[0].mxu0
    %v6411 = vadd.f32 0.0, %v6410
    %v6412 = vpop.f32.mrb[0].mxu0
    %6413 = vdwg.mxu0
    %v6414 = vsel %vm1159, %v5893, -inf
    %6415 = vmax.xlane.f32.xlu0 %v6414
    %v6416 = vpop.xlane.xlu0 %6415
    %v6417 = vsel %vm1159, %v5967, -inf
    %6418 = vmax.xlane.f32.xlu0 %v6417
    %v6419 = vpop.xlane.xlu0 %6418
    %v6420 = vsel %vm1159, %v6041, -inf
    %6421 = vmax.xlane.f32.xlu0 %v6420
    %v6422 = vpop.xlane.xlu0 %6421
    %v6423 = vsel %vm1159, %v6115, -inf
    %6424 = vmax.xlane.f32.xlu0 %v6423
    %v6425 = vpop.xlane.xlu0 %6424
    %v6426 = vsel %vm1159, %v6189, -inf
    %6427 = vmax.xlane.f32.xlu0 %v6426
    %v6428 = vpop.xlane.xlu0 %6427
    %v6429 = vsel %vm1159, %v6263, -inf
    %6430 = vmax.xlane.f32.xlu0 %v6429
    %v6431 = vpop.xlane.xlu0 %6430
    %v6432 = vsel %vm1159, %v6337, -inf
    %6433 = vmax.xlane.f32.xlu0 %v6432
    %v6434 = vpop.xlane.xlu0 %6433
    %v6435 = vsel %vm1159, %v6411, -inf
    %6436 = vmax.xlane.f32.xlu0 %v6435
    %v6437 = vpop.xlane.xlu0 %6436
    %v6438 = vsub.f32 %v5893, %v6416
    %v6439 = vsub.f32 %v5967, %v6419
    %v6440 = vsub.f32 %v6041, %v6422
    %v6441 = vsub.f32 %v6115, %v6425
    %v6442 = vsub.f32 %v6189, %v6428
    %v6443 = vsub.f32 %v6263, %v6431
    %v6444 = vsub.f32 %v6337, %v6434
    %v6445 = vsub.f32 %v6411, %v6437
    %v6446 = vmul.f32 %v6438, 1.442695
    %v6447 = vpow.pop %v6446
    %v6448 = vmul.f32 %v6439, 1.442695
    %v6449 = vpow.pop %v6448
    %v6450 = vmul.f32 %v6440, 1.442695
    %v6451 = vpow.pop %v6450
    %v6452 = vmul.f32 %v6441, 1.442695
    %v6453 = vpow.pop %v6452
    %v6454 = vmul.f32 %v6442, 1.442695
    %v6455 = vpow.pop %v6454
    %v6456 = vmul.f32 %v6443, 1.442695
    %v6457 = vpow.pop %v6456
    %v6458 = vmul.f32 %v6444, 1.442695
    %v6459 = vpow.pop %v6458
    %v6460 = vmul.f32 %v6445, 1.442695
    %v6461 = vpow.pop %v6460
    %v6462 = vsel %vm1159, %v6447, 0.0
    %6463 = vadd.xlane.f32.xlu0 %v6462
    %v6464 = vpop.xlane.xlu0 %6463
    %v6465 = vsel %vm1159, %v6449, 0.0
    %6466 = vadd.xlane.f32.xlu0 %v6465
    %v6467 = vpop.xlane.xlu0 %6466
    %v6468 = vsel %vm1159, %v6451, 0.0
    %6469 = vadd.xlane.f32.xlu0 %v6468
    %v6470 = vpop.xlane.xlu0 %6469
    %v6471 = vsel %vm1159, %v6453, 0.0
    %6472 = vadd.xlane.f32.xlu0 %v6471
    %v6473 = vpop.xlane.xlu0 %6472
    %v6474 = vsel %vm1159, %v6455, 0.0
    %6475 = vadd.xlane.f32.xlu0 %v6474
    %v6476 = vpop.xlane.xlu0 %6475
    %v6477 = vsel %vm1159, %v6457, 0.0
    %6478 = vadd.xlane.f32.xlu0 %v6477
    %v6479 = vpop.xlane.xlu0 %6478
    %v6480 = vsel %vm1159, %v6459, 0.0
    %6481 = vadd.xlane.f32.xlu0 %v6480
    %v6482 = vpop.xlane.xlu0 %6481
    %v6483 = vsel %vm1159, %v6461, 0.0
    %6484 = vadd.xlane.f32.xlu0 %v6483
    %v6485 = vpop.xlane.xlu0 %6484
    %v6486 = vrcp.pop %v6464
    %v6487 = vrcp.pop %v6467
    %v6488 = vrcp.pop %v6470
    %v6489 = vrcp.pop %v6473
    %v6490 = vrcp.pop %v6476
    %v6491 = vrcp.pop %v6479
    %v6492 = vrcp.pop %v6482
    %v6493 = vrcp.pop %v6485
    %v6494 = vmul.f32 %v6447, %v6486
    %v6495 = vmul.f32 %v6449, %v6487
    %v6496 = vmul.f32 %v6451, %v6488
    %v6497 = vmul.f32 %v6453, %v6489
    %v6498 = vmul.f32 %v6455, %v6490
    %v6499 = vmul.f32 %v6457, %v6491
    %v6500 = vmul.f32 %v6459, %v6492
    %v6501 = vmul.f32 %v6461, %v6493
    %v6503 = vsel %vm1248, %v6494, 0
    %v6505 = vsel %vm1252, %v5795, 0
    %6507 = vmatprep.subr.mxu0 0.0
    %6508 = vmatpush1.msra.mxu0 %v6505
    %6509 = vmatprep.subr.mxu0 0.0
    %6510 = vmatpush1.msra.mxu0 0.0
    %6511 = vmatprep.subr.mxu0 0.0
    %6512 = vmatpush1.msra.mxu0 0.0
    %6513 = vmatprep.subr.mxu0 0.0
    %6514 = vmatpush1.msra.mxu0 0.0
    %6515 = vmatprep.subr.mxu0 0.0
    %6516 = vmatpush1.msra.mxu0 0.0
    %6517 = vmatprep.subr.mxu0 0.0
    %6518 = vmatpush1.msra.mxu0 0.0
    %6519 = vmatprep.subr.mxu0 0.0
    %6520 = vmatpush1.msra.mxu0 0.0
    %6521 = vmatprep.subr.mxu0 0.0
    %6522 = vmatpush1.msra.mxu0 0.0
    %6523 = vmatprep.subr.mxu0 0.0
    %6524 = vmatpush1.msra.mxu0 0.0
    %6525 = vmatprep.subr.mxu0 0.0
    %6526 = vmatpush1.msra.mxu0 0.0
    %6527 = vmatprep.subr.mxu0 0.0
    %6528 = vmatpush1.msra.mxu0 0.0
    %6529 = vmatprep.subr.mxu0 0.0
    %6530 = vmatpush1.msra.mxu0 0.0
    %6531 = vmatprep.subr.mxu0 0.0
    %6532 = vmatpush1.msra.mxu0 0.0
    %6533 = vmatprep.subr.mxu0 0.0
    %6534 = vmatpush1.msra.mxu0 0.0
    %6535 = vmatprep.subr.mxu0 0.0
    %6536 = vmatpush1.msra.mxu0 0.0
    %6537 = vmatprep.subr.mxu0 0.0
    %6538 = vmatpush1.msra.mxu0 0.0
    %6539 = vmatprep.subr.mxu0 0.0
    %6540 = vmatpush1.msra.mxu0 0.0
    %6541 = vmatprep.subr.mxu0 0.0
    %6542 = vmatpush1.msra.mxu0 0.0
    %6543 = vmatprep.subr.mxu0 0.0
    %6544 = vmatpush1.msra.mxu0 0.0
    %6545 = vmatprep.subr.mxu0 0.0
    %6546 = vmatpush1.msra.mxu0 0.0
    %6547 = vmatprep.subr.mxu0 0.0
    %6548 = vmatpush1.msra.mxu0 0.0
    %6549 = vmatprep.subr.mxu0 0.0
    %6550 = vmatpush1.msra.mxu0 0.0
    %6551 = vmatprep.subr.mxu0 0.0
    %6552 = vmatpush1.msra.mxu0 0.0
    %6553 = vmatprep.subr.mxu0 0.0
    %6554 = vmatpush1.msra.mxu0 0.0
    %6555 = vmatprep.subr.mxu0 0.0
    %6556 = vmatpush1.msra.mxu0 0.0
    %6557 = vmatprep.subr.mxu0 0.0
    %6558 = vmatpush1.msra.mxu0 0.0
    %6559 = vmatprep.subr.mxu0 0.0
    %6560 = vmatpush1.msra.mxu0 0.0
    %6561 = vmatprep.subr.mxu0 0.0
    %6562 = vmatpush1.msra.mxu0 0.0
    %6563 = vmatprep.subr.mxu0 0.0
    %6564 = vmatpush1.msra.mxu0 0.0
    %6565 = vmatprep.subr.mxu0 0.0
    %6566 = vmatpush1.msra.mxu0 0.0
    %6567 = vmatprep.subr.mxu0 0.0
    %6568 = vmatpush1.msra.mxu0 0.0
    %6569 = vmatprep.subr.mxu0 0.0
    %6570 = vmatpush1.msra.mxu0 0.0
    %6571 = vmatprep.mubr.f32.mxu0 0.0
    %6572 = vmatmul.mubr.f32.gmra.mrb[0].mxu0 %v6503
    %v6573 = vpop.f32.mrb[0].mxu0
    %v6574 = vadd.f32 0.0, %v6573
    %v6575 = vpop.f32.mrb[0].mxu0
    %6576 = vdwg.mxu0
    %v6578 = vsel %vm1248, %v6495, 0
    %v6580 = vsel %vm1252, %v5803, 0
    %6582 = vmatprep.subr.mxu0 0.0
    %6583 = vmatpush1.msra.mxu0 %v6580
    %6584 = vmatprep.subr.mxu0 0.0
    %6585 = vmatpush1.msra.mxu0 0.0
    %6586 = vmatprep.subr.mxu0 0.0
    %6587 = vmatpush1.msra.mxu0 0.0
    %6588 = vmatprep.subr.mxu0 0.0
    %6589 = vmatpush1.msra.mxu0 0.0
    %6590 = vmatprep.subr.mxu0 0.0
    %6591 = vmatpush1.msra.mxu0 0.0
    %6592 = vmatprep.subr.mxu0 0.0
    %6593 = vmatpush1.msra.mxu0 0.0
    %6594 = vmatprep.subr.mxu0 0.0
    %6595 = vmatpush1.msra.mxu0 0.0
    %6596 = vmatprep.subr.mxu0 0.0
    %6597 = vmatpush1.msra.mxu0 0.0
    %6598 = vmatprep.subr.mxu0 0.0
    %6599 = vmatpush1.msra.mxu0 0.0
    %6600 = vmatprep.subr.mxu0 0.0
    %6601 = vmatpush1.msra.mxu0 0.0
    %6602 = vmatprep.subr.mxu0 0.0
    %6603 = vmatpush1.msra.mxu0 0.0
    %6604 = vmatprep.subr.mxu0 0.0
    %6605 = vmatpush1.msra.mxu0 0.0
    %6606 = vmatprep.subr.mxu0 0.0
    %6607 = vmatpush1.msra.mxu0 0.0
    %6608 = vmatprep.subr.mxu0 0.0
    %6609 = vmatpush1.msra.mxu0 0.0
    %6610 = vmatprep.subr.mxu0 0.0
    %6611 = vmatpush1.msra.mxu0 0.0
    %6612 = vmatprep.subr.mxu0 0.0
    %6613 = vmatpush1.msra.mxu0 0.0
    %6614 = vmatprep.subr.mxu0 0.0
    %6615 = vmatpush1.msra.mxu0 0.0
    %6616 = vmatprep.subr.mxu0 0.0
    %6617 = vmatpush1.msra.mxu0 0.0
    %6618 = vmatprep.subr.mxu0 0.0
    %6619 = vmatpush1.msra.mxu0 0.0
    %6620 = vmatprep.subr.mxu0 0.0
    %6621 = vmatpush1.msra.mxu0 0.0
    %6622 = vmatprep.subr.mxu0 0.0
    %6623 = vmatpush1.msra.mxu0 0.0
    %6624 = vmatprep.subr.mxu0 0.0
    %6625 = vmatpush1.msra.mxu0 0.0
    %6626 = vmatprep.subr.mxu0 0.0
    %6627 = vmatpush1.msra.mxu0 0.0
    %6628 = vmatprep.subr.mxu0 0.0
    %6629 = vmatpush1.msra.mxu0 0.0
    %6630 = vmatprep.subr.mxu0 0.0
    %6631 = vmatpush1.msra.mxu0 0.0
    %6632 = vmatprep.subr.mxu0 0.0
    %6633 = vmatpush1.msra.mxu0 0.0
    %6634 = vmatprep.subr.mxu0 0.0
    %6635 = vmatpush1.msra.mxu0 0.0
    %6636 = vmatprep.subr.mxu0 0.0
    %6637 = vmatpush1.msra.mxu0 0.0
    %6638 = vmatprep.subr.mxu0 0.0
    %6639 = vmatpush1.msra.mxu0 0.0
    %6640 = vmatprep.subr.mxu0 0.0
    %6641 = vmatpush1.msra.mxu0 0.0
    %6642 = vmatprep.subr.mxu0 0.0
    %6643 = vmatpush1.msra.mxu0 0.0
    %6644 = vmatprep.subr.mxu0 0.0
    %6645 = vmatpush1.msra.mxu0 0.0
    %6646 = vmatprep.mubr.f32.mxu0 0.0
    %6647 = vmatmul.mubr.f32.gmra.mrb[0].mxu0 %v6578
    %v6648 = vpop.f32.mrb[0].mxu0
    %v6649 = vadd.f32 0.0, %v6648
    %v6650 = vpop.f32.mrb[0].mxu0
    %6651 = vdwg.mxu0
    %v6653 = vsel %vm1248, %v6496, 0
    %v6655 = vsel %vm1252, %v5802, 0
    %6657 = vmatprep.subr.mxu0 0.0
    %6658 = vmatpush1.msra.mxu0 %v6655
    %6659 = vmatprep.subr.mxu0 0.0
    %6660 = vmatpush1.msra.mxu0 0.0
    %6661 = vmatprep.subr.mxu0 0.0
    %6662 = vmatpush1.msra.mxu0 0.0
    %6663 = vmatprep.subr.mxu0 0.0
    %6664 = vmatpush1.msra.mxu0 0.0
    %6665 = vmatprep.subr.mxu0 0.0
    %6666 = vmatpush1.msra.mxu0 0.0
    %6667 = vmatprep.subr.mxu0 0.0
    %6668 = vmatpush1.msra.mxu0 0.0
    %6669 = vmatprep.subr.mxu0 0.0
    %6670 = vmatpush1.msra.mxu0 0.0
    %6671 = vmatprep.subr.mxu0 0.0
    %6672 = vmatpush1.msra.mxu0 0.0
    %6673 = vmatprep.subr.mxu0 0.0
    %6674 = vmatpush1.msra.mxu0 0.0
    %6675 = vmatprep.subr.mxu0 0.0
    %6676 = vmatpush1.msra.mxu0 0.0
    %6677 = vmatprep.subr.mxu0 0.0
    %6678 = vmatpush1.msra.mxu0 0.0
    %6679 = vmatprep.subr.mxu0 0.0
    %6680 = vmatpush1.msra.mxu0 0.0
    %6681 = vmatprep.subr.mxu0 0.0
    %6682 = vmatpush1.msra.mxu0 0.0
    %6683 = vmatprep.subr.mxu0 0.0
    %6684 = vmatpush1.msra.mxu0 0.0
    %6685 = vmatprep.subr.mxu0 0.0
    %6686 = vmatpush1.msra.mxu0 0.0
    %6687 = vmatprep.subr.mxu0 0.0
    %6688 = vmatpush1.msra.mxu0 0.0
    %6689 = vmatprep.subr.mxu0 0.0
    %6690 = vmatpush1.msra.mxu0 0.0
    %6691 = vmatprep.subr.mxu0 0.0
    %6692 = vmatpush1.msra.mxu0 0.0
    %6693 = vmatprep.subr.mxu0 0.0
    %6694 = vmatpush1.msra.mxu0 0.0
    %6695 = vmatprep.subr.mxu0 0.0
    %6696 = vmatpush1.msra.mxu0 0.0
    %6697 = vmatprep.subr.mxu0 0.0
    %6698 = vmatpush1.msra.mxu0 0.0
    %6699 = vmatprep.subr.mxu0 0.0
    %6700 = vmatpush1.msra.mxu0 0.0
    %6701 = vmatprep.subr.mxu0 0.0
    %6702 = vmatpush1.msra.mxu0 0.0
    %6703 = vmatprep.subr.mxu0 0.0
    %6704 = vmatpush1.msra.mxu0 0.0
    %6705 = vmatprep.subr.mxu0 0.0
    %6706 = vmatpush1.msra.mxu0 0.0
    %6707 = vmatprep.subr.mxu0 0.0
    %6708 = vmatpush1.msra.mxu0 0.0
    %6709 = vmatprep.subr.mxu0 0.0
    %6710 = vmatpush1.msra.mxu0 0.0
    %6711 = vmatprep.subr.mxu0 0.0
    %6712 = vmatpush1.msra.mxu0 0.0
    %6713 = vmatprep.subr.mxu0 0.0
    %6714 = vmatpush1.msra.mxu0 0.0
    %6715 = vmatprep.subr.mxu0 0.0
    %6716 = vmatpush1.msra.mxu0 0.0
    %6717 = vmatprep.subr.mxu0 0.0
    %6718 = vmatpush1.msra.mxu0 0.0
    %6719 = vmatprep.subr.mxu0 0.0
    %6720 = vmatpush1.msra.mxu0 0.0
    %6721 = vmatprep.mubr.f32.mxu0 0.0
    %6722 = vmatmul.mubr.f32.gmra.mrb[0].mxu0 %v6653
    %v6723 = vpop.f32.mrb[0].mxu0
    %v6724 = vadd.f32 0.0, %v6723
    %v6725 = vpop.f32.mrb[0].mxu0
    %6726 = vdwg.mxu0
    %v6728 = vsel %vm1248, %v6497, 0
    %v6730 = vsel %vm1252, %v5804, 0
    %6732 = vmatprep.subr.mxu0 0.0
    %6733 = vmatpush1.msra.mxu0 %v6730
    %6734 = vmatprep.subr.mxu0 0.0
    %6735 = vmatpush1.msra.mxu0 0.0
    %6736 = vmatprep.subr.mxu0 0.0
    %6737 = vmatpush1.msra.mxu0 0.0
    %6738 = vmatprep.subr.mxu0 0.0
    %6739 = vmatpush1.msra.mxu0 0.0
    %6740 = vmatprep.subr.mxu0 0.0
    %6741 = vmatpush1.msra.mxu0 0.0
    %6742 = vmatprep.subr.mxu0 0.0
    %6743 = vmatpush1.msra.mxu0 0.0
    %6744 = vmatprep.subr.mxu0 0.0
    %6745 = vmatpush1.msra.mxu0 0.0
    %6746 = vmatprep.subr.mxu0 0.0
    %6747 = vmatpush1.msra.mxu0 0.0
    %6748 = vmatprep.subr.mxu0 0.0
    %6749 = vmatpush1.msra.mxu0 0.0
    %6750 = vmatprep.subr.mxu0 0.0
    %6751 = vmatpush1.msra.mxu0 0.0
    %6752 = vmatprep.subr.mxu0 0.0
    %6753 = vmatpush1.msra.mxu0 0.0
    %6754 = vmatprep.subr.mxu0 0.0
    %6755 = vmatpush1.msra.mxu0 0.0
    %6756 = vmatprep.subr.mxu0 0.0
    %6757 = vmatpush1.msra.mxu0 0.0
    %6758 = vmatprep.subr.mxu0 0.0
    %6759 = vmatpush1.msra.mxu0 0.0
    %6760 = vmatprep.subr.mxu0 0.0
    %6761 = vmatpush1.msra.mxu0 0.0
    %6762 = vmatprep.subr.mxu0 0.0
    %6763 = vmatpush1.msra.mxu0 0.0
    %6764 = vmatprep.subr.mxu0 0.0
    %6765 = vmatpush1.msra.mxu0 0.0
    %6766 = vmatprep.subr.mxu0 0.0
    %6767 = vmatpush1.msra.mxu0 0.0
    %6768 = vmatprep.subr.mxu0 0.0
    %6769 = vmatpush1.msra.mxu0 0.0
    %6770 = vmatprep.subr.mxu0 0.0
    %6771 = vmatpush1.msra.mxu0 0.0
    %6772 = vmatprep.subr.mxu0 0.0
    %6773 = vmatpush1.msra.mxu0 0.0
    %6774 = vmatprep.subr.mxu0 0.0
    %6775 = vmatpush1.msra.mxu0 0.0
    %6776 = vmatprep.subr.mxu0 0.0
    %6777 = vmatpush1.msra.mxu0 0.0
    %6778 = vmatprep.subr.mxu0 0.0
    %6779 = vmatpush1.msra.mxu0 0.0
    %6780 = vmatprep.subr.mxu0 0.0
    %6781 = vmatpush1.msra.mxu0 0.0
    %6782 = vmatprep.subr.mxu0 0.0
    %6783 = vmatpush1.msra.mxu0 0.0
    %6784 = vmatprep.subr.mxu0 0.0
    %6785 = vmatpush1.msra.mxu0 0.0
    %6786 = vmatprep.subr.mxu0 0.0
    %6787 = vmatpush1.msra.mxu0 0.0
    %6788 = vmatprep.subr.mxu0 0.0
    %6789 = vmatpush1.msra.mxu0 0.0
    %6790 = vmatprep.subr.mxu0 0.0
    %6791 = vmatpush1.msra.mxu0 0.0
    %6792 = vmatprep.subr.mxu0 0.0
    %6793 = vmatpush1.msra.mxu0 0.0
    %6794 = vmatprep.subr.mxu0 0.0
    %6795 = vmatpush1.msra.mxu0 0.0
    %6796 = vmatprep.mubr.f32.mxu0 0.0
    %6797 = vmatmul.mubr.f32.gmra.mrb[0].mxu0 %v6728
    %v6798 = vpop.f32.mrb[0].mxu0
    %v6799 = vadd.f32 0.0, %v6798
    %v6800 = vpop.f32.mrb[0].mxu0
    %6801 = vdwg.mxu0
    %v6803 = vsel %vm1248, %v6498, 0
    %v6805 = vsel %vm1252, %v5812, 0
    %6807 = vmatprep.subr.mxu0 0.0
    %6808 = vmatpush1.msra.mxu0 %v6805
    %6809 = vmatprep.subr.mxu0 0.0
    %6810 = vmatpush1.msra.mxu0 0.0
    %6811 = vmatprep.subr.mxu0 0.0
    %6812 = vmatpush1.msra.mxu0 0.0
    %6813 = vmatprep.subr.mxu0 0.0
    %6814 = vmatpush1.msra.mxu0 0.0
    %6815 = vmatprep.subr.mxu0 0.0
    %6816 = vmatpush1.msra.mxu0 0.0
    %6817 = vmatprep.subr.mxu0 0.0
    %6818 = vmatpush1.msra.mxu0 0.0
    %6819 = vmatprep.subr.mxu0 0.0
    %6820 = vmatpush1.msra.mxu0 0.0
    %6821 = vmatprep.subr.mxu0 0.0
    %6822 = vmatpush1.msra.mxu0 0.0
    %6823 = vmatprep.subr.mxu0 0.0
    %6824 = vmatpush1.msra.mxu0 0.0
    %6825 = vmatprep.subr.mxu0 0.0
    %6826 = vmatpush1.msra.mxu0 0.0
    %6827 = vmatprep.subr.mxu0 0.0
    %6828 = vmatpush1.msra.mxu0 0.0
    %6829 = vmatprep.subr.mxu0 0.0
    %6830 = vmatpush1.msra.mxu0 0.0
    %6831 = vmatprep.subr.mxu0 0.0
    %6832 = vmatpush1.msra.mxu0 0.0
    %6833 = vmatprep.subr.mxu0 0.0
    %6834 = vmatpush1.msra.mxu0 0.0
    %6835 = vmatprep.subr.mxu0 0.0
    %6836 = vmatpush1.msra.mxu0 0.0
    %6837 = vmatprep.subr.mxu0 0.0
    %6838 = vmatpush1.msra.mxu0 0.0
    %6839 = vmatprep.subr.mxu0 0.0
    %6840 = vmatpush1.msra.mxu0 0.0
    %6841 = vmatprep.subr.mxu0 0.0
    %6842 = vmatpush1.msra.mxu0 0.0
    %6843 = vmatprep.subr.mxu0 0.0
    %6844 = vmatpush1.msra.mxu0 0.0
    %6845 = vmatprep.subr.mxu0 0.0
    %6846 = vmatpush1.msra.mxu0 0.0
    %6847 = vmatprep.subr.mxu0 0.0
    %6848 = vmatpush1.msra.mxu0 0.0
    %6849 = vmatprep.subr.mxu0 0.0
    %6850 = vmatpush1.msra.mxu0 0.0
    %6851 = vmatprep.subr.mxu0 0.0
    %6852 = vmatpush1.msra.mxu0 0.0
    %6853 = vmatprep.subr.mxu0 0.0
    %6854 = vmatpush1.msra.mxu0 0.0
    %6855 = vmatprep.subr.mxu0 0.0
    %6856 = vmatpush1.msra.mxu0 0.0
    %6857 = vmatprep.subr.mxu0 0.0
    %6858 = vmatpush1.msra.mxu0 0.0
    %6859 = vmatprep.subr.mxu0 0.0
    %6860 = vmatpush1.msra.mxu0 0.0
    %6861 = vmatprep.subr.mxu0 0.0
    %6862 = vmatpush1.msra.mxu0 0.0
    %6863 = vmatprep.subr.mxu0 0.0
    %6864 = vmatpush1.msra.mxu0 0.0
    %6865 = vmatprep.subr.mxu0 0.0
    %6866 = vmatpush1.msra.mxu0 0.0
    %6867 = vmatprep.subr.mxu0 0.0
    %6868 = vmatpush1.msra.mxu0 0.0
    %6869 = vmatprep.subr.mxu0 0.0
    %6870 = vmatpush1.msra.mxu0 0.0
    %6871 = vmatprep.mubr.f32.mxu0 0.0
    %6872 = vmatmul.mubr.f32.gmra.mrb[0].mxu0 %v6803
    %v6873 = vpop.f32.mrb[0].mxu0
    %v6874 = vadd.f32 0.0, %v6873
    %v6875 = vpop.f32.mrb[0].mxu0
    %6876 = vdwg.mxu0
    %v6878 = vsel %vm1248, %v6499, 0
    %v6880 = vsel %vm1252, %v5820, 0
    %6882 = vmatprep.subr.mxu0 0.0
    %6883 = vmatpush1.msra.mxu0 %v6880
    %6884 = vmatprep.subr.mxu0 0.0
    %6885 = vmatpush1.msra.mxu0 0.0
    %6886 = vmatprep.subr.mxu0 0.0
    %6887 = vmatpush1.msra.mxu0 0.0
    %6888 = vmatprep.subr.mxu0 0.0
    %6889 = vmatpush1.msra.mxu0 0.0
    %6890 = vmatprep.subr.mxu0 0.0
    %6891 = vmatpush1.msra.mxu0 0.0
    %6892 = vmatprep.subr.mxu0 0.0
    %6893 = vmatpush1.msra.mxu0 0.0
    %6894 = vmatprep.subr.mxu0 0.0
    %6895 = vmatpush1.msra.mxu0 0.0
    %6896 = vmatprep.subr.mxu0 0.0
    %6897 = vmatpush1.msra.mxu0 0.0
    %6898 = vmatprep.subr.mxu0 0.0
    %6899 = vmatpush1.msra.mxu0 0.0
    %6900 = vmatprep.subr.mxu0 0.0
    %6901 = vmatpush1.msra.mxu0 0.0
    %6902 = vmatprep.subr.mxu0 0.0
    %6903 = vmatpush1.msra.mxu0 0.0
    %6904 = vmatprep.subr.mxu0 0.0
    %6905 = vmatpush1.msra.mxu0 0.0
    %6906 = vmatprep.subr.mxu0 0.0
    %6907 = vmatpush1.msra.mxu0 0.0
    %6908 = vmatprep.subr.mxu0 0.0
    %6909 = vmatpush1.msra.mxu0 0.0
    %6910 = vmatprep.subr.mxu0 0.0
    %6911 = vmatpush1.msra.mxu0 0.0
    %6912 = vmatprep.subr.mxu0 0.0
    %6913 = vmatpush1.msra.mxu0 0.0
    %6914 = vmatprep.subr.mxu0 0.0
    %6915 = vmatpush1.msra.mxu0 0.0
    %6916 = vmatprep.subr.mxu0 0.0
    %6917 = vmatpush1.msra.mxu0 0.0
    %6918 = vmatprep.subr.mxu0 0.0
    %6919 = vmatpush1.msra.mxu0 0.0
    %6920 = vmatprep.subr.mxu0 0.0
    %6921 = vmatpush1.msra.mxu0 0.0
    %6922 = vmatprep.subr.mxu0 0.0
    %6923 = vmatpush1.msra.mxu0 0.0
    %6924 = vmatprep.subr.mxu0 0.0
    %6925 = vmatpush1.msra.mxu0 0.0
    %6926 = vmatprep.subr.mxu0 0.0
    %6927 = vmatpush1.msra.mxu0 0.0
    %6928 = vmatprep.subr.mxu0 0.0
    %6929 = vmatpush1.msra.mxu0 0.0
    %6930 = vmatprep.subr.mxu0 0.0
    %6931 = vmatpush1.msra.mxu0 0.0
    %6932 = vmatprep.subr.mxu0 0.0
    %6933 = vmatpush1.msra.mxu0 0.0
    %6934 = vmatprep.subr.mxu0 0.0
    %6935 = vmatpush1.msra.mxu0 0.0
    %6936 = vmatprep.subr.mxu0 0.0
    %6937 = vmatpush1.msra.mxu0 0.0
    %6938 = vmatprep.subr.mxu0 0.0
    %6939 = vmatpush1.msra.mxu0 0.0
    %6940 = vmatprep.subr.mxu0 0.0
    %6941 = vmatpush1.msra.mxu0 0.0
    %6942 = vmatprep.subr.mxu0 0.0
    %6943 = vmatpush1.msra.mxu0 0.0
    %6944 = vmatprep.subr.mxu0 0.0
    %6945 = vmatpush1.msra.mxu0 0.0
    %6946 = vmatprep.mubr.f32.mxu0 0.0
    %6947 = vmatmul.mubr.f32.gmra.mrb[0].mxu0 %v6878
    %v6948 = vpop.f32.mrb[0].mxu0
    %v6949 = vadd.f32 0.0, %v6948
    %v6950 = vpop.f32.mrb[0].mxu0
    %6951 = vdwg.mxu0
    %v6953 = vsel %vm1248, %v6500, 0
    %v6955 = vsel %vm1252, %v5819, 0
    %6957 = vmatprep.subr.mxu0 0.0
    %6958 = vmatpush1.msra.mxu0 %v6955
    %6959 = vmatprep.subr.mxu0 0.0
    %6960 = vmatpush1.msra.mxu0 0.0
    %6961 = vmatprep.subr.mxu0 0.0
    %6962 = vmatpush1.msra.mxu0 0.0
    %6963 = vmatprep.subr.mxu0 0.0
    %6964 = vmatpush1.msra.mxu0 0.0
    %6965 = vmatprep.subr.mxu0 0.0
    %6966 = vmatpush1.msra.mxu0 0.0
    %6967 = vmatprep.subr.mxu0 0.0
    %6968 = vmatpush1.msra.mxu0 0.0
    %6969 = vmatprep.subr.mxu0 0.0
    %6970 = vmatpush1.msra.mxu0 0.0
    %6971 = vmatprep.subr.mxu0 0.0
    %6972 = vmatpush1.msra.mxu0 0.0
    %6973 = vmatprep.subr.mxu0 0.0
    %6974 = vmatpush1.msra.mxu0 0.0
    %6975 = vmatprep.subr.mxu0 0.0
    %6976 = vmatpush1.msra.mxu0 0.0
    %6977 = vmatprep.subr.mxu0 0.0
    %6978 = vmatpush1.msra.mxu0 0.0
    %6979 = vmatprep.subr.mxu0 0.0
    %6980 = vmatpush1.msra.mxu0 0.0
    %6981 = vmatprep.subr.mxu0 0.0
    %6982 = vmatpush1.msra.mxu0 0.0
    %6983 = vmatprep.subr.mxu0 0.0
    %6984 = vmatpush1.msra.mxu0 0.0
    %6985 = vmatprep.subr.mxu0 0.0
    %6986 = vmatpush1.msra.mxu0 0.0
    %6987 = vmatprep.subr.mxu0 0.0
    %6988 = vmatpush1.msra.mxu0 0.0
    %6989 = vmatprep.subr.mxu0 0.0
    %6990 = vmatpush1.msra.mxu0 0.0
    %6991 = vmatprep.subr.mxu0 0.0
    %6992 = vmatpush1.msra.mxu0 0.0
    %6993 = vmatprep.subr.mxu0 0.0
    %6994 = vmatpush1.msra.mxu0 0.0
    %6995 = vmatprep.subr.mxu0 0.0
    %6996 = vmatpush1.msra.mxu0 0.0
    %6997 = vmatprep.subr.mxu0 0.0
    %6998 = vmatpush1.msra.mxu0 0.0
    %6999 = vmatprep.subr.mxu0 0.0
    %7000 = vmatpush1.msra.mxu0 0.0
    %7001 = vmatprep.subr.mxu0 0.0
    %7002 = vmatpush1.msra.mxu0 0.0
    %7003 = vmatprep.subr.mxu0 0.0
    %7004 = vmatpush1.msra.mxu0 0.0
    %7005 = vmatprep.subr.mxu0 0.0
    %7006 = vmatpush1.msra.mxu0 0.0
    %7007 = vmatprep.subr.mxu0 0.0
    %7008 = vmatpush1.msra.mxu0 0.0
    %7009 = vmatprep.subr.mxu0 0.0
    %7010 = vmatpush1.msra.mxu0 0.0
    %7011 = vmatprep.subr.mxu0 0.0
    %7012 = vmatpush1.msra.mxu0 0.0
    %7013 = vmatprep.subr.mxu0 0.0
    %7014 = vmatpush1.msra.mxu0 0.0
    %7015 = vmatprep.subr.mxu0 0.0
    %7016 = vmatpush1.msra.mxu0 0.0
    %7017 = vmatprep.subr.mxu0 0.0
    %7018 = vmatpush1.msra.mxu0 0.0
    %7019 = vmatprep.subr.mxu0 0.0
    %7020 = vmatpush1.msra.mxu0 0.0
    %7021 = vmatprep.mubr.f32.mxu0 0.0
    %7022 = vmatmul.mubr.f32.gmra.mrb[0].mxu0 %v6953
    %v7023 = vpop.f32.mrb[0].mxu0
    %v7024 = vadd.f32 0.0, %v7023
    %v7025 = vpop.f32.mrb[0].mxu0
    %7026 = vdwg.mxu0
    %v7028 = vsel %vm1248, %v6501, 0
    %v7030 = vsel %vm1252, %v5821, 0
    %7032 = vmatprep.subr.mxu0 0.0
    %7033 = vmatpush1.msra.mxu0 %v7030
    %7034 = vmatprep.subr.mxu0 0.0
    %7035 = vmatpush1.msra.mxu0 0.0
    %7036 = vmatprep.subr.mxu0 0.0
    %7037 = vmatpush1.msra.mxu0 0.0
    %7038 = vmatprep.subr.mxu0 0.0
    %7039 = vmatpush1.msra.mxu0 0.0
    %7040 = vmatprep.subr.mxu0 0.0
    %7041 = vmatpush1.msra.mxu0 0.0
    %7042 = vmatprep.subr.mxu0 0.0
    %7043 = vmatpush1.msra.mxu0 0.0
    %7044 = vmatprep.subr.mxu0 0.0
    %7045 = vmatpush1.msra.mxu0 0.0
    %7046 = vmatprep.subr.mxu0 0.0
    %7047 = vmatpush1.msra.mxu0 0.0
    %7048 = vmatprep.subr.mxu0 0.0
    %7049 = vmatpush1.msra.mxu0 0.0
    %7050 = vmatprep.subr.mxu0 0.0
    %7051 = vmatpush1.msra.mxu0 0.0
    %7052 = vmatprep.subr.mxu0 0.0
    %7053 = vmatpush1.msra.mxu0 0.0
    %7054 = vmatprep.subr.mxu0 0.0
    %7055 = vmatpush1.msra.mxu0 0.0
    %7056 = vmatprep.subr.mxu0 0.0
    %7057 = vmatpush1.msra.mxu0 0.0
    %7058 = vmatprep.subr.mxu0 0.0
    %7059 = vmatpush1.msra.mxu0 0.0
    %7060 = vmatprep.subr.mxu0 0.0
    %7061 = vmatpush1.msra.mxu0 0.0
    %7062 = vmatprep.subr.mxu0 0.0
    %7063 = vmatpush1.msra.mxu0 0.0
    %7064 = vmatprep.subr.mxu0 0.0
    %7065 = vmatpush1.msra.mxu0 0.0
    %7066 = vmatprep.subr.mxu0 0.0
    %7067 = vmatpush1.msra.mxu0 0.0
    %7068 = vmatprep.subr.mxu0 0.0
    %7069 = vmatpush1.msra.mxu0 0.0
    %7070 = vmatprep.subr.mxu0 0.0
    %7071 = vmatpush1.msra.mxu0 0.0
    %7072 = vmatprep.subr.mxu0 0.0
    %7073 = vmatpush1.msra.mxu0 0.0
    %7074 = vmatprep.subr.mxu0 0.0
    %7075 = vmatpush1.msra.mxu0 0.0
    %7076 = vmatprep.subr.mxu0 0.0
    %7077 = vmatpush1.msra.mxu0 0.0
    %7078 = vmatprep.subr.mxu0 0.0
    %7079 = vmatpush1.msra.mxu0 0.0
    %7080 = vmatprep.subr.mxu0 0.0
    %7081 = vmatpush1.msra.mxu0 0.0
    %7082 = vmatprep.subr.mxu0 0.0
    %7083 = vmatpush1.msra.mxu0 0.0
    %7084 = vmatprep.subr.mxu0 0.0
    %7085 = vmatpush1.msra.mxu0 0.0
    %7086 = vmatprep.subr.mxu0 0.0
    %7087 = vmatpush1.msra.mxu0 0.0
    %7088 = vmatprep.subr.mxu0 0.0
    %7089 = vmatpush1.msra.mxu0 0.0
    %7090 = vmatprep.subr.mxu0 0.0
    %7091 = vmatpush1.msra.mxu0 0.0
    %7092 = vmatprep.subr.mxu0 0.0
    %7093 = vmatpush1.msra.mxu0 0.0
    %7094 = vmatprep.subr.mxu0 0.0
    %7095 = vmatpush1.msra.mxu0 0.0
    %7096 = vmatprep.mubr.f32.mxu0 0.0
    %7097 = vmatmul.mubr.f32.gmra.mrb[0].mxu0 %v7028
    %v7098 = vpop.f32.mrb[0].mxu0
    %v7099 = vadd.f32 0.0, %v7098
    %v7100 = vpop.f32.mrb[0].mxu0
    %7101 = vdwg.mxu0
    %v7102 = vld [vmem:[%s6 + $0x18] sm:$0xff]
    %v7111 = vcombine.low %v6574, %v6649
    %v7112 = vcombine.low %v6724, %v6799
    %v7114 = vunpack.c.l.s4 1983009808
    %v7115 = vunpack.c.0.s8 %v7114
    %v7116 = vlaneseq
    %v7117 = vshrl.u32 %v7116, 7
    %v7118 = vsub.s32 %v7115, %v7117
    %v7119 = vrot.slane %v7111, %v7118
    %v7121 = vunpack.c.l.s4 1983009808
    %v7122 = vunpack.c.0.s8 %v7121
    %v7123 = vlaneseq
    %v7124 = vshrl.u32 %v7123, 7
    %v7125 = vsub.s32 %v7122, %v7124
    %v7126 = vrot.slane %v7112, %v7125
    %v7127 = vcombine.low %v7119, %v7126
    %v7128 = vcombine.low %v6874, %v6949
    %v7129 = vcombine.low %v7024, %v7099
    %v7131 = vunpack.c.l.s4 1983009808
    %v7132 = vunpack.c.0.s8 %v7131
    %v7133 = vlaneseq
    %v7134 = vshrl.u32 %v7133, 7
    %v7135 = vsub.s32 %v7132, %v7134
    %v7136 = vrot.slane %v7128, %v7135
    %v7138 = vunpack.c.l.s4 1983009808
    %v7139 = vunpack.c.0.s8 %v7138
    %v7140 = vlaneseq
    %v7141 = vshrl.u32 %v7140, 7
    %v7142 = vsub.s32 %v7139, %v7141
    %v7143 = vrot.slane %v7129, %v7142
    %v7144 = vcombine.low %v7136, %v7143
    %v7145 = vsel %vm566, %v7127, 0
    %v7147 = vsel %vm566, %v7144, 0
    %7149 = vmatprep.subr.mxu0 0.0
    %7150 = vmatpush1.msra.mxu0 %v7102
    %7151 = vmatprep.subr.mxu0 0.0
    %7152 = vmatpush1.msra.mxu0 0.0
    %7153 = vmatprep.subr.mxu0 0.0
    %7154 = vmatpush1.msra.mxu0 0.0
    %7155 = vmatprep.subr.mxu0 0.0
    %7156 = vmatpush1.msra.mxu0 0.0
    %7157 = vmatprep.subr.mxu0 0.0
    %7158 = vmatpush1.msra.mxu0 0.0
    %7159 = vmatprep.subr.mxu0 0.0
    %7160 = vmatpush1.msra.mxu0 0.0
    %7161 = vmatprep.subr.mxu0 0.0
    %7162 = vmatpush1.msra.mxu0 0.0
    %7163 = vmatprep.subr.mxu0 0.0
    %7164 = vmatpush1.msra.mxu0 0.0
    %7165 = vmatprep.subr.mxu0 0.0
    %7166 = vmatpush1.msra.mxu0 0.0
    %7167 = vmatprep.subr.mxu0 0.0
    %7168 = vmatpush1.msra.mxu0 0.0
    %7169 = vmatprep.subr.mxu0 0.0
    %7170 = vmatpush1.msra.mxu0 0.0
    %7171 = vmatprep.subr.mxu0 0.0
    %7172 = vmatpush1.msra.mxu0 0.0
    %7173 = vmatprep.subr.mxu0 0.0
    %7174 = vmatpush1.msra.mxu0 0.0
    %7175 = vmatprep.subr.mxu0 0.0
    %7176 = vmatpush1.msra.mxu0 0.0
    %7177 = vmatprep.subr.mxu0 0.0
    %7178 = vmatpush1.msra.mxu0 0.0
    %7179 = vmatprep.subr.mxu0 0.0
    %7180 = vmatpush1.msra.mxu0 0.0
    %7181 = vmatprep.subr.mxu0 0.0
    %7182 = vmatpush1.msra.mxu0 0.0
    %7183 = vmatprep.subr.mxu0 0.0
    %7184 = vmatpush1.msra.mxu0 0.0
    %7185 = vmatprep.subr.mxu0 0.0
    %7186 = vmatpush1.msra.mxu0 0.0
    %7187 = vmatprep.subr.mxu0 0.0
    %7188 = vmatpush1.msra.mxu0 0.0
    %7189 = vmatprep.subr.mxu0 0.0
    %7190 = vmatpush1.msra.mxu0 0.0
    %7191 = vmatprep.subr.mxu0 0.0
    %7192 = vmatpush1.msra.mxu0 0.0
    %7193 = vmatprep.subr.mxu0 0.0
    %7194 = vmatpush1.msra.mxu0 0.0
    %7195 = vmatprep.subr.mxu0 0.0
    %7196 = vmatpush1.msra.mxu0 0.0
    %7197 = vmatprep.subr.mxu0 0.0
    %7198 = vmatpush1.msra.mxu0 0.0
    %7199 = vmatprep.subr.mxu0 0.0
    %7200 = vmatpush1.msra.mxu0 0.0
    %7201 = vmatprep.subr.mxu0 0.0
    %7202 = vmatpush1.msra.mxu0 0.0
    %7203 = vmatprep.subr.mxu0 0.0
    %7204 = vmatpush1.msra.mxu0 0.0
    %7205 = vmatprep.subr.mxu0 0.0
    %7206 = vmatpush1.msra.mxu0 0.0
    %7207 = vmatprep.subr.mxu0 0.0
    %7208 = vmatpush1.msra.mxu0 0.0
    %7209 = vmatprep.subr.mxu0 0.0
    %7210 = vmatpush1.msra.mxu0 0.0
    %7211 = vmatprep.subr.mxu0 0.0
    %7212 = vmatpush1.msra.mxu0 0.0
    %7213 = vmatprep.mubr.f32.mxu0 0.0
    %7214 = vmatmul.mubr.f32.gmra.mrb[0].mxu0 %v7145
    %v7215 = vpop.f32.mrb[0].mxu0
    %v7216 = vadd.f32 0.0, %v7215
    %v7217 = vpop.f32.mrb[0].mxu0
    %7218 = vmatprep.mubr.f32.mxu0 0.0
    %7219 = vmatmul.mubr.f32.gmra.mrb[0].mxu0 %v7147
    %v7220 = vpop.f32.mrb[0].mxu0
    %v7221 = vadd.f32 0.0, %v7220
    %v7222 = vpop.f32.mrb[0].mxu0
    %7223 = vdwg.mxu0
    %v7224 = vadd.f32 %v5472, %v7216
    %v7225 = vadd.f32 %v5473, %v7221
    %v7226 = vld [vmem:[%s7] sm:$0x1]
    %v7228 = vlaneseq
    %v7229 = vshrl.u32 %v7228, 7
    %v7230 = vsub.s32 0, %v7229
    %v7231 = vrot.slane %v7226, %v7230
    %v7233 = vadd.f32 %v7224, %v7231
    %v7234 = vadd.f32 %v7225, %v7231
    %v7237 = vcombine.high %v7233, %v7233
    %v7239 = vunpack.c.l.s4 1983009808
    %v7240 = vunpack.c.0.s8 %v7239
    %v7241 = vlaneseq
    %v7242 = vshrl.u32 %v7241, 7
    %v7243 = vsub.s32 %v7240, %v7242
    %v7244 = vrot.slane %v7233, %v7243
    %v7246 = vunpack.c.l.s4 1983009808
    %v7247 = vunpack.c.0.s8 %v7246
    %v7248 = vlaneseq
    %v7249 = vshrl.u32 %v7248, 7
    %v7250 = vsub.s32 %v7247, %v7249
    %v7251 = vrot.slane %v7237, %v7250
    %v7252 = vcombine.high %v7244, %v7244
    %v7253 = vcombine.high %v7251, %v7251
    %v7254 = vcombine.high %v7234, %v7234
    %v7256 = vunpack.c.l.s4 1983009808
    %v7257 = vunpack.c.0.s8 %v7256
    %v7258 = vlaneseq
    %v7259 = vshrl.u32 %v7258, 7
    %v7260 = vsub.s32 %v7257, %v7259
    %v7261 = vrot.slane %v7234, %v7260
    %v7263 = vunpack.c.l.s4 1983009808
    %v7264 = vunpack.c.0.s8 %v7263
    %v7265 = vlaneseq
    %v7266 = vshrl.u32 %v7265, 7
    %v7267 = vsub.s32 %v7264, %v7266
    %v7268 = vrot.slane %v7254, %v7267
    %v7269 = vcombine.high %v7261, %v7261
    %v7270 = vcombine.high %v7268, %v7268
    %7279 = vst.msk [vmem:[#allocation2] sm:$0x3] %vm38, %v7244
    %7280 = vst.msk [vmem:[#allocation2 + $0x2] sm:$0x3] %vm38, %v7252
    %7281 = vst.msk [vmem:[#allocation2 + $0x4] sm:$0x3] %vm38, %v7251
    %7282 = vst.msk [vmem:[#allocation2 + $0x6] sm:$0x3] %vm38, %v7253
    %7283 = vst.msk [vmem:[#allocation2 + $0x8] sm:$0x3] %vm38, %v7261
    %7284 = vst.msk [vmem:[#allocation2 + $0xa] sm:$0x3] %vm38, %v7269
    %7285 = vst.msk [vmem:[#allocation2 + $0xc] sm:$0x3] %vm38, %v7268
    %7286 = vst.msk [vmem:[#allocation2 + $0xe] sm:$0x3] %vm38, %v7270
    // Predicated region
    $region34: #{tpu_custom_call.1} parent=1 // pred_check
      _
    $region35: #{tpu_custom_call.1} parent=1 // pred_check_branch
      %7288 = sbr.rel (0) target = $region37
    $region36: #{tpu_custom_call.1} parent=1 // pred_region
      %s7290 = ssub.s32 256, 256
      %7291 = vsyncadd [#allocation3], %s7290
      %s7292 = sshll.u32 [#allocation2], 4
      %s7293 = int_to_ptr.vmem [resolvable:$true] %s7292
      %7298 = dma.vmem_to_hbm [thread:$0]  %s7293, 256, %s8, [#allocation3], 32, 32, 2
    $region37: #{tpu_custom_call.1} parent=1 // pred_fallthru
      _
    // Predicated region
    $region38: #{tpu_custom_call.1} parent=1 // pred_check
      _
    $region39: #{tpu_custom_call.1} parent=1 // pred_check_branch
      %7300 = sbr.rel (0) target = $region41
    $region40: #{tpu_custom_call.1} parent=1 // pred_region
      %7301 = dma.done [#allocation3], 256
    $region41: #{tpu_custom_call.1} parent=1 // pred_fallthru
      _
    %7302 = vsyncpa [#allocation3], 1

</llo_original>
